<compile_context>
chip_gen: v5e
topology: v5e:2x2
jax: 0.10.0
libtpu: 0.0.40
codegen_flags: <defaults>
</compile_context>

<pallas_src>
import functools
import math

import jax
import jax.numpy as jnp
from jax.experimental import pallas as pl
from jax.experimental.pallas import tpu as pltpu

EPS = 1e-5
LANE = 128
_VMEM_LIMIT = 32 * 1024 * 1024   # explicit: raises v5e's 16 MiB default, safe on v6e/v7x


def _round_up(x, m):
    return ((x + m - 1) // m) * m


def _pick_tile(dim, align, cap):
    """Largest divisor of `dim` that is a multiple of `align` and <= cap (else full dim)."""
    best = None
    t = align
    limit = min(dim, cap)
    while t <= limit:
        if dim % t == 0:
            best = t
        t += align
    return best if best is not None else dim


# ----------------------------------------------------------------------------
# Pallas kernels
# ----------------------------------------------------------------------------
def _conv_bnstats_kernel(a_ref, b_ref, y_ref, s_ref, sq_ref, acc_ref):
    """Tiled bf16 matmul with f32 accumulator; BN sum / sum-of-squares fused
    into the epilogue (computed from the f32 accumulator before store)."""
    k = pl.program_id(2)

    @pl.when(k == 0)
    def _():
        acc_ref[...] = jnp.zeros_like(acc_ref)

    acc_ref[...] += jnp.dot(a_ref[...], b_ref[...], preferred_element_type=jnp.float32)

    @pl.when(k == pl.num_programs(2) - 1)
    def _():
        acc = acc_ref[...]
        y_ref[...] = acc
        s_ref[...] = jnp.sum(acc, axis=0, keepdims=True)[None]
        sq_ref[...] = jnp.sum(acc * acc, axis=0, keepdims=True)[None]


def pallas_conv_matmul_bnstats(a, b, *, tm_cap=256, tn_cap=256, tk_cap=512):
    """a: [M, K] bf16, b: [K, Np] bf16 -> (y [M,Np] f32, sum [Np], sumsq [Np])."""
    M, K = a.shape
    K2, Np = b.shape
    assert K == K2
    tm = _pick_tile(M, 8, tm_cap)
    tn = _pick_tile(Np, LANE, tn_cap)
    tk = _pick_tile(K, LANE, tk_cap)
    gm, gn, gk = M // tm, Np // tn, K // tk

    y, s, sq = pl.pallas_call(
        _conv_bnstats_kernel,
        out_shape=(jax.ShapeDtypeStruct((M, Np), jnp.float32),
                   jax.ShapeDtypeStruct((gm, 1, Np), jnp.float32),
                   jax.ShapeDtypeStruct((gm, 1, Np), jnp.float32)),
        grid=(gm, gn, gk),
        in_specs=[pl.BlockSpec((tm, tk), lambda i, j, k: (i, k)),
                  pl.BlockSpec((tk, tn), lambda i, j, k: (k, j))],
        out_specs=(pl.BlockSpec((tm, tn), lambda i, j, k: (i, j)),
                   pl.BlockSpec((1, 1, tn), lambda i, j, k: (i, 0, j)),
                   pl.BlockSpec((1, 1, tn), lambda i, j, k: (i, 0, j))),
        scratch_shapes=[pltpu.VMEM((tm, tn), jnp.float32)],
        compiler_params=pltpu.CompilerParams(
            dimension_semantics=("parallel", "parallel", "arbitrary"),
            vmem_limit_bytes=_VMEM_LIMIT),
    )(a, b)
    # tiny reduction of per-M-block partials in glue (also v7x dual-TC friendly)
    return y, jnp.sum(s[:, 0, :], axis=0), jnp.sum(sq[:, 0, :], axis=0)


def _bn_act_kernel(x_ref, scale_ref, shift_ref, o_ref, *, relu):
    y = x_ref[...] * scale_ref[...] + shift_ref[...]
    if relu:
        y = jnp.maximum(y, 0.0)
    o_ref[...] = y


def _bn_act_res_kernel(x_ref, scale_ref, shift_ref, res_ref, o_ref, *, relu):
    y = x_ref[...] * scale_ref[...] + shift_ref[...] + res_ref[...]
    if relu:
        y = jnp.maximum(y, 0.0)
    o_ref[...] = y


def pallas_bn_act(x, scale, shift, residual=None, relu=True, tm_cap=1024):
    """Fused BN affine + (optional residual add) + (optional ReLU)."""
    M, C = x.shape
    tm = _pick_tile(M, 8, tm_cap)
    scale2 = scale.reshape(1, C).astype(jnp.float32)
    shift2 = shift.reshape(1, C).astype(jnp.float32)
    in_specs = [pl.BlockSpec((tm, C), lambda i: (i, 0)),
                pl.BlockSpec((1, C), lambda i: (0, 0)),
                pl.BlockSpec((1, C), lambda i: (0, 0))]
    args = [x, scale2, shift2]
    if residual is not None:
        kernel = functools.partial(_bn_act_res_kernel, relu=relu)
        in_specs.append(pl.BlockSpec((tm, C), lambda i: (i, 0)))
        args.append(residual)
    else:
        kernel = functools.partial(_bn_act_kernel, relu=relu)
    return pl.pallas_call(
        kernel,
        out_shape=jax.ShapeDtypeStruct((M, C), jnp.float32),
        grid=(M // tm,),
        in_specs=in_specs,
        out_specs=pl.BlockSpec((tm, C), lambda i: (i, 0)),
        compiler_params=pltpu.CompilerParams(
            dimension_semantics=("parallel",), vmem_limit_bytes=_VMEM_LIMIT),
    )(*args)


def _pool_linear_kernel(x_ref, w_ref, b_ref, o_ref):
    pooled = jnp.mean(x_ref[...], axis=1)                       # [N, Cp] f32
    o_ref[...] = (jnp.dot(pooled.astype(jnp.bfloat16), w_ref[...],
                          preferred_element_type=jnp.float32) + b_ref[...])


def pallas_pool_linear(x, w, b):
    """Fused AdaptiveAvgPool2d((1,1)) + flatten + Linear. x: [N, HW, Cp] f32."""
    N, HW, Cp = x.shape
    NCp = w.shape[1]
    return pl.pallas_call(
        _pool_linear_kernel,
        out_shape=jax.ShapeDtypeStruct((N, NCp), jnp.float32),
        compiler_params=pltpu.CompilerParams(vmem_limit_bytes=_VMEM_LIMIT),
    )(x, w, b.reshape(1, NCp))


# ----------------------------------------------------------------------------
# JAX glue: im2col, conv+BN-stats, block composition
# ----------------------------------------------------------------------------
def im2col(x, k, stride, pad):
    """x: [N, H, W, Cp] f32 -> bf16 patches [N*Ho*Wo, k*k*Cp] (order: kh, kw, c).
    `k`, `stride`, `pad` must be Python ints (static)."""
    N, H, W, C = x.shape
    xp = jnp.pad(x, ((0, 0), (pad, pad), (pad, pad), (0, 0))).astype(jnp.bfloat16)
    Ho = (H + 2 * pad - k) // stride + 1
    Wo = (W + 2 * pad - k) // stride + 1
    cols = []
    for kh in range(k):
        for kw in range(k):
            cols.append(xp[:, kh:kh + stride * Ho:stride, kw:kw + stride * Wo:stride, :])
    patches = jnp.stack(cols, axis=-2)                  # [N, Ho, Wo, k*k, Cp]
    return patches.reshape(N * Ho * Wo, k * k * C), Ho, Wo


def conv_bn(x, w2d, ksize, stride, pad, gamma, beta):
    """conv (bf16 MXU matmul, fused BN-stats epilogue) + batch-stat scale/shift."""
    cols, Ho, Wo = im2col(x, ksize, stride, pad)
    y, s, sq = pallas_conv_matmul_bnstats(cols, w2d)
    M = y.shape[0]
    mean = s / M
    # E[x^2]-mean^2 in f32; fine at these magnitudes (stats come from the f32 acc).
    var = jnp.maximum(sq / M - mean * mean, 0.0)        # biased var, as PyTorch BN
    invstd = jax.lax.rsqrt(var + EPS)
    scale = gamma * invstd
    shift = beta - mean * scale
    return y, scale, shift, Ho, Wo


def basic_block(x, blk, stride, has_down):
    """stride / has_down are STATIC Python values (from `arch`), not traced."""
    N, H, W, C = x.shape
    y1, sc1, sh1, Ho, Wo = conv_bn(x, blk['conv1'], 3, stride, 1,
                                   blk['bn1_g'], blk['bn1_b'])
    a1 = pallas_bn_act(y1, sc1, sh1, relu=True).reshape(N, Ho, Wo, -1)
    y2, sc2, sh2, _, _ = conv_bn(a1, blk['conv2'], 3, 1, 1, blk['bn2_g'], blk['bn2_b'])
    if has_down:
        yd, scd, shd, _, _ = conv_bn(x, blk['down_conv'], 1, stride, 0,
                                     blk['down_bn_g'], blk['down_bn_b'])
        r = pallas_bn_act(yd, scd, shd, relu=False)
    else:
        r = x.reshape(N * H * W, C)
    out = pallas_bn_act(y2, sc2, sh2, residual=r, relu=True)
    return out.reshape(N, Ho, Wo, -1)


def resnet_forward(params, x_nchw, *, arch):
    # accept NCHW (PyTorch convention), compute in NHWC with lane-padded channels
    x = jnp.transpose(x_nchw, (0, 2, 3, 1)).astype(jnp.float32)
    C = x.shape[-1]
    Cp = _round_up(C, LANE)
    if Cp != C:
        x = jnp.pad(x, ((0, 0), (0, 0), (0, 0), (0, Cp - C)))
    N = x.shape[0]

    y, sc, sh, Ho, Wo = conv_bn(x, params['head_conv'], 3, 1, 1,
                                params['head_bn_g'], params['head_bn_b'])
    a = pallas_bn_act(y, sc, sh, relu=True).reshape(N, Ho, Wo, -1)

    for layer_params, layer_arch in zip(params['layers'], arch['layers']):
        for blk, blk_arch in zip(layer_params, layer_arch):
            a = basic_block(a, blk, blk_arch['stride'], blk_arch['down'])

    N, H, W, Cp2 = a.shape
    logits = pallas_pool_linear(a.reshape(N, H * W, Cp2), params['fc_w'], params['fc_b'])
    return logits[:, :arch['num_classes']]


# ----------------------------------------------------------------------------
# Deterministic parameter init (matches module __init__ shapes / init scheme);
# weights pre-reshaped to (k*k*Cin_pad, Cout_pad) bf16, channels zero-padded to 128.
# Returns (params, arch): params = traced pytree (arrays only), arch = static
# Python metadata (strides / downsample flags / num_classes).
# ----------------------------------------------------------------------------
def init_params(key, cin, hidden, num_blocks, num_classes):
    keys = iter(jax.random.split(key, 256))

    def conv_w(k, ksz, ci, co):
        fan_out = co * ksz * ksz                        # kaiming_normal_, fan_out, relu
        w = jax.random.normal(k, (ksz, ksz, ci, co), jnp.float32) * math.sqrt(2.0 / fan_out)
        ci_p, co_p = _round_up(ci, LANE), _round_up(co, LANE)
        w = jnp.pad(w, ((0, 0), (0, 0), (0, ci_p - ci), (0, co_p - co)))
        return w.reshape(ksz * ksz * ci_p, co_p).astype(jnp.bfloat16)

    def bn_params(c):
        cp = _round_up(c, LANE)
        return jnp.ones((cp,), jnp.float32), jnp.zeros((cp,), jnp.float32)

    p = {}
    in_planes = hidden[0]
    p['head_conv'] = conv_w(next(keys), 3, cin, in_planes)
    p['head_bn_g'], p['head_bn_b'] = bn_params(in_planes)

    layers = []
    arch_layers = []
    for li, planes in enumerate(hidden):
        stride = 1 if li == 0 else 2
        blocks = []
        arch_blocks = []
        for bi in range(num_blocks[li]):
            s = stride if bi == 0 else 1
            has_down = (s != 1 or in_planes != planes)  # downsample = conv1x1 + BN
            blk = {'conv1': conv_w(next(keys), 3, in_planes, planes),
                   'conv2': conv_w(next(keys), 3, planes, planes)}
            blk['bn1_g'], blk['bn1_b'] = bn_params(planes)
            blk['bn2_g'], blk['bn2_b'] = bn_params(planes)
            if has_down:
                blk['down_conv'] = conv_w(next(keys), 1, in_planes, planes)
                blk['down_bn_g'], blk['down_bn_b'] = bn_params(planes)
            blocks.append(blk)
            arch_blocks.append({'stride': s, 'down': has_down})
            in_planes = planes
        layers.append(blocks)
        arch_layers.append(arch_blocks)
    p['layers'] = layers

    bound = 1.0 / math.sqrt(hidden[-1])                 # PyTorch default Linear init
    fcw = jax.random.uniform(next(keys), (hidden[-1], num_classes), jnp.float32, -bound, bound)
    fcb = jax.random.uniform(next(keys), (num_classes,), jnp.float32, -bound, bound)
    feat_p = _round_up(hidden[-1], LANE)
    nc_p = _round_up(num_classes, LANE)                 # lane-dense classifier output
    p['fc_w'] = jnp.pad(fcw, ((0, feat_p - hidden[-1]), (0, nc_p - num_classes))).astype(jnp.bfloat16)
    p['fc_b'] = jnp.pad(fcb, (0, nc_p - num_classes)).astype(jnp.float32)

    arch = {'layers': arch_layers, 'num_classes': num_classes}
    return p, arch


if __name__ == "__main__":
    # small config: data_shape=(4,16,16), hidden_size=[8,16,32,64],
    # num_blocks=[1,1,1,1], num_classes=10, batch=2, track=False, rate=1,
    # dropout_rate=0, cfg={'scale': False}
    key = jax.random.PRNGKey(0)
    kx, kp = jax.random.split(key)
    x = jax.random.normal(kx, (2, 4, 16, 16), jnp.float32)    # NCHW, like PyTorch
    params, arch = init_params(kp, cin=4, hidden=[8, 16, 32, 64],
                               num_blocks=[1, 1, 1, 1], num_classes=10)
    fwd = jax.jit(functools.partial(resnet_forward, arch=arch))
    out = jax.block_until_ready(fwd(params, x))
    assert out.shape == (2, 10) and out.dtype == jnp.float32
    print("KERNEL_OK")
</pallas_src>

<mosaic_0001>
module attributes {stable_mosaic.version = 11 : i64} {
  func.func @_conv_bnstats_kernel(%arg0: i32, %arg1: i32, %arg2: i32, %arg3: memref<256x384xbf16, #tpu.memory_space<vmem>>, %arg4: memref<384x128xbf16, #tpu.memory_space<vmem>>, %arg5: memref<256x128xf32, #tpu.memory_space<vmem>>, %arg6: memref<1x1x128xf32, #tpu.memory_space<vmem>>, %arg7: memref<1x1x128xf32, #tpu.memory_space<vmem>>, %arg8: memref<256x128xf32, #tpu.memory_space<vmem>>) attributes {dimension_semantics = [#tpu.dimension_semantics<parallel>, #tpu.dimension_semantics<parallel>, #tpu.dimension_semantics<arbitrary>], iteration_bounds = array<i64: 2, 1, 3>, scalar_prefetch = 0 : i64, scratch_operands = 1 : i64, tpu.core_type = #tpu.core_type<tc>, window_params = [{transform_indices = @transform_0, window_bounds = array<i64: 256, 384>}, {transform_indices = @transform_1, window_bounds = array<i64: 384, 128>}, {transform_indices = @transform_2, window_bounds = array<i64: 256, 128>}, {transform_indices = @transform_3, window_bounds = array<i64: 1, 1, 128>}, {transform_indices = @transform_4, window_bounds = array<i64: 1, 1, 128>}]} {
    %c0_i32 = arith.constant 0 : i32
    %0 = arith.cmpi eq, %arg2, %c0_i32 : i32
    %1 = arith.extui %0 : i1 to i32
    %c0_i32_0 = arith.constant 0 : i32
    %2 = arith.cmpi ne, %1, %c0_i32_0 : i32
    scf.if %2 {
      %cst_9 = arith.constant 0.000000e+00 : f32
      %12 = vector.broadcast %cst_9 : f32 to vector<256x128xf32>
      %c0_10 = arith.constant 0 : index
      %c0_11 = arith.constant 0 : index
      %13 = vector.load %arg8[%c0_10, %c0_11] : memref<256x128xf32, #tpu.memory_space<vmem>>, vector<256x128xf32>
      tpu.vector_store %arg8[%c0_10, %c0_11], %12 {strides = array<i32>} : memref<256x128xf32, #tpu.memory_space<vmem>>, vector<256x128xf32>,
    } else {
    }
    %c0 = arith.constant 0 : index
    %c0_1 = arith.constant 0 : index
    %3 = vector.load %arg8[%c0, %c0_1] : memref<256x128xf32, #tpu.memory_space<vmem>>, vector<256x128xf32>
    %c0_2 = arith.constant 0 : index
    %c0_3 = arith.constant 0 : index
    %4 = vector.load %arg3[%c0_2, %c0_3] : memref<256x384xbf16, #tpu.memory_space<vmem>>, vector<256x384xbf16>
    %c0_4 = arith.constant 0 : index
    %c0_5 = arith.constant 0 : index
    %5 = vector.load %arg4[%c0_4, %c0_5] : memref<384x128xbf16, #tpu.memory_space<vmem>>, vector<384x128xbf16>
    %cst = arith.constant dense<0.000000e+00> : vector<256x128xf32>
    %6 = tpu.matmul %4, %5, %cst {dimension_numbers = #tpu.dot_dimension_numbers<[1], [0], [0], [1], [0, 0, 1, 1], [], []>} : vector<256x384xbf16>, vector<384x128xbf16>, vector<256x128xf32> -> vector<256x128xf32>
    %7 = arith.addf %3, %6 : vector<256x128xf32>
    %c0_6 = arith.constant 0 : index
    %c0_7 = arith.constant 0 : index
    %8 = vector.load %arg8[%c0_6, %c0_7] : memref<256x128xf32, #tpu.memory_space<vmem>>, vector<256x128xf32>
    tpu.vector_store %arg8[%c0_6, %c0_7], %7 {strides = array<i32>} : memref<256x128xf32, #tpu.memory_space<vmem>>, vector<256x128xf32>,
    %c2_i32 = arith.constant 2 : i32
    %9 = arith.cmpi eq, %arg2, %c2_i32 : i32
    %10 = arith.extui %9 : i1 to i32
    %c0_i32_8 = arith.constant 0 : i32
    %11 = arith.cmpi ne, %10, %c0_i32_8 : i32
    scf.if %11 {
      %c0_9 = arith.constant 0 : index
      %c0_10 = arith.constant 0 : index
      %12 = vector.load %arg8[%c0_9, %c0_10] : memref<256x128xf32, #tpu.memory_space<vmem>>, vector<256x128xf32>
      %c0_11 = arith.constant 0 : index
      %c0_12 = arith.constant 0 : index
      %13 = vector.load %arg5[%c0_11, %c0_12] : memref<256x128xf32, #tpu.memory_space<vmem>>, vector<256x128xf32>
      tpu.vector_store %arg5[%c0_11, %c0_12], %12 {strides = array<i32>} : memref<256x128xf32, #tpu.memory_space<vmem>>, vector<256x128xf32>,
      %cst_13 = arith.constant dense<0.000000e+00> : vector<128xf32>
      %14 = vector.multi_reduction <add>, %12, %cst_13 [0] : vector<256x128xf32> to vector<128xf32>
      %15 = vector.shape_cast %14 : vector<128xf32> to vector<1x128xf32>
      %16 = vector.shape_cast %15 : vector<1x128xf32> to vector<1x1x128xf32>
      %c0_14 = arith.constant 0 : index
      %c0_15 = arith.constant 0 : index
      %c0_16 = arith.constant 0 : index
      %17 = vector.load %arg6[%c0_14, %c0_15, %c0_16] : memref<1x1x128xf32, #tpu.memory_space<vmem>>, vector<1x1x128xf32>
      tpu.vector_store %arg6[%c0_14, %c0_15, %c0_16], %16 {strides = array<i32>} : memref<1x1x128xf32, #tpu.memory_space<vmem>>, vector<1x1x128xf32>,
      %18 = arith.mulf %12, %12 : vector<256x128xf32>
      %cst_17 = arith.constant dense<0.000000e+00> : vector<128xf32>
      %19 = vector.multi_reduction <add>, %18, %cst_17 [0] : vector<256x128xf32> to vector<128xf32>
      %20 = vector.shape_cast %19 : vector<128xf32> to vector<1x128xf32>
      %21 = vector.shape_cast %20 : vector<1x128xf32> to vector<1x1x128xf32>
      %c0_18 = arith.constant 0 : index
      %c0_19 = arith.constant 0 : index
      %c0_20 = arith.constant 0 : index
      %22 = vector.load %arg7[%c0_18, %c0_19, %c0_20] : memref<1x1x128xf32, #tpu.memory_space<vmem>>, vector<1x1x128xf32>
      tpu.vector_store %arg7[%c0_18, %c0_19, %c0_20], %21 {strides = array<i32>} : memref<1x1x128xf32, #tpu.memory_space<vmem>>, vector<1x1x128xf32>,
    } else {
    }
    return
  }
  func.func @transform_0(%arg0: i32, %arg1: i32, %arg2: i32) -> (i32, i32) {
    %c0_i32 = arith.constant 0 : i32
    return %arg0, %arg2 : i32, i32
  }
  func.func @transform_1(%arg0: i32, %arg1: i32, %arg2: i32) -> (i32, i32) {
    %c0_i32 = arith.constant 0 : i32
    return %arg2, %arg1 : i32, i32
  }
  func.func @transform_2(%arg0: i32, %arg1: i32, %arg2: i32) -> (i32, i32) {
    %c0_i32 = arith.constant 0 : i32
    return %arg0, %arg1 : i32, i32
  }
  func.func @transform_3(%arg0: i32, %arg1: i32, %arg2: i32) -> (i32, i32, i32) {
    %c0_i32 = arith.constant 0 : i32
    %c0_i32_0 = arith.constant 0 : i32
    return %arg0, %c0_i32, %arg1 : i32, i32, i32
  }
  func.func @transform_4(%arg0: i32, %arg1: i32, %arg2: i32) -> (i32, i32, i32) {
    %c0_i32 = arith.constant 0 : i32
    %c0_i32_0 = arith.constant 0 : i32
    return %arg0, %c0_i32, %arg1 : i32, i32, i32
  }
}

module attributes {stable_mosaic.version = 11 : i64} {
  func.func @_bn_act_kernel(%arg0: i32, %arg1: memref<512x128xf32, #tpu.memory_space<vmem>>, %arg2: memref<1x128xf32, #tpu.memory_space<vmem>>, %arg3: memref<1x128xf32, #tpu.memory_space<vmem>>, %arg4: memref<512x128xf32, #tpu.memory_space<vmem>>) attributes {dimension_semantics = [#tpu.dimension_semantics<parallel>], iteration_bounds = array<i64: 1>, scalar_prefetch = 0 : i64, scratch_operands = 0 : i64, tpu.core_type = #tpu.core_type<tc>, window_params = [{transform_indices = @transform_0, window_bounds = array<i64: 512, 128>}, {pipeline_mode = #tpu.pipeline_mode<synchronous>, transform_indices = @transform_1, window_bounds = array<i64: 1, 128>}, {pipeline_mode = #tpu.pipeline_mode<synchronous>, transform_indices = @transform_2, window_bounds = array<i64: 1, 128>}, {transform_indices = @transform_3, window_bounds = array<i64: 512, 128>}]} {
    %c0 = arith.constant 0 : index
    %c0_0 = arith.constant 0 : index
    %0 = vector.load %arg1[%c0, %c0_0] : memref<512x128xf32, #tpu.memory_space<vmem>>, vector<512x128xf32>
    %c0_1 = arith.constant 0 : index
    %c0_2 = arith.constant 0 : index
    %1 = vector.load %arg2[%c0_1, %c0_2] : memref<1x128xf32, #tpu.memory_space<vmem>>, vector<1x128xf32>
    %2 = vector.broadcast %1 : vector<1x128xf32> to vector<512x128xf32>
    %3 = arith.mulf %0, %2 : vector<512x128xf32>
    %c0_3 = arith.constant 0 : index
    %c0_4 = arith.constant 0 : index
    %4 = vector.load %arg3[%c0_3, %c0_4] : memref<1x128xf32, #tpu.memory_space<vmem>>, vector<1x128xf32>
    %5 = vector.broadcast %4 : vector<1x128xf32> to vector<512x128xf32>
    %6 = arith.addf %3, %5 : vector<512x128xf32>
    %cst = arith.constant 0.000000e+00 : f32
    %7 = vector.broadcast %cst : f32 to vector<512x128xf32>
    %8 = arith.maximumf %6, %7 : vector<512x128xf32>
    %c0_5 = arith.constant 0 : index
    %c0_6 = arith.constant 0 : index
    %9 = vector.load %arg4[%c0_5, %c0_6] : memref<512x128xf32, #tpu.memory_space<vmem>>, vector<512x128xf32>
    tpu.vector_store %arg4[%c0_5, %c0_6], %8 {strides = array<i32>} : memref<512x128xf32, #tpu.memory_space<vmem>>, vector<512x128xf32>,
    return
  }
  func.func @transform_0(%arg0: i32) -> (i32, i32) {
    %c0_i32 = arith.constant 0 : i32
    %c0_i32_0 = arith.constant 0 : i32
    return %arg0, %c0_i32 : i32, i32
  }
  func.func @transform_1(%arg0: i32) -> (i32, i32) {
    %c0_i32 = arith.constant 0 : i32
    %c0_i32_0 = arith.constant 0 : i32
    %c0_i32_1 = arith.constant 0 : i32
    return %c0_i32, %c0_i32_0 : i32, i32
  }
  func.func @transform_2(%arg0: i32) -> (i32, i32) {
    %c0_i32 = arith.constant 0 : i32
    %c0_i32_0 = arith.constant 0 : i32
    %c0_i32_1 = arith.constant 0 : i32
    return %c0_i32, %c0_i32_0 : i32, i32
  }
  func.func @transform_3(%arg0: i32) -> (i32, i32) {
    %c0_i32 = arith.constant 0 : i32
    %c0_i32_0 = arith.constant 0 : i32
    return %arg0, %c0_i32 : i32, i32
  }
}

module attributes {stable_mosaic.version = 11 : i64} {
  func.func @_bn_act_res_kernel(%arg0: i32, %arg1: memref<512x128xf32, #tpu.memory_space<vmem>>, %arg2: memref<1x128xf32, #tpu.memory_space<vmem>>, %arg3: memref<1x128xf32, #tpu.memory_space<vmem>>, %arg4: memref<512x128xf32, #tpu.memory_space<vmem>>, %arg5: memref<512x128xf32, #tpu.memory_space<vmem>>) attributes {dimension_semantics = [#tpu.dimension_semantics<parallel>], iteration_bounds = array<i64: 1>, scalar_prefetch = 0 : i64, scratch_operands = 0 : i64, tpu.core_type = #tpu.core_type<tc>, window_params = [{transform_indices = @transform_0, window_bounds = array<i64: 512, 128>}, {pipeline_mode = #tpu.pipeline_mode<synchronous>, transform_indices = @transform_1, window_bounds = array<i64: 1, 128>}, {pipeline_mode = #tpu.pipeline_mode<synchronous>, transform_indices = @transform_2, window_bounds = array<i64: 1, 128>}, {transform_indices = @transform_3, window_bounds = array<i64: 512, 128>}, {transform_indices = @transform_4, window_bounds = array<i64: 512, 128>}]} {
    %c0 = arith.constant 0 : index
    %c0_0 = arith.constant 0 : index
    %0 = vector.load %arg1[%c0, %c0_0] : memref<512x128xf32, #tpu.memory_space<vmem>>, vector<512x128xf32>
    %c0_1 = arith.constant 0 : index
    %c0_2 = arith.constant 0 : index
    %1 = vector.load %arg2[%c0_1, %c0_2] : memref<1x128xf32, #tpu.memory_space<vmem>>, vector<1x128xf32>
    %2 = vector.broadcast %1 : vector<1x128xf32> to vector<512x128xf32>
    %3 = arith.mulf %0, %2 : vector<512x128xf32>
    %c0_3 = arith.constant 0 : index
    %c0_4 = arith.constant 0 : index
    %4 = vector.load %arg3[%c0_3, %c0_4] : memref<1x128xf32, #tpu.memory_space<vmem>>, vector<1x128xf32>
    %5 = vector.broadcast %4 : vector<1x128xf32> to vector<512x128xf32>
    %6 = arith.addf %3, %5 : vector<512x128xf32>
    %c0_5 = arith.constant 0 : index
    %c0_6 = arith.constant 0 : index
    %7 = vector.load %arg4[%c0_5, %c0_6] : memref<512x128xf32, #tpu.memory_space<vmem>>, vector<512x128xf32>
    %8 = arith.addf %6, %7 : vector<512x128xf32>
    %cst = arith.constant 0.000000e+00 : f32
    %9 = vector.broadcast %cst : f32 to vector<512x128xf32>
    %10 = arith.maximumf %8, %9 : vector<512x128xf32>
    %c0_7 = arith.constant 0 : index
    %c0_8 = arith.constant 0 : index
    %11 = vector.load %arg5[%c0_7, %c0_8] : memref<512x128xf32, #tpu.memory_space<vmem>>, vector<512x128xf32>
    tpu.vector_store %arg5[%c0_7, %c0_8], %10 {strides = array<i32>} : memref<512x128xf32, #tpu.memory_space<vmem>>, vector<512x128xf32>,
    return
  }
  func.func @transform_0(%arg0: i32) -> (i32, i32) {
    %c0_i32 = arith.constant 0 : i32
    %c0_i32_0 = arith.constant 0 : i32
    return %arg0, %c0_i32 : i32, i32
  }
  func.func @transform_1(%arg0: i32) -> (i32, i32) {
    %c0_i32 = arith.constant 0 : i32
    %c0_i32_0 = arith.constant 0 : i32
    %c0_i32_1 = arith.constant 0 : i32
    return %c0_i32, %c0_i32_0 : i32, i32
  }
  func.func @transform_2(%arg0: i32) -> (i32, i32) {
    %c0_i32 = arith.constant 0 : i32
    %c0_i32_0 = arith.constant 0 : i32
    %c0_i32_1 = arith.constant 0 : i32
    return %c0_i32, %c0_i32_0 : i32, i32
  }
  func.func @transform_3(%arg0: i32) -> (i32, i32) {
    %c0_i32 = arith.constant 0 : i32
    %c0_i32_0 = arith.constant 0 : i32
    return %arg0, %c0_i32 : i32, i32
  }
  func.func @transform_4(%arg0: i32) -> (i32, i32) {
    %c0_i32 = arith.constant 0 : i32
    %c0_i32_0 = arith.constant 0 : i32
    return %arg0, %c0_i32 : i32, i32
  }
}

module attributes {stable_mosaic.version = 11 : i64} {
  func.func @_conv_bnstats_kernel(%arg0: i32, %arg1: i32, %arg2: i32, %arg3: memref<128x128xbf16, #tpu.memory_space<vmem>>, %arg4: memref<128x128xbf16, #tpu.memory_space<vmem>>, %arg5: memref<128x128xf32, #tpu.memory_space<vmem>>, %arg6: memref<1x1x128xf32, #tpu.memory_space<vmem>>, %arg7: memref<1x1x128xf32, #tpu.memory_space<vmem>>, %arg8: memref<128x128xf32, #tpu.memory_space<vmem>>) attributes {dimension_semantics = [#tpu.dimension_semantics<parallel>, #tpu.dimension_semantics<parallel>, #tpu.dimension_semantics<arbitrary>], iteration_bounds = array<i64: 1, 1, 1>, scalar_prefetch = 0 : i64, scratch_operands = 1 : i64, tpu.core_type = #tpu.core_type<tc>, window_params = [{transform_indices = @transform_0, window_bounds = array<i64: 128, 128>}, {transform_indices = @transform_1, window_bounds = array<i64: 128, 128>}, {transform_indices = @transform_2, window_bounds = array<i64: 128, 128>}, {transform_indices = @transform_3, window_bounds = array<i64: 1, 1, 128>}, {transform_indices = @transform_4, window_bounds = array<i64: 1, 1, 128>}]} {
    %c0_i32 = arith.constant 0 : i32
    %0 = arith.cmpi eq, %arg2, %c0_i32 : i32
    %1 = arith.extui %0 : i1 to i32
    %c0_i32_0 = arith.constant 0 : i32
    %2 = arith.cmpi ne, %1, %c0_i32_0 : i32
    scf.if %2 {
      %cst_10 = arith.constant 0.000000e+00 : f32
      %12 = vector.broadcast %cst_10 : f32 to vector<128x128xf32>
      %c0_11 = arith.constant 0 : index
      %c0_12 = arith.constant 0 : index
      %13 = vector.load %arg8[%c0_11, %c0_12] : memref<128x128xf32, #tpu.memory_space<vmem>>, vector<128x128xf32>
      tpu.vector_store %arg8[%c0_11, %c0_12], %12 {strides = array<i32>} : memref<128x128xf32, #tpu.memory_space<vmem>>, vector<128x128xf32>,
    } else {
    }
    %c0 = arith.constant 0 : index
    %c0_1 = arith.constant 0 : index
    %3 = vector.load %arg8[%c0, %c0_1] : memref<128x128xf32, #tpu.memory_space<vmem>>, vector<128x128xf32>
    %c0_2 = arith.constant 0 : index
    %c0_3 = arith.constant 0 : index
    %4 = vector.load %arg3[%c0_2, %c0_3] : memref<128x128xbf16, #tpu.memory_space<vmem>>, vector<128x128xbf16>
    %c0_4 = arith.constant 0 : index
    %c0_5 = arith.constant 0 : index
    %5 = vector.load %arg4[%c0_4, %c0_5] : memref<128x128xbf16, #tpu.memory_space<vmem>>, vector<128x128xbf16>
    %cst = arith.constant dense<0.000000e+00> : vector<128x128xf32>
    %6 = tpu.matmul %4, %5, %cst {dimension_numbers = #tpu.dot_dimension_numbers<[1], [0], [0], [1], [0, 0, 1, 1], [], []>} : vector<128x128xbf16>, vector<128x128xbf16>, vector<128x128xf32> -> vector<128x128xf32>
    %7 = arith.addf %3, %6 : vector<128x128xf32>
    %c0_6 = arith.constant 0 : index
    %c0_7 = arith.constant 0 : index
    %8 = vector.load %arg8[%c0_6, %c0_7] : memref<128x128xf32, #tpu.memory_space<vmem>>, vector<128x128xf32>
    tpu.vector_store %arg8[%c0_6, %c0_7], %7 {strides = array<i32>} : memref<128x128xf32, #tpu.memory_space<vmem>>, vector<128x128xf32>,
    %c0_i32_8 = arith.constant 0 : i32
    %9 = arith.cmpi eq, %arg2, %c0_i32_8 : i32
    %10 = arith.extui %9 : i1 to i32
    %c0_i32_9 = arith.constant 0 : i32
    %11 = arith.cmpi ne, %10, %c0_i32_9 : i32
    scf.if %11 {
      %c0_10 = arith.constant 0 : index
      %c0_11 = arith.constant 0 : index
      %12 = vector.load %arg8[%c0_10, %c0_11] : memref<128x128xf32, #tpu.memory_space<vmem>>, vector<128x128xf32>
      %c0_12 = arith.constant 0 : index
      %c0_13 = arith.constant 0 : index
      %13 = vector.load %arg5[%c0_12, %c0_13] : memref<128x128xf32, #tpu.memory_space<vmem>>, vector<128x128xf32>
      tpu.vector_store %arg5[%c0_12, %c0_13], %12 {strides = array<i32>} : memref<128x128xf32, #tpu.memory_space<vmem>>, vector<128x128xf32>,
      %cst_14 = arith.constant dense<0.000000e+00> : vector<128xf32>
      %14 = vector.multi_reduction <add>, %12, %cst_14 [0] : vector<128x128xf32> to vector<128xf32>
      %15 = vector.shape_cast %14 : vector<128xf32> to vector<1x128xf32>
      %16 = vector.shape_cast %15 : vector<1x128xf32> to vector<1x1x128xf32>
      %c0_15 = arith.constant 0 : index
      %c0_16 = arith.constant 0 : index
      %c0_17 = arith.constant 0 : index
      %17 = vector.load %arg6[%c0_15, %c0_16, %c0_17] : memref<1x1x128xf32, #tpu.memory_space<vmem>>, vector<1x1x128xf32>
      tpu.vector_store %arg6[%c0_15, %c0_16, %c0_17], %16 {strides = array<i32>} : memref<1x1x128xf32, #tpu.memory_space<vmem>>, vector<1x1x128xf32>,
      %18 = arith.mulf %12, %12 : vector<128x128xf32>
      %cst_18 = arith.constant dense<0.000000e+00> : vector<128xf32>
      %19 = vector.multi_reduction <add>, %18, %cst_18 [0] : vector<128x128xf32> to vector<128xf32>
      %20 = vector.shape_cast %19 : vector<128xf32> to vector<1x128xf32>
      %21 = vector.shape_cast %20 : vector<1x128xf32> to vector<1x1x128xf32>
      %c0_19 = arith.constant 0 : index
      %c0_20 = arith.constant 0 : index
      %c0_21 = arith.constant 0 : index
      %22 = vector.load %arg7[%c0_19, %c0_20, %c0_21] : memref<1x1x128xf32, #tpu.memory_space<vmem>>, vector<1x1x128xf32>
      tpu.vector_store %arg7[%c0_19, %c0_20, %c0_21], %21 {strides = array<i32>} : memref<1x1x128xf32, #tpu.memory_space<vmem>>, vector<1x1x128xf32>,
    } else {
    }
    return
  }
  func.func @transform_0(%arg0: i32, %arg1: i32, %arg2: i32) -> (i32, i32) {
    %c0_i32 = arith.constant 0 : i32
    return %arg0, %arg2 : i32, i32
  }
  func.func @transform_1(%arg0: i32, %arg1: i32, %arg2: i32) -> (i32, i32) {
    %c0_i32 = arith.constant 0 : i32
    return %arg2, %arg1 : i32, i32
  }
  func.func @transform_2(%arg0: i32, %arg1: i32, %arg2: i32) -> (i32, i32) {
    %c0_i32 = arith.constant 0 : i32
    return %arg0, %arg1 : i32, i32
  }
  func.func @transform_3(%arg0: i32, %arg1: i32, %arg2: i32) -> (i32, i32, i32) {
    %c0_i32 = arith.constant 0 : i32
    %c0_i32_0 = arith.constant 0 : i32
    return %arg0, %c0_i32, %arg1 : i32, i32, i32
  }
  func.func @transform_4(%arg0: i32, %arg1: i32, %arg2: i32) -> (i32, i32, i32) {
    %c0_i32 = arith.constant 0 : i32
    %c0_i32_0 = arith.constant 0 : i32
    return %arg0, %c0_i32, %arg1 : i32, i32, i32
  }
}

module attributes {stable_mosaic.version = 11 : i64} {
  func.func @_bn_act_kernel(%arg0: i32, %arg1: memref<128x128xf32, #tpu.memory_space<vmem>>, %arg2: memref<1x128xf32, #tpu.memory_space<vmem>>, %arg3: memref<1x128xf32, #tpu.memory_space<vmem>>, %arg4: memref<128x128xf32, #tpu.memory_space<vmem>>) attributes {dimension_semantics = [#tpu.dimension_semantics<parallel>], iteration_bounds = array<i64: 1>, scalar_prefetch = 0 : i64, scratch_operands = 0 : i64, tpu.core_type = #tpu.core_type<tc>, window_params = [{transform_indices = @transform_0, window_bounds = array<i64: 128, 128>}, {pipeline_mode = #tpu.pipeline_mode<synchronous>, transform_indices = @transform_1, window_bounds = array<i64: 1, 128>}, {pipeline_mode = #tpu.pipeline_mode<synchronous>, transform_indices = @transform_2, window_bounds = array<i64: 1, 128>}, {transform_indices = @transform_3, window_bounds = array<i64: 128, 128>}]} {
    %c0 = arith.constant 0 : index
    %c0_0 = arith.constant 0 : index
    %0 = vector.load %arg1[%c0, %c0_0] : memref<128x128xf32, #tpu.memory_space<vmem>>, vector<128x128xf32>
    %c0_1 = arith.constant 0 : index
    %c0_2 = arith.constant 0 : index
    %1 = vector.load %arg2[%c0_1, %c0_2] : memref<1x128xf32, #tpu.memory_space<vmem>>, vector<1x128xf32>
    %2 = vector.broadcast %1 : vector<1x128xf32> to vector<128x128xf32>
    %3 = arith.mulf %0, %2 : vector<128x128xf32>
    %c0_3 = arith.constant 0 : index
    %c0_4 = arith.constant 0 : index
    %4 = vector.load %arg3[%c0_3, %c0_4] : memref<1x128xf32, #tpu.memory_space<vmem>>, vector<1x128xf32>
    %5 = vector.broadcast %4 : vector<1x128xf32> to vector<128x128xf32>
    %6 = arith.addf %3, %5 : vector<128x128xf32>
    %c0_5 = arith.constant 0 : index
    %c0_6 = arith.constant 0 : index
    %7 = vector.load %arg4[%c0_5, %c0_6] : memref<128x128xf32, #tpu.memory_space<vmem>>, vector<128x128xf32>
    tpu.vector_store %arg4[%c0_5, %c0_6], %6 {strides = array<i32>} : memref<128x128xf32, #tpu.memory_space<vmem>>, vector<128x128xf32>,
    return
  }
  func.func @transform_0(%arg0: i32) -> (i32, i32) {
    %c0_i32 = arith.constant 0 : i32
    %c0_i32_0 = arith.constant 0 : i32
    return %arg0, %c0_i32 : i32, i32
  }
  func.func @transform_1(%arg0: i32) -> (i32, i32) {
    %c0_i32 = arith.constant 0 : i32
    %c0_i32_0 = arith.constant 0 : i32
    %c0_i32_1 = arith.constant 0 : i32
    return %c0_i32, %c0_i32_0 : i32, i32
  }
  func.func @transform_2(%arg0: i32) -> (i32, i32) {
    %c0_i32 = arith.constant 0 : i32
    %c0_i32_0 = arith.constant 0 : i32
    %c0_i32_1 = arith.constant 0 : i32
    return %c0_i32, %c0_i32_0 : i32, i32
  }
  func.func @transform_3(%arg0: i32) -> (i32, i32) {
    %c0_i32 = arith.constant 0 : i32
    %c0_i32_0 = arith.constant 0 : i32
    return %arg0, %c0_i32 : i32, i32
  }
}

module attributes {stable_mosaic.version = 11 : i64} {
  func.func @_conv_bnstats_kernel(%arg0: i32, %arg1: i32, %arg2: i32, %arg3: memref<128x384xbf16, #tpu.memory_space<vmem>>, %arg4: memref<384x128xbf16, #tpu.memory_space<vmem>>, %arg5: memref<128x128xf32, #tpu.memory_space<vmem>>, %arg6: memref<1x1x128xf32, #tpu.memory_space<vmem>>, %arg7: memref<1x1x128xf32, #tpu.memory_space<vmem>>, %arg8: memref<128x128xf32, #tpu.memory_space<vmem>>) attributes {dimension_semantics = [#tpu.dimension_semantics<parallel>, #tpu.dimension_semantics<parallel>, #tpu.dimension_semantics<arbitrary>], iteration_bounds = array<i64: 1, 1, 3>, scalar_prefetch = 0 : i64, scratch_operands = 1 : i64, tpu.core_type = #tpu.core_type<tc>, window_params = [{transform_indices = @transform_0, window_bounds = array<i64: 128, 384>}, {transform_indices = @transform_1, window_bounds = array<i64: 384, 128>}, {transform_indices = @transform_2, window_bounds = array<i64: 128, 128>}, {transform_indices = @transform_3, window_bounds = array<i64: 1, 1, 128>}, {transform_indices = @transform_4, window_bounds = array<i64: 1, 1, 128>}]} {
    %c0_i32 = arith.constant 0 : i32
    %0 = arith.cmpi eq, %arg2, %c0_i32 : i32
    %1 = arith.extui %0 : i1 to i32
    %c0_i32_0 = arith.constant 0 : i32
    %2 = arith.cmpi ne, %1, %c0_i32_0 : i32
    scf.if %2 {
      %cst_9 = arith.constant 0.000000e+00 : f32
      %12 = vector.broadcast %cst_9 : f32 to vector<128x128xf32>
      %c0_10 = arith.constant 0 : index
      %c0_11 = arith.constant 0 : index
      %13 = vector.load %arg8[%c0_10, %c0_11] : memref<128x128xf32, #tpu.memory_space<vmem>>, vector<128x128xf32>
      tpu.vector_store %arg8[%c0_10, %c0_11], %12 {strides = array<i32>} : memref<128x128xf32, #tpu.memory_space<vmem>>, vector<128x128xf32>,
    } else {
    }
    %c0 = arith.constant 0 : index
    %c0_1 = arith.constant 0 : index
    %3 = vector.load %arg8[%c0, %c0_1] : memref<128x128xf32, #tpu.memory_space<vmem>>, vector<128x128xf32>
    %c0_2 = arith.constant 0 : index
    %c0_3 = arith.constant 0 : index
    %4 = vector.load %arg3[%c0_2, %c0_3] : memref<128x384xbf16, #tpu.memory_space<vmem>>, vector<128x384xbf16>
    %c0_4 = arith.constant 0 : index
    %c0_5 = arith.constant 0 : index
    %5 = vector.load %arg4[%c0_4, %c0_5] : memref<384x128xbf16, #tpu.memory_space<vmem>>, vector<384x128xbf16>
    %cst = arith.constant dense<0.000000e+00> : vector<128x128xf32>
    %6 = tpu.matmul %4, %5, %cst {dimension_numbers = #tpu.dot_dimension_numbers<[1], [0], [0], [1], [0, 0, 1, 1], [], []>} : vector<128x384xbf16>, vector<384x128xbf16>, vector<128x128xf32> -> vector<128x128xf32>
    %7 = arith.addf %3, %6 : vector<128x128xf32>
    %c0_6 = arith.constant 0 : index
    %c0_7 = arith.constant 0 : index
    %8 = vector.load %arg8[%c0_6, %c0_7] : memref<128x128xf32, #tpu.memory_space<vmem>>, vector<128x128xf32>
    tpu.vector_store %arg8[%c0_6, %c0_7], %7 {strides = array<i32>} : memref<128x128xf32, #tpu.memory_space<vmem>>, vector<128x128xf32>,
    %c2_i32 = arith.constant 2 : i32
    %9 = arith.cmpi eq, %arg2, %c2_i32 : i32
    %10 = arith.extui %9 : i1 to i32
    %c0_i32_8 = arith.constant 0 : i32
    %11 = arith.cmpi ne, %10, %c0_i32_8 : i32
    scf.if %11 {
      %c0_9 = arith.constant 0 : index
      %c0_10 = arith.constant 0 : index
      %12 = vector.load %arg8[%c0_9, %c0_10] : memref<128x128xf32, #tpu.memory_space<vmem>>, vector<128x128xf32>
      %c0_11 = arith.constant 0 : index
      %c0_12 = arith.constant 0 : index
      %13 = vector.load %arg5[%c0_11, %c0_12] : memref<128x128xf32, #tpu.memory_space<vmem>>, vector<128x128xf32>
      tpu.vector_store %arg5[%c0_11, %c0_12], %12 {strides = array<i32>} : memref<128x128xf32, #tpu.memory_space<vmem>>, vector<128x128xf32>,
      %cst_13 = arith.constant dense<0.000000e+00> : vector<128xf32>
      %14 = vector.multi_reduction <add>, %12, %cst_13 [0] : vector<128x128xf32> to vector<128xf32>
      %15 = vector.shape_cast %14 : vector<128xf32> to vector<1x128xf32>
      %16 = vector.shape_cast %15 : vector<1x128xf32> to vector<1x1x128xf32>
      %c0_14 = arith.constant 0 : index
      %c0_15 = arith.constant 0 : index
      %c0_16 = arith.constant 0 : index
      %17 = vector.load %arg6[%c0_14, %c0_15, %c0_16] : memref<1x1x128xf32, #tpu.memory_space<vmem>>, vector<1x1x128xf32>
      tpu.vector_store %arg6[%c0_14, %c0_15, %c0_16], %16 {strides = array<i32>} : memref<1x1x128xf32, #tpu.memory_space<vmem>>, vector<1x1x128xf32>,
      %18 = arith.mulf %12, %12 : vector<128x128xf32>
      %cst_17 = arith.constant dense<0.000000e+00> : vector<128xf32>
      %19 = vector.multi_reduction <add>, %18, %cst_17 [0] : vector<128x128xf32> to vector<128xf32>
      %20 = vector.shape_cast %19 : vector<128xf32> to vector<1x128xf32>
      %21 = vector.shape_cast %20 : vector<1x128xf32> to vector<1x1x128xf32>
      %c0_18 = arith.constant 0 : index
      %c0_19 = arith.constant 0 : index
      %c0_20 = arith.constant 0 : index
      %22 = vector.load %arg7[%c0_18, %c0_19, %c0_20] : memref<1x1x128xf32, #tpu.memory_space<vmem>>, vector<1x1x128xf32>
      tpu.vector_store %arg7[%c0_18, %c0_19, %c0_20], %21 {strides = array<i32>} : memref<1x1x128xf32, #tpu.memory_space<vmem>>, vector<1x1x128xf32>,
    } else {
    }
    return
  }
  func.func @transform_0(%arg0: i32, %arg1: i32, %arg2: i32) -> (i32, i32) {
    %c0_i32 = arith.constant 0 : i32
    return %arg0, %arg2 : i32, i32
  }
  func.func @transform_1(%arg0: i32, %arg1: i32, %arg2: i32) -> (i32, i32) {
    %c0_i32 = arith.constant 0 : i32
    return %arg2, %arg1 : i32, i32
  }
  func.func @transform_2(%arg0: i32, %arg1: i32, %arg2: i32) -> (i32, i32) {
    %c0_i32 = arith.constant 0 : i32
    return %arg0, %arg1 : i32, i32
  }
  func.func @transform_3(%arg0: i32, %arg1: i32, %arg2: i32) -> (i32, i32, i32) {
    %c0_i32 = arith.constant 0 : i32
    %c0_i32_0 = arith.constant 0 : i32
    return %arg0, %c0_i32, %arg1 : i32, i32, i32
  }
  func.func @transform_4(%arg0: i32, %arg1: i32, %arg2: i32) -> (i32, i32, i32) {
    %c0_i32 = arith.constant 0 : i32
    %c0_i32_0 = arith.constant 0 : i32
    return %arg0, %c0_i32, %arg1 : i32, i32, i32
  }
}

module attributes {stable_mosaic.version = 11 : i64} {
  func.func @_bn_act_kernel(%arg0: i32, %arg1: memref<128x128xf32, #tpu.memory_space<vmem>>, %arg2: memref<1x128xf32, #tpu.memory_space<vmem>>, %arg3: memref<1x128xf32, #tpu.memory_space<vmem>>, %arg4: memref<128x128xf32, #tpu.memory_space<vmem>>) attributes {dimension_semantics = [#tpu.dimension_semantics<parallel>], iteration_bounds = array<i64: 1>, scalar_prefetch = 0 : i64, scratch_operands = 0 : i64, tpu.core_type = #tpu.core_type<tc>, window_params = [{transform_indices = @transform_0, window_bounds = array<i64: 128, 128>}, {pipeline_mode = #tpu.pipeline_mode<synchronous>, transform_indices = @transform_1, window_bounds = array<i64: 1, 128>}, {pipeline_mode = #tpu.pipeline_mode<synchronous>, transform_indices = @transform_2, window_bounds = array<i64: 1, 128>}, {transform_indices = @transform_3, window_bounds = array<i64: 128, 128>}]} {
    %c0 = arith.constant 0 : index
    %c0_0 = arith.constant 0 : index
    %0 = vector.load %arg1[%c0, %c0_0] : memref<128x128xf32, #tpu.memory_space<vmem>>, vector<128x128xf32>
    %c0_1 = arith.constant 0 : index
    %c0_2 = arith.constant 0 : index
    %1 = vector.load %arg2[%c0_1, %c0_2] : memref<1x128xf32, #tpu.memory_space<vmem>>, vector<1x128xf32>
    %2 = vector.broadcast %1 : vector<1x128xf32> to vector<128x128xf32>
    %3 = arith.mulf %0, %2 : vector<128x128xf32>
    %c0_3 = arith.constant 0 : index
    %c0_4 = arith.constant 0 : index
    %4 = vector.load %arg3[%c0_3, %c0_4] : memref<1x128xf32, #tpu.memory_space<vmem>>, vector<1x128xf32>
    %5 = vector.broadcast %4 : vector<1x128xf32> to vector<128x128xf32>
    %6 = arith.addf %3, %5 : vector<128x128xf32>
    %cst = arith.constant 0.000000e+00 : f32
    %7 = vector.broadcast %cst : f32 to vector<128x128xf32>
    %8 = arith.maximumf %6, %7 : vector<128x128xf32>
    %c0_5 = arith.constant 0 : index
    %c0_6 = arith.constant 0 : index
    %9 = vector.load %arg4[%c0_5, %c0_6] : memref<128x128xf32, #tpu.memory_space<vmem>>, vector<128x128xf32>
    tpu.vector_store %arg4[%c0_5, %c0_6], %8 {strides = array<i32>} : memref<128x128xf32, #tpu.memory_space<vmem>>, vector<128x128xf32>,
    return
  }
  func.func @transform_0(%arg0: i32) -> (i32, i32) {
    %c0_i32 = arith.constant 0 : i32
    %c0_i32_0 = arith.constant 0 : i32
    return %arg0, %c0_i32 : i32, i32
  }
  func.func @transform_1(%arg0: i32) -> (i32, i32) {
    %c0_i32 = arith.constant 0 : i32
    %c0_i32_0 = arith.constant 0 : i32
    %c0_i32_1 = arith.constant 0 : i32
    return %c0_i32, %c0_i32_0 : i32, i32
  }
  func.func @transform_2(%arg0: i32) -> (i32, i32) {
    %c0_i32 = arith.constant 0 : i32
    %c0_i32_0 = arith.constant 0 : i32
    %c0_i32_1 = arith.constant 0 : i32
    return %c0_i32, %c0_i32_0 : i32, i32
  }
  func.func @transform_3(%arg0: i32) -> (i32, i32) {
    %c0_i32 = arith.constant 0 : i32
    %c0_i32_0 = arith.constant 0 : i32
    return %arg0, %c0_i32 : i32, i32
  }
}

module attributes {stable_mosaic.version = 11 : i64} {
  func.func @_bn_act_res_kernel(%arg0: i32, %arg1: memref<128x128xf32, #tpu.memory_space<vmem>>, %arg2: memref<1x128xf32, #tpu.memory_space<vmem>>, %arg3: memref<1x128xf32, #tpu.memory_space<vmem>>, %arg4: memref<128x128xf32, #tpu.memory_space<vmem>>, %arg5: memref<128x128xf32, #tpu.memory_space<vmem>>) attributes {dimension_semantics = [#tpu.dimension_semantics<parallel>], iteration_bounds = array<i64: 1>, scalar_prefetch = 0 : i64, scratch_operands = 0 : i64, tpu.core_type = #tpu.core_type<tc>, window_params = [{transform_indices = @transform_0, window_bounds = array<i64: 128, 128>}, {pipeline_mode = #tpu.pipeline_mode<synchronous>, transform_indices = @transform_1, window_bounds = array<i64: 1, 128>}, {pipeline_mode = #tpu.pipeline_mode<synchronous>, transform_indices = @transform_2, window_bounds = array<i64: 1, 128>}, {transform_indices = @transform_3, window_bounds = array<i64: 128, 128>}, {transform_indices = @transform_4, window_bounds = array<i64: 128, 128>}]} {
    %c0 = arith.constant 0 : index
    %c0_0 = arith.constant 0 : index
    %0 = vector.load %arg1[%c0, %c0_0] : memref<128x128xf32, #tpu.memory_space<vmem>>, vector<128x128xf32>
    %c0_1 = arith.constant 0 : index
    %c0_2 = arith.constant 0 : index
    %1 = vector.load %arg2[%c0_1, %c0_2] : memref<1x128xf32, #tpu.memory_space<vmem>>, vector<1x128xf32>
    %2 = vector.broadcast %1 : vector<1x128xf32> to vector<128x128xf32>
    %3 = arith.mulf %0, %2 : vector<128x128xf32>
    %c0_3 = arith.constant 0 : index
    %c0_4 = arith.constant 0 : index
    %4 = vector.load %arg3[%c0_3, %c0_4] : memref<1x128xf32, #tpu.memory_space<vmem>>, vector<1x128xf32>
    %5 = vector.broadcast %4 : vector<1x128xf32> to vector<128x128xf32>
    %6 = arith.addf %3, %5 : vector<128x128xf32>
    %c0_5 = arith.constant 0 : index
    %c0_6 = arith.constant 0 : index
    %7 = vector.load %arg4[%c0_5, %c0_6] : memref<128x128xf32, #tpu.memory_space<vmem>>, vector<128x128xf32>
    %8 = arith.addf %6, %7 : vector<128x128xf32>
    %cst = arith.constant 0.000000e+00 : f32
    %9 = vector.broadcast %cst : f32 to vector<128x128xf32>
    %10 = arith.maximumf %8, %9 : vector<128x128xf32>
    %c0_7 = arith.constant 0 : index
    %c0_8 = arith.constant 0 : index
    %11 = vector.load %arg5[%c0_7, %c0_8] : memref<128x128xf32, #tpu.memory_space<vmem>>, vector<128x128xf32>
    tpu.vector_store %arg5[%c0_7, %c0_8], %10 {strides = array<i32>} : memref<128x128xf32, #tpu.memory_space<vmem>>, vector<128x128xf32>,
    return
  }
  func.func @transform_0(%arg0: i32) -> (i32, i32) {
    %c0_i32 = arith.constant 0 : i32
    %c0_i32_0 = arith.constant 0 : i32
    return %arg0, %c0_i32 : i32, i32
  }
  func.func @transform_1(%arg0: i32) -> (i32, i32) {
    %c0_i32 = arith.constant 0 : i32
    %c0_i32_0 = arith.constant 0 : i32
    %c0_i32_1 = arith.constant 0 : i32
    return %c0_i32, %c0_i32_0 : i32, i32
  }
  func.func @transform_2(%arg0: i32) -> (i32, i32) {
    %c0_i32 = arith.constant 0 : i32
    %c0_i32_0 = arith.constant 0 : i32
    %c0_i32_1 = arith.constant 0 : i32
    return %c0_i32, %c0_i32_0 : i32, i32
  }
  func.func @transform_3(%arg0: i32) -> (i32, i32) {
    %c0_i32 = arith.constant 0 : i32
    %c0_i32_0 = arith.constant 0 : i32
    return %arg0, %c0_i32 : i32, i32
  }
  func.func @transform_4(%arg0: i32) -> (i32, i32) {
    %c0_i32 = arith.constant 0 : i32
    %c0_i32_0 = arith.constant 0 : i32
    return %arg0, %c0_i32 : i32, i32
  }
}

module attributes {stable_mosaic.version = 11 : i64} {
  func.func @_conv_bnstats_kernel(%arg0: i32, %arg1: i32, %arg2: i32, %arg3: memref<32x128xbf16, #tpu.memory_space<vmem>>, %arg4: memref<128x128xbf16, #tpu.memory_space<vmem>>, %arg5: memref<32x128xf32, #tpu.memory_space<vmem>>, %arg6: memref<1x1x128xf32, #tpu.memory_space<vmem>>, %arg7: memref<1x1x128xf32, #tpu.memory_space<vmem>>, %arg8: memref<32x128xf32, #tpu.memory_space<vmem>>) attributes {dimension_semantics = [#tpu.dimension_semantics<parallel>, #tpu.dimension_semantics<parallel>, #tpu.dimension_semantics<arbitrary>], iteration_bounds = array<i64: 1, 1, 1>, scalar_prefetch = 0 : i64, scratch_operands = 1 : i64, tpu.core_type = #tpu.core_type<tc>, window_params = [{transform_indices = @transform_0, window_bounds = array<i64: 32, 128>}, {transform_indices = @transform_1, window_bounds = array<i64: 128, 128>}, {transform_indices = @transform_2, window_bounds = array<i64: 32, 128>}, {transform_indices = @transform_3, window_bounds = array<i64: 1, 1, 128>}, {transform_indices = @transform_4, window_bounds = array<i64: 1, 1, 128>}]} {
    %c0_i32 = arith.constant 0 : i32
    %0 = arith.cmpi eq, %arg2, %c0_i32 : i32
    %1 = arith.extui %0 : i1 to i32
    %c0_i32_0 = arith.constant 0 : i32
    %2 = arith.cmpi ne, %1, %c0_i32_0 : i32
    scf.if %2 {
      %cst_10 = arith.constant 0.000000e+00 : f32
      %12 = vector.broadcast %cst_10 : f32 to vector<32x128xf32>
      %c0_11 = arith.constant 0 : index
      %c0_12 = arith.constant 0 : index
      %13 = vector.load %arg8[%c0_11, %c0_12] : memref<32x128xf32, #tpu.memory_space<vmem>>, vector<32x128xf32>
      tpu.vector_store %arg8[%c0_11, %c0_12], %12 {strides = array<i32>} : memref<32x128xf32, #tpu.memory_space<vmem>>, vector<32x128xf32>,
    } else {
    }
    %c0 = arith.constant 0 : index
    %c0_1 = arith.constant 0 : index
    %3 = vector.load %arg8[%c0, %c0_1] : memref<32x128xf32, #tpu.memory_space<vmem>>, vector<32x128xf32>
    %c0_2 = arith.constant 0 : index
    %c0_3 = arith.constant 0 : index
    %4 = vector.load %arg3[%c0_2, %c0_3] : memref<32x128xbf16, #tpu.memory_space<vmem>>, vector<32x128xbf16>
    %c0_4 = arith.constant 0 : index
    %c0_5 = arith.constant 0 : index
    %5 = vector.load %arg4[%c0_4, %c0_5] : memref<128x128xbf16, #tpu.memory_space<vmem>>, vector<128x128xbf16>
    %cst = arith.constant dense<0.000000e+00> : vector<32x128xf32>
    %6 = tpu.matmul %4, %5, %cst {dimension_numbers = #tpu.dot_dimension_numbers<[1], [0], [0], [1], [0, 0, 1, 1], [], []>} : vector<32x128xbf16>, vector<128x128xbf16>, vector<32x128xf32> -> vector<32x128xf32>
    %7 = arith.addf %3, %6 : vector<32x128xf32>
    %c0_6 = arith.constant 0 : index
    %c0_7 = arith.constant 0 : index
    %8 = vector.load %arg8[%c0_6, %c0_7] : memref<32x128xf32, #tpu.memory_space<vmem>>, vector<32x128xf32>
    tpu.vector_store %arg8[%c0_6, %c0_7], %7 {strides = array<i32>} : memref<32x128xf32, #tpu.memory_space<vmem>>, vector<32x128xf32>,
    %c0_i32_8 = arith.constant 0 : i32
    %9 = arith.cmpi eq, %arg2, %c0_i32_8 : i32
    %10 = arith.extui %9 : i1 to i32
    %c0_i32_9 = arith.constant 0 : i32
    %11 = arith.cmpi ne, %10, %c0_i32_9 : i32
    scf.if %11 {
      %c0_10 = arith.constant 0 : index
      %c0_11 = arith.constant 0 : index
      %12 = vector.load %arg8[%c0_10, %c0_11] : memref<32x128xf32, #tpu.memory_space<vmem>>, vector<32x128xf32>
      %c0_12 = arith.constant 0 : index
      %c0_13 = arith.constant 0 : index
      %13 = vector.load %arg5[%c0_12, %c0_13] : memref<32x128xf32, #tpu.memory_space<vmem>>, vector<32x128xf32>
      tpu.vector_store %arg5[%c0_12, %c0_13], %12 {strides = array<i32>} : memref<32x128xf32, #tpu.memory_space<vmem>>, vector<32x128xf32>,
      %cst_14 = arith.constant dense<0.000000e+00> : vector<128xf32>
      %14 = vector.multi_reduction <add>, %12, %cst_14 [0] : vector<32x128xf32> to vector<128xf32>
      %15 = vector.shape_cast %14 : vector<128xf32> to vector<1x128xf32>
      %16 = vector.shape_cast %15 : vector<1x128xf32> to vector<1x1x128xf32>
      %c0_15 = arith.constant 0 : index
      %c0_16 = arith.constant 0 : index
      %c0_17 = arith.constant 0 : index
      %17 = vector.load %arg6[%c0_15, %c0_16, %c0_17] : memref<1x1x128xf32, #tpu.memory_space<vmem>>, vector<1x1x128xf32>
      tpu.vector_store %arg6[%c0_15, %c0_16, %c0_17], %16 {strides = array<i32>} : memref<1x1x128xf32, #tpu.memory_space<vmem>>, vector<1x1x128xf32>,
      %18 = arith.mulf %12, %12 : vector<32x128xf32>
      %cst_18 = arith.constant dense<0.000000e+00> : vector<128xf32>
      %19 = vector.multi_reduction <add>, %18, %cst_18 [0] : vector<32x128xf32> to vector<128xf32>
      %20 = vector.shape_cast %19 : vector<128xf32> to vector<1x128xf32>
      %21 = vector.shape_cast %20 : vector<1x128xf32> to vector<1x1x128xf32>
      %c0_19 = arith.constant 0 : index
      %c0_20 = arith.constant 0 : index
      %c0_21 = arith.constant 0 : index
      %22 = vector.load %arg7[%c0_19, %c0_20, %c0_21] : memref<1x1x128xf32, #tpu.memory_space<vmem>>, vector<1x1x128xf32>
      tpu.vector_store %arg7[%c0_19, %c0_20, %c0_21], %21 {strides = array<i32>} : memref<1x1x128xf32, #tpu.memory_space<vmem>>, vector<1x1x128xf32>,
    } else {
    }
    return
  }
  func.func @transform_0(%arg0: i32, %arg1: i32, %arg2: i32) -> (i32, i32) {
    %c0_i32 = arith.constant 0 : i32
    return %arg0, %arg2 : i32, i32
  }
  func.func @transform_1(%arg0: i32, %arg1: i32, %arg2: i32) -> (i32, i32) {
    %c0_i32 = arith.constant 0 : i32
    return %arg2, %arg1 : i32, i32
  }
  func.func @transform_2(%arg0: i32, %arg1: i32, %arg2: i32) -> (i32, i32) {
    %c0_i32 = arith.constant 0 : i32
    return %arg0, %arg1 : i32, i32
  }
  func.func @transform_3(%arg0: i32, %arg1: i32, %arg2: i32) -> (i32, i32, i32) {
    %c0_i32 = arith.constant 0 : i32
    %c0_i32_0 = arith.constant 0 : i32
    return %arg0, %c0_i32, %arg1 : i32, i32, i32
  }
  func.func @transform_4(%arg0: i32, %arg1: i32, %arg2: i32) -> (i32, i32, i32) {
    %c0_i32 = arith.constant 0 : i32
    %c0_i32_0 = arith.constant 0 : i32
    return %arg0, %c0_i32, %arg1 : i32, i32, i32
  }
}

module attributes {stable_mosaic.version = 11 : i64} {
  func.func @_bn_act_kernel(%arg0: i32, %arg1: memref<32x128xf32, #tpu.memory_space<vmem>>, %arg2: memref<1x128xf32, #tpu.memory_space<vmem>>, %arg3: memref<1x128xf32, #tpu.memory_space<vmem>>, %arg4: memref<32x128xf32, #tpu.memory_space<vmem>>) attributes {dimension_semantics = [#tpu.dimension_semantics<parallel>], iteration_bounds = array<i64: 1>, scalar_prefetch = 0 : i64, scratch_operands = 0 : i64, tpu.core_type = #tpu.core_type<tc>, window_params = [{transform_indices = @transform_0, window_bounds = array<i64: 32, 128>}, {pipeline_mode = #tpu.pipeline_mode<synchronous>, transform_indices = @transform_1, window_bounds = array<i64: 1, 128>}, {pipeline_mode = #tpu.pipeline_mode<synchronous>, transform_indices = @transform_2, window_bounds = array<i64: 1, 128>}, {transform_indices = @transform_3, window_bounds = array<i64: 32, 128>}]} {
    %c0 = arith.constant 0 : index
    %c0_0 = arith.constant 0 : index
    %0 = vector.load %arg1[%c0, %c0_0] : memref<32x128xf32, #tpu.memory_space<vmem>>, vector<32x128xf32>
    %c0_1 = arith.constant 0 : index
    %c0_2 = arith.constant 0 : index
    %1 = vector.load %arg2[%c0_1, %c0_2] : memref<1x128xf32, #tpu.memory_space<vmem>>, vector<1x128xf32>
    %2 = vector.broadcast %1 : vector<1x128xf32> to vector<32x128xf32>
    %3 = arith.mulf %0, %2 : vector<32x128xf32>
    %c0_3 = arith.constant 0 : index
    %c0_4 = arith.constant 0 : index
    %4 = vector.load %arg3[%c0_3, %c0_4] : memref<1x128xf32, #tpu.memory_space<vmem>>, vector<1x128xf32>
    %5 = vector.broadcast %4 : vector<1x128xf32> to vector<32x128xf32>
    %6 = arith.addf %3, %5 : vector<32x128xf32>
    %c0_5 = arith.constant 0 : index
    %c0_6 = arith.constant 0 : index
    %7 = vector.load %arg4[%c0_5, %c0_6] : memref<32x128xf32, #tpu.memory_space<vmem>>, vector<32x128xf32>
    tpu.vector_store %arg4[%c0_5, %c0_6], %6 {strides = array<i32>} : memref<32x128xf32, #tpu.memory_space<vmem>>, vector<32x128xf32>,
    return
  }
  func.func @transform_0(%arg0: i32) -> (i32, i32) {
    %c0_i32 = arith.constant 0 : i32
    %c0_i32_0 = arith.constant 0 : i32
    return %arg0, %c0_i32 : i32, i32
  }
  func.func @transform_1(%arg0: i32) -> (i32, i32) {
    %c0_i32 = arith.constant 0 : i32
    %c0_i32_0 = arith.constant 0 : i32
    %c0_i32_1 = arith.constant 0 : i32
    return %c0_i32, %c0_i32_0 : i32, i32
  }
  func.func @transform_2(%arg0: i32) -> (i32, i32) {
    %c0_i32 = arith.constant 0 : i32
    %c0_i32_0 = arith.constant 0 : i32
    %c0_i32_1 = arith.constant 0 : i32
    return %c0_i32, %c0_i32_0 : i32, i32
  }
  func.func @transform_3(%arg0: i32) -> (i32, i32) {
    %c0_i32 = arith.constant 0 : i32
    %c0_i32_0 = arith.constant 0 : i32
    return %arg0, %c0_i32 : i32, i32
  }
}

module attributes {stable_mosaic.version = 11 : i64} {
  func.func @_conv_bnstats_kernel(%arg0: i32, %arg1: i32, %arg2: i32, %arg3: memref<32x384xbf16, #tpu.memory_space<vmem>>, %arg4: memref<384x128xbf16, #tpu.memory_space<vmem>>, %arg5: memref<32x128xf32, #tpu.memory_space<vmem>>, %arg6: memref<1x1x128xf32, #tpu.memory_space<vmem>>, %arg7: memref<1x1x128xf32, #tpu.memory_space<vmem>>, %arg8: memref<32x128xf32, #tpu.memory_space<vmem>>) attributes {dimension_semantics = [#tpu.dimension_semantics<parallel>, #tpu.dimension_semantics<parallel>, #tpu.dimension_semantics<arbitrary>], iteration_bounds = array<i64: 1, 1, 3>, scalar_prefetch = 0 : i64, scratch_operands = 1 : i64, tpu.core_type = #tpu.core_type<tc>, window_params = [{transform_indices = @transform_0, window_bounds = array<i64: 32, 384>}, {transform_indices = @transform_1, window_bounds = array<i64: 384, 128>}, {transform_indices = @transform_2, window_bounds = array<i64: 32, 128>}, {transform_indices = @transform_3, window_bounds = array<i64: 1, 1, 128>}, {transform_indices = @transform_4, window_bounds = array<i64: 1, 1, 128>}]} {
    %c0_i32 = arith.constant 0 : i32
    %0 = arith.cmpi eq, %arg2, %c0_i32 : i32
    %1 = arith.extui %0 : i1 to i32
    %c0_i32_0 = arith.constant 0 : i32
    %2 = arith.cmpi ne, %1, %c0_i32_0 : i32
    scf.if %2 {
      %cst_9 = arith.constant 0.000000e+00 : f32
      %12 = vector.broadcast %cst_9 : f32 to vector<32x128xf32>
      %c0_10 = arith.constant 0 : index
      %c0_11 = arith.constant 0 : index
      %13 = vector.load %arg8[%c0_10, %c0_11] : memref<32x128xf32, #tpu.memory_space<vmem>>, vector<32x128xf32>
      tpu.vector_store %arg8[%c0_10, %c0_11], %12 {strides = array<i32>} : memref<32x128xf32, #tpu.memory_space<vmem>>, vector<32x128xf32>,
    } else {
    }
    %c0 = arith.constant 0 : index
    %c0_1 = arith.constant 0 : index
    %3 = vector.load %arg8[%c0, %c0_1] : memref<32x128xf32, #tpu.memory_space<vmem>>, vector<32x128xf32>
    %c0_2 = arith.constant 0 : index
    %c0_3 = arith.constant 0 : index
    %4 = vector.load %arg3[%c0_2, %c0_3] : memref<32x384xbf16, #tpu.memory_space<vmem>>, vector<32x384xbf16>
    %c0_4 = arith.constant 0 : index
    %c0_5 = arith.constant 0 : index
    %5 = vector.load %arg4[%c0_4, %c0_5] : memref<384x128xbf16, #tpu.memory_space<vmem>>, vector<384x128xbf16>
    %cst = arith.constant dense<0.000000e+00> : vector<32x128xf32>
    %6 = tpu.matmul %4, %5, %cst {dimension_numbers = #tpu.dot_dimension_numbers<[1], [0], [0], [1], [0, 0, 1, 1], [], []>} : vector<32x384xbf16>, vector<384x128xbf16>, vector<32x128xf32> -> vector<32x128xf32>
    %7 = arith.addf %3, %6 : vector<32x128xf32>
    %c0_6 = arith.constant 0 : index
    %c0_7 = arith.constant 0 : index
    %8 = vector.load %arg8[%c0_6, %c0_7] : memref<32x128xf32, #tpu.memory_space<vmem>>, vector<32x128xf32>
    tpu.vector_store %arg8[%c0_6, %c0_7], %7 {strides = array<i32>} : memref<32x128xf32, #tpu.memory_space<vmem>>, vector<32x128xf32>,
    %c2_i32 = arith.constant 2 : i32
    %9 = arith.cmpi eq, %arg2, %c2_i32 : i32
    %10 = arith.extui %9 : i1 to i32
    %c0_i32_8 = arith.constant 0 : i32
    %11 = arith.cmpi ne, %10, %c0_i32_8 : i32
    scf.if %11 {
      %c0_9 = arith.constant 0 : index
      %c0_10 = arith.constant 0 : index
      %12 = vector.load %arg8[%c0_9, %c0_10] : memref<32x128xf32, #tpu.memory_space<vmem>>, vector<32x128xf32>
      %c0_11 = arith.constant 0 : index
      %c0_12 = arith.constant 0 : index
      %13 = vector.load %arg5[%c0_11, %c0_12] : memref<32x128xf32, #tpu.memory_space<vmem>>, vector<32x128xf32>
      tpu.vector_store %arg5[%c0_11, %c0_12], %12 {strides = array<i32>} : memref<32x128xf32, #tpu.memory_space<vmem>>, vector<32x128xf32>,
      %cst_13 = arith.constant dense<0.000000e+00> : vector<128xf32>
      %14 = vector.multi_reduction <add>, %12, %cst_13 [0] : vector<32x128xf32> to vector<128xf32>
      %15 = vector.shape_cast %14 : vector<128xf32> to vector<1x128xf32>
      %16 = vector.shape_cast %15 : vector<1x128xf32> to vector<1x1x128xf32>
      %c0_14 = arith.constant 0 : index
      %c0_15 = arith.constant 0 : index
      %c0_16 = arith.constant 0 : index
      %17 = vector.load %arg6[%c0_14, %c0_15, %c0_16] : memref<1x1x128xf32, #tpu.memory_space<vmem>>, vector<1x1x128xf32>
      tpu.vector_store %arg6[%c0_14, %c0_15, %c0_16], %16 {strides = array<i32>} : memref<1x1x128xf32, #tpu.memory_space<vmem>>, vector<1x1x128xf32>,
      %18 = arith.mulf %12, %12 : vector<32x128xf32>
      %cst_17 = arith.constant dense<0.000000e+00> : vector<128xf32>
      %19 = vector.multi_reduction <add>, %18, %cst_17 [0] : vector<32x128xf32> to vector<128xf32>
      %20 = vector.shape_cast %19 : vector<128xf32> to vector<1x128xf32>
      %21 = vector.shape_cast %20 : vector<1x128xf32> to vector<1x1x128xf32>
      %c0_18 = arith.constant 0 : index
      %c0_19 = arith.constant 0 : index
      %c0_20 = arith.constant 0 : index
      %22 = vector.load %arg7[%c0_18, %c0_19, %c0_20] : memref<1x1x128xf32, #tpu.memory_space<vmem>>, vector<1x1x128xf32>
      tpu.vector_store %arg7[%c0_18, %c0_19, %c0_20], %21 {strides = array<i32>} : memref<1x1x128xf32, #tpu.memory_space<vmem>>, vector<1x1x128xf32>,
    } else {
    }
    return
  }
  func.func @transform_0(%arg0: i32, %arg1: i32, %arg2: i32) -> (i32, i32) {
    %c0_i32 = arith.constant 0 : i32
    return %arg0, %arg2 : i32, i32
  }
  func.func @transform_1(%arg0: i32, %arg1: i32, %arg2: i32) -> (i32, i32) {
    %c0_i32 = arith.constant 0 : i32
    return %arg2, %arg1 : i32, i32
  }
  func.func @transform_2(%arg0: i32, %arg1: i32, %arg2: i32) -> (i32, i32) {
    %c0_i32 = arith.constant 0 : i32
    return %arg0, %arg1 : i32, i32
  }
  func.func @transform_3(%arg0: i32, %arg1: i32, %arg2: i32) -> (i32, i32, i32) {
    %c0_i32 = arith.constant 0 : i32
    %c0_i32_0 = arith.constant 0 : i32
    return %arg0, %c0_i32, %arg1 : i32, i32, i32
  }
  func.func @transform_4(%arg0: i32, %arg1: i32, %arg2: i32) -> (i32, i32, i32) {
    %c0_i32 = arith.constant 0 : i32
    %c0_i32_0 = arith.constant 0 : i32
    return %arg0, %c0_i32, %arg1 : i32, i32, i32
  }
}

module attributes {stable_mosaic.version = 11 : i64} {
  func.func @_bn_act_kernel(%arg0: i32, %arg1: memref<32x128xf32, #tpu.memory_space<vmem>>, %arg2: memref<1x128xf32, #tpu.memory_space<vmem>>, %arg3: memref<1x128xf32, #tpu.memory_space<vmem>>, %arg4: memref<32x128xf32, #tpu.memory_space<vmem>>) attributes {dimension_semantics = [#tpu.dimension_semantics<parallel>], iteration_bounds = array<i64: 1>, scalar_prefetch = 0 : i64, scratch_operands = 0 : i64, tpu.core_type = #tpu.core_type<tc>, window_params = [{transform_indices = @transform_0, window_bounds = array<i64: 32, 128>}, {pipeline_mode = #tpu.pipeline_mode<synchronous>, transform_indices = @transform_1, window_bounds = array<i64: 1, 128>}, {pipeline_mode = #tpu.pipeline_mode<synchronous>, transform_indices = @transform_2, window_bounds = array<i64: 1, 128>}, {transform_indices = @transform_3, window_bounds = array<i64: 32, 128>}]} {
    %c0 = arith.constant 0 : index
    %c0_0 = arith.constant 0 : index
    %0 = vector.load %arg1[%c0, %c0_0] : memref<32x128xf32, #tpu.memory_space<vmem>>, vector<32x128xf32>
    %c0_1 = arith.constant 0 : index
    %c0_2 = arith.constant 0 : index
    %1 = vector.load %arg2[%c0_1, %c0_2] : memref<1x128xf32, #tpu.memory_space<vmem>>, vector<1x128xf32>
    %2 = vector.broadcast %1 : vector<1x128xf32> to vector<32x128xf32>
    %3 = arith.mulf %0, %2 : vector<32x128xf32>
    %c0_3 = arith.constant 0 : index
    %c0_4 = arith.constant 0 : index
    %4 = vector.load %arg3[%c0_3, %c0_4] : memref<1x128xf32, #tpu.memory_space<vmem>>, vector<1x128xf32>
    %5 = vector.broadcast %4 : vector<1x128xf32> to vector<32x128xf32>
    %6 = arith.addf %3, %5 : vector<32x128xf32>
    %cst = arith.constant 0.000000e+00 : f32
    %7 = vector.broadcast %cst : f32 to vector<32x128xf32>
    %8 = arith.maximumf %6, %7 : vector<32x128xf32>
    %c0_5 = arith.constant 0 : index
    %c0_6 = arith.constant 0 : index
    %9 = vector.load %arg4[%c0_5, %c0_6] : memref<32x128xf32, #tpu.memory_space<vmem>>, vector<32x128xf32>
    tpu.vector_store %arg4[%c0_5, %c0_6], %8 {strides = array<i32>} : memref<32x128xf32, #tpu.memory_space<vmem>>, vector<32x128xf32>,
    return
  }
  func.func @transform_0(%arg0: i32) -> (i32, i32) {
    %c0_i32 = arith.constant 0 : i32
    %c0_i32_0 = arith.constant 0 : i32
    return %arg0, %c0_i32 : i32, i32
  }
  func.func @transform_1(%arg0: i32) -> (i32, i32) {
    %c0_i32 = arith.constant 0 : i32
    %c0_i32_0 = arith.constant 0 : i32
    %c0_i32_1 = arith.constant 0 : i32
    return %c0_i32, %c0_i32_0 : i32, i32
  }
  func.func @transform_2(%arg0: i32) -> (i32, i32) {
    %c0_i32 = arith.constant 0 : i32
    %c0_i32_0 = arith.constant 0 : i32
    %c0_i32_1 = arith.constant 0 : i32
    return %c0_i32, %c0_i32_0 : i32, i32
  }
  func.func @transform_3(%arg0: i32) -> (i32, i32) {
    %c0_i32 = arith.constant 0 : i32
    %c0_i32_0 = arith.constant 0 : i32
    return %arg0, %c0_i32 : i32, i32
  }
}

module attributes {stable_mosaic.version = 11 : i64} {
  func.func @_bn_act_res_kernel(%arg0: i32, %arg1: memref<32x128xf32, #tpu.memory_space<vmem>>, %arg2: memref<1x128xf32, #tpu.memory_space<vmem>>, %arg3: memref<1x128xf32, #tpu.memory_space<vmem>>, %arg4: memref<32x128xf32, #tpu.memory_space<vmem>>, %arg5: memref<32x128xf32, #tpu.memory_space<vmem>>) attributes {dimension_semantics = [#tpu.dimension_semantics<parallel>], iteration_bounds = array<i64: 1>, scalar_prefetch = 0 : i64, scratch_operands = 0 : i64, tpu.core_type = #tpu.core_type<tc>, window_params = [{transform_indices = @transform_0, window_bounds = array<i64: 32, 128>}, {pipeline_mode = #tpu.pipeline_mode<synchronous>, transform_indices = @transform_1, window_bounds = array<i64: 1, 128>}, {pipeline_mode = #tpu.pipeline_mode<synchronous>, transform_indices = @transform_2, window_bounds = array<i64: 1, 128>}, {transform_indices = @transform_3, window_bounds = array<i64: 32, 128>}, {transform_indices = @transform_4, window_bounds = array<i64: 32, 128>}]} {
    %c0 = arith.constant 0 : index
    %c0_0 = arith.constant 0 : index
    %0 = vector.load %arg1[%c0, %c0_0] : memref<32x128xf32, #tpu.memory_space<vmem>>, vector<32x128xf32>
    %c0_1 = arith.constant 0 : index
    %c0_2 = arith.constant 0 : index
    %1 = vector.load %arg2[%c0_1, %c0_2] : memref<1x128xf32, #tpu.memory_space<vmem>>, vector<1x128xf32>
    %2 = vector.broadcast %1 : vector<1x128xf32> to vector<32x128xf32>
    %3 = arith.mulf %0, %2 : vector<32x128xf32>
    %c0_3 = arith.constant 0 : index
    %c0_4 = arith.constant 0 : index
    %4 = vector.load %arg3[%c0_3, %c0_4] : memref<1x128xf32, #tpu.memory_space<vmem>>, vector<1x128xf32>
    %5 = vector.broadcast %4 : vector<1x128xf32> to vector<32x128xf32>
    %6 = arith.addf %3, %5 : vector<32x128xf32>
    %c0_5 = arith.constant 0 : index
    %c0_6 = arith.constant 0 : index
    %7 = vector.load %arg4[%c0_5, %c0_6] : memref<32x128xf32, #tpu.memory_space<vmem>>, vector<32x128xf32>
    %8 = arith.addf %6, %7 : vector<32x128xf32>
    %cst = arith.constant 0.000000e+00 : f32
    %9 = vector.broadcast %cst : f32 to vector<32x128xf32>
    %10 = arith.maximumf %8, %9 : vector<32x128xf32>
    %c0_7 = arith.constant 0 : index
    %c0_8 = arith.constant 0 : index
    %11 = vector.load %arg5[%c0_7, %c0_8] : memref<32x128xf32, #tpu.memory_space<vmem>>, vector<32x128xf32>
    tpu.vector_store %arg5[%c0_7, %c0_8], %10 {strides = array<i32>} : memref<32x128xf32, #tpu.memory_space<vmem>>, vector<32x128xf32>,
    return
  }
  func.func @transform_0(%arg0: i32) -> (i32, i32) {
    %c0_i32 = arith.constant 0 : i32
    %c0_i32_0 = arith.constant 0 : i32
    return %arg0, %c0_i32 : i32, i32
  }
  func.func @transform_1(%arg0: i32) -> (i32, i32) {
    %c0_i32 = arith.constant 0 : i32
    %c0_i32_0 = arith.constant 0 : i32
    %c0_i32_1 = arith.constant 0 : i32
    return %c0_i32, %c0_i32_0 : i32, i32
  }
  func.func @transform_2(%arg0: i32) -> (i32, i32) {
    %c0_i32 = arith.constant 0 : i32
    %c0_i32_0 = arith.constant 0 : i32
    %c0_i32_1 = arith.constant 0 : i32
    return %c0_i32, %c0_i32_0 : i32, i32
  }
  func.func @transform_3(%arg0: i32) -> (i32, i32) {
    %c0_i32 = arith.constant 0 : i32
    %c0_i32_0 = arith.constant 0 : i32
    return %arg0, %c0_i32 : i32, i32
  }
  func.func @transform_4(%arg0: i32) -> (i32, i32) {
    %c0_i32 = arith.constant 0 : i32
    %c0_i32_0 = arith.constant 0 : i32
    return %arg0, %c0_i32 : i32, i32
  }
}

module attributes {stable_mosaic.version = 11 : i64} {
  func.func @_conv_bnstats_kernel(%arg0: i32, %arg1: i32, %arg2: i32, %arg3: memref<8x128xbf16, #tpu.memory_space<vmem>>, %arg4: memref<128x128xbf16, #tpu.memory_space<vmem>>, %arg5: memref<8x128xf32, #tpu.memory_space<vmem>>, %arg6: memref<1x1x128xf32, #tpu.memory_space<vmem>>, %arg7: memref<1x1x128xf32, #tpu.memory_space<vmem>>, %arg8: memref<8x128xf32, #tpu.memory_space<vmem>>) attributes {dimension_semantics = [#tpu.dimension_semantics<parallel>, #tpu.dimension_semantics<parallel>, #tpu.dimension_semantics<arbitrary>], iteration_bounds = array<i64: 1, 1, 1>, scalar_prefetch = 0 : i64, scratch_operands = 1 : i64, tpu.core_type = #tpu.core_type<tc>, window_params = [{transform_indices = @transform_0, window_bounds = array<i64: 8, 128>}, {transform_indices = @transform_1, window_bounds = array<i64: 128, 128>}, {transform_indices = @transform_2, window_bounds = array<i64: 8, 128>}, {transform_indices = @transform_3, window_bounds = array<i64: 1, 1, 128>}, {transform_indices = @transform_4, window_bounds = array<i64: 1, 1, 128>}]} {
    %c0_i32 = arith.constant 0 : i32
    %0 = arith.cmpi eq, %arg2, %c0_i32 : i32
    %1 = arith.extui %0 : i1 to i32
    %c0_i32_0 = arith.constant 0 : i32
    %2 = arith.cmpi ne, %1, %c0_i32_0 : i32
    scf.if %2 {
      %cst_10 = arith.constant 0.000000e+00 : f32
      %12 = vector.broadcast %cst_10 : f32 to vector<8x128xf32>
      %c0_11 = arith.constant 0 : index
      %c0_12 = arith.constant 0 : index
      %13 = vector.load %arg8[%c0_11, %c0_12] : memref<8x128xf32, #tpu.memory_space<vmem>>, vector<8x128xf32>
      tpu.vector_store %arg8[%c0_11, %c0_12], %12 {strides = array<i32>} : memref<8x128xf32, #tpu.memory_space<vmem>>, vector<8x128xf32>,
    } else {
    }
    %c0 = arith.constant 0 : index
    %c0_1 = arith.constant 0 : index
    %3 = vector.load %arg8[%c0, %c0_1] : memref<8x128xf32, #tpu.memory_space<vmem>>, vector<8x128xf32>
    %c0_2 = arith.constant 0 : index
    %c0_3 = arith.constant 0 : index
    %4 = vector.load %arg3[%c0_2, %c0_3] : memref<8x128xbf16, #tpu.memory_space<vmem>>, vector<8x128xbf16>
    %c0_4 = arith.constant 0 : index
    %c0_5 = arith.constant 0 : index
    %5 = vector.load %arg4[%c0_4, %c0_5] : memref<128x128xbf16, #tpu.memory_space<vmem>>, vector<128x128xbf16>
    %cst = arith.constant dense<0.000000e+00> : vector<8x128xf32>
    %6 = tpu.matmul %4, %5, %cst {dimension_numbers = #tpu.dot_dimension_numbers<[1], [0], [0], [1], [0, 0, 1, 1], [], []>} : vector<8x128xbf16>, vector<128x128xbf16>, vector<8x128xf32> -> vector<8x128xf32>
    %7 = arith.addf %3, %6 : vector<8x128xf32>
    %c0_6 = arith.constant 0 : index
    %c0_7 = arith.constant 0 : index
    %8 = vector.load %arg8[%c0_6, %c0_7] : memref<8x128xf32, #tpu.memory_space<vmem>>, vector<8x128xf32>
    tpu.vector_store %arg8[%c0_6, %c0_7], %7 {strides = array<i32>} : memref<8x128xf32, #tpu.memory_space<vmem>>, vector<8x128xf32>,
    %c0_i32_8 = arith.constant 0 : i32
    %9 = arith.cmpi eq, %arg2, %c0_i32_8 : i32
    %10 = arith.extui %9 : i1 to i32
    %c0_i32_9 = arith.constant 0 : i32
    %11 = arith.cmpi ne, %10, %c0_i32_9 : i32
    scf.if %11 {
      %c0_10 = arith.constant 0 : index
      %c0_11 = arith.constant 0 : index
      %12 = vector.load %arg8[%c0_10, %c0_11] : memref<8x128xf32, #tpu.memory_space<vmem>>, vector<8x128xf32>
      %c0_12 = arith.constant 0 : index
      %c0_13 = arith.constant 0 : index
      %13 = vector.load %arg5[%c0_12, %c0_13] : memref<8x128xf32, #tpu.memory_space<vmem>>, vector<8x128xf32>
      tpu.vector_store %arg5[%c0_12, %c0_13], %12 {strides = array<i32>} : memref<8x128xf32, #tpu.memory_space<vmem>>, vector<8x128xf32>,
      %cst_14 = arith.constant dense<0.000000e+00> : vector<128xf32>
      %14 = vector.multi_reduction <add>, %12, %cst_14 [0] : vector<8x128xf32> to vector<128xf32>
      %15 = vector.shape_cast %14 : vector<128xf32> to vector<1x128xf32>
      %16 = vector.shape_cast %15 : vector<1x128xf32> to vector<1x1x128xf32>
      %c0_15 = arith.constant 0 : index
      %c0_16 = arith.constant 0 : index
      %c0_17 = arith.constant 0 : index
      %17 = vector.load %arg6[%c0_15, %c0_16, %c0_17] : memref<1x1x128xf32, #tpu.memory_space<vmem>>, vector<1x1x128xf32>
      tpu.vector_store %arg6[%c0_15, %c0_16, %c0_17], %16 {strides = array<i32>} : memref<1x1x128xf32, #tpu.memory_space<vmem>>, vector<1x1x128xf32>,
      %18 = arith.mulf %12, %12 : vector<8x128xf32>
      %cst_18 = arith.constant dense<0.000000e+00> : vector<128xf32>
      %19 = vector.multi_reduction <add>, %18, %cst_18 [0] : vector<8x128xf32> to vector<128xf32>
      %20 = vector.shape_cast %19 : vector<128xf32> to vector<1x128xf32>
      %21 = vector.shape_cast %20 : vector<1x128xf32> to vector<1x1x128xf32>
      %c0_19 = arith.constant 0 : index
      %c0_20 = arith.constant 0 : index
      %c0_21 = arith.constant 0 : index
      %22 = vector.load %arg7[%c0_19, %c0_20, %c0_21] : memref<1x1x128xf32, #tpu.memory_space<vmem>>, vector<1x1x128xf32>
      tpu.vector_store %arg7[%c0_19, %c0_20, %c0_21], %21 {strides = array<i32>} : memref<1x1x128xf32, #tpu.memory_space<vmem>>, vector<1x1x128xf32>,
    } else {
    }
    return
  }
  func.func @transform_0(%arg0: i32, %arg1: i32, %arg2: i32) -> (i32, i32) {
    %c0_i32 = arith.constant 0 : i32
    return %arg0, %arg2 : i32, i32
  }
  func.func @transform_1(%arg0: i32, %arg1: i32, %arg2: i32) -> (i32, i32) {
    %c0_i32 = arith.constant 0 : i32
    return %arg2, %arg1 : i32, i32
  }
  func.func @transform_2(%arg0: i32, %arg1: i32, %arg2: i32) -> (i32, i32) {
    %c0_i32 = arith.constant 0 : i32
    return %arg0, %arg1 : i32, i32
  }
  func.func @transform_3(%arg0: i32, %arg1: i32, %arg2: i32) -> (i32, i32, i32) {
    %c0_i32 = arith.constant 0 : i32
    %c0_i32_0 = arith.constant 0 : i32
    return %arg0, %c0_i32, %arg1 : i32, i32, i32
  }
  func.func @transform_4(%arg0: i32, %arg1: i32, %arg2: i32) -> (i32, i32, i32) {
    %c0_i32 = arith.constant 0 : i32
    %c0_i32_0 = arith.constant 0 : i32
    return %arg0, %c0_i32, %arg1 : i32, i32, i32
  }
}

module attributes {stable_mosaic.version = 11 : i64} {
  func.func @_bn_act_kernel(%arg0: i32, %arg1: memref<8x128xf32, #tpu.memory_space<vmem>>, %arg2: memref<1x128xf32, #tpu.memory_space<vmem>>, %arg3: memref<1x128xf32, #tpu.memory_space<vmem>>, %arg4: memref<8x128xf32, #tpu.memory_space<vmem>>) attributes {dimension_semantics = [#tpu.dimension_semantics<parallel>], iteration_bounds = array<i64: 1>, scalar_prefetch = 0 : i64, scratch_operands = 0 : i64, tpu.core_type = #tpu.core_type<tc>, window_params = [{transform_indices = @transform_0, window_bounds = array<i64: 8, 128>}, {pipeline_mode = #tpu.pipeline_mode<synchronous>, transform_indices = @transform_1, window_bounds = array<i64: 1, 128>}, {pipeline_mode = #tpu.pipeline_mode<synchronous>, transform_indices = @transform_2, window_bounds = array<i64: 1, 128>}, {transform_indices = @transform_3, window_bounds = array<i64: 8, 128>}]} {
    %c0 = arith.constant 0 : index
    %c0_0 = arith.constant 0 : index
    %0 = vector.load %arg1[%c0, %c0_0] : memref<8x128xf32, #tpu.memory_space<vmem>>, vector<8x128xf32>
    %c0_1 = arith.constant 0 : index
    %c0_2 = arith.constant 0 : index
    %1 = vector.load %arg2[%c0_1, %c0_2] : memref<1x128xf32, #tpu.memory_space<vmem>>, vector<1x128xf32>
    %2 = vector.broadcast %1 : vector<1x128xf32> to vector<8x128xf32>
    %3 = arith.mulf %0, %2 : vector<8x128xf32>
    %c0_3 = arith.constant 0 : index
    %c0_4 = arith.constant 0 : index
    %4 = vector.load %arg3[%c0_3, %c0_4] : memref<1x128xf32, #tpu.memory_space<vmem>>, vector<1x128xf32>
    %5 = vector.broadcast %4 : vector<1x128xf32> to vector<8x128xf32>
    %6 = arith.addf %3, %5 : vector<8x128xf32>
    %c0_5 = arith.constant 0 : index
    %c0_6 = arith.constant 0 : index
    %7 = vector.load %arg4[%c0_5, %c0_6] : memref<8x128xf32, #tpu.memory_space<vmem>>, vector<8x128xf32>
    tpu.vector_store %arg4[%c0_5, %c0_6], %6 {strides = array<i32>} : memref<8x128xf32, #tpu.memory_space<vmem>>, vector<8x128xf32>,
    return
  }
  func.func @transform_0(%arg0: i32) -> (i32, i32) {
    %c0_i32 = arith.constant 0 : i32
    %c0_i32_0 = arith.constant 0 : i32
    return %arg0, %c0_i32 : i32, i32
  }
  func.func @transform_1(%arg0: i32) -> (i32, i32) {
    %c0_i32 = arith.constant 0 : i32
    %c0_i32_0 = arith.constant 0 : i32
    %c0_i32_1 = arith.constant 0 : i32
    return %c0_i32, %c0_i32_0 : i32, i32
  }
  func.func @transform_2(%arg0: i32) -> (i32, i32) {
    %c0_i32 = arith.constant 0 : i32
    %c0_i32_0 = arith.constant 0 : i32
    %c0_i32_1 = arith.constant 0 : i32
    return %c0_i32, %c0_i32_0 : i32, i32
  }
  func.func @transform_3(%arg0: i32) -> (i32, i32) {
    %c0_i32 = arith.constant 0 : i32
    %c0_i32_0 = arith.constant 0 : i32
    return %arg0, %c0_i32 : i32, i32
  }
}

module attributes {stable_mosaic.version = 11 : i64} {
  func.func @_conv_bnstats_kernel(%arg0: i32, %arg1: i32, %arg2: i32, %arg3: memref<8x384xbf16, #tpu.memory_space<vmem>>, %arg4: memref<384x128xbf16, #tpu.memory_space<vmem>>, %arg5: memref<8x128xf32, #tpu.memory_space<vmem>>, %arg6: memref<1x1x128xf32, #tpu.memory_space<vmem>>, %arg7: memref<1x1x128xf32, #tpu.memory_space<vmem>>, %arg8: memref<8x128xf32, #tpu.memory_space<vmem>>) attributes {dimension_semantics = [#tpu.dimension_semantics<parallel>, #tpu.dimension_semantics<parallel>, #tpu.dimension_semantics<arbitrary>], iteration_bounds = array<i64: 1, 1, 3>, scalar_prefetch = 0 : i64, scratch_operands = 1 : i64, tpu.core_type = #tpu.core_type<tc>, window_params = [{transform_indices = @transform_0, window_bounds = array<i64: 8, 384>}, {transform_indices = @transform_1, window_bounds = array<i64: 384, 128>}, {transform_indices = @transform_2, window_bounds = array<i64: 8, 128>}, {transform_indices = @transform_3, window_bounds = array<i64: 1, 1, 128>}, {transform_indices = @transform_4, window_bounds = array<i64: 1, 1, 128>}]} {
    %c0_i32 = arith.constant 0 : i32
    %0 = arith.cmpi eq, %arg2, %c0_i32 : i32
    %1 = arith.extui %0 : i1 to i32
    %c0_i32_0 = arith.constant 0 : i32
    %2 = arith.cmpi ne, %1, %c0_i32_0 : i32
    scf.if %2 {
      %cst_9 = arith.constant 0.000000e+00 : f32
      %12 = vector.broadcast %cst_9 : f32 to vector<8x128xf32>
      %c0_10 = arith.constant 0 : index
      %c0_11 = arith.constant 0 : index
      %13 = vector.load %arg8[%c0_10, %c0_11] : memref<8x128xf32, #tpu.memory_space<vmem>>, vector<8x128xf32>
      tpu.vector_store %arg8[%c0_10, %c0_11], %12 {strides = array<i32>} : memref<8x128xf32, #tpu.memory_space<vmem>>, vector<8x128xf32>,
    } else {
    }
    %c0 = arith.constant 0 : index
    %c0_1 = arith.constant 0 : index
    %3 = vector.load %arg8[%c0, %c0_1] : memref<8x128xf32, #tpu.memory_space<vmem>>, vector<8x128xf32>
    %c0_2 = arith.constant 0 : index
    %c0_3 = arith.constant 0 : index
    %4 = vector.load %arg3[%c0_2, %c0_3] : memref<8x384xbf16, #tpu.memory_space<vmem>>, vector<8x384xbf16>
    %c0_4 = arith.constant 0 : index
    %c0_5 = arith.constant 0 : index
    %5 = vector.load %arg4[%c0_4, %c0_5] : memref<384x128xbf16, #tpu.memory_space<vmem>>, vector<384x128xbf16>
    %cst = arith.constant dense<0.000000e+00> : vector<8x128xf32>
    %6 = tpu.matmul %4, %5, %cst {dimension_numbers = #tpu.dot_dimension_numbers<[1], [0], [0], [1], [0, 0, 1, 1], [], []>} : vector<8x384xbf16>, vector<384x128xbf16>, vector<8x128xf32> -> vector<8x128xf32>
    %7 = arith.addf %3, %6 : vector<8x128xf32>
    %c0_6 = arith.constant 0 : index
    %c0_7 = arith.constant 0 : index
    %8 = vector.load %arg8[%c0_6, %c0_7] : memref<8x128xf32, #tpu.memory_space<vmem>>, vector<8x128xf32>
    tpu.vector_store %arg8[%c0_6, %c0_7], %7 {strides = array<i32>} : memref<8x128xf32, #tpu.memory_space<vmem>>, vector<8x128xf32>,
    %c2_i32 = arith.constant 2 : i32
    %9 = arith.cmpi eq, %arg2, %c2_i32 : i32
    %10 = arith.extui %9 : i1 to i32
    %c0_i32_8 = arith.constant 0 : i32
    %11 = arith.cmpi ne, %10, %c0_i32_8 : i32
    scf.if %11 {
      %c0_9 = arith.constant 0 : index
      %c0_10 = arith.constant 0 : index
      %12 = vector.load %arg8[%c0_9, %c0_10] : memref<8x128xf32, #tpu.memory_space<vmem>>, vector<8x128xf32>
      %c0_11 = arith.constant 0 : index
      %c0_12 = arith.constant 0 : index
      %13 = vector.load %arg5[%c0_11, %c0_12] : memref<8x128xf32, #tpu.memory_space<vmem>>, vector<8x128xf32>
      tpu.vector_store %arg5[%c0_11, %c0_12], %12 {strides = array<i32>} : memref<8x128xf32, #tpu.memory_space<vmem>>, vector<8x128xf32>,
      %cst_13 = arith.constant dense<0.000000e+00> : vector<128xf32>
      %14 = vector.multi_reduction <add>, %12, %cst_13 [0] : vector<8x128xf32> to vector<128xf32>
      %15 = vector.shape_cast %14 : vector<128xf32> to vector<1x128xf32>
      %16 = vector.shape_cast %15 : vector<1x128xf32> to vector<1x1x128xf32>
      %c0_14 = arith.constant 0 : index
      %c0_15 = arith.constant 0 : index
      %c0_16 = arith.constant 0 : index
      %17 = vector.load %arg6[%c0_14, %c0_15, %c0_16] : memref<1x1x128xf32, #tpu.memory_space<vmem>>, vector<1x1x128xf32>
      tpu.vector_store %arg6[%c0_14, %c0_15, %c0_16], %16 {strides = array<i32>} : memref<1x1x128xf32, #tpu.memory_space<vmem>>, vector<1x1x128xf32>,
      %18 = arith.mulf %12, %12 : vector<8x128xf32>
      %cst_17 = arith.constant dense<0.000000e+00> : vector<128xf32>
      %19 = vector.multi_reduction <add>, %18, %cst_17 [0] : vector<8x128xf32> to vector<128xf32>
      %20 = vector.shape_cast %19 : vector<128xf32> to vector<1x128xf32>
      %21 = vector.shape_cast %20 : vector<1x128xf32> to vector<1x1x128xf32>
      %c0_18 = arith.constant 0 : index
      %c0_19 = arith.constant 0 : index
      %c0_20 = arith.constant 0 : index
      %22 = vector.load %arg7[%c0_18, %c0_19, %c0_20] : memref<1x1x128xf32, #tpu.memory_space<vmem>>, vector<1x1x128xf32>
      tpu.vector_store %arg7[%c0_18, %c0_19, %c0_20], %21 {strides = array<i32>} : memref<1x1x128xf32, #tpu.memory_space<vmem>>, vector<1x1x128xf32>,
    } else {
    }
    return
  }
  func.func @transform_0(%arg0: i32, %arg1: i32, %arg2: i32) -> (i32, i32) {
    %c0_i32 = arith.constant 0 : i32
    return %arg0, %arg2 : i32, i32
  }
  func.func @transform_1(%arg0: i32, %arg1: i32, %arg2: i32) -> (i32, i32) {
    %c0_i32 = arith.constant 0 : i32
    return %arg2, %arg1 : i32, i32
  }
  func.func @transform_2(%arg0: i32, %arg1: i32, %arg2: i32) -> (i32, i32) {
    %c0_i32 = arith.constant 0 : i32
    return %arg0, %arg1 : i32, i32
  }
  func.func @transform_3(%arg0: i32, %arg1: i32, %arg2: i32) -> (i32, i32, i32) {
    %c0_i32 = arith.constant 0 : i32
    %c0_i32_0 = arith.constant 0 : i32
    return %arg0, %c0_i32, %arg1 : i32, i32, i32
  }
  func.func @transform_4(%arg0: i32, %arg1: i32, %arg2: i32) -> (i32, i32, i32) {
    %c0_i32 = arith.constant 0 : i32
    %c0_i32_0 = arith.constant 0 : i32
    return %arg0, %c0_i32, %arg1 : i32, i32, i32
  }
}

module attributes {stable_mosaic.version = 11 : i64} {
  func.func @_bn_act_kernel(%arg0: i32, %arg1: memref<8x128xf32, #tpu.memory_space<vmem>>, %arg2: memref<1x128xf32, #tpu.memory_space<vmem>>, %arg3: memref<1x128xf32, #tpu.memory_space<vmem>>, %arg4: memref<8x128xf32, #tpu.memory_space<vmem>>) attributes {dimension_semantics = [#tpu.dimension_semantics<parallel>], iteration_bounds = array<i64: 1>, scalar_prefetch = 0 : i64, scratch_operands = 0 : i64, tpu.core_type = #tpu.core_type<tc>, window_params = [{transform_indices = @transform_0, window_bounds = array<i64: 8, 128>}, {pipeline_mode = #tpu.pipeline_mode<synchronous>, transform_indices = @transform_1, window_bounds = array<i64: 1, 128>}, {pipeline_mode = #tpu.pipeline_mode<synchronous>, transform_indices = @transform_2, window_bounds = array<i64: 1, 128>}, {transform_indices = @transform_3, window_bounds = array<i64: 8, 128>}]} {
    %c0 = arith.constant 0 : index
    %c0_0 = arith.constant 0 : index
    %0 = vector.load %arg1[%c0, %c0_0] : memref<8x128xf32, #tpu.memory_space<vmem>>, vector<8x128xf32>
    %c0_1 = arith.constant 0 : index
    %c0_2 = arith.constant 0 : index
    %1 = vector.load %arg2[%c0_1, %c0_2] : memref<1x128xf32, #tpu.memory_space<vmem>>, vector<1x128xf32>
    %2 = vector.broadcast %1 : vector<1x128xf32> to vector<8x128xf32>
    %3 = arith.mulf %0, %2 : vector<8x128xf32>
    %c0_3 = arith.constant 0 : index
    %c0_4 = arith.constant 0 : index
    %4 = vector.load %arg3[%c0_3, %c0_4] : memref<1x128xf32, #tpu.memory_space<vmem>>, vector<1x128xf32>
    %5 = vector.broadcast %4 : vector<1x128xf32> to vector<8x128xf32>
    %6 = arith.addf %3, %5 : vector<8x128xf32>
    %cst = arith.constant 0.000000e+00 : f32
    %7 = vector.broadcast %cst : f32 to vector<8x128xf32>
    %8 = arith.maximumf %6, %7 : vector<8x128xf32>
    %c0_5 = arith.constant 0 : index
    %c0_6 = arith.constant 0 : index
    %9 = vector.load %arg4[%c0_5, %c0_6] : memref<8x128xf32, #tpu.memory_space<vmem>>, vector<8x128xf32>
    tpu.vector_store %arg4[%c0_5, %c0_6], %8 {strides = array<i32>} : memref<8x128xf32, #tpu.memory_space<vmem>>, vector<8x128xf32>,
    return
  }
  func.func @transform_0(%arg0: i32) -> (i32, i32) {
    %c0_i32 = arith.constant 0 : i32
    %c0_i32_0 = arith.constant 0 : i32
    return %arg0, %c0_i32 : i32, i32
  }
  func.func @transform_1(%arg0: i32) -> (i32, i32) {
    %c0_i32 = arith.constant 0 : i32
    %c0_i32_0 = arith.constant 0 : i32
    %c0_i32_1 = arith.constant 0 : i32
    return %c0_i32, %c0_i32_0 : i32, i32
  }
  func.func @transform_2(%arg0: i32) -> (i32, i32) {
    %c0_i32 = arith.constant 0 : i32
    %c0_i32_0 = arith.constant 0 : i32
    %c0_i32_1 = arith.constant 0 : i32
    return %c0_i32, %c0_i32_0 : i32, i32
  }
  func.func @transform_3(%arg0: i32) -> (i32, i32) {
    %c0_i32 = arith.constant 0 : i32
    %c0_i32_0 = arith.constant 0 : i32
    return %arg0, %c0_i32 : i32, i32
  }
}

module attributes {stable_mosaic.version = 11 : i64} {
  func.func @_pool_linear_kernel(%arg0: memref<2x4x128xf32, #tpu.memory_space<vmem>>, %arg1: memref<128x128xbf16, #tpu.memory_space<vmem>>, %arg2: memref<1x128xf32, #tpu.memory_space<vmem>>, %arg3: memref<2x128xf32, #tpu.memory_space<vmem>>) attributes {dimension_semantics = [], scalar_prefetch = 0 : i64, scratch_operands = 0 : i64, tpu.core_type = #tpu.core_type<tc>} {
    %c0 = arith.constant 0 : index
    %c0_0 = arith.constant 0 : index
    %c0_1 = arith.constant 0 : index
    %0 = vector.load %arg0[%c0, %c0_0, %c0_1] : memref<2x4x128xf32, #tpu.memory_space<vmem>>, vector<2x4x128xf32>
    %cst = arith.constant dense<0.000000e+00> : vector<2x128xf32>
    %1 = vector.multi_reduction <add>, %0, %cst [1] : vector<2x4x128xf32> to vector<2x128xf32>
    %cst_2 = arith.constant 4.000000e+00 : f32
    %2 = vector.broadcast %cst_2 : f32 to vector<2x128xf32>
    %3 = arith.divf %1, %2 : vector<2x128xf32>
    %4 = arith.truncf %3 : vector<2x128xf32> to vector<2x128xbf16>
    %c0_3 = arith.constant 0 : index
    %c0_4 = arith.constant 0 : index
    %5 = vector.load %arg1[%c0_3, %c0_4] : memref<128x128xbf16, #tpu.memory_space<vmem>>, vector<128x128xbf16>
    %cst_5 = arith.constant dense<0.000000e+00> : vector<2x128xf32>
    %6 = tpu.matmul %4, %5, %cst_5 {dimension_numbers = #tpu.dot_dimension_numbers<[1], [0], [0], [1], [0, 0, 1, 1], [], []>} : vector<2x128xbf16>, vector<128x128xbf16>, vector<2x128xf32> -> vector<2x128xf32>
    %c0_6 = arith.constant 0 : index
    %c0_7 = arith.constant 0 : index
    %7 = vector.load %arg2[%c0_6, %c0_7] : memref<1x128xf32, #tpu.memory_space<vmem>>, vector<1x128xf32>
    %8 = vector.broadcast %7 : vector<1x128xf32> to vector<2x128xf32>
    %9 = arith.addf %6, %8 : vector<2x128xf32>
    %c0_8 = arith.constant 0 : index
    %c0_9 = arith.constant 0 : index
    %10 = vector.load %arg3[%c0_8, %c0_9] : memref<2x128xf32, #tpu.memory_space<vmem>>, vector<2x128xf32>
    tpu.vector_store %arg3[%c0_8, %c0_9], %9 {strides = array<i32>} : memref<2x128xf32, #tpu.memory_space<vmem>>, vector<2x128xf32>,
    return
  }
}

module attributes {stable_mosaic.version = 11 : i64} {
  func.func @_bn_act_res_kernel(%arg0: i32, %arg1: memref<8x128xf32, #tpu.memory_space<vmem>>, %arg2: memref<1x128xf32, #tpu.memory_space<vmem>>, %arg3: memref<1x128xf32, #tpu.memory_space<vmem>>, %arg4: memref<8x128xf32, #tpu.memory_space<vmem>>, %arg5: memref<8x128xf32, #tpu.memory_space<vmem>>) attributes {dimension_semantics = [#tpu.dimension_semantics<parallel>], iteration_bounds = array<i64: 1>, scalar_prefetch = 0 : i64, scratch_operands = 0 : i64, tpu.core_type = #tpu.core_type<tc>, window_params = [{transform_indices = @transform_0, window_bounds = array<i64: 8, 128>}, {pipeline_mode = #tpu.pipeline_mode<synchronous>, transform_indices = @transform_1, window_bounds = array<i64: 1, 128>}, {pipeline_mode = #tpu.pipeline_mode<synchronous>, transform_indices = @transform_2, window_bounds = array<i64: 1, 128>}, {transform_indices = @transform_3, window_bounds = array<i64: 8, 128>}, {transform_indices = @transform_4, window_bounds = array<i64: 8, 128>}]} {
    %c0 = arith.constant 0 : index
    %c0_0 = arith.constant 0 : index
    %0 = vector.load %arg1[%c0, %c0_0] : memref<8x128xf32, #tpu.memory_space<vmem>>, vector<8x128xf32>
    %c0_1 = arith.constant 0 : index
    %c0_2 = arith.constant 0 : index
    %1 = vector.load %arg2[%c0_1, %c0_2] : memref<1x128xf32, #tpu.memory_space<vmem>>, vector<1x128xf32>
    %2 = vector.broadcast %1 : vector<1x128xf32> to vector<8x128xf32>
    %3 = arith.mulf %0, %2 : vector<8x128xf32>
    %c0_3 = arith.constant 0 : index
    %c0_4 = arith.constant 0 : index
    %4 = vector.load %arg3[%c0_3, %c0_4] : memref<1x128xf32, #tpu.memory_space<vmem>>, vector<1x128xf32>
    %5 = vector.broadcast %4 : vector<1x128xf32> to vector<8x128xf32>
    %6 = arith.addf %3, %5 : vector<8x128xf32>
    %c0_5 = arith.constant 0 : index
    %c0_6 = arith.constant 0 : index
    %7 = vector.load %arg4[%c0_5, %c0_6] : memref<8x128xf32, #tpu.memory_space<vmem>>, vector<8x128xf32>
    %8 = arith.addf %6, %7 : vector<8x128xf32>
    %cst = arith.constant 0.000000e+00 : f32
    %9 = vector.broadcast %cst : f32 to vector<8x128xf32>
    %10 = arith.maximumf %8, %9 : vector<8x128xf32>
    %c0_7 = arith.constant 0 : index
    %c0_8 = arith.constant 0 : index
    %11 = vector.load %arg5[%c0_7, %c0_8] : memref<8x128xf32, #tpu.memory_space<vmem>>, vector<8x128xf32>
    tpu.vector_store %arg5[%c0_7, %c0_8], %10 {strides = array<i32>} : memref<8x128xf32, #tpu.memory_space<vmem>>, vector<8x128xf32>,
    return
  }
  func.func @transform_0(%arg0: i32) -> (i32, i32) {
    %c0_i32 = arith.constant 0 : i32
    %c0_i32_0 = arith.constant 0 : i32
    return %arg0, %c0_i32 : i32, i32
  }
  func.func @transform_1(%arg0: i32) -> (i32, i32) {
    %c0_i32 = arith.constant 0 : i32
    %c0_i32_0 = arith.constant 0 : i32
    %c0_i32_1 = arith.constant 0 : i32
    return %c0_i32, %c0_i32_0 : i32, i32
  }
  func.func @transform_2(%arg0: i32) -> (i32, i32) {
    %c0_i32 = arith.constant 0 : i32
    %c0_i32_0 = arith.constant 0 : i32
    %c0_i32_1 = arith.constant 0 : i32
    return %c0_i32, %c0_i32_0 : i32, i32
  }
  func.func @transform_3(%arg0: i32) -> (i32, i32) {
    %c0_i32 = arith.constant 0 : i32
    %c0_i32_0 = arith.constant 0 : i32
    return %arg0, %c0_i32 : i32, i32
  }
  func.func @transform_4(%arg0: i32) -> (i32, i32) {
    %c0_i32 = arith.constant 0 : i32
    %c0_i32_0 = arith.constant 0 : i32
    return %arg0, %c0_i32 : i32, i32
  }
}

</mosaic_0001>

<llo_original>
// kernel: resnet_forward.25
$region0: #{resnet_forward.25}
  #allocation0 [shape = 'u32[]', space=smem, size = 0x4, offset = 0x4, fixed_abs, tag = 'smem constant byte address 0x4 - core index']
  #allocation1 [shape = 'u32[72,128]{1,0:T(1,128)}', space=vmem, size = 0x9000, scoped, tag = 'internal scratch']
  #allocation2 [shape = 'f32[256,128]{1,0:T(8,128)}', space=vmem, size = 0x20000, scoped, tag = 'scratch operand']
  %s0 = inlined_call_operand.vmem [shape: bf16[512,1152], index: 0, kind: input, shape index: {}]
  %s1 = inlined_call_operand.vmem [shape: bf16[1152,128], index: 1, kind: input, shape index: {}]
  %s2 = inlined_call_operand.vmem [shape: f32[512,128], index: 2, kind: output, shape index: {0}]
  %s3 = inlined_call_operand.vmem [shape: f32[2,1,128], index: 3, kind: output, shape index: {1}]
  %s4 = inlined_call_operand.vmem [shape: f32[2,1,128], index: 4, kind: output, shape index: {2}]
  %5 = xla_tuple %s2, %s3, %s4
  %s6 = sld [smem:[#allocation0]]
  $region91: #{resnet_forward.25} parent=0
    _
  %s8 = ssub.s32 1, %s6
  %s9 = scalar_select 0, %s8, %s6
  $region1: #{resnet_forward.25} parent=0
    #allocation3 [shape = 'u8[393216]{0}', space=vmem, size = 0x60000, scoped, tag = 'input window, operand 0']
    loop: start=0, step=1, limit=8
    $region2: #{resnet_forward.25} parent=1 // loop_pre_header
      _
    $region3: #{resnet_forward.25} parent=1 // loop_header
      %s11 = sphi 0, %s15
      %p12 = scmp.ge.s32.totalorder %s11, 8
      %s18 = sphi 0, %s37
      %s19 = sphi 0, %s33
      %s20 = sphi 0, %s29
      %s21 = sphi 0, %s18
      %s22 = sphi 0, %s19
      %s23 = sphi 0, %s20
      %s24 = sphi 0, %s21
      %s25 = sphi 0, %s22
      %s26 = sphi 0, %s23
      %s42 = sphi 0, %s44
      %s45 = sphi 0, %s42
      %s46 = sphi 0, %s45
      %s62 = sphi 0, %s46
      %s70 = sphi 0, %s72
      %s73 = sphi 0, %s70
      %s74 = sphi 0, %s73
      %s90 = sphi 0, %s74
      %s98 = sphi 0, %s100
      %s101 = sphi 0, %s98
      %s102 = sphi 0, %s101
      %s118 = sphi 0, %s102
      %s126 = sphi 0, %s128
      %s129 = sphi 0, %s126
      %s130 = sphi 0, %s129
      %s146 = sphi 0, %s130
      %s154 = sphi 0, %s156
      %s157 = sphi 0, %s154
      %s158 = sphi 0, %s157
      %s174 = sphi 0, %s158
    $region4: #{resnet_forward.25} parent=1 // loop_header_branch
      %14 = sbr.rel (%p12) target = $region8
    $region5: #{resnet_forward.25} parent=1 // loop_body
      %s16 = ssub.s32 %s11, 1
      %s17 = ssub.s32 %s11, 2
      %s27 = sadd.s32 1, %s20
      %p28 = scmp.ge.s32.totalorder %s27, 3
      %s29 = scalar_select %p28, 0, %s27
      %s30 = sadd.s32 1, %s19
      %s31 = scalar_select %p28, %s30, %s19
      %p32 = scmp.ge.s32.totalorder %s31, 1
      %s33 = scalar_select %p32, 0, %s31
      %s34 = sadd.s32 1, %s18
      %s35 = scalar_select %p32, %s34, %s18
      %p36 = scmp.ge.s32.totalorder %s35, 2
      %s37 = scalar_select %p36, 0, %s35
      %s38 = ssub.s32 %s18, %s37
      %s39 = ssub.s32 %s20, %s29
      %s40 = sor.u32 %s38, %s39
      %p41 = scmp.eq.s32.totalorder %s40, 0
      %s43 = sadd.s32 %s42, 1
      %s44 = scalar_select %p41, %s42, %s43
      %p47 = pneg %p41
      %p48 = scmp.eq.s32.totalorder %s11, 5
      %p49 = por %p47, %p48
      %p50 = scmp.ne.s32.totalorder %s42, %s45
      %p51 = scmp.eq.s32.totalorder %s11, 0
      %p52 = por %p50, %p51
      %p53 = scmp.ne.s32.totalorder %s42, %s45
      %p54 = scmp.eq.s32.totalorder %s16, 5
      %p55 = por %p53, %p54
      %p56 = scmp.ne.s32.totalorder %s45, %s46
      %p57 = scmp.eq.s32.totalorder %s16, 0
      %p58 = por %p56, %p57
      %p59 = scmp.ne.s32.totalorder %s45, %s46
      %p60 = scmp.eq.s32.totalorder %s17, 5
      %p61 = por %p59, %p60
      %p63 = scmp.ne.s32.totalorder %s46, %s62
      %p64 = scmp.eq.s32.totalorder %s17, 0
      %p65 = por %p63, %p64
      %s66 = ssub.s32 %s20, %s29
      %s67 = ssub.s32 %s19, %s33
      %s68 = sor.u32 %s66, %s67
      %p69 = scmp.eq.s32.totalorder %s68, 0
      %s71 = sadd.s32 %s70, 1
      %s72 = scalar_select %p69, %s70, %s71
      %p75 = pneg %p69
      %p76 = scmp.eq.s32.totalorder %s11, 5
      %p77 = por %p75, %p76
      %p78 = scmp.ne.s32.totalorder %s70, %s73
      %p79 = scmp.eq.s32.totalorder %s11, 0
      %p80 = por %p78, %p79
      %p81 = scmp.ne.s32.totalorder %s70, %s73
      %p82 = scmp.eq.s32.totalorder %s16, 5
      %p83 = por %p81, %p82
      %p84 = scmp.ne.s32.totalorder %s73, %s74
      %p85 = scmp.eq.s32.totalorder %s16, 0
      %p86 = por %p84, %p85
      %p87 = scmp.ne.s32.totalorder %s73, %s74
      %p88 = scmp.eq.s32.totalorder %s17, 5
      %p89 = por %p87, %p88
      %p91 = scmp.ne.s32.totalorder %s74, %s90
      %p92 = scmp.eq.s32.totalorder %s17, 0
      %p93 = por %p91, %p92
      %s94 = ssub.s32 %s18, %s37
      %s95 = ssub.s32 %s19, %s33
      %s96 = sor.u32 %s94, %s95
      %p97 = scmp.eq.s32.totalorder %s96, 0
      %s99 = sadd.s32 %s98, 1
      %s100 = scalar_select %p97, %s98, %s99
      %p103 = pneg %p97
      %p104 = scmp.eq.s32.totalorder %s11, 5
      %p105 = por %p103, %p104
      %p106 = scmp.ne.s32.totalorder %s98, %s101
      %p107 = scmp.eq.s32.totalorder %s11, 0
      %p108 = por %p106, %p107
      %p109 = scmp.ne.s32.totalorder %s98, %s101
      %p110 = scmp.eq.s32.totalorder %s16, 5
      %p111 = por %p109, %p110
      %p112 = scmp.ne.s32.totalorder %s101, %s102
      %p113 = scmp.eq.s32.totalorder %s16, 0
      %p114 = por %p112, %p113
      %p115 = scmp.ne.s32.totalorder %s101, %s102
      %p116 = scmp.eq.s32.totalorder %s17, 5
      %p117 = por %p115, %p116
      %p119 = scmp.ne.s32.totalorder %s102, %s118
      %p120 = scmp.eq.s32.totalorder %s17, 0
      %p121 = por %p119, %p120
      %s122 = ssub.s32 %s18, %s37
      %s123 = ssub.s32 %s19, %s33
      %s124 = sor.u32 %s122, %s123
      %p125 = scmp.eq.s32.totalorder %s124, 0
      %s127 = sadd.s32 %s126, 1
      %s128 = scalar_select %p125, %s126, %s127
      %p131 = pneg %p125
      %p132 = scmp.eq.s32.totalorder %s11, 5
      %p133 = por %p131, %p132
      %p134 = scmp.ne.s32.totalorder %s126, %s129
      %p135 = scmp.eq.s32.totalorder %s11, 0
      %p136 = por %p134, %p135
      %p137 = scmp.ne.s32.totalorder %s126, %s129
      %p138 = scmp.eq.s32.totalorder %s16, 5
      %p139 = por %p137, %p138
      %p140 = scmp.ne.s32.totalorder %s129, %s130
      %p141 = scmp.eq.s32.totalorder %s16, 0
      %p142 = por %p140, %p141
      %p143 = scmp.ne.s32.totalorder %s129, %s130
      %p144 = scmp.eq.s32.totalorder %s17, 5
      %p145 = por %p143, %p144
      %p147 = scmp.ne.s32.totalorder %s130, %s146
      %p148 = scmp.eq.s32.totalorder %s17, 0
      %p149 = por %p147, %p148
      %s150 = ssub.s32 %s18, %s37
      %s151 = ssub.s32 %s19, %s33
      %s152 = sor.u32 %s150, %s151
      %p153 = scmp.eq.s32.totalorder %s152, 0
      %s155 = sadd.s32 %s154, 1
      %s156 = scalar_select %p153, %s154, %s155
      %p159 = pneg %p153
      %p160 = scmp.eq.s32.totalorder %s11, 5
      %p161 = por %p159, %p160
      %p162 = scmp.ne.s32.totalorder %s154, %s157
      %p163 = scmp.eq.s32.totalorder %s11, 0
      %p164 = por %p162, %p163
      %p165 = scmp.ne.s32.totalorder %s154, %s157
      %p166 = scmp.eq.s32.totalorder %s16, 5
      %p167 = por %p165, %p166
      %p168 = scmp.ne.s32.totalorder %s157, %s158
      %p169 = scmp.eq.s32.totalorder %s16, 0
      %p170 = por %p168, %p169
      %p171 = scmp.ne.s32.totalorder %s157, %s158
      %p172 = scmp.eq.s32.totalorder %s17, 5
      %p173 = por %p171, %p172
      %p175 = scmp.ne.s32.totalorder %s158, %s174
      %p176 = scmp.eq.s32.totalorder %s17, 0
      %p177 = por %p175, %p176
      %p178 = scmp.le.s32.totalorder 1, %s11
      %p179 = scmp.lt.s32.totalorder %s11, 7
      %p180 = pnand %p178, %p179
      %p181 = pneg %p180
      // Predicated region
      $region9: #{resnet_forward.25} parent=5 // pred_check
        _
      $region10: #{resnet_forward.25} parent=5 // pred_check_branch
        %183 = sbr.rel (%p180) target = $region12
      $region11: #{resnet_forward.25} parent=5 // pred_region
        %s184 = ssub.s32 %s11, 1
      $region12: #{resnet_forward.25} parent=5 // pred_fallthru
        _
      %p185 = scmp.lt.s32.totalorder %s11, 6
      // Predicated region
      $region13: #{resnet_forward.25} parent=5 // pred_check
        %p186 = pneg %p185
      $region14: #{resnet_forward.25} parent=5 // pred_check_branch
        %188 = sbr.rel (%p186) target = $region16
      $region15: #{resnet_forward.25} parent=5 // pred_region
        // Predicated region
        $region17: #{resnet_forward.25} parent=15 // pred_check
          %p189 = pneg %p52
        $region18: #{resnet_forward.25} parent=15 // pred_check_branch
          %191 = sbr.rel (%p189) target = $region20
        $region19: #{resnet_forward.25} parent=15 // pred_region
          %s192 = sand.u32 %s42, 1
          %s193 = sand.u32 %s42, 1
          %s194 = smul.addr %s193, 384
          %s195 = scalar_lea.vmem [#allocation3], %s194
          %s196 = smul.u32 32, %s18
          %s197 = smul.u32 3, %s20
          %s198 = smul.addr %s196, 9
          %s199 = sadd.s32 %s197, %s198
          %s200 = smul.addr %s199, 4
          %s201 = scalar_lea.vmem %s0, %s200
          // Predicated region
          $region21: #{resnet_forward.25} parent=19 // pred_check
            _
          $region22: #{resnet_forward.25} parent=19 // pred_check_branch
            %203 = sbr.rel (0) target = $region24
          $region23: #{resnet_forward.25} parent=19 // pred_region
            // Predicated region
            $region25: #{resnet_forward.25} parent=23 // pred_check
              _
            $region26: #{resnet_forward.25} parent=23 // pred_check_branch
              %205 = sbr.rel (0) target = $region28
            $region27: #{resnet_forward.25} parent=23 // pred_region
              %s206 = scalar_lea.vmem %s201, 8
              %s207 = scalar_lea.vmem %s195, 8 [#allocation3]
              loop: start=0, step=1, limit=1
              $region29: #{resnet_forward.25} parent=27 // loop_pre_header
                _
              $region30: #{resnet_forward.25} parent=27 // loop_header
                %s209 = sphi 0, %s213
                %p210 = scmp.ge.s32.totalorder %s209, 1
                %s214 = sphi %s201, %s201
                %s215 = sphi %s195, %s195
              $region31: #{resnet_forward.25} parent=27 // loop_header_branch
                %212 = sbr.rel (%p210) target = $region35
              $region32: #{resnet_forward.25} parent=27 // loop_body
                %v216 = vld [vmem:[%s214] sm:$0xff]
                %217 = vst [vmem:[%s215] sm:$0xff] %v216
                %v218 = vld [vmem:[%s214 + $0x24] sm:$0xff]
                %219 = vst [vmem:[%s215 + $0xc] sm:$0xff] %v218
                %v220 = vld [vmem:[%s214 + $0x48] sm:$0xff]
                %221 = vst [vmem:[%s215 + $0x18] sm:$0xff] %v220
                %v222 = vld [vmem:[%s214 + $0x6c] sm:$0xff]
                %223 = vst [vmem:[%s215 + $0x24] sm:$0xff] %v222
                %v224 = vld [vmem:[%s214 + $0x90] sm:$0xff]
                %225 = vst [vmem:[%s215 + $0x30] sm:$0xff] %v224
                %v226 = vld [vmem:[%s214 + $0xb4] sm:$0xff]
                %227 = vst [vmem:[%s215 + $0x3c] sm:$0xff] %v226
                %v228 = vld [vmem:[%s214 + $0xd8] sm:$0xff]
                %229 = vst [vmem:[%s215 + $0x48] sm:$0xff] %v228
                %v230 = vld [vmem:[%s214 + $0xfc] sm:$0xff]
                %231 = vst [vmem:[%s215 + $0x54] sm:$0xff] %v230
                %v232 = vld [vmem:[%s214 + $0x120] sm:$0xff]
                %233 = vst [vmem:[%s215 + $0x60] sm:$0xff] %v232
                %v234 = vld [vmem:[%s214 + $0x144] sm:$0xff]
                %235 = vst [vmem:[%s215 + $0x6c] sm:$0xff] %v234
                %v236 = vld [vmem:[%s214 + $0x168] sm:$0xff]
                %237 = vst [vmem:[%s215 + $0x78] sm:$0xff] %v236
                %v238 = vld [vmem:[%s214 + $0x18c] sm:$0xff]
                %239 = vst [vmem:[%s215 + $0x84] sm:$0xff] %v238
                %v240 = vld [vmem:[%s214 + $0x1b0] sm:$0xff]
                %241 = vst [vmem:[%s215 + $0x90] sm:$0xff] %v240
                %v242 = vld [vmem:[%s214 + $0x1d4] sm:$0xff]
                %243 = vst [vmem:[%s215 + $0x9c] sm:$0xff] %v242
                %v244 = vld [vmem:[%s214 + $0x1f8] sm:$0xff]
                %245 = vst [vmem:[%s215 + $0xa8] sm:$0xff] %v244
                %v246 = vld [vmem:[%s214 + $0x21c] sm:$0xff]
                %247 = vst [vmem:[%s215 + $0xb4] sm:$0xff] %v246
                %v248 = vld [vmem:[%s214 + $0x240] sm:$0xff]
                %249 = vst [vmem:[%s215 + $0xc0] sm:$0xff] %v248
                %v250 = vld [vmem:[%s214 + $0x264] sm:$0xff]
                %251 = vst [vmem:[%s215 + $0xcc] sm:$0xff] %v250
                %v252 = vld [vmem:[%s214 + $0x288] sm:$0xff]
                %253 = vst [vmem:[%s215 + $0xd8] sm:$0xff] %v252
                %v254 = vld [vmem:[%s214 + $0x2ac] sm:$0xff]
                %255 = vst [vmem:[%s215 + $0xe4] sm:$0xff] %v254
                %v256 = vld [vmem:[%s214 + $0x2d0] sm:$0xff]
                %257 = vst [vmem:[%s215 + $0xf0] sm:$0xff] %v256
                %v258 = vld [vmem:[%s214 + $0x2f4] sm:$0xff]
                %259 = vst [vmem:[%s215 + $0xfc] sm:$0xff] %v258
                %v260 = vld [vmem:[%s214 + $0x318] sm:$0xff]
                %261 = vst [vmem:[%s215 + $0x108] sm:$0xff] %v260
                %v262 = vld [vmem:[%s214 + $0x33c] sm:$0xff]
                %263 = vst [vmem:[%s215 + $0x114] sm:$0xff] %v262
                %v264 = vld [vmem:[%s214 + $0x360] sm:$0xff]
                %265 = vst [vmem:[%s215 + $0x120] sm:$0xff] %v264
                %v266 = vld [vmem:[%s214 + $0x384] sm:$0xff]
                %267 = vst [vmem:[%s215 + $0x12c] sm:$0xff] %v266
                %v268 = vld [vmem:[%s214 + $0x3a8] sm:$0xff]
                %269 = vst [vmem:[%s215 + $0x138] sm:$0xff] %v268
                %v270 = vld [vmem:[%s214 + $0x3cc] sm:$0xff]
                %271 = vst [vmem:[%s215 + $0x144] sm:$0xff] %v270
                %v272 = vld [vmem:[%s214 + $0x3f0] sm:$0xff]
                %273 = vst [vmem:[%s215 + $0x150] sm:$0xff] %v272
                %v274 = vld [vmem:[%s214 + $0x414] sm:$0xff]
                %275 = vst [vmem:[%s215 + $0x15c] sm:$0xff] %v274
                %v276 = vld [vmem:[%s214 + $0x438] sm:$0xff]
                %277 = vst [vmem:[%s215 + $0x168] sm:$0xff] %v276
                %v278 = vld [vmem:[%s214 + $0x45c] sm:$0xff]
                %279 = vst [vmem:[%s215 + $0x174] sm:$0xff] %v278
              $region33: #{resnet_forward.25} parent=27 // loop_footer
                %s213 = sadd.s32 1, %s209
              $region34: #{resnet_forward.25} parent=27 // loop_footer_branch
                %208 = sbr.rel target = $region30
              $region35: #{resnet_forward.25} parent=27 // loop_exit
                _
              %s281 = ssub.s32 16, 1
              loop: start=0, step=1, limit=1
              $region36: #{resnet_forward.25} parent=27 // loop_pre_header
                _
              $region37: #{resnet_forward.25} parent=27 // loop_header
                %s283 = sphi 0, %s287
                %p284 = scmp.ge.s32.totalorder %s283, 1
                %s288 = sphi %s206, %s206
                %s289 = sphi %s207, %s207
              $region38: #{resnet_forward.25} parent=27 // loop_header_branch
                %286 = sbr.rel (%p284) target = $region42
              $region39: #{resnet_forward.25} parent=27 // loop_body
                %v290 = vld [vmem:[%s288] sm:%s281]
                %291 = vst [vmem:[%s289] sm:%s281] %v290
                %v292 = vld [vmem:[%s288 + $0x24] sm:%s281]
                %293 = vst [vmem:[%s289 + $0xc] sm:%s281] %v292
                %v294 = vld [vmem:[%s288 + $0x48] sm:%s281]
                %295 = vst [vmem:[%s289 + $0x18] sm:%s281] %v294
                %v296 = vld [vmem:[%s288 + $0x6c] sm:%s281]
                %297 = vst [vmem:[%s289 + $0x24] sm:%s281] %v296
                %v298 = vld [vmem:[%s288 + $0x90] sm:%s281]
                %299 = vst [vmem:[%s289 + $0x30] sm:%s281] %v298
                %v300 = vld [vmem:[%s288 + $0xb4] sm:%s281]
                %301 = vst [vmem:[%s289 + $0x3c] sm:%s281] %v300
                %v302 = vld [vmem:[%s288 + $0xd8] sm:%s281]
                %303 = vst [vmem:[%s289 + $0x48] sm:%s281] %v302
                %v304 = vld [vmem:[%s288 + $0xfc] sm:%s281]
                %305 = vst [vmem:[%s289 + $0x54] sm:%s281] %v304
                %v306 = vld [vmem:[%s288 + $0x120] sm:%s281]
                %307 = vst [vmem:[%s289 + $0x60] sm:%s281] %v306
                %v308 = vld [vmem:[%s288 + $0x144] sm:%s281]
                %309 = vst [vmem:[%s289 + $0x6c] sm:%s281] %v308
                %v310 = vld [vmem:[%s288 + $0x168] sm:%s281]
                %311 = vst [vmem:[%s289 + $0x78] sm:%s281] %v310
                %v312 = vld [vmem:[%s288 + $0x18c] sm:%s281]
                %313 = vst [vmem:[%s289 + $0x84] sm:%s281] %v312
                %v314 = vld [vmem:[%s288 + $0x1b0] sm:%s281]
                %315 = vst [vmem:[%s289 + $0x90] sm:%s281] %v314
                %v316 = vld [vmem:[%s288 + $0x1d4] sm:%s281]
                %317 = vst [vmem:[%s289 + $0x9c] sm:%s281] %v316
                %v318 = vld [vmem:[%s288 + $0x1f8] sm:%s281]
                %319 = vst [vmem:[%s289 + $0xa8] sm:%s281] %v318
                %v320 = vld [vmem:[%s288 + $0x21c] sm:%s281]
                %321 = vst [vmem:[%s289 + $0xb4] sm:%s281] %v320
                %v322 = vld [vmem:[%s288 + $0x240] sm:%s281]
                %323 = vst [vmem:[%s289 + $0xc0] sm:%s281] %v322
                %v324 = vld [vmem:[%s288 + $0x264] sm:%s281]
                %325 = vst [vmem:[%s289 + $0xcc] sm:%s281] %v324
                %v326 = vld [vmem:[%s288 + $0x288] sm:%s281]
                %327 = vst [vmem:[%s289 + $0xd8] sm:%s281] %v326
                %v328 = vld [vmem:[%s288 + $0x2ac] sm:%s281]
                %329 = vst [vmem:[%s289 + $0xe4] sm:%s281] %v328
                %v330 = vld [vmem:[%s288 + $0x2d0] sm:%s281]
                %331 = vst [vmem:[%s289 + $0xf0] sm:%s281] %v330
                %v332 = vld [vmem:[%s288 + $0x2f4] sm:%s281]
                %333 = vst [vmem:[%s289 + $0xfc] sm:%s281] %v332
                %v334 = vld [vmem:[%s288 + $0x318] sm:%s281]
                %335 = vst [vmem:[%s289 + $0x108] sm:%s281] %v334
                %v336 = vld [vmem:[%s288 + $0x33c] sm:%s281]
                %337 = vst [vmem:[%s289 + $0x114] sm:%s281] %v336
                %v338 = vld [vmem:[%s288 + $0x360] sm:%s281]
                %339 = vst [vmem:[%s289 + $0x120] sm:%s281] %v338
                %v340 = vld [vmem:[%s288 + $0x384] sm:%s281]
                %341 = vst [vmem:[%s289 + $0x12c] sm:%s281] %v340
                %v342 = vld [vmem:[%s288 + $0x3a8] sm:%s281]
                %343 = vst [vmem:[%s289 + $0x138] sm:%s281] %v342
                %v344 = vld [vmem:[%s288 + $0x3cc] sm:%s281]
                %345 = vst [vmem:[%s289 + $0x144] sm:%s281] %v344
                %v346 = vld [vmem:[%s288 + $0x3f0] sm:%s281]
                %347 = vst [vmem:[%s289 + $0x150] sm:%s281] %v346
                %v348 = vld [vmem:[%s288 + $0x414] sm:%s281]
                %349 = vst [vmem:[%s289 + $0x15c] sm:%s281] %v348
                %v350 = vld [vmem:[%s288 + $0x438] sm:%s281]
                %351 = vst [vmem:[%s289 + $0x168] sm:%s281] %v350
                %v352 = vld [vmem:[%s288 + $0x45c] sm:%s281]
                %353 = vst [vmem:[%s289 + $0x174] sm:%s281] %v352
              $region40: #{resnet_forward.25} parent=27 // loop_footer
                %s287 = sadd.s32 1, %s283
              $region41: #{resnet_forward.25} parent=27 // loop_footer_branch
                %282 = sbr.rel target = $region37
              $region42: #{resnet_forward.25} parent=27 // loop_exit
                _
            $region28: #{resnet_forward.25} parent=23 // pred_fallthru
              _
          $region24: #{resnet_forward.25} parent=19 // pred_fallthru
            _
          %354 = vnop
        $region20: #{resnet_forward.25} parent=15 // pred_fallthru
          _
        // Predicated region
        $region43: #{resnet_forward.25} parent=15 // pred_check
          %p355 = pneg %p80
        $region44: #{resnet_forward.25} parent=15 // pred_check_branch
          %357 = sbr.rel (%p355) target = $region46
        $region45: #{resnet_forward.25} parent=15 // pred_region
          %s358 = smul.u32 48, %s20
          %p359 = scmp.lt.s32.totalorder %s358, 143
          %s360 = scalar_select %p359, %s358, 143
          %p361 = scmp.lt.s32.totalorder %s19, 0
          %s362 = scalar_select %p361, %s19, 0
          %s363 = sadd.s32 %s362, %s360
          %s364 = smul.addr %s363, 4
          %s365 = scalar_lea.vmem %s1, %s364
          %s366 = smul.u32 48, %s20
        $region46: #{resnet_forward.25} parent=15 // pred_fallthru
          _
      $region16: #{resnet_forward.25} parent=5 // pred_fallthru
        _
      %p367 = scmp.le.s32.totalorder 1, %s11
      %p368 = scmp.lt.s32.totalorder %s11, 7
      %p369 = pnand %p367, %p368
      %p370 = pneg %p369
      // Predicated region
      $region47: #{resnet_forward.25} parent=5 // pred_check
        _
      $region48: #{resnet_forward.25} parent=5 // pred_check_branch
        %372 = sbr.rel (%p369) target = $region50
      $region49: #{resnet_forward.25} parent=5 // pred_region
        %s373 = ssub.s32 %s11, 1
        %s374 = sand.u32 %s45, 1
        %s375 = sand.u32 %s45, 1
        %s376 = smul.addr %s375, 384
        %s377 = scalar_lea.vmem [#allocation3], %s376
        // Predicated region
        $region51: #{resnet_forward.25} parent=49 // pred_check
          %p378 = pneg %p58
        $region52: #{resnet_forward.25} parent=49 // pred_check_branch
          %380 = sbr.rel (%p378) target = $region54
        $region53: #{resnet_forward.25} parent=49 // pred_region
          _
        $region54: #{resnet_forward.25} parent=49 // pred_fallthru
          _
        %s381 = sand.u32 %s45, 1
        %s382 = sand.u32 %s45, 1
        %s383 = smul.addr %s382, 384
        %s384 = scalar_lea.vmem [#allocation3], %s383
        %p385 = pneg %p58
        %p386 = pneg %p55
        %s387 = smul.u32 48, %s23
        %p388 = scmp.lt.s32.totalorder %s387, 143
        %s389 = scalar_select %p388, %s387, 143
        %p390 = scmp.lt.s32.totalorder %s22, 0
        %s391 = scalar_select %p390, %s22, 0
        %s392 = sadd.s32 %s391, %s389
        %s393 = smul.addr %s392, 4
        %s394 = scalar_lea.vmem %s1, %s393
        %p395 = pneg %p86
        %p396 = pneg %p83
        %p397 = pneg %p114
        %p398 = pneg %p111
        %s399 = smul.u32 32, %s21
        %p400 = scmp.lt.s32.totalorder %s399, 63
        %s401 = scalar_select %p400, %s399, 63
        %p402 = scmp.lt.s32.totalorder %s22, 0
        %s403 = scalar_select %p402, %s22, 0
        %s404 = sadd.s32 %s403, %s401
        %s405 = smul.addr %s404, 8
        %s406 = scalar_lea.vmem %s2, %s405
        %p407 = pneg %p142
        %p408 = pneg %p139
        %p409 = scmp.lt.s32.totalorder %s21, 1
        %s410 = scalar_select %p409, %s21, 1
        %p411 = scmp.lt.s32.totalorder %s22, 0
        %s412 = scalar_select %p411, %s22, 0
        %s413 = sadd.s32 %s412, %s410
        %s414 = scalar_lea.vmem %s3, %s413
        %p415 = pneg %p170
        %p416 = pneg %p167
        %p417 = scmp.lt.s32.totalorder %s21, 1
        %s418 = scalar_select %p417, %s21, 1
        %p419 = scmp.lt.s32.totalorder %s22, 0
        %s420 = scalar_select %p419, %s22, 0
        %s421 = sadd.s32 %s420, %s418
        %s422 = scalar_lea.vmem %s4, %s421
        %s423 = smul.u32 32, %s21
        %s424 = smul.u32 3, %s23
        %s425 = smul.u32 48, %s23
        %p426 = scmp.lt.s32.totalorder %s425, 143
        %s427 = scalar_select %p426, %s425, 143
        %p428 = scmp.lt.s32.totalorder %s22, 0
        %s429 = scalar_select %p428, %s22, 0
        %s430 = sadd.s32 %s429, %s427
        %s431 = smul.addr %s430, 4
        %s432 = scalar_lea.vmem %s1, %s431
        %s433 = smul.u32 48, %s23
        %s434 = smul.u32 32, %s21
        %p435 = scmp.lt.s32.totalorder %s434, 63
        %s436 = scalar_select %p435, %s434, 63
        %p437 = scmp.lt.s32.totalorder %s22, 0
        %s438 = scalar_select %p437, %s22, 0
        %s439 = sadd.s32 %s438, %s436
        %s440 = smul.addr %s439, 8
        %s441 = scalar_lea.vmem %s2, %s440
        %s442 = smul.u32 32, %s21
        %p443 = scmp.lt.s32.totalorder %s21, 1
        %s444 = scalar_select %p443, %s21, 1
        %p445 = scmp.lt.s32.totalorder %s22, 0
        %s446 = scalar_select %p445, %s22, 0
        %s447 = sadd.s32 %s446, %s444
        %s448 = scalar_lea.vmem %s3, %s447
        %p449 = scmp.lt.s32.totalorder %s21, 1
        %s450 = scalar_select %p449, %s21, 1
        %p451 = scmp.lt.s32.totalorder %s22, 0
        %s452 = scalar_select %p451, %s22, 0
        %s453 = sadd.s32 %s452, %s450
        %s454 = scalar_lea.vmem %s4, %s453
        %p455 = scmp.eq.s32.totalorder %s23, 0
        // Predicated region
        $region55: #{resnet_forward.25} parent=49 // pred_check
          %p456 = pneg %p455
        $region56: #{resnet_forward.25} parent=49 // pred_check_branch
          %458 = sbr.rel (%p456) target = $region58
        $region57: #{resnet_forward.25} parent=49 // pred_region
          %459 = vst [vmem:[#allocation2] sm:$0xff] 0.0
          %460 = vst [vmem:[#allocation2 + $0x8] sm:$0xff] 0.0
          %461 = vst [vmem:[#allocation2 + $0x10] sm:$0xff] 0.0
          %462 = vst [vmem:[#allocation2 + $0x18] sm:$0xff] 0.0
          %463 = vst [vmem:[#allocation2 + $0x20] sm:$0xff] 0.0
          %464 = vst [vmem:[#allocation2 + $0x28] sm:$0xff] 0.0
          %465 = vst [vmem:[#allocation2 + $0x30] sm:$0xff] 0.0
          %466 = vst [vmem:[#allocation2 + $0x38] sm:$0xff] 0.0
          %467 = vst [vmem:[#allocation2 + $0x40] sm:$0xff] 0.0
          %468 = vst [vmem:[#allocation2 + $0x48] sm:$0xff] 0.0
          %469 = vst [vmem:[#allocation2 + $0x50] sm:$0xff] 0.0
          %470 = vst [vmem:[#allocation2 + $0x58] sm:$0xff] 0.0
          %471 = vst [vmem:[#allocation2 + $0x60] sm:$0xff] 0.0
          %472 = vst [vmem:[#allocation2 + $0x68] sm:$0xff] 0.0
          %473 = vst [vmem:[#allocation2 + $0x70] sm:$0xff] 0.0
          %474 = vst [vmem:[#allocation2 + $0x78] sm:$0xff] 0.0
          %475 = vst [vmem:[#allocation2 + $0x80] sm:$0xff] 0.0
          %476 = vst [vmem:[#allocation2 + $0x88] sm:$0xff] 0.0
          %477 = vst [vmem:[#allocation2 + $0x90] sm:$0xff] 0.0
          %478 = vst [vmem:[#allocation2 + $0x98] sm:$0xff] 0.0
          %479 = vst [vmem:[#allocation2 + $0xa0] sm:$0xff] 0.0
          %480 = vst [vmem:[#allocation2 + $0xa8] sm:$0xff] 0.0
          %481 = vst [vmem:[#allocation2 + $0xb0] sm:$0xff] 0.0
          %482 = vst [vmem:[#allocation2 + $0xb8] sm:$0xff] 0.0
          %483 = vst [vmem:[#allocation2 + $0xc0] sm:$0xff] 0.0
          %484 = vst [vmem:[#allocation2 + $0xc8] sm:$0xff] 0.0
          %485 = vst [vmem:[#allocation2 + $0xd0] sm:$0xff] 0.0
          %486 = vst [vmem:[#allocation2 + $0xd8] sm:$0xff] 0.0
          %487 = vst [vmem:[#allocation2 + $0xe0] sm:$0xff] 0.0
          %488 = vst [vmem:[#allocation2 + $0xe8] sm:$0xff] 0.0
          %489 = vst [vmem:[#allocation2 + $0xf0] sm:$0xff] 0.0
          %490 = vst [vmem:[#allocation2 + $0xf8] sm:$0xff] 0.0
        $region58: #{resnet_forward.25} parent=49 // pred_fallthru
          _
        %v491 = vld [vmem:[#allocation2] sm:$0xff]
        %v492 = vld [vmem:[#allocation2 + $0x8] sm:$0xff]
        %v493 = vld [vmem:[#allocation2 + $0x10] sm:$0xff]
        %v494 = vld [vmem:[#allocation2 + $0x18] sm:$0xff]
        %v495 = vld [vmem:[#allocation2 + $0x20] sm:$0xff]
        %v496 = vld [vmem:[#allocation2 + $0x28] sm:$0xff]
        %v497 = vld [vmem:[#allocation2 + $0x30] sm:$0xff]
        %v498 = vld [vmem:[#allocation2 + $0x38] sm:$0xff]
        %v499 = vld [vmem:[#allocation2 + $0x40] sm:$0xff]
        %v500 = vld [vmem:[#allocation2 + $0x48] sm:$0xff]
        %v501 = vld [vmem:[#allocation2 + $0x50] sm:$0xff]
        %v502 = vld [vmem:[#allocation2 + $0x58] sm:$0xff]
        %v503 = vld [vmem:[#allocation2 + $0x60] sm:$0xff]
        %v504 = vld [vmem:[#allocation2 + $0x68] sm:$0xff]
        %v505 = vld [vmem:[#allocation2 + $0x70] sm:$0xff]
        %v506 = vld [vmem:[#allocation2 + $0x78] sm:$0xff]
        %v507 = vld [vmem:[#allocation2 + $0x80] sm:$0xff]
        %v508 = vld [vmem:[#allocation2 + $0x88] sm:$0xff]
        %v509 = vld [vmem:[#allocation2 + $0x90] sm:$0xff]
        %v510 = vld [vmem:[#allocation2 + $0x98] sm:$0xff]
        %v511 = vld [vmem:[#allocation2 + $0xa0] sm:$0xff]
        %v512 = vld [vmem:[#allocation2 + $0xa8] sm:$0xff]
        %v513 = vld [vmem:[#allocation2 + $0xb0] sm:$0xff]
        %v514 = vld [vmem:[#allocation2 + $0xb8] sm:$0xff]
        %v515 = vld [vmem:[#allocation2 + $0xc0] sm:$0xff]
        %v516 = vld [vmem:[#allocation2 + $0xc8] sm:$0xff]
        %v517 = vld [vmem:[#allocation2 + $0xd0] sm:$0xff]
        %v518 = vld [vmem:[#allocation2 + $0xd8] sm:$0xff]
        %v519 = vld [vmem:[#allocation2 + $0xe0] sm:$0xff]
        %v520 = vld [vmem:[#allocation2 + $0xe8] sm:$0xff]
        %v521 = vld [vmem:[#allocation2 + $0xf0] sm:$0xff]
        %v522 = vld [vmem:[#allocation2 + $0xf8] sm:$0xff]
        %v523 = vld [vmem:[%s377] sm:$0xff]
        %v524 = vld [vmem:[%s377 + $0x8] sm:$0xf]
        %v525 = vld [vmem:[%s377 + $0xc] sm:$0xff]
        %v526 = vld [vmem:[%s377 + $0x14] sm:$0xf]
        %v527 = vld [vmem:[%s377 + $0x18] sm:$0xff]
        %v528 = vld [vmem:[%s377 + $0x20] sm:$0xf]
        %v529 = vld [vmem:[%s377 + $0x24] sm:$0xff]
        %v530 = vld [vmem:[%s377 + $0x2c] sm:$0xf]
        %v531 = vld [vmem:[%s377 + $0x30] sm:$0xff]
        %v532 = vld [vmem:[%s377 + $0x38] sm:$0xf]
        %v533 = vld [vmem:[%s377 + $0x3c] sm:$0xff]
        %v534 = vld [vmem:[%s377 + $0x44] sm:$0xf]
        %v535 = vld [vmem:[%s377 + $0x48] sm:$0xff]
        %v536 = vld [vmem:[%s377 + $0x50] sm:$0xf]
        %v537 = vld [vmem:[%s377 + $0x54] sm:$0xff]
        %v538 = vld [vmem:[%s377 + $0x5c] sm:$0xf]
        %v539 = vld [vmem:[%s377 + $0x60] sm:$0xff]
        %v540 = vld [vmem:[%s377 + $0x68] sm:$0xf]
        %v541 = vld [vmem:[%s377 + $0x6c] sm:$0xff]
        %v542 = vld [vmem:[%s377 + $0x74] sm:$0xf]
        %v543 = vld [vmem:[%s377 + $0x78] sm:$0xff]
        %v544 = vld [vmem:[%s377 + $0x80] sm:$0xf]
        %v545 = vld [vmem:[%s377 + $0x84] sm:$0xff]
        %v546 = vld [vmem:[%s377 + $0x8c] sm:$0xf]
        %v547 = vld [vmem:[%s377 + $0x90] sm:$0xff]
        %v548 = vld [vmem:[%s377 + $0x98] sm:$0xf]
        %v549 = vld [vmem:[%s377 + $0x9c] sm:$0xff]
        %v550 = vld [vmem:[%s377 + $0xa4] sm:$0xf]
        %v551 = vld [vmem:[%s377 + $0xa8] sm:$0xff]
        %v552 = vld [vmem:[%s377 + $0xb0] sm:$0xf]
        %v553 = vld [vmem:[%s377 + $0xb4] sm:$0xff]
        %v554 = vld [vmem:[%s377 + $0xbc] sm:$0xf]
        %v555 = vld [vmem:[%s377 + $0xc0] sm:$0xff]
        %v556 = vld [vmem:[%s377 + $0xc8] sm:$0xf]
        %v557 = vld [vmem:[%s377 + $0xcc] sm:$0xff]
        %v558 = vld [vmem:[%s377 + $0xd4] sm:$0xf]
        %v559 = vld [vmem:[%s377 + $0xd8] sm:$0xff]
        %v560 = vld [vmem:[%s377 + $0xe0] sm:$0xf]
        %v561 = vld [vmem:[%s377 + $0xe4] sm:$0xff]
        %v562 = vld [vmem:[%s377 + $0xec] sm:$0xf]
        %v563 = vld [vmem:[%s377 + $0xf0] sm:$0xff]
        %v564 = vld [vmem:[%s377 + $0xf8] sm:$0xf]
        %v565 = vld [vmem:[%s377 + $0xfc] sm:$0xff]
        %v566 = vld [vmem:[%s377 + $0x104] sm:$0xf]
        %v567 = vld [vmem:[%s377 + $0x108] sm:$0xff]
        %v568 = vld [vmem:[%s377 + $0x110] sm:$0xf]
        %v569 = vld [vmem:[%s377 + $0x114] sm:$0xff]
        %v570 = vld [vmem:[%s377 + $0x11c] sm:$0xf]
        %v571 = vld [vmem:[%s377 + $0x120] sm:$0xff]
        %v572 = vld [vmem:[%s377 + $0x128] sm:$0xf]
        %v573 = vld [vmem:[%s377 + $0x12c] sm:$0xff]
        %v574 = vld [vmem:[%s377 + $0x134] sm:$0xf]
        %v575 = vld [vmem:[%s377 + $0x138] sm:$0xff]
        %v576 = vld [vmem:[%s377 + $0x140] sm:$0xf]
        %v577 = vld [vmem:[%s377 + $0x144] sm:$0xff]
        %v578 = vld [vmem:[%s377 + $0x14c] sm:$0xf]
        %v579 = vld [vmem:[%s377 + $0x150] sm:$0xff]
        %v580 = vld [vmem:[%s377 + $0x158] sm:$0xf]
        %v581 = vld [vmem:[%s377 + $0x15c] sm:$0xff]
        %v582 = vld [vmem:[%s377 + $0x164] sm:$0xf]
        %v583 = vld [vmem:[%s377 + $0x168] sm:$0xff]
        %v584 = vld [vmem:[%s377 + $0x170] sm:$0xf]
        %v585 = vld [vmem:[%s377 + $0x174] sm:$0xff]
        %v586 = vld [vmem:[%s377 + $0x17c] sm:$0xf]
        %v587 = vld [vmem:[%s432] sm:$0xf]
        %v588 = vld [vmem:[%s432 + $0x4] sm:$0xf]
        %v589 = vld [vmem:[%s432 + $0x8] sm:$0xf]
        %v590 = vld [vmem:[%s432 + $0xc] sm:$0xf]
        %v591 = vld [vmem:[%s432 + $0x10] sm:$0xf]
        %v592 = vld [vmem:[%s432 + $0x14] sm:$0xf]
        %v593 = vld [vmem:[%s432 + $0x18] sm:$0xf]
        %v594 = vld [vmem:[%s432 + $0x1c] sm:$0xf]
        %v595 = vld [vmem:[%s432 + $0x20] sm:$0xf]
        %v596 = vld [vmem:[%s432 + $0x24] sm:$0xf]
        %v597 = vld [vmem:[%s432 + $0x28] sm:$0xf]
        %v598 = vld [vmem:[%s432 + $0x2c] sm:$0xf]
        %v599 = vld [vmem:[%s432 + $0x30] sm:$0xf]
        %v600 = vld [vmem:[%s432 + $0x34] sm:$0xf]
        %v601 = vld [vmem:[%s432 + $0x38] sm:$0xf]
        %v602 = vld [vmem:[%s432 + $0x3c] sm:$0xf]
        %v603 = vld [vmem:[%s432 + $0x40] sm:$0xf]
        %v604 = vld [vmem:[%s432 + $0x44] sm:$0xf]
        %v605 = vld [vmem:[%s432 + $0x48] sm:$0xf]
        %v606 = vld [vmem:[%s432 + $0x4c] sm:$0xf]
        %v607 = vld [vmem:[%s432 + $0x50] sm:$0xf]
        %v608 = vld [vmem:[%s432 + $0x54] sm:$0xf]
        %v609 = vld [vmem:[%s432 + $0x58] sm:$0xf]
        %v610 = vld [vmem:[%s432 + $0x5c] sm:$0xf]
        %v611 = vld [vmem:[%s432 + $0x60] sm:$0xf]
        %v612 = vld [vmem:[%s432 + $0x64] sm:$0xf]
        %v613 = vld [vmem:[%s432 + $0x68] sm:$0xf]
        %v614 = vld [vmem:[%s432 + $0x6c] sm:$0xf]
        %v615 = vld [vmem:[%s432 + $0x70] sm:$0xf]
        %v616 = vld [vmem:[%s432 + $0x74] sm:$0xf]
        %v617 = vld [vmem:[%s432 + $0x78] sm:$0xf]
        %v618 = vld [vmem:[%s432 + $0x7c] sm:$0xf]
        %v619 = vld [vmem:[%s432 + $0x80] sm:$0xf]
        %v620 = vld [vmem:[%s432 + $0x84] sm:$0xf]
        %v621 = vld [vmem:[%s432 + $0x88] sm:$0xf]
        %v622 = vld [vmem:[%s432 + $0x8c] sm:$0xf]
        %v623 = vld [vmem:[%s432 + $0x90] sm:$0xf]
        %v624 = vld [vmem:[%s432 + $0x94] sm:$0xf]
        %v625 = vld [vmem:[%s432 + $0x98] sm:$0xf]
        %v626 = vld [vmem:[%s432 + $0x9c] sm:$0xf]
        %v627 = vld [vmem:[%s432 + $0xa0] sm:$0xf]
        %v628 = vld [vmem:[%s432 + $0xa4] sm:$0xf]
        %v629 = vld [vmem:[%s432 + $0xa8] sm:$0xf]
        %v630 = vld [vmem:[%s432 + $0xac] sm:$0xf]
        %v631 = vld [vmem:[%s432 + $0xb0] sm:$0xf]
        %v632 = vld [vmem:[%s432 + $0xb4] sm:$0xf]
        %v633 = vld [vmem:[%s432 + $0xb8] sm:$0xf]
        %v634 = vld [vmem:[%s432 + $0xbc] sm:$0xf]
        %v699 = vunpack.c.l.b16 %v523
        %v700 = vunpack.c.h.b16 %v523
        %v701 = vunpack.c.l.b16 %v524
        %v702 = vunpack.c.l.b16 %v525
        %v703 = vunpack.c.h.b16 %v525
        %v704 = vunpack.c.l.b16 %v526
        %v705 = vunpack.c.l.b16 %v527
        %v706 = vunpack.c.h.b16 %v527
        %v707 = vunpack.c.l.b16 %v528
        %v708 = vunpack.c.l.b16 %v529
        %v709 = vunpack.c.h.b16 %v529
        %v710 = vunpack.c.l.b16 %v530
        %v711 = vunpack.c.l.b16 %v531
        %v712 = vunpack.c.h.b16 %v531
        %v713 = vunpack.c.l.b16 %v532
        %v714 = vunpack.c.l.b16 %v533
        %v715 = vunpack.c.h.b16 %v533
        %v716 = vunpack.c.l.b16 %v534
        %v717 = vunpack.c.l.b16 %v535
        %v718 = vunpack.c.h.b16 %v535
        %v719 = vunpack.c.l.b16 %v536
        %v720 = vunpack.c.l.b16 %v537
        %v721 = vunpack.c.h.b16 %v537
        %v722 = vunpack.c.l.b16 %v538
        %v723 = vunpack.c.l.b16 %v539
        %v724 = vunpack.c.h.b16 %v539
        %v725 = vunpack.c.l.b16 %v540
        %v726 = vunpack.c.l.b16 %v541
        %v727 = vunpack.c.h.b16 %v541
        %v728 = vunpack.c.l.b16 %v542
        %v729 = vunpack.c.l.b16 %v543
        %v730 = vunpack.c.h.b16 %v543
        %v731 = vunpack.c.l.b16 %v544
        %v732 = vunpack.c.l.b16 %v545
        %v733 = vunpack.c.h.b16 %v545
        %v734 = vunpack.c.l.b16 %v546
        %v735 = vunpack.c.l.b16 %v547
        %v736 = vunpack.c.h.b16 %v547
        %v737 = vunpack.c.l.b16 %v548
        %v738 = vunpack.c.l.b16 %v549
        %v739 = vunpack.c.h.b16 %v549
        %v740 = vunpack.c.l.b16 %v550
        %v741 = vunpack.c.l.b16 %v551
        %v742 = vunpack.c.h.b16 %v551
        %v743 = vunpack.c.l.b16 %v552
        %v744 = vunpack.c.l.b16 %v553
        %v745 = vunpack.c.h.b16 %v553
        %v746 = vunpack.c.l.b16 %v554
        %v747 = vunpack.c.l.b16 %v555
        %v748 = vunpack.c.h.b16 %v555
        %v749 = vunpack.c.l.b16 %v556
        %v750 = vunpack.c.l.b16 %v557
        %v751 = vunpack.c.h.b16 %v557
        %v752 = vunpack.c.l.b16 %v558
        %v753 = vunpack.c.l.b16 %v559
        %v754 = vunpack.c.h.b16 %v559
        %v755 = vunpack.c.l.b16 %v560
        %v756 = vunpack.c.l.b16 %v561
        %v757 = vunpack.c.h.b16 %v561
        %v758 = vunpack.c.l.b16 %v562
        %v759 = vunpack.c.l.b16 %v563
        %v760 = vunpack.c.h.b16 %v563
        %v761 = vunpack.c.l.b16 %v564
        %v762 = vunpack.c.l.b16 %v565
        %v763 = vunpack.c.h.b16 %v565
        %v764 = vunpack.c.l.b16 %v566
        %v765 = vunpack.c.l.b16 %v567
        %v766 = vunpack.c.h.b16 %v567
        %v767 = vunpack.c.l.b16 %v568
        %v768 = vunpack.c.l.b16 %v569
        %v769 = vunpack.c.h.b16 %v569
        %v770 = vunpack.c.l.b16 %v570
        %v771 = vunpack.c.l.b16 %v571
        %v772 = vunpack.c.h.b16 %v571
        %v773 = vunpack.c.l.b16 %v572
        %v774 = vunpack.c.l.b16 %v573
        %v775 = vunpack.c.h.b16 %v573
        %v776 = vunpack.c.l.b16 %v574
        %v777 = vunpack.c.l.b16 %v575
        %v778 = vunpack.c.h.b16 %v575
        %v779 = vunpack.c.l.b16 %v576
        %v780 = vunpack.c.l.b16 %v577
        %v781 = vunpack.c.h.b16 %v577
        %v782 = vunpack.c.l.b16 %v578
        %v783 = vunpack.c.l.b16 %v579
        %v784 = vunpack.c.h.b16 %v579
        %v785 = vunpack.c.l.b16 %v580
        %v786 = vunpack.c.l.b16 %v581
        %v787 = vunpack.c.h.b16 %v581
        %v788 = vunpack.c.l.b16 %v582
        %v789 = vunpack.c.l.b16 %v583
        %v790 = vunpack.c.h.b16 %v583
        %v791 = vunpack.c.l.b16 %v584
        %v792 = vunpack.c.l.b16 %v585
        %v793 = vunpack.c.h.b16 %v585
        %v794 = vunpack.c.l.b16 %v586
        %v795 = vpack.c.b16 %v702, %v699
        %v796 = vpack.c.b16 %v703, %v700
        %v797 = vpack.c.b16 %v704, %v701
        %v798 = vpack.c.b16 %v708, %v705
        %v799 = vpack.c.b16 %v709, %v706
        %v800 = vpack.c.b16 %v710, %v707
        %v801 = vpack.c.b16 %v714, %v711
        %v802 = vpack.c.b16 %v715, %v712
        %v803 = vpack.c.b16 %v716, %v713
        %v804 = vpack.c.b16 %v720, %v717
        %v805 = vpack.c.b16 %v721, %v718
        %v806 = vpack.c.b16 %v722, %v719
        %v807 = vpack.c.b16 %v726, %v723
        %v808 = vpack.c.b16 %v727, %v724
        %v809 = vpack.c.b16 %v728, %v725
        %v810 = vpack.c.b16 %v732, %v729
        %v811 = vpack.c.b16 %v733, %v730
        %v812 = vpack.c.b16 %v734, %v731
        %v813 = vpack.c.b16 %v738, %v735
        %v814 = vpack.c.b16 %v739, %v736
        %v815 = vpack.c.b16 %v740, %v737
        %v816 = vpack.c.b16 %v744, %v741
        %v817 = vpack.c.b16 %v745, %v742
        %v818 = vpack.c.b16 %v746, %v743
        %v819 = vpack.c.b16 %v750, %v747
        %v820 = vpack.c.b16 %v751, %v748
        %v821 = vpack.c.b16 %v752, %v749
        %v822 = vpack.c.b16 %v756, %v753
        %v823 = vpack.c.b16 %v757, %v754
        %v824 = vpack.c.b16 %v758, %v755
        %v825 = vpack.c.b16 %v762, %v759
        %v826 = vpack.c.b16 %v763, %v760
        %v827 = vpack.c.b16 %v764, %v761
        %v828 = vpack.c.b16 %v768, %v765
        %v829 = vpack.c.b16 %v769, %v766
        %v830 = vpack.c.b16 %v770, %v767
        %v831 = vpack.c.b16 %v774, %v771
        %v832 = vpack.c.b16 %v775, %v772
        %v833 = vpack.c.b16 %v776, %v773
        %v834 = vpack.c.b16 %v780, %v777
        %v835 = vpack.c.b16 %v781, %v778
        %v836 = vpack.c.b16 %v782, %v779
        %v837 = vpack.c.b16 %v786, %v783
        %v838 = vpack.c.b16 %v787, %v784
        %v839 = vpack.c.b16 %v788, %v785
        %v840 = vpack.c.b16 %v792, %v789
        %v841 = vpack.c.b16 %v793, %v790
        %v842 = vpack.c.b16 %v794, %v791
        %v939 = vunpack.c.l.b16 %v587
        %v940 = vunpack.c.l.b16 %v588
        %v941 = vunpack.c.l.b16 %v589
        %v942 = vunpack.c.l.b16 %v590
        %v943 = vunpack.c.l.b16 %v591
        %v944 = vunpack.c.l.b16 %v592
        %v945 = vunpack.c.l.b16 %v593
        %v946 = vunpack.c.l.b16 %v594
        %v947 = vunpack.c.l.b16 %v595
        %v948 = vunpack.c.l.b16 %v596
        %v949 = vunpack.c.l.b16 %v597
        %v950 = vunpack.c.l.b16 %v598
        %v951 = vunpack.c.l.b16 %v599
        %v952 = vunpack.c.l.b16 %v600
        %v953 = vunpack.c.l.b16 %v601
        %v954 = vunpack.c.l.b16 %v602
        %v955 = vunpack.c.l.b16 %v603
        %v956 = vunpack.c.l.b16 %v604
        %v957 = vunpack.c.l.b16 %v605
        %v958 = vunpack.c.l.b16 %v606
        %v959 = vunpack.c.l.b16 %v607
        %v960 = vunpack.c.l.b16 %v608
        %v961 = vunpack.c.l.b16 %v609
        %v962 = vunpack.c.l.b16 %v610
        %v963 = vunpack.c.l.b16 %v611
        %v964 = vunpack.c.l.b16 %v612
        %v965 = vunpack.c.l.b16 %v613
        %v966 = vunpack.c.l.b16 %v614
        %v967 = vunpack.c.l.b16 %v615
        %v968 = vunpack.c.l.b16 %v616
        %v969 = vunpack.c.l.b16 %v617
        %v970 = vunpack.c.l.b16 %v618
        %v971 = vunpack.c.l.b16 %v619
        %v972 = vunpack.c.l.b16 %v620
        %v973 = vunpack.c.l.b16 %v621
        %v974 = vunpack.c.l.b16 %v622
        %v975 = vunpack.c.l.b16 %v623
        %v976 = vunpack.c.l.b16 %v624
        %v977 = vunpack.c.l.b16 %v625
        %v978 = vunpack.c.l.b16 %v626
        %v979 = vunpack.c.l.b16 %v627
        %v980 = vunpack.c.l.b16 %v628
        %v981 = vunpack.c.l.b16 %v629
        %v982 = vunpack.c.l.b16 %v630
        %v983 = vunpack.c.l.b16 %v631
        %v984 = vunpack.c.l.b16 %v632
        %v985 = vunpack.c.l.b16 %v633
        %v986 = vunpack.c.l.b16 %v634
        %v987 = vpack.c.b16 %v940, %v939
        %v988 = vpack.c.b16 %v942, %v941
        %v989 = vpack.c.b16 %v944, %v943
        %v990 = vpack.c.b16 %v946, %v945
        %v991 = vpack.c.b16 %v948, %v947
        %v992 = vpack.c.b16 %v950, %v949
        %v993 = vpack.c.b16 %v952, %v951
        %v994 = vpack.c.b16 %v954, %v953
        %v995 = vpack.c.b16 %v956, %v955
        %v996 = vpack.c.b16 %v958, %v957
        %v997 = vpack.c.b16 %v960, %v959
        %v998 = vpack.c.b16 %v962, %v961
        %v999 = vpack.c.b16 %v964, %v963
        %v1000 = vpack.c.b16 %v966, %v965
        %v1001 = vpack.c.b16 %v968, %v967
        %v1002 = vpack.c.b16 %v970, %v969
        %v1003 = vpack.c.b16 %v972, %v971
        %v1004 = vpack.c.b16 %v974, %v973
        %v1005 = vpack.c.b16 %v976, %v975
        %v1006 = vpack.c.b16 %v978, %v977
        %v1007 = vpack.c.b16 %v980, %v979
        %v1008 = vpack.c.b16 %v982, %v981
        %v1009 = vpack.c.b16 %v984, %v983
        %v1010 = vpack.c.b16 %v986, %v985
        %1035 = vmatpush.bf16.msra.mxu0 %v994
        %1036 = vmatpush.bf16.msra.mxu0 %v993
        %1037 = vmatpush.bf16.msra.mxu0 %v992
        %1038 = vmatpush.bf16.msra.mxu0 %v991
        %1039 = vmatpush.bf16.msra.mxu0 %v990
        %1040 = vmatpush.bf16.msra.mxu0 %v989
        %1041 = vmatpush.bf16.msra.mxu0 %v988
        %1042 = vmatpush.bf16.msra.mxu0 %v987
        %1043 = vmatmul.bf16.gmra.mxu0 %v795
        %v1044 = vpop.f32.mrf.mxu0
        %v1045 = vadd.f32 0.0, %v1044
        %v1046 = vpop.f32.mrf.mxu0
        %v1047 = vadd.f32 0.0, %v1046
        %1048 = vmatmul.bf16.gmra.mxu0 %v798
        %v1049 = vpop.f32.mrf.mxu0
        %v1050 = vadd.f32 0.0, %v1049
        %v1051 = vpop.f32.mrf.mxu0
        %v1052 = vadd.f32 0.0, %v1051
        %1053 = vmatmul.bf16.gmra.mxu0 %v801
        %v1054 = vpop.f32.mrf.mxu0
        %v1055 = vadd.f32 0.0, %v1054
        %v1056 = vpop.f32.mrf.mxu0
        %v1057 = vadd.f32 0.0, %v1056
        %1058 = vmatmul.bf16.gmra.mxu0 %v804
        %v1059 = vpop.f32.mrf.mxu0
        %v1060 = vadd.f32 0.0, %v1059
        %v1061 = vpop.f32.mrf.mxu0
        %v1062 = vadd.f32 0.0, %v1061
        %1063 = vmatmul.bf16.gmra.mxu0 %v807
        %v1064 = vpop.f32.mrf.mxu0
        %v1065 = vadd.f32 0.0, %v1064
        %v1066 = vpop.f32.mrf.mxu0
        %v1067 = vadd.f32 0.0, %v1066
        %1068 = vmatmul.bf16.gmra.mxu0 %v810
        %v1069 = vpop.f32.mrf.mxu0
        %v1070 = vadd.f32 0.0, %v1069
        %v1071 = vpop.f32.mrf.mxu0
        %v1072 = vadd.f32 0.0, %v1071
        %1073 = vmatmul.bf16.gmra.mxu0 %v813
        %v1074 = vpop.f32.mrf.mxu0
        %v1075 = vadd.f32 0.0, %v1074
        %v1076 = vpop.f32.mrf.mxu0
        %v1077 = vadd.f32 0.0, %v1076
        %1078 = vmatmul.bf16.gmra.mxu0 %v816
        %v1079 = vpop.f32.mrf.mxu0
        %v1080 = vadd.f32 0.0, %v1079
        %v1081 = vpop.f32.mrf.mxu0
        %v1082 = vadd.f32 0.0, %v1081
        %1083 = vmatmul.bf16.gmra.mxu0 %v819
        %v1084 = vpop.f32.mrf.mxu0
        %v1085 = vadd.f32 0.0, %v1084
        %v1086 = vpop.f32.mrf.mxu0
        %v1087 = vadd.f32 0.0, %v1086
        %1088 = vmatmul.bf16.gmra.mxu0 %v822
        %v1089 = vpop.f32.mrf.mxu0
        %v1090 = vadd.f32 0.0, %v1089
        %v1091 = vpop.f32.mrf.mxu0
        %v1092 = vadd.f32 0.0, %v1091
        %1093 = vmatmul.bf16.gmra.mxu0 %v825
        %v1094 = vpop.f32.mrf.mxu0
        %v1095 = vadd.f32 0.0, %v1094
        %v1096 = vpop.f32.mrf.mxu0
        %v1097 = vadd.f32 0.0, %v1096
        %1098 = vmatmul.bf16.gmra.mxu0 %v828
        %v1099 = vpop.f32.mrf.mxu0
        %v1100 = vadd.f32 0.0, %v1099
        %v1101 = vpop.f32.mrf.mxu0
        %v1102 = vadd.f32 0.0, %v1101
        %1103 = vmatmul.bf16.gmra.mxu0 %v831
        %v1104 = vpop.f32.mrf.mxu0
        %v1105 = vadd.f32 0.0, %v1104
        %v1106 = vpop.f32.mrf.mxu0
        %v1107 = vadd.f32 0.0, %v1106
        %1108 = vmatmul.bf16.gmra.mxu0 %v834
        %v1109 = vpop.f32.mrf.mxu0
        %v1110 = vadd.f32 0.0, %v1109
        %v1111 = vpop.f32.mrf.mxu0
        %v1112 = vadd.f32 0.0, %v1111
        %1113 = vmatmul.bf16.gmra.mxu0 %v837
        %v1114 = vpop.f32.mrf.mxu0
        %v1115 = vadd.f32 0.0, %v1114
        %v1116 = vpop.f32.mrf.mxu0
        %v1117 = vadd.f32 0.0, %v1116
        %1118 = vmatmul.bf16.gmra.mxu0 %v840
        %v1119 = vpop.f32.mrf.mxu0
        %v1120 = vadd.f32 0.0, %v1119
        %v1121 = vpop.f32.mrf.mxu0
        %v1122 = vadd.f32 0.0, %v1121
        %1123 = vdwg.mxu0
        %1124 = vmatpush.bf16.msra.mxu0 %v1002
        %1125 = vmatpush.bf16.msra.mxu0 %v1001
        %1126 = vmatpush.bf16.msra.mxu0 %v1000
        %1127 = vmatpush.bf16.msra.mxu0 %v999
        %1128 = vmatpush.bf16.msra.mxu0 %v998
        %1129 = vmatpush.bf16.msra.mxu0 %v997
        %1130 = vmatpush.bf16.msra.mxu0 %v996
        %1131 = vmatpush.bf16.msra.mxu0 %v995
        %1132 = vmatmul.bf16.gmra.mxu0 %v796
        %v1133 = vpop.f32.mrf.mxu0
        %v1134 = vadd.f32 %v1045, %v1133
        %v1135 = vpop.f32.mrf.mxu0
        %v1136 = vadd.f32 %v1047, %v1135
        %1137 = vmatmul.bf16.gmra.mxu0 %v799
        %v1138 = vpop.f32.mrf.mxu0
        %v1139 = vadd.f32 %v1050, %v1138
        %v1140 = vpop.f32.mrf.mxu0
        %v1141 = vadd.f32 %v1052, %v1140
        %1142 = vmatmul.bf16.gmra.mxu0 %v802
        %v1143 = vpop.f32.mrf.mxu0
        %v1144 = vadd.f32 %v1055, %v1143
        %v1145 = vpop.f32.mrf.mxu0
        %v1146 = vadd.f32 %v1057, %v1145
        %1147 = vmatmul.bf16.gmra.mxu0 %v805
        %v1148 = vpop.f32.mrf.mxu0
        %v1149 = vadd.f32 %v1060, %v1148
        %v1150 = vpop.f32.mrf.mxu0
        %v1151 = vadd.f32 %v1062, %v1150
        %1152 = vmatmul.bf16.gmra.mxu0 %v808
        %v1153 = vpop.f32.mrf.mxu0
        %v1154 = vadd.f32 %v1065, %v1153
        %v1155 = vpop.f32.mrf.mxu0
        %v1156 = vadd.f32 %v1067, %v1155
        %1157 = vmatmul.bf16.gmra.mxu0 %v811
        %v1158 = vpop.f32.mrf.mxu0
        %v1159 = vadd.f32 %v1070, %v1158
        %v1160 = vpop.f32.mrf.mxu0
        %v1161 = vadd.f32 %v1072, %v1160
        %1162 = vmatmul.bf16.gmra.mxu0 %v814
        %v1163 = vpop.f32.mrf.mxu0
        %v1164 = vadd.f32 %v1075, %v1163
        %v1165 = vpop.f32.mrf.mxu0
        %v1166 = vadd.f32 %v1077, %v1165
        %1167 = vmatmul.bf16.gmra.mxu0 %v817
        %v1168 = vpop.f32.mrf.mxu0
        %v1169 = vadd.f32 %v1080, %v1168
        %v1170 = vpop.f32.mrf.mxu0
        %v1171 = vadd.f32 %v1082, %v1170
        %1172 = vmatmul.bf16.gmra.mxu0 %v820
        %v1173 = vpop.f32.mrf.mxu0
        %v1174 = vadd.f32 %v1085, %v1173
        %v1175 = vpop.f32.mrf.mxu0
        %v1176 = vadd.f32 %v1087, %v1175
        %1177 = vmatmul.bf16.gmra.mxu0 %v823
        %v1178 = vpop.f32.mrf.mxu0
        %v1179 = vadd.f32 %v1090, %v1178
        %v1180 = vpop.f32.mrf.mxu0
        %v1181 = vadd.f32 %v1092, %v1180
        %1182 = vmatmul.bf16.gmra.mxu0 %v826
        %v1183 = vpop.f32.mrf.mxu0
        %v1184 = vadd.f32 %v1095, %v1183
        %v1185 = vpop.f32.mrf.mxu0
        %v1186 = vadd.f32 %v1097, %v1185
        %1187 = vmatmul.bf16.gmra.mxu0 %v829
        %v1188 = vpop.f32.mrf.mxu0
        %v1189 = vadd.f32 %v1100, %v1188
        %v1190 = vpop.f32.mrf.mxu0
        %v1191 = vadd.f32 %v1102, %v1190
        %1192 = vmatmul.bf16.gmra.mxu0 %v832
        %v1193 = vpop.f32.mrf.mxu0
        %v1194 = vadd.f32 %v1105, %v1193
        %v1195 = vpop.f32.mrf.mxu0
        %v1196 = vadd.f32 %v1107, %v1195
        %1197 = vmatmul.bf16.gmra.mxu0 %v835
        %v1198 = vpop.f32.mrf.mxu0
        %v1199 = vadd.f32 %v1110, %v1198
        %v1200 = vpop.f32.mrf.mxu0
        %v1201 = vadd.f32 %v1112, %v1200
        %1202 = vmatmul.bf16.gmra.mxu0 %v838
        %v1203 = vpop.f32.mrf.mxu0
        %v1204 = vadd.f32 %v1115, %v1203
        %v1205 = vpop.f32.mrf.mxu0
        %v1206 = vadd.f32 %v1117, %v1205
        %1207 = vmatmul.bf16.gmra.mxu0 %v841
        %v1208 = vpop.f32.mrf.mxu0
        %v1209 = vadd.f32 %v1120, %v1208
        %v1210 = vpop.f32.mrf.mxu0
        %v1211 = vadd.f32 %v1122, %v1210
        %1212 = vdwg.mxu0
        %1213 = vmatpush.bf16.msra.mxu0 %v1010
        %1214 = vmatpush.bf16.msra.mxu0 %v1009
        %1215 = vmatpush.bf16.msra.mxu0 %v1008
        %1216 = vmatpush.bf16.msra.mxu0 %v1007
        %1217 = vmatpush.bf16.msra.mxu0 %v1006
        %1218 = vmatpush.bf16.msra.mxu0 %v1005
        %1219 = vmatpush.bf16.msra.mxu0 %v1004
        %1220 = vmatpush.bf16.msra.mxu0 %v1003
        %1221 = vmatmul.bf16.gmra.mxu0 %v797
        %v1222 = vpop.f32.mrf.mxu0
        %v1223 = vadd.f32 %v1134, %v1222
        %v1224 = vpop.f32.mrf.mxu0
        %v1225 = vadd.f32 %v1136, %v1224
        %1226 = vmatmul.bf16.gmra.mxu0 %v800
        %v1227 = vpop.f32.mrf.mxu0
        %v1228 = vadd.f32 %v1139, %v1227
        %v1229 = vpop.f32.mrf.mxu0
        %v1230 = vadd.f32 %v1141, %v1229
        %1231 = vmatmul.bf16.gmra.mxu0 %v803
        %v1232 = vpop.f32.mrf.mxu0
        %v1233 = vadd.f32 %v1144, %v1232
        %v1234 = vpop.f32.mrf.mxu0
        %v1235 = vadd.f32 %v1146, %v1234
        %1236 = vmatmul.bf16.gmra.mxu0 %v806
        %v1237 = vpop.f32.mrf.mxu0
        %v1238 = vadd.f32 %v1149, %v1237
        %v1239 = vpop.f32.mrf.mxu0
        %v1240 = vadd.f32 %v1151, %v1239
        %1241 = vmatmul.bf16.gmra.mxu0 %v809
        %v1242 = vpop.f32.mrf.mxu0
        %v1243 = vadd.f32 %v1154, %v1242
        %v1244 = vpop.f32.mrf.mxu0
        %v1245 = vadd.f32 %v1156, %v1244
        %1246 = vmatmul.bf16.gmra.mxu0 %v812
        %v1247 = vpop.f32.mrf.mxu0
        %v1248 = vadd.f32 %v1159, %v1247
        %v1249 = vpop.f32.mrf.mxu0
        %v1250 = vadd.f32 %v1161, %v1249
        %1251 = vmatmul.bf16.gmra.mxu0 %v815
        %v1252 = vpop.f32.mrf.mxu0
        %v1253 = vadd.f32 %v1164, %v1252
        %v1254 = vpop.f32.mrf.mxu0
        %v1255 = vadd.f32 %v1166, %v1254
        %1256 = vmatmul.bf16.gmra.mxu0 %v818
        %v1257 = vpop.f32.mrf.mxu0
        %v1258 = vadd.f32 %v1169, %v1257
        %v1259 = vpop.f32.mrf.mxu0
        %v1260 = vadd.f32 %v1171, %v1259
        %1261 = vmatmul.bf16.gmra.mxu0 %v821
        %v1262 = vpop.f32.mrf.mxu0
        %v1263 = vadd.f32 %v1174, %v1262
        %v1264 = vpop.f32.mrf.mxu0
        %v1265 = vadd.f32 %v1176, %v1264
        %1266 = vmatmul.bf16.gmra.mxu0 %v824
        %v1267 = vpop.f32.mrf.mxu0
        %v1268 = vadd.f32 %v1179, %v1267
        %v1269 = vpop.f32.mrf.mxu0
        %v1270 = vadd.f32 %v1181, %v1269
        %1271 = vmatmul.bf16.gmra.mxu0 %v827
        %v1272 = vpop.f32.mrf.mxu0
        %v1273 = vadd.f32 %v1184, %v1272
        %v1274 = vpop.f32.mrf.mxu0
        %v1275 = vadd.f32 %v1186, %v1274
        %1276 = vmatmul.bf16.gmra.mxu0 %v830
        %v1277 = vpop.f32.mrf.mxu0
        %v1278 = vadd.f32 %v1189, %v1277
        %v1279 = vpop.f32.mrf.mxu0
        %v1280 = vadd.f32 %v1191, %v1279
        %1281 = vmatmul.bf16.gmra.mxu0 %v833
        %v1282 = vpop.f32.mrf.mxu0
        %v1283 = vadd.f32 %v1194, %v1282
        %v1284 = vpop.f32.mrf.mxu0
        %v1285 = vadd.f32 %v1196, %v1284
        %1286 = vmatmul.bf16.gmra.mxu0 %v836
        %v1287 = vpop.f32.mrf.mxu0
        %v1288 = vadd.f32 %v1199, %v1287
        %v1289 = vpop.f32.mrf.mxu0
        %v1290 = vadd.f32 %v1201, %v1289
        %1291 = vmatmul.bf16.gmra.mxu0 %v839
        %v1292 = vpop.f32.mrf.mxu0
        %v1293 = vadd.f32 %v1204, %v1292
        %v1294 = vpop.f32.mrf.mxu0
        %v1295 = vadd.f32 %v1206, %v1294
        %1296 = vmatmul.bf16.gmra.mxu0 %v842
        %v1297 = vpop.f32.mrf.mxu0
        %v1298 = vadd.f32 %v1209, %v1297
        %v1299 = vpop.f32.mrf.mxu0
        %v1300 = vadd.f32 %v1211, %v1299
        %1301 = vdwg.mxu0
        %v1302 = vadd.f32 %v491, %v1223
        %v1303 = vadd.f32 %v492, %v1225
        %v1304 = vadd.f32 %v493, %v1228
        %v1305 = vadd.f32 %v494, %v1230
        %v1306 = vadd.f32 %v495, %v1233
        %v1307 = vadd.f32 %v496, %v1235
        %v1308 = vadd.f32 %v497, %v1238
        %v1309 = vadd.f32 %v498, %v1240
        %v1310 = vadd.f32 %v499, %v1243
        %v1311 = vadd.f32 %v500, %v1245
        %v1312 = vadd.f32 %v501, %v1248
        %v1313 = vadd.f32 %v502, %v1250
        %v1314 = vadd.f32 %v503, %v1253
        %v1315 = vadd.f32 %v504, %v1255
        %v1316 = vadd.f32 %v505, %v1258
        %v1317 = vadd.f32 %v506, %v1260
        %v1318 = vadd.f32 %v507, %v1263
        %v1319 = vadd.f32 %v508, %v1265
        %v1320 = vadd.f32 %v509, %v1268
        %v1321 = vadd.f32 %v510, %v1270
        %v1322 = vadd.f32 %v511, %v1273
        %v1323 = vadd.f32 %v512, %v1275
        %v1324 = vadd.f32 %v513, %v1278
        %v1325 = vadd.f32 %v514, %v1280
        %v1326 = vadd.f32 %v515, %v1283
        %v1327 = vadd.f32 %v516, %v1285
        %v1328 = vadd.f32 %v517, %v1288
        %v1329 = vadd.f32 %v518, %v1290
        %v1330 = vadd.f32 %v519, %v1293
        %v1331 = vadd.f32 %v520, %v1295
        %v1332 = vadd.f32 %v521, %v1298
        %v1333 = vadd.f32 %v522, %v1300
        %1334 = vst [vmem:[#allocation2] sm:$0xff] %v1302
        %1335 = vst [vmem:[#allocation2 + $0x8] sm:$0xff] %v1303
        %1336 = vst [vmem:[#allocation2 + $0x10] sm:$0xff] %v1304
        %1337 = vst [vmem:[#allocation2 + $0x18] sm:$0xff] %v1305
        %1338 = vst [vmem:[#allocation2 + $0x20] sm:$0xff] %v1306
        %1339 = vst [vmem:[#allocation2 + $0x28] sm:$0xff] %v1307
        %1340 = vst [vmem:[#allocation2 + $0x30] sm:$0xff] %v1308
        %1341 = vst [vmem:[#allocation2 + $0x38] sm:$0xff] %v1309
        %1342 = vst [vmem:[#allocation2 + $0x40] sm:$0xff] %v1310
        %1343 = vst [vmem:[#allocation2 + $0x48] sm:$0xff] %v1311
        %1344 = vst [vmem:[#allocation2 + $0x50] sm:$0xff] %v1312
        %1345 = vst [vmem:[#allocation2 + $0x58] sm:$0xff] %v1313
        %1346 = vst [vmem:[#allocation2 + $0x60] sm:$0xff] %v1314
        %1347 = vst [vmem:[#allocation2 + $0x68] sm:$0xff] %v1315
        %1348 = vst [vmem:[#allocation2 + $0x70] sm:$0xff] %v1316
        %1349 = vst [vmem:[#allocation2 + $0x78] sm:$0xff] %v1317
        %1350 = vst [vmem:[#allocation2 + $0x80] sm:$0xff] %v1318
        %1351 = vst [vmem:[#allocation2 + $0x88] sm:$0xff] %v1319
        %1352 = vst [vmem:[#allocation2 + $0x90] sm:$0xff] %v1320
        %1353 = vst [vmem:[#allocation2 + $0x98] sm:$0xff] %v1321
        %1354 = vst [vmem:[#allocation2 + $0xa0] sm:$0xff] %v1322
        %1355 = vst [vmem:[#allocation2 + $0xa8] sm:$0xff] %v1323
        %1356 = vst [vmem:[#allocation2 + $0xb0] sm:$0xff] %v1324
        %1357 = vst [vmem:[#allocation2 + $0xb8] sm:$0xff] %v1325
        %1358 = vst [vmem:[#allocation2 + $0xc0] sm:$0xff] %v1326
        %1359 = vst [vmem:[#allocation2 + $0xc8] sm:$0xff] %v1327
        %1360 = vst [vmem:[#allocation2 + $0xd0] sm:$0xff] %v1328
        %1361 = vst [vmem:[#allocation2 + $0xd8] sm:$0xff] %v1329
        %1362 = vst [vmem:[#allocation2 + $0xe0] sm:$0xff] %v1330
        %1363 = vst [vmem:[#allocation2 + $0xe8] sm:$0xff] %v1331
        %1364 = vst [vmem:[#allocation2 + $0xf0] sm:$0xff] %v1332
        %1365 = vst [vmem:[#allocation2 + $0xf8] sm:$0xff] %v1333
        %p1366 = scmp.eq.s32.totalorder %s23, 2
        // Predicated region
        $region59: #{resnet_forward.25} parent=49 // pred_check
          %p1367 = pneg %p1366
        $region60: #{resnet_forward.25} parent=49 // pred_check_branch
          %1369 = sbr.rel (%p1367) target = $region62
        $region61: #{resnet_forward.25} parent=49 // pred_region
          %v1370 = vld [vmem:[#allocation2] sm:$0xff]
          %v1371 = vld [vmem:[#allocation2 + $0x8] sm:$0xff]
          %v1372 = vld [vmem:[#allocation2 + $0x10] sm:$0xff]
          %v1373 = vld [vmem:[#allocation2 + $0x18] sm:$0xff]
          %v1374 = vld [vmem:[#allocation2 + $0x20] sm:$0xff]
          %v1375 = vld [vmem:[#allocation2 + $0x28] sm:$0xff]
          %v1376 = vld [vmem:[#allocation2 + $0x30] sm:$0xff]
          %v1377 = vld [vmem:[#allocation2 + $0x38] sm:$0xff]
          %v1378 = vld [vmem:[#allocation2 + $0x40] sm:$0xff]
          %v1379 = vld [vmem:[#allocation2 + $0x48] sm:$0xff]
          %v1380 = vld [vmem:[#allocation2 + $0x50] sm:$0xff]
          %v1381 = vld [vmem:[#allocation2 + $0x58] sm:$0xff]
          %v1382 = vld [vmem:[#allocation2 + $0x60] sm:$0xff]
          %v1383 = vld [vmem:[#allocation2 + $0x68] sm:$0xff]
          %v1384 = vld [vmem:[#allocation2 + $0x70] sm:$0xff]
          %v1385 = vld [vmem:[#allocation2 + $0x78] sm:$0xff]
          %v1386 = vld [vmem:[#allocation2 + $0x80] sm:$0xff]
          %v1387 = vld [vmem:[#allocation2 + $0x88] sm:$0xff]
          %v1388 = vld [vmem:[#allocation2 + $0x90] sm:$0xff]
          %v1389 = vld [vmem:[#allocation2 + $0x98] sm:$0xff]
          %v1390 = vld [vmem:[#allocation2 + $0xa0] sm:$0xff]
          %v1391 = vld [vmem:[#allocation2 + $0xa8] sm:$0xff]
          %v1392 = vld [vmem:[#allocation2 + $0xb0] sm:$0xff]
          %v1393 = vld [vmem:[#allocation2 + $0xb8] sm:$0xff]
          %v1394 = vld [vmem:[#allocation2 + $0xc0] sm:$0xff]
          %v1395 = vld [vmem:[#allocation2 + $0xc8] sm:$0xff]
          %v1396 = vld [vmem:[#allocation2 + $0xd0] sm:$0xff]
          %v1397 = vld [vmem:[#allocation2 + $0xd8] sm:$0xff]
          %v1398 = vld [vmem:[#allocation2 + $0xe0] sm:$0xff]
          %v1399 = vld [vmem:[#allocation2 + $0xe8] sm:$0xff]
          %v1400 = vld [vmem:[#allocation2 + $0xf0] sm:$0xff]
          %v1401 = vld [vmem:[#allocation2 + $0xf8] sm:$0xff]
          %1402 = vst [vmem:[%s441] sm:$0xff] %v1370
          %1403 = vst [vmem:[%s441 + $0x8] sm:$0xff] %v1371
          %1404 = vst [vmem:[%s441 + $0x10] sm:$0xff] %v1372
          %1405 = vst [vmem:[%s441 + $0x18] sm:$0xff] %v1373
          %1406 = vst [vmem:[%s441 + $0x20] sm:$0xff] %v1374
          %1407 = vst [vmem:[%s441 + $0x28] sm:$0xff] %v1375
          %1408 = vst [vmem:[%s441 + $0x30] sm:$0xff] %v1376
          %1409 = vst [vmem:[%s441 + $0x38] sm:$0xff] %v1377
          %1410 = vst [vmem:[%s441 + $0x40] sm:$0xff] %v1378
          %1411 = vst [vmem:[%s441 + $0x48] sm:$0xff] %v1379
          %1412 = vst [vmem:[%s441 + $0x50] sm:$0xff] %v1380
          %1413 = vst [vmem:[%s441 + $0x58] sm:$0xff] %v1381
          %1414 = vst [vmem:[%s441 + $0x60] sm:$0xff] %v1382
          %1415 = vst [vmem:[%s441 + $0x68] sm:$0xff] %v1383
          %1416 = vst [vmem:[%s441 + $0x70] sm:$0xff] %v1384
          %1417 = vst [vmem:[%s441 + $0x78] sm:$0xff] %v1385
          %1418 = vst [vmem:[%s441 + $0x80] sm:$0xff] %v1386
          %1419 = vst [vmem:[%s441 + $0x88] sm:$0xff] %v1387
          %1420 = vst [vmem:[%s441 + $0x90] sm:$0xff] %v1388
          %1421 = vst [vmem:[%s441 + $0x98] sm:$0xff] %v1389
          %1422 = vst [vmem:[%s441 + $0xa0] sm:$0xff] %v1390
          %1423 = vst [vmem:[%s441 + $0xa8] sm:$0xff] %v1391
          %1424 = vst [vmem:[%s441 + $0xb0] sm:$0xff] %v1392
          %1425 = vst [vmem:[%s441 + $0xb8] sm:$0xff] %v1393
          %1426 = vst [vmem:[%s441 + $0xc0] sm:$0xff] %v1394
          %1427 = vst [vmem:[%s441 + $0xc8] sm:$0xff] %v1395
          %1428 = vst [vmem:[%s441 + $0xd0] sm:$0xff] %v1396
          %1429 = vst [vmem:[%s441 + $0xd8] sm:$0xff] %v1397
          %1430 = vst [vmem:[%s441 + $0xe0] sm:$0xff] %v1398
          %1431 = vst [vmem:[%s441 + $0xe8] sm:$0xff] %v1399
          %1432 = vst [vmem:[%s441 + $0xf0] sm:$0xff] %v1400
          %1433 = vst [vmem:[%s441 + $0xf8] sm:$0xff] %v1401
          %v1434 = vadd.f32 %v1370, %v1371
          %v1435 = vadd.f32 %v1434, %v1372
          %v1436 = vadd.f32 %v1435, %v1373
          %v1437 = vadd.f32 %v1436, %v1374
          %v1438 = vadd.f32 %v1437, %v1375
          %v1439 = vadd.f32 %v1438, %v1376
          %v1440 = vadd.f32 %v1439, %v1377
          %v1441 = vadd.f32 %v1440, %v1378
          %v1442 = vadd.f32 %v1441, %v1379
          %v1443 = vadd.f32 %v1442, %v1380
          %v1444 = vadd.f32 %v1443, %v1381
          %v1445 = vadd.f32 %v1444, %v1382
          %v1446 = vadd.f32 %v1445, %v1383
          %v1447 = vadd.f32 %v1446, %v1384
          %v1448 = vadd.f32 %v1447, %v1385
          %v1449 = vadd.f32 %v1448, %v1386
          %v1450 = vadd.f32 %v1449, %v1387
          %v1451 = vadd.f32 %v1450, %v1388
          %v1452 = vadd.f32 %v1451, %v1389
          %v1453 = vadd.f32 %v1452, %v1390
          %v1454 = vadd.f32 %v1453, %v1391
          %v1455 = vadd.f32 %v1454, %v1392
          %v1456 = vadd.f32 %v1455, %v1393
          %v1457 = vadd.f32 %v1456, %v1394
          %v1458 = vadd.f32 %v1457, %v1395
          %v1459 = vadd.f32 %v1458, %v1396
          %v1460 = vadd.f32 %v1459, %v1397
          %v1461 = vadd.f32 %v1460, %v1398
          %v1462 = vadd.f32 %v1461, %v1399
          %v1463 = vadd.f32 %v1462, %v1400
          %v1464 = vadd.f32 %v1463, %v1401
          %v1465 = vrot.slane %v1464, 4
          %v1466 = vadd.f32 %v1464, %v1465
          %v1467 = vrot.slane %v1466, 2
          %v1468 = vadd.f32 %v1466, %v1467
          %v1469 = vrot.slane %v1468, 1
          %v1470 = vadd.f32 %v1468, %v1469
          %1471 = vst [vmem:[%s448] sm:$0x1] %v1470
          %v1472 = vmul.f32 %v1370, %v1370
          %v1473 = vmul.f32 %v1371, %v1371
          %v1474 = vmul.f32 %v1372, %v1372
          %v1475 = vmul.f32 %v1373, %v1373
          %v1476 = vmul.f32 %v1374, %v1374
          %v1477 = vmul.f32 %v1375, %v1375
          %v1478 = vmul.f32 %v1376, %v1376
          %v1479 = vmul.f32 %v1377, %v1377
          %v1480 = vmul.f32 %v1378, %v1378
          %v1481 = vmul.f32 %v1379, %v1379
          %v1482 = vmul.f32 %v1380, %v1380
          %v1483 = vmul.f32 %v1381, %v1381
          %v1484 = vmul.f32 %v1382, %v1382
          %v1485 = vmul.f32 %v1383, %v1383
          %v1486 = vmul.f32 %v1384, %v1384
          %v1487 = vmul.f32 %v1385, %v1385
          %v1488 = vmul.f32 %v1386, %v1386
          %v1489 = vmul.f32 %v1387, %v1387
          %v1490 = vmul.f32 %v1388, %v1388
          %v1491 = vmul.f32 %v1389, %v1389
          %v1492 = vmul.f32 %v1390, %v1390
          %v1493 = vmul.f32 %v1391, %v1391
          %v1494 = vmul.f32 %v1392, %v1392
          %v1495 = vmul.f32 %v1393, %v1393
          %v1496 = vmul.f32 %v1394, %v1394
          %v1497 = vmul.f32 %v1395, %v1395
          %v1498 = vmul.f32 %v1396, %v1396
          %v1499 = vmul.f32 %v1397, %v1397
          %v1500 = vmul.f32 %v1398, %v1398
          %v1501 = vmul.f32 %v1399, %v1399
          %v1502 = vmul.f32 %v1400, %v1400
          %v1503 = vmul.f32 %v1401, %v1401
          %v1504 = vadd.f32 %v1472, %v1473
          %v1505 = vadd.f32 %v1504, %v1474
          %v1506 = vadd.f32 %v1505, %v1475
          %v1507 = vadd.f32 %v1506, %v1476
          %v1508 = vadd.f32 %v1507, %v1477
          %v1509 = vadd.f32 %v1508, %v1478
          %v1510 = vadd.f32 %v1509, %v1479
          %v1511 = vadd.f32 %v1510, %v1480
          %v1512 = vadd.f32 %v1511, %v1481
          %v1513 = vadd.f32 %v1512, %v1482
          %v1514 = vadd.f32 %v1513, %v1483
          %v1515 = vadd.f32 %v1514, %v1484
          %v1516 = vadd.f32 %v1515, %v1485
          %v1517 = vadd.f32 %v1516, %v1486
          %v1518 = vadd.f32 %v1517, %v1487
          %v1519 = vadd.f32 %v1518, %v1488
          %v1520 = vadd.f32 %v1519, %v1489
          %v1521 = vadd.f32 %v1520, %v1490
          %v1522 = vadd.f32 %v1521, %v1491
          %v1523 = vadd.f32 %v1522, %v1492
          %v1524 = vadd.f32 %v1523, %v1493
          %v1525 = vadd.f32 %v1524, %v1494
          %v1526 = vadd.f32 %v1525, %v1495
          %v1527 = vadd.f32 %v1526, %v1496
          %v1528 = vadd.f32 %v1527, %v1497
          %v1529 = vadd.f32 %v1528, %v1498
          %v1530 = vadd.f32 %v1529, %v1499
          %v1531 = vadd.f32 %v1530, %v1500
          %v1532 = vadd.f32 %v1531, %v1501
          %v1533 = vadd.f32 %v1532, %v1502
          %v1534 = vadd.f32 %v1533, %v1503
          %v1535 = vrot.slane %v1534, 4
          %v1536 = vadd.f32 %v1534, %v1535
          %v1537 = vrot.slane %v1536, 2
          %v1538 = vadd.f32 %v1536, %v1537
          %v1539 = vrot.slane %v1538, 1
          %v1540 = vadd.f32 %v1538, %v1539
          %1541 = vst [vmem:[%s454] sm:$0x1] %v1540
        $region62: #{resnet_forward.25} parent=49 // pred_fallthru
          _
        %s1542 = smul.u32 32, %s21
        %p1543 = scmp.lt.s32.totalorder %s1542, 63
        %s1544 = scalar_select %p1543, %s1542, 63
        %p1545 = scmp.lt.s32.totalorder %s22, 0
        %s1546 = scalar_select %p1545, %s22, 0
        %s1547 = sadd.s32 %s1546, %s1544
        %s1548 = smul.addr %s1547, 8
        %s1549 = scalar_lea.vmem %s2, %s1548
        %p1550 = scmp.lt.s32.totalorder %s21, 1
        %s1551 = scalar_select %p1550, %s21, 1
        %p1552 = scmp.lt.s32.totalorder %s22, 0
        %s1553 = scalar_select %p1552, %s22, 0
        %s1554 = sadd.s32 %s1553, %s1551
        %s1555 = scalar_lea.vmem %s3, %s1554
        %p1556 = scmp.lt.s32.totalorder %s21, 1
        %s1557 = scalar_select %p1556, %s21, 1
        %p1558 = scmp.lt.s32.totalorder %s22, 0
        %s1559 = scalar_select %p1558, %s22, 0
        %s1560 = sadd.s32 %s1559, %s1557
        %s1561 = scalar_lea.vmem %s4, %s1560
        // Predicated region
        $region63: #{resnet_forward.25} parent=49 // pred_check
          %p1562 = pneg %p111
        $region64: #{resnet_forward.25} parent=49 // pred_check_branch
          %1564 = sbr.rel (%p1562) target = $region66
        $region65: #{resnet_forward.25} parent=49 // pred_region
          %s1565 = smul.u32 32, %s21
        $region66: #{resnet_forward.25} parent=49 // pred_fallthru
          _
        // Predicated region
        $region67: #{resnet_forward.25} parent=49 // pred_check
          %p1566 = pneg %p139
        $region68: #{resnet_forward.25} parent=49 // pred_check_branch
          %1568 = sbr.rel (%p1566) target = $region70
        $region69: #{resnet_forward.25} parent=49 // pred_region
          _
        $region70: #{resnet_forward.25} parent=49 // pred_fallthru
          _
        // Predicated region
        $region71: #{resnet_forward.25} parent=49 // pred_check
          %p1569 = pneg %p167
        $region72: #{resnet_forward.25} parent=49 // pred_check_branch
          %1571 = sbr.rel (%p1569) target = $region74
        $region73: #{resnet_forward.25} parent=49 // pred_region
          _
        $region74: #{resnet_forward.25} parent=49 // pred_fallthru
          _
      $region50: #{resnet_forward.25} parent=5 // pred_fallthru
        _
      %p1572 = scmp.le.s32.totalorder 2, %s11
      // Predicated region
      $region75: #{resnet_forward.25} parent=5 // pred_check
        %p1573 = pneg %p1572
      $region76: #{resnet_forward.25} parent=5 // pred_check_branch
        %1575 = sbr.rel (%p1573) target = $region78
      $region77: #{resnet_forward.25} parent=5 // pred_region
        %s1576 = ssub.s32 %s11, 2
        // Predicated region
        $region79: #{resnet_forward.25} parent=77 // pred_check
          %p1577 = pneg %p117
        $region80: #{resnet_forward.25} parent=77 // pred_check_branch
          %1579 = sbr.rel (%p1577) target = $region82
        $region81: #{resnet_forward.25} parent=77 // pred_region
          %s1580 = smul.u32 32, %s24
          %p1581 = scmp.lt.s32.totalorder %s1580, 63
          %s1582 = scalar_select %p1581, %s1580, 63
          %p1583 = scmp.lt.s32.totalorder %s25, 0
          %s1584 = scalar_select %p1583, %s25, 0
          %s1585 = sadd.s32 %s1584, %s1582
          %s1586 = smul.addr %s1585, 8
          %s1587 = scalar_lea.vmem %s2, %s1586
        $region82: #{resnet_forward.25} parent=77 // pred_fallthru
          _
        // Predicated region
        $region83: #{resnet_forward.25} parent=77 // pred_check
          %p1588 = pneg %p145
        $region84: #{resnet_forward.25} parent=77 // pred_check_branch
          %1590 = sbr.rel (%p1588) target = $region86
        $region85: #{resnet_forward.25} parent=77 // pred_region
          %p1591 = scmp.lt.s32.totalorder %s24, 1
          %s1592 = scalar_select %p1591, %s24, 1
          %p1593 = scmp.lt.s32.totalorder %s25, 0
          %s1594 = scalar_select %p1593, %s25, 0
          %s1595 = sadd.s32 %s1594, %s1592
          %s1596 = scalar_lea.vmem %s3, %s1595
        $region86: #{resnet_forward.25} parent=77 // pred_fallthru
          _
        // Predicated region
        $region87: #{resnet_forward.25} parent=77 // pred_check
          %p1597 = pneg %p173
        $region88: #{resnet_forward.25} parent=77 // pred_check_branch
          %1599 = sbr.rel (%p1597) target = $region90
        $region89: #{resnet_forward.25} parent=77 // pred_region
          %p1600 = scmp.lt.s32.totalorder %s24, 1
          %s1601 = scalar_select %p1600, %s24, 1
          %p1602 = scmp.lt.s32.totalorder %s25, 0
          %s1603 = scalar_select %p1602, %s25, 0
          %s1604 = sadd.s32 %s1603, %s1601
          %s1605 = scalar_lea.vmem %s4, %s1604
        $region90: #{resnet_forward.25} parent=77 // pred_fallthru
          _
      $region78: #{resnet_forward.25} parent=5 // pred_fallthru
        _
    $region6: #{resnet_forward.25} parent=1 // loop_footer
      %s15 = sadd.s32 1, %s11
    $region7: #{resnet_forward.25} parent=1 // loop_footer_branch
      %10 = sbr.rel target = $region3
    $region8: #{resnet_forward.25} parent=1 // loop_exit
      _

// kernel: resnet_forward.26
$region0: #{resnet_forward.26}
  #allocation0 [shape = 'u32[]', space=smem, size = 0x4, offset = 0x4, fixed_abs, tag = 'smem constant byte address 0x4 - core index']
  #allocation1 [shape = 'u32[72,128]{1,0:T(1,128)}', space=vmem, size = 0x9000, scoped, tag = 'internal scratch']
  %s0 = inlined_call_operand.vmem [shape: f32[512,128], index: 0, kind: input, shape index: {}]
  %s1 = inlined_call_operand.vmem [shape: f32[1,128], index: 1, kind: input, shape index: {}]
  %s2 = inlined_call_operand.vmem [shape: f32[1,128], index: 2, kind: input, shape index: {}]
  %s3 = inlined_call_operand.vmem [shape: f32[512,128], index: 3, kind: output, shape index: {}]
  %s4 = sld [smem:[#allocation0]]
  $region22: #{resnet_forward.26} parent=0
    _
  %s6 = ssub.s32 1, %s4
  %s7 = scalar_select 0, %s6, %s4
  // Predicated region
  $region2: #{resnet_forward.26} parent=0 // pred_check
    _
  $region3: #{resnet_forward.26} parent=0 // pred_check_branch
    %9 = sbr.rel (0) target = $region5
  $region4: #{resnet_forward.26} parent=0 // pred_region
    _
  $region5: #{resnet_forward.26} parent=0 // pred_fallthru
    _
  // Predicated region
  $region6: #{resnet_forward.26} parent=0 // pred_check
    _
  $region7: #{resnet_forward.26} parent=0 // pred_check_branch
    %11 = sbr.rel (0) target = $region9
  $region8: #{resnet_forward.26} parent=0 // pred_region
    _
  $region9: #{resnet_forward.26} parent=0 // pred_fallthru
    _
  // Predicated region
  $region10: #{resnet_forward.26} parent=0 // pred_check
    _
  $region11: #{resnet_forward.26} parent=0 // pred_check_branch
    %13 = sbr.rel (0) target = $region13
  $region12: #{resnet_forward.26} parent=0 // pred_region
    _
  $region13: #{resnet_forward.26} parent=0 // pred_fallthru
    _
  %v14 = vld [vmem:[%s0] sm:$0xff]
  %v15 = vld [vmem:[%s0 + $0x8] sm:$0xff]
  %v16 = vld [vmem:[%s0 + $0x10] sm:$0xff]
  %v17 = vld [vmem:[%s0 + $0x18] sm:$0xff]
  %v18 = vld [vmem:[%s0 + $0x20] sm:$0xff]
  %v19 = vld [vmem:[%s0 + $0x28] sm:$0xff]
  %v20 = vld [vmem:[%s0 + $0x30] sm:$0xff]
  %v21 = vld [vmem:[%s0 + $0x38] sm:$0xff]
  %v22 = vld [vmem:[%s0 + $0x40] sm:$0xff]
  %v23 = vld [vmem:[%s0 + $0x48] sm:$0xff]
  %v24 = vld [vmem:[%s0 + $0x50] sm:$0xff]
  %v25 = vld [vmem:[%s0 + $0x58] sm:$0xff]
  %v26 = vld [vmem:[%s0 + $0x60] sm:$0xff]
  %v27 = vld [vmem:[%s0 + $0x68] sm:$0xff]
  %v28 = vld [vmem:[%s0 + $0x70] sm:$0xff]
  %v29 = vld [vmem:[%s0 + $0x78] sm:$0xff]
  %v30 = vld [vmem:[%s0 + $0x80] sm:$0xff]
  %v31 = vld [vmem:[%s0 + $0x88] sm:$0xff]
  %v32 = vld [vmem:[%s0 + $0x90] sm:$0xff]
  %v33 = vld [vmem:[%s0 + $0x98] sm:$0xff]
  %v34 = vld [vmem:[%s0 + $0xa0] sm:$0xff]
  %v35 = vld [vmem:[%s0 + $0xa8] sm:$0xff]
  %v36 = vld [vmem:[%s0 + $0xb0] sm:$0xff]
  %v37 = vld [vmem:[%s0 + $0xb8] sm:$0xff]
  %v38 = vld [vmem:[%s0 + $0xc0] sm:$0xff]
  %v39 = vld [vmem:[%s0 + $0xc8] sm:$0xff]
  %v40 = vld [vmem:[%s0 + $0xd0] sm:$0xff]
  %v41 = vld [vmem:[%s0 + $0xd8] sm:$0xff]
  %v42 = vld [vmem:[%s0 + $0xe0] sm:$0xff]
  %v43 = vld [vmem:[%s0 + $0xe8] sm:$0xff]
  %v44 = vld [vmem:[%s0 + $0xf0] sm:$0xff]
  %v45 = vld [vmem:[%s0 + $0xf8] sm:$0xff]
  %v46 = vld [vmem:[%s0 + $0x100] sm:$0xff]
  %v47 = vld [vmem:[%s0 + $0x108] sm:$0xff]
  %v48 = vld [vmem:[%s0 + $0x110] sm:$0xff]
  %v49 = vld [vmem:[%s0 + $0x118] sm:$0xff]
  %v50 = vld [vmem:[%s0 + $0x120] sm:$0xff]
  %v51 = vld [vmem:[%s0 + $0x128] sm:$0xff]
  %v52 = vld [vmem:[%s0 + $0x130] sm:$0xff]
  %v53 = vld [vmem:[%s0 + $0x138] sm:$0xff]
  %v54 = vld [vmem:[%s0 + $0x140] sm:$0xff]
  %v55 = vld [vmem:[%s0 + $0x148] sm:$0xff]
  %v56 = vld [vmem:[%s0 + $0x150] sm:$0xff]
  %v57 = vld [vmem:[%s0 + $0x158] sm:$0xff]
  %v58 = vld [vmem:[%s0 + $0x160] sm:$0xff]
  %v59 = vld [vmem:[%s0 + $0x168] sm:$0xff]
  %v60 = vld [vmem:[%s0 + $0x170] sm:$0xff]
  %v61 = vld [vmem:[%s0 + $0x178] sm:$0xff]
  %v62 = vld [vmem:[%s0 + $0x180] sm:$0xff]
  %v63 = vld [vmem:[%s0 + $0x188] sm:$0xff]
  %v64 = vld [vmem:[%s0 + $0x190] sm:$0xff]
  %v65 = vld [vmem:[%s0 + $0x198] sm:$0xff]
  %v66 = vld [vmem:[%s0 + $0x1a0] sm:$0xff]
  %v67 = vld [vmem:[%s0 + $0x1a8] sm:$0xff]
  %v68 = vld [vmem:[%s0 + $0x1b0] sm:$0xff]
  %v69 = vld [vmem:[%s0 + $0x1b8] sm:$0xff]
  %v70 = vld [vmem:[%s0 + $0x1c0] sm:$0xff]
  %v71 = vld [vmem:[%s0 + $0x1c8] sm:$0xff]
  %v72 = vld [vmem:[%s0 + $0x1d0] sm:$0xff]
  %v73 = vld [vmem:[%s0 + $0x1d8] sm:$0xff]
  %v74 = vld [vmem:[%s0 + $0x1e0] sm:$0xff]
  %v75 = vld [vmem:[%s0 + $0x1e8] sm:$0xff]
  %v76 = vld [vmem:[%s0 + $0x1f0] sm:$0xff]
  %v77 = vld [vmem:[%s0 + $0x1f8] sm:$0xff]
  %v78 = vld [vmem:[%s1] sm:$0x1]
  %v80 = vperm.slane %v78, 0
  %v82 = vmul.f32 %v14, %v80
  %v83 = vmul.f32 %v15, %v80
  %v84 = vmul.f32 %v16, %v80
  %v85 = vmul.f32 %v17, %v80
  %v86 = vmul.f32 %v18, %v80
  %v87 = vmul.f32 %v19, %v80
  %v88 = vmul.f32 %v20, %v80
  %v89 = vmul.f32 %v21, %v80
  %v90 = vmul.f32 %v22, %v80
  %v91 = vmul.f32 %v23, %v80
  %v92 = vmul.f32 %v24, %v80
  %v93 = vmul.f32 %v25, %v80
  %v94 = vmul.f32 %v26, %v80
  %v95 = vmul.f32 %v27, %v80
  %v96 = vmul.f32 %v28, %v80
  %v97 = vmul.f32 %v29, %v80
  %v98 = vmul.f32 %v30, %v80
  %v99 = vmul.f32 %v31, %v80
  %v100 = vmul.f32 %v32, %v80
  %v101 = vmul.f32 %v33, %v80
  %v102 = vmul.f32 %v34, %v80
  %v103 = vmul.f32 %v35, %v80
  %v104 = vmul.f32 %v36, %v80
  %v105 = vmul.f32 %v37, %v80
  %v106 = vmul.f32 %v38, %v80
  %v107 = vmul.f32 %v39, %v80
  %v108 = vmul.f32 %v40, %v80
  %v109 = vmul.f32 %v41, %v80
  %v110 = vmul.f32 %v42, %v80
  %v111 = vmul.f32 %v43, %v80
  %v112 = vmul.f32 %v44, %v80
  %v113 = vmul.f32 %v45, %v80
  %v114 = vmul.f32 %v46, %v80
  %v115 = vmul.f32 %v47, %v80
  %v116 = vmul.f32 %v48, %v80
  %v117 = vmul.f32 %v49, %v80
  %v118 = vmul.f32 %v50, %v80
  %v119 = vmul.f32 %v51, %v80
  %v120 = vmul.f32 %v52, %v80
  %v121 = vmul.f32 %v53, %v80
  %v122 = vmul.f32 %v54, %v80
  %v123 = vmul.f32 %v55, %v80
  %v124 = vmul.f32 %v56, %v80
  %v125 = vmul.f32 %v57, %v80
  %v126 = vmul.f32 %v58, %v80
  %v127 = vmul.f32 %v59, %v80
  %v128 = vmul.f32 %v60, %v80
  %v129 = vmul.f32 %v61, %v80
  %v130 = vmul.f32 %v62, %v80
  %v131 = vmul.f32 %v63, %v80
  %v132 = vmul.f32 %v64, %v80
  %v133 = vmul.f32 %v65, %v80
  %v134 = vmul.f32 %v66, %v80
  %v135 = vmul.f32 %v67, %v80
  %v136 = vmul.f32 %v68, %v80
  %v137 = vmul.f32 %v69, %v80
  %v138 = vmul.f32 %v70, %v80
  %v139 = vmul.f32 %v71, %v80
  %v140 = vmul.f32 %v72, %v80
  %v141 = vmul.f32 %v73, %v80
  %v142 = vmul.f32 %v74, %v80
  %v143 = vmul.f32 %v75, %v80
  %v144 = vmul.f32 %v76, %v80
  %v145 = vmul.f32 %v77, %v80
  %v146 = vld [vmem:[%s2] sm:$0x1]
  %v148 = vperm.slane %v146, 0
  %v150 = vadd.f32 %v82, %v148
  %v151 = vadd.f32 %v83, %v148
  %v152 = vadd.f32 %v84, %v148
  %v153 = vadd.f32 %v85, %v148
  %v154 = vadd.f32 %v86, %v148
  %v155 = vadd.f32 %v87, %v148
  %v156 = vadd.f32 %v88, %v148
  %v157 = vadd.f32 %v89, %v148
  %v158 = vadd.f32 %v90, %v148
  %v159 = vadd.f32 %v91, %v148
  %v160 = vadd.f32 %v92, %v148
  %v161 = vadd.f32 %v93, %v148
  %v162 = vadd.f32 %v94, %v148
  %v163 = vadd.f32 %v95, %v148
  %v164 = vadd.f32 %v96, %v148
  %v165 = vadd.f32 %v97, %v148
  %v166 = vadd.f32 %v98, %v148
  %v167 = vadd.f32 %v99, %v148
  %v168 = vadd.f32 %v100, %v148
  %v169 = vadd.f32 %v101, %v148
  %v170 = vadd.f32 %v102, %v148
  %v171 = vadd.f32 %v103, %v148
  %v172 = vadd.f32 %v104, %v148
  %v173 = vadd.f32 %v105, %v148
  %v174 = vadd.f32 %v106, %v148
  %v175 = vadd.f32 %v107, %v148
  %v176 = vadd.f32 %v108, %v148
  %v177 = vadd.f32 %v109, %v148
  %v178 = vadd.f32 %v110, %v148
  %v179 = vadd.f32 %v111, %v148
  %v180 = vadd.f32 %v112, %v148
  %v181 = vadd.f32 %v113, %v148
  %v182 = vadd.f32 %v114, %v148
  %v183 = vadd.f32 %v115, %v148
  %v184 = vadd.f32 %v116, %v148
  %v185 = vadd.f32 %v117, %v148
  %v186 = vadd.f32 %v118, %v148
  %v187 = vadd.f32 %v119, %v148
  %v188 = vadd.f32 %v120, %v148
  %v189 = vadd.f32 %v121, %v148
  %v190 = vadd.f32 %v122, %v148
  %v191 = vadd.f32 %v123, %v148
  %v192 = vadd.f32 %v124, %v148
  %v193 = vadd.f32 %v125, %v148
  %v194 = vadd.f32 %v126, %v148
  %v195 = vadd.f32 %v127, %v148
  %v196 = vadd.f32 %v128, %v148
  %v197 = vadd.f32 %v129, %v148
  %v198 = vadd.f32 %v130, %v148
  %v199 = vadd.f32 %v131, %v148
  %v200 = vadd.f32 %v132, %v148
  %v201 = vadd.f32 %v133, %v148
  %v202 = vadd.f32 %v134, %v148
  %v203 = vadd.f32 %v135, %v148
  %v204 = vadd.f32 %v136, %v148
  %v205 = vadd.f32 %v137, %v148
  %v206 = vadd.f32 %v138, %v148
  %v207 = vadd.f32 %v139, %v148
  %v208 = vadd.f32 %v140, %v148
  %v209 = vadd.f32 %v141, %v148
  %v210 = vadd.f32 %v142, %v148
  %v211 = vadd.f32 %v143, %v148
  %v212 = vadd.f32 %v144, %v148
  %v213 = vadd.f32 %v145, %v148
  %v214 = vmax.f32 %v150, 0.0
  %v215 = vmax.f32 %v151, 0.0
  %v216 = vmax.f32 %v152, 0.0
  %v217 = vmax.f32 %v153, 0.0
  %v218 = vmax.f32 %v154, 0.0
  %v219 = vmax.f32 %v155, 0.0
  %v220 = vmax.f32 %v156, 0.0
  %v221 = vmax.f32 %v157, 0.0
  %v222 = vmax.f32 %v158, 0.0
  %v223 = vmax.f32 %v159, 0.0
  %v224 = vmax.f32 %v160, 0.0
  %v225 = vmax.f32 %v161, 0.0
  %v226 = vmax.f32 %v162, 0.0
  %v227 = vmax.f32 %v163, 0.0
  %v228 = vmax.f32 %v164, 0.0
  %v229 = vmax.f32 %v165, 0.0
  %v230 = vmax.f32 %v166, 0.0
  %v231 = vmax.f32 %v167, 0.0
  %v232 = vmax.f32 %v168, 0.0
  %v233 = vmax.f32 %v169, 0.0
  %v234 = vmax.f32 %v170, 0.0
  %v235 = vmax.f32 %v171, 0.0
  %v236 = vmax.f32 %v172, 0.0
  %v237 = vmax.f32 %v173, 0.0
  %v238 = vmax.f32 %v174, 0.0
  %v239 = vmax.f32 %v175, 0.0
  %v240 = vmax.f32 %v176, 0.0
  %v241 = vmax.f32 %v177, 0.0
  %v242 = vmax.f32 %v178, 0.0
  %v243 = vmax.f32 %v179, 0.0
  %v244 = vmax.f32 %v180, 0.0
  %v245 = vmax.f32 %v181, 0.0
  %v246 = vmax.f32 %v182, 0.0
  %v247 = vmax.f32 %v183, 0.0
  %v248 = vmax.f32 %v184, 0.0
  %v249 = vmax.f32 %v185, 0.0
  %v250 = vmax.f32 %v186, 0.0
  %v251 = vmax.f32 %v187, 0.0
  %v252 = vmax.f32 %v188, 0.0
  %v253 = vmax.f32 %v189, 0.0
  %v254 = vmax.f32 %v190, 0.0
  %v255 = vmax.f32 %v191, 0.0
  %v256 = vmax.f32 %v192, 0.0
  %v257 = vmax.f32 %v193, 0.0
  %v258 = vmax.f32 %v194, 0.0
  %v259 = vmax.f32 %v195, 0.0
  %v260 = vmax.f32 %v196, 0.0
  %v261 = vmax.f32 %v197, 0.0
  %v262 = vmax.f32 %v198, 0.0
  %v263 = vmax.f32 %v199, 0.0
  %v264 = vmax.f32 %v200, 0.0
  %v265 = vmax.f32 %v201, 0.0
  %v266 = vmax.f32 %v202, 0.0
  %v267 = vmax.f32 %v203, 0.0
  %v268 = vmax.f32 %v204, 0.0
  %v269 = vmax.f32 %v205, 0.0
  %v270 = vmax.f32 %v206, 0.0
  %v271 = vmax.f32 %v207, 0.0
  %v272 = vmax.f32 %v208, 0.0
  %v273 = vmax.f32 %v209, 0.0
  %v274 = vmax.f32 %v210, 0.0
  %v275 = vmax.f32 %v211, 0.0
  %v276 = vmax.f32 %v212, 0.0
  %v277 = vmax.f32 %v213, 0.0
  %278 = vst [vmem:[%s3] sm:$0xff] %v214
  %279 = vst [vmem:[%s3 + $0x8] sm:$0xff] %v215
  %280 = vst [vmem:[%s3 + $0x10] sm:$0xff] %v216
  %281 = vst [vmem:[%s3 + $0x18] sm:$0xff] %v217
  %282 = vst [vmem:[%s3 + $0x20] sm:$0xff] %v218
  %283 = vst [vmem:[%s3 + $0x28] sm:$0xff] %v219
  %284 = vst [vmem:[%s3 + $0x30] sm:$0xff] %v220
  %285 = vst [vmem:[%s3 + $0x38] sm:$0xff] %v221
  %286 = vst [vmem:[%s3 + $0x40] sm:$0xff] %v222
  %287 = vst [vmem:[%s3 + $0x48] sm:$0xff] %v223
  %288 = vst [vmem:[%s3 + $0x50] sm:$0xff] %v224
  %289 = vst [vmem:[%s3 + $0x58] sm:$0xff] %v225
  %290 = vst [vmem:[%s3 + $0x60] sm:$0xff] %v226
  %291 = vst [vmem:[%s3 + $0x68] sm:$0xff] %v227
  %292 = vst [vmem:[%s3 + $0x70] sm:$0xff] %v228
  %293 = vst [vmem:[%s3 + $0x78] sm:$0xff] %v229
  %294 = vst [vmem:[%s3 + $0x80] sm:$0xff] %v230
  %295 = vst [vmem:[%s3 + $0x88] sm:$0xff] %v231
  %296 = vst [vmem:[%s3 + $0x90] sm:$0xff] %v232
  %297 = vst [vmem:[%s3 + $0x98] sm:$0xff] %v233
  %298 = vst [vmem:[%s3 + $0xa0] sm:$0xff] %v234
  %299 = vst [vmem:[%s3 + $0xa8] sm:$0xff] %v235
  %300 = vst [vmem:[%s3 + $0xb0] sm:$0xff] %v236
  %301 = vst [vmem:[%s3 + $0xb8] sm:$0xff] %v237
  %302 = vst [vmem:[%s3 + $0xc0] sm:$0xff] %v238
  %303 = vst [vmem:[%s3 + $0xc8] sm:$0xff] %v239
  %304 = vst [vmem:[%s3 + $0xd0] sm:$0xff] %v240
  %305 = vst [vmem:[%s3 + $0xd8] sm:$0xff] %v241
  %306 = vst [vmem:[%s3 + $0xe0] sm:$0xff] %v242
  %307 = vst [vmem:[%s3 + $0xe8] sm:$0xff] %v243
  %308 = vst [vmem:[%s3 + $0xf0] sm:$0xff] %v244
  %309 = vst [vmem:[%s3 + $0xf8] sm:$0xff] %v245
  %310 = vst [vmem:[%s3 + $0x100] sm:$0xff] %v246
  %311 = vst [vmem:[%s3 + $0x108] sm:$0xff] %v247
  %312 = vst [vmem:[%s3 + $0x110] sm:$0xff] %v248
  %313 = vst [vmem:[%s3 + $0x118] sm:$0xff] %v249
  %314 = vst [vmem:[%s3 + $0x120] sm:$0xff] %v250
  %315 = vst [vmem:[%s3 + $0x128] sm:$0xff] %v251
  %316 = vst [vmem:[%s3 + $0x130] sm:$0xff] %v252
  %317 = vst [vmem:[%s3 + $0x138] sm:$0xff] %v253
  %318 = vst [vmem:[%s3 + $0x140] sm:$0xff] %v254
  %319 = vst [vmem:[%s3 + $0x148] sm:$0xff] %v255
  %320 = vst [vmem:[%s3 + $0x150] sm:$0xff] %v256
  %321 = vst [vmem:[%s3 + $0x158] sm:$0xff] %v257
  %322 = vst [vmem:[%s3 + $0x160] sm:$0xff] %v258
  %323 = vst [vmem:[%s3 + $0x168] sm:$0xff] %v259
  %324 = vst [vmem:[%s3 + $0x170] sm:$0xff] %v260
  %325 = vst [vmem:[%s3 + $0x178] sm:$0xff] %v261
  %326 = vst [vmem:[%s3 + $0x180] sm:$0xff] %v262
  %327 = vst [vmem:[%s3 + $0x188] sm:$0xff] %v263
  %328 = vst [vmem:[%s3 + $0x190] sm:$0xff] %v264
  %329 = vst [vmem:[%s3 + $0x198] sm:$0xff] %v265
  %330 = vst [vmem:[%s3 + $0x1a0] sm:$0xff] %v266
  %331 = vst [vmem:[%s3 + $0x1a8] sm:$0xff] %v267
  %332 = vst [vmem:[%s3 + $0x1b0] sm:$0xff] %v268
  %333 = vst [vmem:[%s3 + $0x1b8] sm:$0xff] %v269
  %334 = vst [vmem:[%s3 + $0x1c0] sm:$0xff] %v270
  %335 = vst [vmem:[%s3 + $0x1c8] sm:$0xff] %v271
  %336 = vst [vmem:[%s3 + $0x1d0] sm:$0xff] %v272
  %337 = vst [vmem:[%s3 + $0x1d8] sm:$0xff] %v273
  %338 = vst [vmem:[%s3 + $0x1e0] sm:$0xff] %v274
  %339 = vst [vmem:[%s3 + $0x1e8] sm:$0xff] %v275
  %340 = vst [vmem:[%s3 + $0x1f0] sm:$0xff] %v276
  %341 = vst [vmem:[%s3 + $0x1f8] sm:$0xff] %v277
  // Predicated region
  $region14: #{resnet_forward.26} parent=0 // pred_check
    _
  $region15: #{resnet_forward.26} parent=0 // pred_check_branch
    %343 = sbr.rel (0) target = $region17
  $region16: #{resnet_forward.26} parent=0 // pred_region
    _
  $region17: #{resnet_forward.26} parent=0 // pred_fallthru
    _
  // Predicated region
  $region18: #{resnet_forward.26} parent=0 // pred_check
    _
  $region19: #{resnet_forward.26} parent=0 // pred_check_branch
    %345 = sbr.rel (0) target = $region21
  $region20: #{resnet_forward.26} parent=0 // pred_region
    _
  $region21: #{resnet_forward.26} parent=0 // pred_fallthru
    _

// kernel: resnet_forward.30
$region0: #{resnet_forward.30}
  #allocation0 [shape = 'u32[]', space=smem, size = 0x4, offset = 0x4, fixed_abs, tag = 'smem constant byte address 0x4 - core index']
  #allocation1 [shape = 'u32[72,128]{1,0:T(1,128)}', space=vmem, size = 0x9000, scoped, tag = 'internal scratch']
  %s0 = inlined_call_operand.vmem [shape: f32[512,128], index: 0, kind: input, shape index: {}]
  %s1 = inlined_call_operand.vmem [shape: f32[1,128], index: 1, kind: input, shape index: {}]
  %s2 = inlined_call_operand.vmem [shape: f32[1,128], index: 2, kind: input, shape index: {}]
  %s3 = inlined_call_operand.vmem [shape: f32[512,128], index: 3, kind: input, shape index: {}]
  %s4 = inlined_call_operand.vmem [shape: f32[512,128], index: 4, kind: output, shape index: {}]
  %s5 = sld [smem:[#allocation0]]
  $region26: #{resnet_forward.30} parent=0
    _
  %s7 = ssub.s32 1, %s5
  %s8 = scalar_select 0, %s7, %s5
  // Predicated region
  $region2: #{resnet_forward.30} parent=0 // pred_check
    _
  $region3: #{resnet_forward.30} parent=0 // pred_check_branch
    %10 = sbr.rel (0) target = $region5
  $region4: #{resnet_forward.30} parent=0 // pred_region
    _
  $region5: #{resnet_forward.30} parent=0 // pred_fallthru
    _
  // Predicated region
  $region6: #{resnet_forward.30} parent=0 // pred_check
    _
  $region7: #{resnet_forward.30} parent=0 // pred_check_branch
    %12 = sbr.rel (0) target = $region9
  $region8: #{resnet_forward.30} parent=0 // pred_region
    _
  $region9: #{resnet_forward.30} parent=0 // pred_fallthru
    _
  // Predicated region
  $region10: #{resnet_forward.30} parent=0 // pred_check
    _
  $region11: #{resnet_forward.30} parent=0 // pred_check_branch
    %14 = sbr.rel (0) target = $region13
  $region12: #{resnet_forward.30} parent=0 // pred_region
    _
  $region13: #{resnet_forward.30} parent=0 // pred_fallthru
    _
  // Predicated region
  $region14: #{resnet_forward.30} parent=0 // pred_check
    _
  $region15: #{resnet_forward.30} parent=0 // pred_check_branch
    %16 = sbr.rel (0) target = $region17
  $region16: #{resnet_forward.30} parent=0 // pred_region
    _
  $region17: #{resnet_forward.30} parent=0 // pred_fallthru
    _
  %v17 = vld [vmem:[%s0] sm:$0xff]
  %v18 = vld [vmem:[%s0 + $0x8] sm:$0xff]
  %v19 = vld [vmem:[%s0 + $0x10] sm:$0xff]
  %v20 = vld [vmem:[%s0 + $0x18] sm:$0xff]
  %v21 = vld [vmem:[%s0 + $0x20] sm:$0xff]
  %v22 = vld [vmem:[%s0 + $0x28] sm:$0xff]
  %v23 = vld [vmem:[%s0 + $0x30] sm:$0xff]
  %v24 = vld [vmem:[%s0 + $0x38] sm:$0xff]
  %v25 = vld [vmem:[%s0 + $0x40] sm:$0xff]
  %v26 = vld [vmem:[%s0 + $0x48] sm:$0xff]
  %v27 = vld [vmem:[%s0 + $0x50] sm:$0xff]
  %v28 = vld [vmem:[%s0 + $0x58] sm:$0xff]
  %v29 = vld [vmem:[%s0 + $0x60] sm:$0xff]
  %v30 = vld [vmem:[%s0 + $0x68] sm:$0xff]
  %v31 = vld [vmem:[%s0 + $0x70] sm:$0xff]
  %v32 = vld [vmem:[%s0 + $0x78] sm:$0xff]
  %v33 = vld [vmem:[%s0 + $0x80] sm:$0xff]
  %v34 = vld [vmem:[%s0 + $0x88] sm:$0xff]
  %v35 = vld [vmem:[%s0 + $0x90] sm:$0xff]
  %v36 = vld [vmem:[%s0 + $0x98] sm:$0xff]
  %v37 = vld [vmem:[%s0 + $0xa0] sm:$0xff]
  %v38 = vld [vmem:[%s0 + $0xa8] sm:$0xff]
  %v39 = vld [vmem:[%s0 + $0xb0] sm:$0xff]
  %v40 = vld [vmem:[%s0 + $0xb8] sm:$0xff]
  %v41 = vld [vmem:[%s0 + $0xc0] sm:$0xff]
  %v42 = vld [vmem:[%s0 + $0xc8] sm:$0xff]
  %v43 = vld [vmem:[%s0 + $0xd0] sm:$0xff]
  %v44 = vld [vmem:[%s0 + $0xd8] sm:$0xff]
  %v45 = vld [vmem:[%s0 + $0xe0] sm:$0xff]
  %v46 = vld [vmem:[%s0 + $0xe8] sm:$0xff]
  %v47 = vld [vmem:[%s0 + $0xf0] sm:$0xff]
  %v48 = vld [vmem:[%s0 + $0xf8] sm:$0xff]
  %v49 = vld [vmem:[%s0 + $0x100] sm:$0xff]
  %v50 = vld [vmem:[%s0 + $0x108] sm:$0xff]
  %v51 = vld [vmem:[%s0 + $0x110] sm:$0xff]
  %v52 = vld [vmem:[%s0 + $0x118] sm:$0xff]
  %v53 = vld [vmem:[%s0 + $0x120] sm:$0xff]
  %v54 = vld [vmem:[%s0 + $0x128] sm:$0xff]
  %v55 = vld [vmem:[%s0 + $0x130] sm:$0xff]
  %v56 = vld [vmem:[%s0 + $0x138] sm:$0xff]
  %v57 = vld [vmem:[%s0 + $0x140] sm:$0xff]
  %v58 = vld [vmem:[%s0 + $0x148] sm:$0xff]
  %v59 = vld [vmem:[%s0 + $0x150] sm:$0xff]
  %v60 = vld [vmem:[%s0 + $0x158] sm:$0xff]
  %v61 = vld [vmem:[%s0 + $0x160] sm:$0xff]
  %v62 = vld [vmem:[%s0 + $0x168] sm:$0xff]
  %v63 = vld [vmem:[%s0 + $0x170] sm:$0xff]
  %v64 = vld [vmem:[%s0 + $0x178] sm:$0xff]
  %v65 = vld [vmem:[%s0 + $0x180] sm:$0xff]
  %v66 = vld [vmem:[%s0 + $0x188] sm:$0xff]
  %v67 = vld [vmem:[%s0 + $0x190] sm:$0xff]
  %v68 = vld [vmem:[%s0 + $0x198] sm:$0xff]
  %v69 = vld [vmem:[%s0 + $0x1a0] sm:$0xff]
  %v70 = vld [vmem:[%s0 + $0x1a8] sm:$0xff]
  %v71 = vld [vmem:[%s0 + $0x1b0] sm:$0xff]
  %v72 = vld [vmem:[%s0 + $0x1b8] sm:$0xff]
  %v73 = vld [vmem:[%s0 + $0x1c0] sm:$0xff]
  %v74 = vld [vmem:[%s0 + $0x1c8] sm:$0xff]
  %v75 = vld [vmem:[%s0 + $0x1d0] sm:$0xff]
  %v76 = vld [vmem:[%s0 + $0x1d8] sm:$0xff]
  %v77 = vld [vmem:[%s0 + $0x1e0] sm:$0xff]
  %v78 = vld [vmem:[%s0 + $0x1e8] sm:$0xff]
  %v79 = vld [vmem:[%s0 + $0x1f0] sm:$0xff]
  %v80 = vld [vmem:[%s0 + $0x1f8] sm:$0xff]
  %v81 = vld [vmem:[%s1] sm:$0x1]
  %v83 = vperm.slane %v81, 0
  %v85 = vmul.f32 %v17, %v83
  %v86 = vmul.f32 %v18, %v83
  %v87 = vmul.f32 %v19, %v83
  %v88 = vmul.f32 %v20, %v83
  %v89 = vmul.f32 %v21, %v83
  %v90 = vmul.f32 %v22, %v83
  %v91 = vmul.f32 %v23, %v83
  %v92 = vmul.f32 %v24, %v83
  %v93 = vmul.f32 %v25, %v83
  %v94 = vmul.f32 %v26, %v83
  %v95 = vmul.f32 %v27, %v83
  %v96 = vmul.f32 %v28, %v83
  %v97 = vmul.f32 %v29, %v83
  %v98 = vmul.f32 %v30, %v83
  %v99 = vmul.f32 %v31, %v83
  %v100 = vmul.f32 %v32, %v83
  %v101 = vmul.f32 %v33, %v83
  %v102 = vmul.f32 %v34, %v83
  %v103 = vmul.f32 %v35, %v83
  %v104 = vmul.f32 %v36, %v83
  %v105 = vmul.f32 %v37, %v83
  %v106 = vmul.f32 %v38, %v83
  %v107 = vmul.f32 %v39, %v83
  %v108 = vmul.f32 %v40, %v83
  %v109 = vmul.f32 %v41, %v83
  %v110 = vmul.f32 %v42, %v83
  %v111 = vmul.f32 %v43, %v83
  %v112 = vmul.f32 %v44, %v83
  %v113 = vmul.f32 %v45, %v83
  %v114 = vmul.f32 %v46, %v83
  %v115 = vmul.f32 %v47, %v83
  %v116 = vmul.f32 %v48, %v83
  %v117 = vmul.f32 %v49, %v83
  %v118 = vmul.f32 %v50, %v83
  %v119 = vmul.f32 %v51, %v83
  %v120 = vmul.f32 %v52, %v83
  %v121 = vmul.f32 %v53, %v83
  %v122 = vmul.f32 %v54, %v83
  %v123 = vmul.f32 %v55, %v83
  %v124 = vmul.f32 %v56, %v83
  %v125 = vmul.f32 %v57, %v83
  %v126 = vmul.f32 %v58, %v83
  %v127 = vmul.f32 %v59, %v83
  %v128 = vmul.f32 %v60, %v83
  %v129 = vmul.f32 %v61, %v83
  %v130 = vmul.f32 %v62, %v83
  %v131 = vmul.f32 %v63, %v83
  %v132 = vmul.f32 %v64, %v83
  %v133 = vmul.f32 %v65, %v83
  %v134 = vmul.f32 %v66, %v83
  %v135 = vmul.f32 %v67, %v83
  %v136 = vmul.f32 %v68, %v83
  %v137 = vmul.f32 %v69, %v83
  %v138 = vmul.f32 %v70, %v83
  %v139 = vmul.f32 %v71, %v83
  %v140 = vmul.f32 %v72, %v83
  %v141 = vmul.f32 %v73, %v83
  %v142 = vmul.f32 %v74, %v83
  %v143 = vmul.f32 %v75, %v83
  %v144 = vmul.f32 %v76, %v83
  %v145 = vmul.f32 %v77, %v83
  %v146 = vmul.f32 %v78, %v83
  %v147 = vmul.f32 %v79, %v83
  %v148 = vmul.f32 %v80, %v83
  %v149 = vld [vmem:[%s2] sm:$0x1]
  %v151 = vperm.slane %v149, 0
  %v153 = vadd.f32 %v85, %v151
  %v154 = vadd.f32 %v86, %v151
  %v155 = vadd.f32 %v87, %v151
  %v156 = vadd.f32 %v88, %v151
  %v157 = vadd.f32 %v89, %v151
  %v158 = vadd.f32 %v90, %v151
  %v159 = vadd.f32 %v91, %v151
  %v160 = vadd.f32 %v92, %v151
  %v161 = vadd.f32 %v93, %v151
  %v162 = vadd.f32 %v94, %v151
  %v163 = vadd.f32 %v95, %v151
  %v164 = vadd.f32 %v96, %v151
  %v165 = vadd.f32 %v97, %v151
  %v166 = vadd.f32 %v98, %v151
  %v167 = vadd.f32 %v99, %v151
  %v168 = vadd.f32 %v100, %v151
  %v169 = vadd.f32 %v101, %v151
  %v170 = vadd.f32 %v102, %v151
  %v171 = vadd.f32 %v103, %v151
  %v172 = vadd.f32 %v104, %v151
  %v173 = vadd.f32 %v105, %v151
  %v174 = vadd.f32 %v106, %v151
  %v175 = vadd.f32 %v107, %v151
  %v176 = vadd.f32 %v108, %v151
  %v177 = vadd.f32 %v109, %v151
  %v178 = vadd.f32 %v110, %v151
  %v179 = vadd.f32 %v111, %v151
  %v180 = vadd.f32 %v112, %v151
  %v181 = vadd.f32 %v113, %v151
  %v182 = vadd.f32 %v114, %v151
  %v183 = vadd.f32 %v115, %v151
  %v184 = vadd.f32 %v116, %v151
  %v185 = vadd.f32 %v117, %v151
  %v186 = vadd.f32 %v118, %v151
  %v187 = vadd.f32 %v119, %v151
  %v188 = vadd.f32 %v120, %v151
  %v189 = vadd.f32 %v121, %v151
  %v190 = vadd.f32 %v122, %v151
  %v191 = vadd.f32 %v123, %v151
  %v192 = vadd.f32 %v124, %v151
  %v193 = vadd.f32 %v125, %v151
  %v194 = vadd.f32 %v126, %v151
  %v195 = vadd.f32 %v127, %v151
  %v196 = vadd.f32 %v128, %v151
  %v197 = vadd.f32 %v129, %v151
  %v198 = vadd.f32 %v130, %v151
  %v199 = vadd.f32 %v131, %v151
  %v200 = vadd.f32 %v132, %v151
  %v201 = vadd.f32 %v133, %v151
  %v202 = vadd.f32 %v134, %v151
  %v203 = vadd.f32 %v135, %v151
  %v204 = vadd.f32 %v136, %v151
  %v205 = vadd.f32 %v137, %v151
  %v206 = vadd.f32 %v138, %v151
  %v207 = vadd.f32 %v139, %v151
  %v208 = vadd.f32 %v140, %v151
  %v209 = vadd.f32 %v141, %v151
  %v210 = vadd.f32 %v142, %v151
  %v211 = vadd.f32 %v143, %v151
  %v212 = vadd.f32 %v144, %v151
  %v213 = vadd.f32 %v145, %v151
  %v214 = vadd.f32 %v146, %v151
  %v215 = vadd.f32 %v147, %v151
  %v216 = vadd.f32 %v148, %v151
  %v217 = vld [vmem:[%s3] sm:$0xff]
  %v218 = vld [vmem:[%s3 + $0x8] sm:$0xff]
  %v219 = vld [vmem:[%s3 + $0x10] sm:$0xff]
  %v220 = vld [vmem:[%s3 + $0x18] sm:$0xff]
  %v221 = vld [vmem:[%s3 + $0x20] sm:$0xff]
  %v222 = vld [vmem:[%s3 + $0x28] sm:$0xff]
  %v223 = vld [vmem:[%s3 + $0x30] sm:$0xff]
  %v224 = vld [vmem:[%s3 + $0x38] sm:$0xff]
  %v225 = vld [vmem:[%s3 + $0x40] sm:$0xff]
  %v226 = vld [vmem:[%s3 + $0x48] sm:$0xff]
  %v227 = vld [vmem:[%s3 + $0x50] sm:$0xff]
  %v228 = vld [vmem:[%s3 + $0x58] sm:$0xff]
  %v229 = vld [vmem:[%s3 + $0x60] sm:$0xff]
  %v230 = vld [vmem:[%s3 + $0x68] sm:$0xff]
  %v231 = vld [vmem:[%s3 + $0x70] sm:$0xff]
  %v232 = vld [vmem:[%s3 + $0x78] sm:$0xff]
  %v233 = vld [vmem:[%s3 + $0x80] sm:$0xff]
  %v234 = vld [vmem:[%s3 + $0x88] sm:$0xff]
  %v235 = vld [vmem:[%s3 + $0x90] sm:$0xff]
  %v236 = vld [vmem:[%s3 + $0x98] sm:$0xff]
  %v237 = vld [vmem:[%s3 + $0xa0] sm:$0xff]
  %v238 = vld [vmem:[%s3 + $0xa8] sm:$0xff]
  %v239 = vld [vmem:[%s3 + $0xb0] sm:$0xff]
  %v240 = vld [vmem:[%s3 + $0xb8] sm:$0xff]
  %v241 = vld [vmem:[%s3 + $0xc0] sm:$0xff]
  %v242 = vld [vmem:[%s3 + $0xc8] sm:$0xff]
  %v243 = vld [vmem:[%s3 + $0xd0] sm:$0xff]
  %v244 = vld [vmem:[%s3 + $0xd8] sm:$0xff]
  %v245 = vld [vmem:[%s3 + $0xe0] sm:$0xff]
  %v246 = vld [vmem:[%s3 + $0xe8] sm:$0xff]
  %v247 = vld [vmem:[%s3 + $0xf0] sm:$0xff]
  %v248 = vld [vmem:[%s3 + $0xf8] sm:$0xff]
  %v249 = vld [vmem:[%s3 + $0x100] sm:$0xff]
  %v250 = vld [vmem:[%s3 + $0x108] sm:$0xff]
  %v251 = vld [vmem:[%s3 + $0x110] sm:$0xff]
  %v252 = vld [vmem:[%s3 + $0x118] sm:$0xff]
  %v253 = vld [vmem:[%s3 + $0x120] sm:$0xff]
  %v254 = vld [vmem:[%s3 + $0x128] sm:$0xff]
  %v255 = vld [vmem:[%s3 + $0x130] sm:$0xff]
  %v256 = vld [vmem:[%s3 + $0x138] sm:$0xff]
  %v257 = vld [vmem:[%s3 + $0x140] sm:$0xff]
  %v258 = vld [vmem:[%s3 + $0x148] sm:$0xff]
  %v259 = vld [vmem:[%s3 + $0x150] sm:$0xff]
  %v260 = vld [vmem:[%s3 + $0x158] sm:$0xff]
  %v261 = vld [vmem:[%s3 + $0x160] sm:$0xff]
  %v262 = vld [vmem:[%s3 + $0x168] sm:$0xff]
  %v263 = vld [vmem:[%s3 + $0x170] sm:$0xff]
  %v264 = vld [vmem:[%s3 + $0x178] sm:$0xff]
  %v265 = vld [vmem:[%s3 + $0x180] sm:$0xff]
  %v266 = vld [vmem:[%s3 + $0x188] sm:$0xff]
  %v267 = vld [vmem:[%s3 + $0x190] sm:$0xff]
  %v268 = vld [vmem:[%s3 + $0x198] sm:$0xff]
  %v269 = vld [vmem:[%s3 + $0x1a0] sm:$0xff]
  %v270 = vld [vmem:[%s3 + $0x1a8] sm:$0xff]
  %v271 = vld [vmem:[%s3 + $0x1b0] sm:$0xff]
  %v272 = vld [vmem:[%s3 + $0x1b8] sm:$0xff]
  %v273 = vld [vmem:[%s3 + $0x1c0] sm:$0xff]
  %v274 = vld [vmem:[%s3 + $0x1c8] sm:$0xff]
  %v275 = vld [vmem:[%s3 + $0x1d0] sm:$0xff]
  %v276 = vld [vmem:[%s3 + $0x1d8] sm:$0xff]
  %v277 = vld [vmem:[%s3 + $0x1e0] sm:$0xff]
  %v278 = vld [vmem:[%s3 + $0x1e8] sm:$0xff]
  %v279 = vld [vmem:[%s3 + $0x1f0] sm:$0xff]
  %v280 = vld [vmem:[%s3 + $0x1f8] sm:$0xff]
  %v281 = vadd.f32 %v153, %v217
  %v282 = vadd.f32 %v154, %v218
  %v283 = vadd.f32 %v155, %v219
  %v284 = vadd.f32 %v156, %v220
  %v285 = vadd.f32 %v157, %v221
  %v286 = vadd.f32 %v158, %v222
  %v287 = vadd.f32 %v159, %v223
  %v288 = vadd.f32 %v160, %v224
  %v289 = vadd.f32 %v161, %v225
  %v290 = vadd.f32 %v162, %v226
  %v291 = vadd.f32 %v163, %v227
  %v292 = vadd.f32 %v164, %v228
  %v293 = vadd.f32 %v165, %v229
  %v294 = vadd.f32 %v166, %v230
  %v295 = vadd.f32 %v167, %v231
  %v296 = vadd.f32 %v168, %v232
  %v297 = vadd.f32 %v169, %v233
  %v298 = vadd.f32 %v170, %v234
  %v299 = vadd.f32 %v171, %v235
  %v300 = vadd.f32 %v172, %v236
  %v301 = vadd.f32 %v173, %v237
  %v302 = vadd.f32 %v174, %v238
  %v303 = vadd.f32 %v175, %v239
  %v304 = vadd.f32 %v176, %v240
  %v305 = vadd.f32 %v177, %v241
  %v306 = vadd.f32 %v178, %v242
  %v307 = vadd.f32 %v179, %v243
  %v308 = vadd.f32 %v180, %v244
  %v309 = vadd.f32 %v181, %v245
  %v310 = vadd.f32 %v182, %v246
  %v311 = vadd.f32 %v183, %v247
  %v312 = vadd.f32 %v184, %v248
  %v313 = vadd.f32 %v185, %v249
  %v314 = vadd.f32 %v186, %v250
  %v315 = vadd.f32 %v187, %v251
  %v316 = vadd.f32 %v188, %v252
  %v317 = vadd.f32 %v189, %v253
  %v318 = vadd.f32 %v190, %v254
  %v319 = vadd.f32 %v191, %v255
  %v320 = vadd.f32 %v192, %v256
  %v321 = vadd.f32 %v193, %v257
  %v322 = vadd.f32 %v194, %v258
  %v323 = vadd.f32 %v195, %v259
  %v324 = vadd.f32 %v196, %v260
  %v325 = vadd.f32 %v197, %v261
  %v326 = vadd.f32 %v198, %v262
  %v327 = vadd.f32 %v199, %v263
  %v328 = vadd.f32 %v200, %v264
  %v329 = vadd.f32 %v201, %v265
  %v330 = vadd.f32 %v202, %v266
  %v331 = vadd.f32 %v203, %v267
  %v332 = vadd.f32 %v204, %v268
  %v333 = vadd.f32 %v205, %v269
  %v334 = vadd.f32 %v206, %v270
  %v335 = vadd.f32 %v207, %v271
  %v336 = vadd.f32 %v208, %v272
  %v337 = vadd.f32 %v209, %v273
  %v338 = vadd.f32 %v210, %v274
  %v339 = vadd.f32 %v211, %v275
  %v340 = vadd.f32 %v212, %v276
  %v341 = vadd.f32 %v213, %v277
  %v342 = vadd.f32 %v214, %v278
  %v343 = vadd.f32 %v215, %v279
  %v344 = vadd.f32 %v216, %v280
  %v345 = vmax.f32 %v281, 0.0
  %v346 = vmax.f32 %v282, 0.0
  %v347 = vmax.f32 %v283, 0.0
  %v348 = vmax.f32 %v284, 0.0
  %v349 = vmax.f32 %v285, 0.0
  %v350 = vmax.f32 %v286, 0.0
  %v351 = vmax.f32 %v287, 0.0
  %v352 = vmax.f32 %v288, 0.0
  %v353 = vmax.f32 %v289, 0.0
  %v354 = vmax.f32 %v290, 0.0
  %v355 = vmax.f32 %v291, 0.0
  %v356 = vmax.f32 %v292, 0.0
  %v357 = vmax.f32 %v293, 0.0
  %v358 = vmax.f32 %v294, 0.0
  %v359 = vmax.f32 %v295, 0.0
  %v360 = vmax.f32 %v296, 0.0
  %v361 = vmax.f32 %v297, 0.0
  %v362 = vmax.f32 %v298, 0.0
  %v363 = vmax.f32 %v299, 0.0
  %v364 = vmax.f32 %v300, 0.0
  %v365 = vmax.f32 %v301, 0.0
  %v366 = vmax.f32 %v302, 0.0
  %v367 = vmax.f32 %v303, 0.0
  %v368 = vmax.f32 %v304, 0.0
  %v369 = vmax.f32 %v305, 0.0
  %v370 = vmax.f32 %v306, 0.0
  %v371 = vmax.f32 %v307, 0.0
  %v372 = vmax.f32 %v308, 0.0
  %v373 = vmax.f32 %v309, 0.0
  %v374 = vmax.f32 %v310, 0.0
  %v375 = vmax.f32 %v311, 0.0
  %v376 = vmax.f32 %v312, 0.0
  %v377 = vmax.f32 %v313, 0.0
  %v378 = vmax.f32 %v314, 0.0
  %v379 = vmax.f32 %v315, 0.0
  %v380 = vmax.f32 %v316, 0.0
  %v381 = vmax.f32 %v317, 0.0
  %v382 = vmax.f32 %v318, 0.0
  %v383 = vmax.f32 %v319, 0.0
  %v384 = vmax.f32 %v320, 0.0
  %v385 = vmax.f32 %v321, 0.0
  %v386 = vmax.f32 %v322, 0.0
  %v387 = vmax.f32 %v323, 0.0
  %v388 = vmax.f32 %v324, 0.0
  %v389 = vmax.f32 %v325, 0.0
  %v390 = vmax.f32 %v326, 0.0
  %v391 = vmax.f32 %v327, 0.0
  %v392 = vmax.f32 %v328, 0.0
  %v393 = vmax.f32 %v329, 0.0
  %v394 = vmax.f32 %v330, 0.0
  %v395 = vmax.f32 %v331, 0.0
  %v396 = vmax.f32 %v332, 0.0
  %v397 = vmax.f32 %v333, 0.0
  %v398 = vmax.f32 %v334, 0.0
  %v399 = vmax.f32 %v335, 0.0
  %v400 = vmax.f32 %v336, 0.0
  %v401 = vmax.f32 %v337, 0.0
  %v402 = vmax.f32 %v338, 0.0
  %v403 = vmax.f32 %v339, 0.0
  %v404 = vmax.f32 %v340, 0.0
  %v405 = vmax.f32 %v341, 0.0
  %v406 = vmax.f32 %v342, 0.0
  %v407 = vmax.f32 %v343, 0.0
  %v408 = vmax.f32 %v344, 0.0
  %409 = vst [vmem:[%s4] sm:$0xff] %v345
  %410 = vst [vmem:[%s4 + $0x8] sm:$0xff] %v346
  %411 = vst [vmem:[%s4 + $0x10] sm:$0xff] %v347
  %412 = vst [vmem:[%s4 + $0x18] sm:$0xff] %v348
  %413 = vst [vmem:[%s4 + $0x20] sm:$0xff] %v349
  %414 = vst [vmem:[%s4 + $0x28] sm:$0xff] %v350
  %415 = vst [vmem:[%s4 + $0x30] sm:$0xff] %v351
  %416 = vst [vmem:[%s4 + $0x38] sm:$0xff] %v352
  %417 = vst [vmem:[%s4 + $0x40] sm:$0xff] %v353
  %418 = vst [vmem:[%s4 + $0x48] sm:$0xff] %v354
  %419 = vst [vmem:[%s4 + $0x50] sm:$0xff] %v355
  %420 = vst [vmem:[%s4 + $0x58] sm:$0xff] %v356
  %421 = vst [vmem:[%s4 + $0x60] sm:$0xff] %v357
  %422 = vst [vmem:[%s4 + $0x68] sm:$0xff] %v358
  %423 = vst [vmem:[%s4 + $0x70] sm:$0xff] %v359
  %424 = vst [vmem:[%s4 + $0x78] sm:$0xff] %v360
  %425 = vst [vmem:[%s4 + $0x80] sm:$0xff] %v361
  %426 = vst [vmem:[%s4 + $0x88] sm:$0xff] %v362
  %427 = vst [vmem:[%s4 + $0x90] sm:$0xff] %v363
  %428 = vst [vmem:[%s4 + $0x98] sm:$0xff] %v364
  %429 = vst [vmem:[%s4 + $0xa0] sm:$0xff] %v365
  %430 = vst [vmem:[%s4 + $0xa8] sm:$0xff] %v366
  %431 = vst [vmem:[%s4 + $0xb0] sm:$0xff] %v367
  %432 = vst [vmem:[%s4 + $0xb8] sm:$0xff] %v368
  %433 = vst [vmem:[%s4 + $0xc0] sm:$0xff] %v369
  %434 = vst [vmem:[%s4 + $0xc8] sm:$0xff] %v370
  %435 = vst [vmem:[%s4 + $0xd0] sm:$0xff] %v371
  %436 = vst [vmem:[%s4 + $0xd8] sm:$0xff] %v372
  %437 = vst [vmem:[%s4 + $0xe0] sm:$0xff] %v373
  %438 = vst [vmem:[%s4 + $0xe8] sm:$0xff] %v374
  %439 = vst [vmem:[%s4 + $0xf0] sm:$0xff] %v375
  %440 = vst [vmem:[%s4 + $0xf8] sm:$0xff] %v376
  %441 = vst [vmem:[%s4 + $0x100] sm:$0xff] %v377
  %442 = vst [vmem:[%s4 + $0x108] sm:$0xff] %v378
  %443 = vst [vmem:[%s4 + $0x110] sm:$0xff] %v379
  %444 = vst [vmem:[%s4 + $0x118] sm:$0xff] %v380
  %445 = vst [vmem:[%s4 + $0x120] sm:$0xff] %v381
  %446 = vst [vmem:[%s4 + $0x128] sm:$0xff] %v382
  %447 = vst [vmem:[%s4 + $0x130] sm:$0xff] %v383
  %448 = vst [vmem:[%s4 + $0x138] sm:$0xff] %v384
  %449 = vst [vmem:[%s4 + $0x140] sm:$0xff] %v385
  %450 = vst [vmem:[%s4 + $0x148] sm:$0xff] %v386
  %451 = vst [vmem:[%s4 + $0x150] sm:$0xff] %v387
  %452 = vst [vmem:[%s4 + $0x158] sm:$0xff] %v388
  %453 = vst [vmem:[%s4 + $0x160] sm:$0xff] %v389
  %454 = vst [vmem:[%s4 + $0x168] sm:$0xff] %v390
  %455 = vst [vmem:[%s4 + $0x170] sm:$0xff] %v391
  %456 = vst [vmem:[%s4 + $0x178] sm:$0xff] %v392
  %457 = vst [vmem:[%s4 + $0x180] sm:$0xff] %v393
  %458 = vst [vmem:[%s4 + $0x188] sm:$0xff] %v394
  %459 = vst [vmem:[%s4 + $0x190] sm:$0xff] %v395
  %460 = vst [vmem:[%s4 + $0x198] sm:$0xff] %v396
  %461 = vst [vmem:[%s4 + $0x1a0] sm:$0xff] %v397
  %462 = vst [vmem:[%s4 + $0x1a8] sm:$0xff] %v398
  %463 = vst [vmem:[%s4 + $0x1b0] sm:$0xff] %v399
  %464 = vst [vmem:[%s4 + $0x1b8] sm:$0xff] %v400
  %465 = vst [vmem:[%s4 + $0x1c0] sm:$0xff] %v401
  %466 = vst [vmem:[%s4 + $0x1c8] sm:$0xff] %v402
  %467 = vst [vmem:[%s4 + $0x1d0] sm:$0xff] %v403
  %468 = vst [vmem:[%s4 + $0x1d8] sm:$0xff] %v404
  %469 = vst [vmem:[%s4 + $0x1e0] sm:$0xff] %v405
  %470 = vst [vmem:[%s4 + $0x1e8] sm:$0xff] %v406
  %471 = vst [vmem:[%s4 + $0x1f0] sm:$0xff] %v407
  %472 = vst [vmem:[%s4 + $0x1f8] sm:$0xff] %v408
  // Predicated region
  $region18: #{resnet_forward.30} parent=0 // pred_check
    _
  $region19: #{resnet_forward.30} parent=0 // pred_check_branch
    %474 = sbr.rel (0) target = $region21
  $region20: #{resnet_forward.30} parent=0 // pred_region
    _
  $region21: #{resnet_forward.30} parent=0 // pred_fallthru
    _
  // Predicated region
  $region22: #{resnet_forward.30} parent=0 // pred_check
    _
  $region23: #{resnet_forward.30} parent=0 // pred_check_branch
    %476 = sbr.rel (0) target = $region25
  $region24: #{resnet_forward.30} parent=0 // pred_region
    _
  $region25: #{resnet_forward.30} parent=0 // pred_fallthru
    _

// kernel: resnet_forward.34
$region0: #{resnet_forward.34}
  #allocation0 [shape = 'u32[]', space=smem, size = 0x4, offset = 0x4, fixed_abs, tag = 'smem constant byte address 0x4 - core index']
  #allocation1 [shape = 'u32[72,128]{1,0:T(1,128)}', space=vmem, size = 0x9000, scoped, tag = 'internal scratch']
  #allocation2 [shape = 'f32[128,128]{1,0:T(8,128)}', space=vmem, size = 0x10000, scoped, tag = 'scratch operand']
  %s0 = inlined_call_operand.vmem [shape: bf16[128,128], index: 0, kind: input, shape index: {}]
  %s1 = inlined_call_operand.vmem [shape: bf16[128,128], index: 1, kind: input, shape index: {}]
  %s2 = inlined_call_operand.vmem [shape: f32[128,128], index: 2, kind: output, shape index: {0}]
  %s3 = inlined_call_operand.vmem [shape: f32[1,1,128], index: 3, kind: output, shape index: {1}]
  %s4 = inlined_call_operand.vmem [shape: f32[1,1,128], index: 4, kind: output, shape index: {2}]
  %5 = xla_tuple %s2, %s3, %s4
  %s6 = sld [smem:[#allocation0]]
  $region42: #{resnet_forward.34} parent=0
    _
  %s8 = ssub.s32 1, %s6
  %s9 = scalar_select 0, %s8, %s6
  // Predicated region
  $region2: #{resnet_forward.34} parent=0 // pred_check
    _
  $region3: #{resnet_forward.34} parent=0 // pred_check_branch
    %11 = sbr.rel (0) target = $region5
  $region4: #{resnet_forward.34} parent=0 // pred_region
    _
  $region5: #{resnet_forward.34} parent=0 // pred_fallthru
    _
  // Predicated region
  $region6: #{resnet_forward.34} parent=0 // pred_check
    _
  $region7: #{resnet_forward.34} parent=0 // pred_check_branch
    %13 = sbr.rel (0) target = $region9
  $region8: #{resnet_forward.34} parent=0 // pred_region
    _
  $region9: #{resnet_forward.34} parent=0 // pred_fallthru
    _
  %p14 = scmp.eq.s32.totalorder 0, 0
  // Predicated region
  $region10: #{resnet_forward.34} parent=0 // pred_check
    %p15 = pneg %p14
  $region11: #{resnet_forward.34} parent=0 // pred_check_branch
    %17 = sbr.rel (%p15) target = $region13
  $region12: #{resnet_forward.34} parent=0 // pred_region
    %18 = vst [vmem:[#allocation2] sm:$0xff] 0.0
    %19 = vst [vmem:[#allocation2 + $0x8] sm:$0xff] 0.0
    %20 = vst [vmem:[#allocation2 + $0x10] sm:$0xff] 0.0
    %21 = vst [vmem:[#allocation2 + $0x18] sm:$0xff] 0.0
    %22 = vst [vmem:[#allocation2 + $0x20] sm:$0xff] 0.0
    %23 = vst [vmem:[#allocation2 + $0x28] sm:$0xff] 0.0
    %24 = vst [vmem:[#allocation2 + $0x30] sm:$0xff] 0.0
    %25 = vst [vmem:[#allocation2 + $0x38] sm:$0xff] 0.0
    %26 = vst [vmem:[#allocation2 + $0x40] sm:$0xff] 0.0
    %27 = vst [vmem:[#allocation2 + $0x48] sm:$0xff] 0.0
    %28 = vst [vmem:[#allocation2 + $0x50] sm:$0xff] 0.0
    %29 = vst [vmem:[#allocation2 + $0x58] sm:$0xff] 0.0
    %30 = vst [vmem:[#allocation2 + $0x60] sm:$0xff] 0.0
    %31 = vst [vmem:[#allocation2 + $0x68] sm:$0xff] 0.0
    %32 = vst [vmem:[#allocation2 + $0x70] sm:$0xff] 0.0
    %33 = vst [vmem:[#allocation2 + $0x78] sm:$0xff] 0.0
  $region13: #{resnet_forward.34} parent=0 // pred_fallthru
    _
  %v34 = vld [vmem:[#allocation2] sm:$0xff]
  %v35 = vld [vmem:[#allocation2 + $0x8] sm:$0xff]
  %v36 = vld [vmem:[#allocation2 + $0x10] sm:$0xff]
  %v37 = vld [vmem:[#allocation2 + $0x18] sm:$0xff]
  %v38 = vld [vmem:[#allocation2 + $0x20] sm:$0xff]
  %v39 = vld [vmem:[#allocation2 + $0x28] sm:$0xff]
  %v40 = vld [vmem:[#allocation2 + $0x30] sm:$0xff]
  %v41 = vld [vmem:[#allocation2 + $0x38] sm:$0xff]
  %v42 = vld [vmem:[#allocation2 + $0x40] sm:$0xff]
  %v43 = vld [vmem:[#allocation2 + $0x48] sm:$0xff]
  %v44 = vld [vmem:[#allocation2 + $0x50] sm:$0xff]
  %v45 = vld [vmem:[#allocation2 + $0x58] sm:$0xff]
  %v46 = vld [vmem:[#allocation2 + $0x60] sm:$0xff]
  %v47 = vld [vmem:[#allocation2 + $0x68] sm:$0xff]
  %v48 = vld [vmem:[#allocation2 + $0x70] sm:$0xff]
  %v49 = vld [vmem:[#allocation2 + $0x78] sm:$0xff]
  %v50 = vld [vmem:[%s0] sm:$0xf]
  %v51 = vld [vmem:[%s0 + $0x4] sm:$0xf]
  %v52 = vld [vmem:[%s0 + $0x8] sm:$0xf]
  %v53 = vld [vmem:[%s0 + $0xc] sm:$0xf]
  %v54 = vld [vmem:[%s0 + $0x10] sm:$0xf]
  %v55 = vld [vmem:[%s0 + $0x14] sm:$0xf]
  %v56 = vld [vmem:[%s0 + $0x18] sm:$0xf]
  %v57 = vld [vmem:[%s0 + $0x1c] sm:$0xf]
  %v58 = vld [vmem:[%s0 + $0x20] sm:$0xf]
  %v59 = vld [vmem:[%s0 + $0x24] sm:$0xf]
  %v60 = vld [vmem:[%s0 + $0x28] sm:$0xf]
  %v61 = vld [vmem:[%s0 + $0x2c] sm:$0xf]
  %v62 = vld [vmem:[%s0 + $0x30] sm:$0xf]
  %v63 = vld [vmem:[%s0 + $0x34] sm:$0xf]
  %v64 = vld [vmem:[%s0 + $0x38] sm:$0xf]
  %v65 = vld [vmem:[%s0 + $0x3c] sm:$0xf]
  %v66 = vld [vmem:[%s1] sm:$0xf]
  %v67 = vld [vmem:[%s1 + $0x4] sm:$0xf]
  %v68 = vld [vmem:[%s1 + $0x8] sm:$0xf]
  %v69 = vld [vmem:[%s1 + $0xc] sm:$0xf]
  %v70 = vld [vmem:[%s1 + $0x10] sm:$0xf]
  %v71 = vld [vmem:[%s1 + $0x14] sm:$0xf]
  %v72 = vld [vmem:[%s1 + $0x18] sm:$0xf]
  %v73 = vld [vmem:[%s1 + $0x1c] sm:$0xf]
  %v74 = vld [vmem:[%s1 + $0x20] sm:$0xf]
  %v75 = vld [vmem:[%s1 + $0x24] sm:$0xf]
  %v76 = vld [vmem:[%s1 + $0x28] sm:$0xf]
  %v77 = vld [vmem:[%s1 + $0x2c] sm:$0xf]
  %v78 = vld [vmem:[%s1 + $0x30] sm:$0xf]
  %v79 = vld [vmem:[%s1 + $0x34] sm:$0xf]
  %v80 = vld [vmem:[%s1 + $0x38] sm:$0xf]
  %v81 = vld [vmem:[%s1 + $0x3c] sm:$0xf]
  %v98 = vunpack.c.l.b16 %v50
  %v99 = vunpack.c.l.b16 %v51
  %v100 = vunpack.c.l.b16 %v52
  %v101 = vunpack.c.l.b16 %v53
  %v102 = vunpack.c.l.b16 %v54
  %v103 = vunpack.c.l.b16 %v55
  %v104 = vunpack.c.l.b16 %v56
  %v105 = vunpack.c.l.b16 %v57
  %v106 = vunpack.c.l.b16 %v58
  %v107 = vunpack.c.l.b16 %v59
  %v108 = vunpack.c.l.b16 %v60
  %v109 = vunpack.c.l.b16 %v61
  %v110 = vunpack.c.l.b16 %v62
  %v111 = vunpack.c.l.b16 %v63
  %v112 = vunpack.c.l.b16 %v64
  %v113 = vunpack.c.l.b16 %v65
  %v114 = vpack.c.b16 %v99, %v98
  %v115 = vpack.c.b16 %v101, %v100
  %v116 = vpack.c.b16 %v103, %v102
  %v117 = vpack.c.b16 %v105, %v104
  %v118 = vpack.c.b16 %v107, %v106
  %v119 = vpack.c.b16 %v109, %v108
  %v120 = vpack.c.b16 %v111, %v110
  %v121 = vpack.c.b16 %v113, %v112
  %v146 = vunpack.c.l.b16 %v66
  %v147 = vunpack.c.l.b16 %v67
  %v148 = vunpack.c.l.b16 %v68
  %v149 = vunpack.c.l.b16 %v69
  %v150 = vunpack.c.l.b16 %v70
  %v151 = vunpack.c.l.b16 %v71
  %v152 = vunpack.c.l.b16 %v72
  %v153 = vunpack.c.l.b16 %v73
  %v154 = vunpack.c.l.b16 %v74
  %v155 = vunpack.c.l.b16 %v75
  %v156 = vunpack.c.l.b16 %v76
  %v157 = vunpack.c.l.b16 %v77
  %v158 = vunpack.c.l.b16 %v78
  %v159 = vunpack.c.l.b16 %v79
  %v160 = vunpack.c.l.b16 %v80
  %v161 = vunpack.c.l.b16 %v81
  %v162 = vpack.c.b16 %v147, %v146
  %v163 = vpack.c.b16 %v149, %v148
  %v164 = vpack.c.b16 %v151, %v150
  %v165 = vpack.c.b16 %v153, %v152
  %v166 = vpack.c.b16 %v155, %v154
  %v167 = vpack.c.b16 %v157, %v156
  %v168 = vpack.c.b16 %v159, %v158
  %v169 = vpack.c.b16 %v161, %v160
  %178 = vmatpush.bf16.msra.mxu0 %v169
  %179 = vmatpush.bf16.msra.mxu0 %v168
  %180 = vmatpush.bf16.msra.mxu0 %v167
  %181 = vmatpush.bf16.msra.mxu0 %v166
  %182 = vmatpush.bf16.msra.mxu0 %v165
  %183 = vmatpush.bf16.msra.mxu0 %v164
  %184 = vmatpush.bf16.msra.mxu0 %v163
  %185 = vmatpush.bf16.msra.mxu0 %v162
  %186 = vmatmul.bf16.gmra.mxu0 %v114
  %v187 = vpop.f32.mrf.mxu0
  %v188 = vadd.f32 0.0, %v187
  %v189 = vpop.f32.mrf.mxu0
  %v190 = vadd.f32 0.0, %v189
  %191 = vmatmul.bf16.gmra.mxu0 %v115
  %v192 = vpop.f32.mrf.mxu0
  %v193 = vadd.f32 0.0, %v192
  %v194 = vpop.f32.mrf.mxu0
  %v195 = vadd.f32 0.0, %v194
  %196 = vmatmul.bf16.gmra.mxu0 %v116
  %v197 = vpop.f32.mrf.mxu0
  %v198 = vadd.f32 0.0, %v197
  %v199 = vpop.f32.mrf.mxu0
  %v200 = vadd.f32 0.0, %v199
  %201 = vmatmul.bf16.gmra.mxu0 %v117
  %v202 = vpop.f32.mrf.mxu0
  %v203 = vadd.f32 0.0, %v202
  %v204 = vpop.f32.mrf.mxu0
  %v205 = vadd.f32 0.0, %v204
  %206 = vmatmul.bf16.gmra.mxu0 %v118
  %v207 = vpop.f32.mrf.mxu0
  %v208 = vadd.f32 0.0, %v207
  %v209 = vpop.f32.mrf.mxu0
  %v210 = vadd.f32 0.0, %v209
  %211 = vmatmul.bf16.gmra.mxu0 %v119
  %v212 = vpop.f32.mrf.mxu0
  %v213 = vadd.f32 0.0, %v212
  %v214 = vpop.f32.mrf.mxu0
  %v215 = vadd.f32 0.0, %v214
  %216 = vmatmul.bf16.gmra.mxu0 %v120
  %v217 = vpop.f32.mrf.mxu0
  %v218 = vadd.f32 0.0, %v217
  %v219 = vpop.f32.mrf.mxu0
  %v220 = vadd.f32 0.0, %v219
  %221 = vmatmul.bf16.gmra.mxu0 %v121
  %v222 = vpop.f32.mrf.mxu0
  %v223 = vadd.f32 0.0, %v222
  %v224 = vpop.f32.mrf.mxu0
  %v225 = vadd.f32 0.0, %v224
  %226 = vdwg.mxu0
  %v227 = vadd.f32 %v34, %v188
  %v228 = vadd.f32 %v35, %v190
  %v229 = vadd.f32 %v36, %v193
  %v230 = vadd.f32 %v37, %v195
  %v231 = vadd.f32 %v38, %v198
  %v232 = vadd.f32 %v39, %v200
  %v233 = vadd.f32 %v40, %v203
  %v234 = vadd.f32 %v41, %v205
  %v235 = vadd.f32 %v42, %v208
  %v236 = vadd.f32 %v43, %v210
  %v237 = vadd.f32 %v44, %v213
  %v238 = vadd.f32 %v45, %v215
  %v239 = vadd.f32 %v46, %v218
  %v240 = vadd.f32 %v47, %v220
  %v241 = vadd.f32 %v48, %v223
  %v242 = vadd.f32 %v49, %v225
  %243 = vst [vmem:[#allocation2] sm:$0xff] %v227
  %244 = vst [vmem:[#allocation2 + $0x8] sm:$0xff] %v228
  %245 = vst [vmem:[#allocation2 + $0x10] sm:$0xff] %v229
  %246 = vst [vmem:[#allocation2 + $0x18] sm:$0xff] %v230
  %247 = vst [vmem:[#allocation2 + $0x20] sm:$0xff] %v231
  %248 = vst [vmem:[#allocation2 + $0x28] sm:$0xff] %v232
  %249 = vst [vmem:[#allocation2 + $0x30] sm:$0xff] %v233
  %250 = vst [vmem:[#allocation2 + $0x38] sm:$0xff] %v234
  %251 = vst [vmem:[#allocation2 + $0x40] sm:$0xff] %v235
  %252 = vst [vmem:[#allocation2 + $0x48] sm:$0xff] %v236
  %253 = vst [vmem:[#allocation2 + $0x50] sm:$0xff] %v237
  %254 = vst [vmem:[#allocation2 + $0x58] sm:$0xff] %v238
  %255 = vst [vmem:[#allocation2 + $0x60] sm:$0xff] %v239
  %256 = vst [vmem:[#allocation2 + $0x68] sm:$0xff] %v240
  %257 = vst [vmem:[#allocation2 + $0x70] sm:$0xff] %v241
  %258 = vst [vmem:[#allocation2 + $0x78] sm:$0xff] %v242
  // Predicated region
  $region14: #{resnet_forward.34} parent=0 // pred_check
    %p259 = pneg %p14
  $region15: #{resnet_forward.34} parent=0 // pred_check_branch
    %261 = sbr.rel (%p259) target = $region17
  $region16: #{resnet_forward.34} parent=0 // pred_region
    %v262 = vld [vmem:[#allocation2] sm:$0xff]
    %v263 = vld [vmem:[#allocation2 + $0x8] sm:$0xff]
    %v264 = vld [vmem:[#allocation2 + $0x10] sm:$0xff]
    %v265 = vld [vmem:[#allocation2 + $0x18] sm:$0xff]
    %v266 = vld [vmem:[#allocation2 + $0x20] sm:$0xff]
    %v267 = vld [vmem:[#allocation2 + $0x28] sm:$0xff]
    %v268 = vld [vmem:[#allocation2 + $0x30] sm:$0xff]
    %v269 = vld [vmem:[#allocation2 + $0x38] sm:$0xff]
    %v270 = vld [vmem:[#allocation2 + $0x40] sm:$0xff]
    %v271 = vld [vmem:[#allocation2 + $0x48] sm:$0xff]
    %v272 = vld [vmem:[#allocation2 + $0x50] sm:$0xff]
    %v273 = vld [vmem:[#allocation2 + $0x58] sm:$0xff]
    %v274 = vld [vmem:[#allocation2 + $0x60] sm:$0xff]
    %v275 = vld [vmem:[#allocation2 + $0x68] sm:$0xff]
    %v276 = vld [vmem:[#allocation2 + $0x70] sm:$0xff]
    %v277 = vld [vmem:[#allocation2 + $0x78] sm:$0xff]
    %278 = vst [vmem:[%s2] sm:$0xff] %v262
    %279 = vst [vmem:[%s2 + $0x8] sm:$0xff] %v263
    %280 = vst [vmem:[%s2 + $0x10] sm:$0xff] %v264
    %281 = vst [vmem:[%s2 + $0x18] sm:$0xff] %v265
    %282 = vst [vmem:[%s2 + $0x20] sm:$0xff] %v266
    %283 = vst [vmem:[%s2 + $0x28] sm:$0xff] %v267
    %284 = vst [vmem:[%s2 + $0x30] sm:$0xff] %v268
    %285 = vst [vmem:[%s2 + $0x38] sm:$0xff] %v269
    %286 = vst [vmem:[%s2 + $0x40] sm:$0xff] %v270
    %287 = vst [vmem:[%s2 + $0x48] sm:$0xff] %v271
    %288 = vst [vmem:[%s2 + $0x50] sm:$0xff] %v272
    %289 = vst [vmem:[%s2 + $0x58] sm:$0xff] %v273
    %290 = vst [vmem:[%s2 + $0x60] sm:$0xff] %v274
    %291 = vst [vmem:[%s2 + $0x68] sm:$0xff] %v275
    %292 = vst [vmem:[%s2 + $0x70] sm:$0xff] %v276
    %293 = vst [vmem:[%s2 + $0x78] sm:$0xff] %v277
    %v294 = vadd.f32 %v262, %v263
    %v295 = vadd.f32 %v294, %v264
    %v296 = vadd.f32 %v295, %v265
    %v297 = vadd.f32 %v296, %v266
    %v298 = vadd.f32 %v297, %v267
    %v299 = vadd.f32 %v298, %v268
    %v300 = vadd.f32 %v299, %v269
    %v301 = vadd.f32 %v300, %v270
    %v302 = vadd.f32 %v301, %v271
    %v303 = vadd.f32 %v302, %v272
    %v304 = vadd.f32 %v303, %v273
    %v305 = vadd.f32 %v304, %v274
    %v306 = vadd.f32 %v305, %v275
    %v307 = vadd.f32 %v306, %v276
    %v308 = vadd.f32 %v307, %v277
    %v309 = vrot.slane %v308, 4
    %v310 = vadd.f32 %v308, %v309
    %v311 = vrot.slane %v310, 2
    %v312 = vadd.f32 %v310, %v311
    %v313 = vrot.slane %v312, 1
    %v314 = vadd.f32 %v312, %v313
    %315 = vst [vmem:[%s3] sm:$0x1] %v314
    %v316 = vmul.f32 %v262, %v262
    %v317 = vmul.f32 %v263, %v263
    %v318 = vmul.f32 %v264, %v264
    %v319 = vmul.f32 %v265, %v265
    %v320 = vmul.f32 %v266, %v266
    %v321 = vmul.f32 %v267, %v267
    %v322 = vmul.f32 %v268, %v268
    %v323 = vmul.f32 %v269, %v269
    %v324 = vmul.f32 %v270, %v270
    %v325 = vmul.f32 %v271, %v271
    %v326 = vmul.f32 %v272, %v272
    %v327 = vmul.f32 %v273, %v273
    %v328 = vmul.f32 %v274, %v274
    %v329 = vmul.f32 %v275, %v275
    %v330 = vmul.f32 %v276, %v276
    %v331 = vmul.f32 %v277, %v277
    %v332 = vadd.f32 %v316, %v317
    %v333 = vadd.f32 %v332, %v318
    %v334 = vadd.f32 %v333, %v319
    %v335 = vadd.f32 %v334, %v320
    %v336 = vadd.f32 %v335, %v321
    %v337 = vadd.f32 %v336, %v322
    %v338 = vadd.f32 %v337, %v323
    %v339 = vadd.f32 %v338, %v324
    %v340 = vadd.f32 %v339, %v325
    %v341 = vadd.f32 %v340, %v326
    %v342 = vadd.f32 %v341, %v327
    %v343 = vadd.f32 %v342, %v328
    %v344 = vadd.f32 %v343, %v329
    %v345 = vadd.f32 %v344, %v330
    %v346 = vadd.f32 %v345, %v331
    %v347 = vrot.slane %v346, 4
    %v348 = vadd.f32 %v346, %v347
    %v349 = vrot.slane %v348, 2
    %v350 = vadd.f32 %v348, %v349
    %v351 = vrot.slane %v350, 1
    %v352 = vadd.f32 %v350, %v351
    %353 = vst [vmem:[%s4] sm:$0x1] %v352
  $region17: #{resnet_forward.34} parent=0 // pred_fallthru
    _
  // Predicated region
  $region18: #{resnet_forward.34} parent=0 // pred_check
    _
  $region19: #{resnet_forward.34} parent=0 // pred_check_branch
    %355 = sbr.rel (0) target = $region21
  $region20: #{resnet_forward.34} parent=0 // pred_region
    _
  $region21: #{resnet_forward.34} parent=0 // pred_fallthru
    _
  // Predicated region
  $region22: #{resnet_forward.34} parent=0 // pred_check
    _
  $region23: #{resnet_forward.34} parent=0 // pred_check_branch
    %357 = sbr.rel (0) target = $region25
  $region24: #{resnet_forward.34} parent=0 // pred_region
    _
  $region25: #{resnet_forward.34} parent=0 // pred_fallthru
    _
  // Predicated region
  $region26: #{resnet_forward.34} parent=0 // pred_check
    _
  $region27: #{resnet_forward.34} parent=0 // pred_check_branch
    %359 = sbr.rel (0) target = $region29
  $region28: #{resnet_forward.34} parent=0 // pred_region
    _
  $region29: #{resnet_forward.34} parent=0 // pred_fallthru
    _
  // Predicated region
  $region30: #{resnet_forward.34} parent=0 // pred_check
    _
  $region31: #{resnet_forward.34} parent=0 // pred_check_branch
    %361 = sbr.rel (0) target = $region33
  $region32: #{resnet_forward.34} parent=0 // pred_region
    _
  $region33: #{resnet_forward.34} parent=0 // pred_fallthru
    _
  // Predicated region
  $region34: #{resnet_forward.34} parent=0 // pred_check
    _
  $region35: #{resnet_forward.34} parent=0 // pred_check_branch
    %363 = sbr.rel (0) target = $region37
  $region36: #{resnet_forward.34} parent=0 // pred_region
    _
  $region37: #{resnet_forward.34} parent=0 // pred_fallthru
    _
  // Predicated region
  $region38: #{resnet_forward.34} parent=0 // pred_check
    _
  $region39: #{resnet_forward.34} parent=0 // pred_check_branch
    %365 = sbr.rel (0) target = $region41
  $region40: #{resnet_forward.34} parent=0 // pred_region
    _
  $region41: #{resnet_forward.34} parent=0 // pred_fallthru
    _

// kernel: resnet_forward.35
$region0: #{resnet_forward.35}
  #allocation0 [shape = 'u32[]', space=smem, size = 0x4, offset = 0x4, fixed_abs, tag = 'smem constant byte address 0x4 - core index']
  #allocation1 [shape = 'u32[72,128]{1,0:T(1,128)}', space=vmem, size = 0x9000, scoped, tag = 'internal scratch']
  %s0 = inlined_call_operand.vmem [shape: f32[128,128], index: 0, kind: input, shape index: {}]
  %s1 = inlined_call_operand.vmem [shape: f32[1,128], index: 1, kind: input, shape index: {}]
  %s2 = inlined_call_operand.vmem [shape: f32[1,128], index: 2, kind: input, shape index: {}]
  %s3 = inlined_call_operand.vmem [shape: f32[128,128], index: 3, kind: output, shape index: {}]
  %s4 = sld [smem:[#allocation0]]
  $region22: #{resnet_forward.35} parent=0
    _
  %s6 = ssub.s32 1, %s4
  %s7 = scalar_select 0, %s6, %s4
  // Predicated region
  $region2: #{resnet_forward.35} parent=0 // pred_check
    _
  $region3: #{resnet_forward.35} parent=0 // pred_check_branch
    %9 = sbr.rel (0) target = $region5
  $region4: #{resnet_forward.35} parent=0 // pred_region
    _
  $region5: #{resnet_forward.35} parent=0 // pred_fallthru
    _
  // Predicated region
  $region6: #{resnet_forward.35} parent=0 // pred_check
    _
  $region7: #{resnet_forward.35} parent=0 // pred_check_branch
    %11 = sbr.rel (0) target = $region9
  $region8: #{resnet_forward.35} parent=0 // pred_region
    _
  $region9: #{resnet_forward.35} parent=0 // pred_fallthru
    _
  // Predicated region
  $region10: #{resnet_forward.35} parent=0 // pred_check
    _
  $region11: #{resnet_forward.35} parent=0 // pred_check_branch
    %13 = sbr.rel (0) target = $region13
  $region12: #{resnet_forward.35} parent=0 // pred_region
    _
  $region13: #{resnet_forward.35} parent=0 // pred_fallthru
    _
  %v14 = vld [vmem:[%s0] sm:$0xff]
  %v15 = vld [vmem:[%s0 + $0x8] sm:$0xff]
  %v16 = vld [vmem:[%s0 + $0x10] sm:$0xff]
  %v17 = vld [vmem:[%s0 + $0x18] sm:$0xff]
  %v18 = vld [vmem:[%s0 + $0x20] sm:$0xff]
  %v19 = vld [vmem:[%s0 + $0x28] sm:$0xff]
  %v20 = vld [vmem:[%s0 + $0x30] sm:$0xff]
  %v21 = vld [vmem:[%s0 + $0x38] sm:$0xff]
  %v22 = vld [vmem:[%s0 + $0x40] sm:$0xff]
  %v23 = vld [vmem:[%s0 + $0x48] sm:$0xff]
  %v24 = vld [vmem:[%s0 + $0x50] sm:$0xff]
  %v25 = vld [vmem:[%s0 + $0x58] sm:$0xff]
  %v26 = vld [vmem:[%s0 + $0x60] sm:$0xff]
  %v27 = vld [vmem:[%s0 + $0x68] sm:$0xff]
  %v28 = vld [vmem:[%s0 + $0x70] sm:$0xff]
  %v29 = vld [vmem:[%s0 + $0x78] sm:$0xff]
  %v30 = vld [vmem:[%s1] sm:$0x1]
  %v32 = vperm.slane %v30, 0
  %v34 = vmul.f32 %v14, %v32
  %v35 = vmul.f32 %v15, %v32
  %v36 = vmul.f32 %v16, %v32
  %v37 = vmul.f32 %v17, %v32
  %v38 = vmul.f32 %v18, %v32
  %v39 = vmul.f32 %v19, %v32
  %v40 = vmul.f32 %v20, %v32
  %v41 = vmul.f32 %v21, %v32
  %v42 = vmul.f32 %v22, %v32
  %v43 = vmul.f32 %v23, %v32
  %v44 = vmul.f32 %v24, %v32
  %v45 = vmul.f32 %v25, %v32
  %v46 = vmul.f32 %v26, %v32
  %v47 = vmul.f32 %v27, %v32
  %v48 = vmul.f32 %v28, %v32
  %v49 = vmul.f32 %v29, %v32
  %v50 = vld [vmem:[%s2] sm:$0x1]
  %v52 = vperm.slane %v50, 0
  %v54 = vadd.f32 %v34, %v52
  %v55 = vadd.f32 %v35, %v52
  %v56 = vadd.f32 %v36, %v52
  %v57 = vadd.f32 %v37, %v52
  %v58 = vadd.f32 %v38, %v52
  %v59 = vadd.f32 %v39, %v52
  %v60 = vadd.f32 %v40, %v52
  %v61 = vadd.f32 %v41, %v52
  %v62 = vadd.f32 %v42, %v52
  %v63 = vadd.f32 %v43, %v52
  %v64 = vadd.f32 %v44, %v52
  %v65 = vadd.f32 %v45, %v52
  %v66 = vadd.f32 %v46, %v52
  %v67 = vadd.f32 %v47, %v52
  %v68 = vadd.f32 %v48, %v52
  %v69 = vadd.f32 %v49, %v52
  %70 = vst [vmem:[%s3] sm:$0xff] %v54
  %71 = vst [vmem:[%s3 + $0x8] sm:$0xff] %v55
  %72 = vst [vmem:[%s3 + $0x10] sm:$0xff] %v56
  %73 = vst [vmem:[%s3 + $0x18] sm:$0xff] %v57
  %74 = vst [vmem:[%s3 + $0x20] sm:$0xff] %v58
  %75 = vst [vmem:[%s3 + $0x28] sm:$0xff] %v59
  %76 = vst [vmem:[%s3 + $0x30] sm:$0xff] %v60
  %77 = vst [vmem:[%s3 + $0x38] sm:$0xff] %v61
  %78 = vst [vmem:[%s3 + $0x40] sm:$0xff] %v62
  %79 = vst [vmem:[%s3 + $0x48] sm:$0xff] %v63
  %80 = vst [vmem:[%s3 + $0x50] sm:$0xff] %v64
  %81 = vst [vmem:[%s3 + $0x58] sm:$0xff] %v65
  %82 = vst [vmem:[%s3 + $0x60] sm:$0xff] %v66
  %83 = vst [vmem:[%s3 + $0x68] sm:$0xff] %v67
  %84 = vst [vmem:[%s3 + $0x70] sm:$0xff] %v68
  %85 = vst [vmem:[%s3 + $0x78] sm:$0xff] %v69
  // Predicated region
  $region14: #{resnet_forward.35} parent=0 // pred_check
    _
  $region15: #{resnet_forward.35} parent=0 // pred_check_branch
    %87 = sbr.rel (0) target = $region17
  $region16: #{resnet_forward.35} parent=0 // pred_region
    _
  $region17: #{resnet_forward.35} parent=0 // pred_fallthru
    _
  // Predicated region
  $region18: #{resnet_forward.35} parent=0 // pred_check
    _
  $region19: #{resnet_forward.35} parent=0 // pred_check_branch
    %89 = sbr.rel (0) target = $region21
  $region20: #{resnet_forward.35} parent=0 // pred_region
    _
  $region21: #{resnet_forward.35} parent=0 // pred_fallthru
    _

// kernel: resnet_forward.32
$region0: #{resnet_forward.32}
  #allocation0 [shape = 'u32[]', space=smem, size = 0x4, offset = 0x4, fixed_abs, tag = 'smem constant byte address 0x4 - core index']
  #allocation1 [shape = 'u32[72,128]{1,0:T(1,128)}', space=vmem, size = 0x9000, scoped, tag = 'internal scratch']
  %s0 = inlined_call_operand.vmem [shape: f32[128,128], index: 0, kind: input, shape index: {}]
  %s1 = inlined_call_operand.vmem [shape: f32[1,128], index: 1, kind: input, shape index: {}]
  %s2 = inlined_call_operand.vmem [shape: f32[1,128], index: 2, kind: input, shape index: {}]
  %s3 = inlined_call_operand.vmem [shape: f32[128,128], index: 3, kind: output, shape index: {}]
  %s4 = sld [smem:[#allocation0]]
  $region22: #{resnet_forward.32} parent=0
    _
  %s6 = ssub.s32 1, %s4
  %s7 = scalar_select 0, %s6, %s4
  // Predicated region
  $region2: #{resnet_forward.32} parent=0 // pred_check
    _
  $region3: #{resnet_forward.32} parent=0 // pred_check_branch
    %9 = sbr.rel (0) target = $region5
  $region4: #{resnet_forward.32} parent=0 // pred_region
    _
  $region5: #{resnet_forward.32} parent=0 // pred_fallthru
    _
  // Predicated region
  $region6: #{resnet_forward.32} parent=0 // pred_check
    _
  $region7: #{resnet_forward.32} parent=0 // pred_check_branch
    %11 = sbr.rel (0) target = $region9
  $region8: #{resnet_forward.32} parent=0 // pred_region
    _
  $region9: #{resnet_forward.32} parent=0 // pred_fallthru
    _
  // Predicated region
  $region10: #{resnet_forward.32} parent=0 // pred_check
    _
  $region11: #{resnet_forward.32} parent=0 // pred_check_branch
    %13 = sbr.rel (0) target = $region13
  $region12: #{resnet_forward.32} parent=0 // pred_region
    _
  $region13: #{resnet_forward.32} parent=0 // pred_fallthru
    _
  %v14 = vld [vmem:[%s0] sm:$0xff]
  %v15 = vld [vmem:[%s0 + $0x8] sm:$0xff]
  %v16 = vld [vmem:[%s0 + $0x10] sm:$0xff]
  %v17 = vld [vmem:[%s0 + $0x18] sm:$0xff]
  %v18 = vld [vmem:[%s0 + $0x20] sm:$0xff]
  %v19 = vld [vmem:[%s0 + $0x28] sm:$0xff]
  %v20 = vld [vmem:[%s0 + $0x30] sm:$0xff]
  %v21 = vld [vmem:[%s0 + $0x38] sm:$0xff]
  %v22 = vld [vmem:[%s0 + $0x40] sm:$0xff]
  %v23 = vld [vmem:[%s0 + $0x48] sm:$0xff]
  %v24 = vld [vmem:[%s0 + $0x50] sm:$0xff]
  %v25 = vld [vmem:[%s0 + $0x58] sm:$0xff]
  %v26 = vld [vmem:[%s0 + $0x60] sm:$0xff]
  %v27 = vld [vmem:[%s0 + $0x68] sm:$0xff]
  %v28 = vld [vmem:[%s0 + $0x70] sm:$0xff]
  %v29 = vld [vmem:[%s0 + $0x78] sm:$0xff]
  %v30 = vld [vmem:[%s1] sm:$0x1]
  %v32 = vperm.slane %v30, 0
  %v34 = vmul.f32 %v14, %v32
  %v35 = vmul.f32 %v15, %v32
  %v36 = vmul.f32 %v16, %v32
  %v37 = vmul.f32 %v17, %v32
  %v38 = vmul.f32 %v18, %v32
  %v39 = vmul.f32 %v19, %v32
  %v40 = vmul.f32 %v20, %v32
  %v41 = vmul.f32 %v21, %v32
  %v42 = vmul.f32 %v22, %v32
  %v43 = vmul.f32 %v23, %v32
  %v44 = vmul.f32 %v24, %v32
  %v45 = vmul.f32 %v25, %v32
  %v46 = vmul.f32 %v26, %v32
  %v47 = vmul.f32 %v27, %v32
  %v48 = vmul.f32 %v28, %v32
  %v49 = vmul.f32 %v29, %v32
  %v50 = vld [vmem:[%s2] sm:$0x1]
  %v52 = vperm.slane %v50, 0
  %v54 = vadd.f32 %v34, %v52
  %v55 = vadd.f32 %v35, %v52
  %v56 = vadd.f32 %v36, %v52
  %v57 = vadd.f32 %v37, %v52
  %v58 = vadd.f32 %v38, %v52
  %v59 = vadd.f32 %v39, %v52
  %v60 = vadd.f32 %v40, %v52
  %v61 = vadd.f32 %v41, %v52
  %v62 = vadd.f32 %v42, %v52
  %v63 = vadd.f32 %v43, %v52
  %v64 = vadd.f32 %v44, %v52
  %v65 = vadd.f32 %v45, %v52
  %v66 = vadd.f32 %v46, %v52
  %v67 = vadd.f32 %v47, %v52
  %v68 = vadd.f32 %v48, %v52
  %v69 = vadd.f32 %v49, %v52
  %v70 = vmax.f32 %v54, 0.0
  %v71 = vmax.f32 %v55, 0.0
  %v72 = vmax.f32 %v56, 0.0
  %v73 = vmax.f32 %v57, 0.0
  %v74 = vmax.f32 %v58, 0.0
  %v75 = vmax.f32 %v59, 0.0
  %v76 = vmax.f32 %v60, 0.0
  %v77 = vmax.f32 %v61, 0.0
  %v78 = vmax.f32 %v62, 0.0
  %v79 = vmax.f32 %v63, 0.0
  %v80 = vmax.f32 %v64, 0.0
  %v81 = vmax.f32 %v65, 0.0
  %v82 = vmax.f32 %v66, 0.0
  %v83 = vmax.f32 %v67, 0.0
  %v84 = vmax.f32 %v68, 0.0
  %v85 = vmax.f32 %v69, 0.0
  %86 = vst [vmem:[%s3] sm:$0xff] %v70
  %87 = vst [vmem:[%s3 + $0x8] sm:$0xff] %v71
  %88 = vst [vmem:[%s3 + $0x10] sm:$0xff] %v72
  %89 = vst [vmem:[%s3 + $0x18] sm:$0xff] %v73
  %90 = vst [vmem:[%s3 + $0x20] sm:$0xff] %v74
  %91 = vst [vmem:[%s3 + $0x28] sm:$0xff] %v75
  %92 = vst [vmem:[%s3 + $0x30] sm:$0xff] %v76
  %93 = vst [vmem:[%s3 + $0x38] sm:$0xff] %v77
  %94 = vst [vmem:[%s3 + $0x40] sm:$0xff] %v78
  %95 = vst [vmem:[%s3 + $0x48] sm:$0xff] %v79
  %96 = vst [vmem:[%s3 + $0x50] sm:$0xff] %v80
  %97 = vst [vmem:[%s3 + $0x58] sm:$0xff] %v81
  %98 = vst [vmem:[%s3 + $0x60] sm:$0xff] %v82
  %99 = vst [vmem:[%s3 + $0x68] sm:$0xff] %v83
  %100 = vst [vmem:[%s3 + $0x70] sm:$0xff] %v84
  %101 = vst [vmem:[%s3 + $0x78] sm:$0xff] %v85
  // Predicated region
  $region14: #{resnet_forward.32} parent=0 // pred_check
    _
  $region15: #{resnet_forward.32} parent=0 // pred_check_branch
    %103 = sbr.rel (0) target = $region17
  $region16: #{resnet_forward.32} parent=0 // pred_region
    _
  $region17: #{resnet_forward.32} parent=0 // pred_fallthru
    _
  // Predicated region
  $region18: #{resnet_forward.32} parent=0 // pred_check
    _
  $region19: #{resnet_forward.32} parent=0 // pred_check_branch
    %105 = sbr.rel (0) target = $region21
  $region20: #{resnet_forward.32} parent=0 // pred_region
    _
  $region21: #{resnet_forward.32} parent=0 // pred_fallthru
    _

// kernel: resnet_forward.31
$region0: #{resnet_forward.31}
  #allocation0 [shape = 'u32[]', space=smem, size = 0x4, offset = 0x4, fixed_abs, tag = 'smem constant byte address 0x4 - core index']
  #allocation1 [shape = 'u32[72,128]{1,0:T(1,128)}', space=vmem, size = 0x9000, scoped, tag = 'internal scratch']
  #allocation2 [shape = 'f32[128,128]{1,0:T(8,128)}', space=vmem, size = 0x10000, scoped, tag = 'scratch operand']
  %s0 = inlined_call_operand.vmem [shape: bf16[128,1152], index: 0, kind: input, shape index: {}]
  %s1 = inlined_call_operand.vmem [shape: bf16[1152,128], index: 1, kind: input, shape index: {}]
  %s2 = inlined_call_operand.vmem [shape: f32[128,128], index: 2, kind: output, shape index: {0}]
  %s3 = inlined_call_operand.vmem [shape: f32[1,1,128], index: 3, kind: output, shape index: {1}]
  %s4 = inlined_call_operand.vmem [shape: f32[1,1,128], index: 4, kind: output, shape index: {2}]
  %5 = xla_tuple %s2, %s3, %s4
  %s6 = sld [smem:[#allocation0]]
  $region91: #{resnet_forward.31} parent=0
    _
  %s8 = ssub.s32 1, %s6
  %s9 = scalar_select 0, %s8, %s6
  $region1: #{resnet_forward.31} parent=0
    #allocation3 [shape = 'u8[196608]{0}', space=vmem, size = 0x30000, scoped, tag = 'input window, operand 0']
    loop: start=0, step=1, limit=5
    $region2: #{resnet_forward.31} parent=1 // loop_pre_header
      _
    $region3: #{resnet_forward.31} parent=1 // loop_header
      %s11 = sphi 0, %s15
      %p12 = scmp.ge.s32.totalorder %s11, 5
      %s18 = sphi 0, %s37
      %s19 = sphi 0, %s33
      %s20 = sphi 0, %s29
      %s21 = sphi 0, %s18
      %s22 = sphi 0, %s19
      %s23 = sphi 0, %s20
      %s24 = sphi 0, %s21
      %s25 = sphi 0, %s22
      %s26 = sphi 0, %s23
      %s42 = sphi 0, %s44
      %s45 = sphi 0, %s42
      %s46 = sphi 0, %s45
      %s62 = sphi 0, %s46
      %s70 = sphi 0, %s72
      %s73 = sphi 0, %s70
      %s74 = sphi 0, %s73
      %s90 = sphi 0, %s74
      %s98 = sphi 0, %s100
      %s101 = sphi 0, %s98
      %s102 = sphi 0, %s101
      %s118 = sphi 0, %s102
      %s126 = sphi 0, %s128
      %s129 = sphi 0, %s126
      %s130 = sphi 0, %s129
      %s146 = sphi 0, %s130
      %s154 = sphi 0, %s156
      %s157 = sphi 0, %s154
      %s158 = sphi 0, %s157
      %s174 = sphi 0, %s158
    $region4: #{resnet_forward.31} parent=1 // loop_header_branch
      %14 = sbr.rel (%p12) target = $region8
    $region5: #{resnet_forward.31} parent=1 // loop_body
      %s16 = ssub.s32 %s11, 1
      %s17 = ssub.s32 %s11, 2
      %s27 = sadd.s32 1, %s20
      %p28 = scmp.ge.s32.totalorder %s27, 3
      %s29 = scalar_select %p28, 0, %s27
      %s30 = sadd.s32 1, %s19
      %s31 = scalar_select %p28, %s30, %s19
      %p32 = scmp.ge.s32.totalorder %s31, 1
      %s33 = scalar_select %p32, 0, %s31
      %s34 = sadd.s32 1, %s18
      %s35 = scalar_select %p32, %s34, %s18
      %p36 = scmp.ge.s32.totalorder %s35, 1
      %s37 = scalar_select %p36, 0, %s35
      %s38 = ssub.s32 %s18, %s37
      %s39 = ssub.s32 %s20, %s29
      %s40 = sor.u32 %s38, %s39
      %p41 = scmp.eq.s32.totalorder %s40, 0
      %s43 = sadd.s32 %s42, 1
      %s44 = scalar_select %p41, %s42, %s43
      %p47 = pneg %p41
      %p48 = scmp.eq.s32.totalorder %s11, 2
      %p49 = por %p47, %p48
      %p50 = scmp.ne.s32.totalorder %s42, %s45
      %p51 = scmp.eq.s32.totalorder %s11, 0
      %p52 = por %p50, %p51
      %p53 = scmp.ne.s32.totalorder %s42, %s45
      %p54 = scmp.eq.s32.totalorder %s16, 2
      %p55 = por %p53, %p54
      %p56 = scmp.ne.s32.totalorder %s45, %s46
      %p57 = scmp.eq.s32.totalorder %s16, 0
      %p58 = por %p56, %p57
      %p59 = scmp.ne.s32.totalorder %s45, %s46
      %p60 = scmp.eq.s32.totalorder %s17, 2
      %p61 = por %p59, %p60
      %p63 = scmp.ne.s32.totalorder %s46, %s62
      %p64 = scmp.eq.s32.totalorder %s17, 0
      %p65 = por %p63, %p64
      %s66 = ssub.s32 %s20, %s29
      %s67 = ssub.s32 %s19, %s33
      %s68 = sor.u32 %s66, %s67
      %p69 = scmp.eq.s32.totalorder %s68, 0
      %s71 = sadd.s32 %s70, 1
      %s72 = scalar_select %p69, %s70, %s71
      %p75 = pneg %p69
      %p76 = scmp.eq.s32.totalorder %s11, 2
      %p77 = por %p75, %p76
      %p78 = scmp.ne.s32.totalorder %s70, %s73
      %p79 = scmp.eq.s32.totalorder %s11, 0
      %p80 = por %p78, %p79
      %p81 = scmp.ne.s32.totalorder %s70, %s73
      %p82 = scmp.eq.s32.totalorder %s16, 2
      %p83 = por %p81, %p82
      %p84 = scmp.ne.s32.totalorder %s73, %s74
      %p85 = scmp.eq.s32.totalorder %s16, 0
      %p86 = por %p84, %p85
      %p87 = scmp.ne.s32.totalorder %s73, %s74
      %p88 = scmp.eq.s32.totalorder %s17, 2
      %p89 = por %p87, %p88
      %p91 = scmp.ne.s32.totalorder %s74, %s90
      %p92 = scmp.eq.s32.totalorder %s17, 0
      %p93 = por %p91, %p92
      %s94 = ssub.s32 %s18, %s37
      %s95 = ssub.s32 %s19, %s33
      %s96 = sor.u32 %s94, %s95
      %p97 = scmp.eq.s32.totalorder %s96, 0
      %s99 = sadd.s32 %s98, 1
      %s100 = scalar_select %p97, %s98, %s99
      %p103 = pneg %p97
      %p104 = scmp.eq.s32.totalorder %s11, 2
      %p105 = por %p103, %p104
      %p106 = scmp.ne.s32.totalorder %s98, %s101
      %p107 = scmp.eq.s32.totalorder %s11, 0
      %p108 = por %p106, %p107
      %p109 = scmp.ne.s32.totalorder %s98, %s101
      %p110 = scmp.eq.s32.totalorder %s16, 2
      %p111 = por %p109, %p110
      %p112 = scmp.ne.s32.totalorder %s101, %s102
      %p113 = scmp.eq.s32.totalorder %s16, 0
      %p114 = por %p112, %p113
      %p115 = scmp.ne.s32.totalorder %s101, %s102
      %p116 = scmp.eq.s32.totalorder %s17, 2
      %p117 = por %p115, %p116
      %p119 = scmp.ne.s32.totalorder %s102, %s118
      %p120 = scmp.eq.s32.totalorder %s17, 0
      %p121 = por %p119, %p120
      %s122 = ssub.s32 %s18, %s37
      %s123 = ssub.s32 %s19, %s33
      %s124 = sor.u32 %s122, %s123
      %p125 = scmp.eq.s32.totalorder %s124, 0
      %s127 = sadd.s32 %s126, 1
      %s128 = scalar_select %p125, %s126, %s127
      %p131 = pneg %p125
      %p132 = scmp.eq.s32.totalorder %s11, 2
      %p133 = por %p131, %p132
      %p134 = scmp.ne.s32.totalorder %s126, %s129
      %p135 = scmp.eq.s32.totalorder %s11, 0
      %p136 = por %p134, %p135
      %p137 = scmp.ne.s32.totalorder %s126, %s129
      %p138 = scmp.eq.s32.totalorder %s16, 2
      %p139 = por %p137, %p138
      %p140 = scmp.ne.s32.totalorder %s129, %s130
      %p141 = scmp.eq.s32.totalorder %s16, 0
      %p142 = por %p140, %p141
      %p143 = scmp.ne.s32.totalorder %s129, %s130
      %p144 = scmp.eq.s32.totalorder %s17, 2
      %p145 = por %p143, %p144
      %p147 = scmp.ne.s32.totalorder %s130, %s146
      %p148 = scmp.eq.s32.totalorder %s17, 0
      %p149 = por %p147, %p148
      %s150 = ssub.s32 %s18, %s37
      %s151 = ssub.s32 %s19, %s33
      %s152 = sor.u32 %s150, %s151
      %p153 = scmp.eq.s32.totalorder %s152, 0
      %s155 = sadd.s32 %s154, 1
      %s156 = scalar_select %p153, %s154, %s155
      %p159 = pneg %p153
      %p160 = scmp.eq.s32.totalorder %s11, 2
      %p161 = por %p159, %p160
      %p162 = scmp.ne.s32.totalorder %s154, %s157
      %p163 = scmp.eq.s32.totalorder %s11, 0
      %p164 = por %p162, %p163
      %p165 = scmp.ne.s32.totalorder %s154, %s157
      %p166 = scmp.eq.s32.totalorder %s16, 2
      %p167 = por %p165, %p166
      %p168 = scmp.ne.s32.totalorder %s157, %s158
      %p169 = scmp.eq.s32.totalorder %s16, 0
      %p170 = por %p168, %p169
      %p171 = scmp.ne.s32.totalorder %s157, %s158
      %p172 = scmp.eq.s32.totalorder %s17, 2
      %p173 = por %p171, %p172
      %p175 = scmp.ne.s32.totalorder %s158, %s174
      %p176 = scmp.eq.s32.totalorder %s17, 0
      %p177 = por %p175, %p176
      %p178 = scmp.le.s32.totalorder 1, %s11
      %p179 = scmp.lt.s32.totalorder %s11, 4
      %p180 = pnand %p178, %p179
      %p181 = pneg %p180
      // Predicated region
      $region9: #{resnet_forward.31} parent=5 // pred_check
        _
      $region10: #{resnet_forward.31} parent=5 // pred_check_branch
        %183 = sbr.rel (%p180) target = $region12
      $region11: #{resnet_forward.31} parent=5 // pred_region
        %s184 = ssub.s32 %s11, 1
      $region12: #{resnet_forward.31} parent=5 // pred_fallthru
        _
      %p185 = scmp.lt.s32.totalorder %s11, 3
      // Predicated region
      $region13: #{resnet_forward.31} parent=5 // pred_check
        %p186 = pneg %p185
      $region14: #{resnet_forward.31} parent=5 // pred_check_branch
        %188 = sbr.rel (%p186) target = $region16
      $region15: #{resnet_forward.31} parent=5 // pred_region
        // Predicated region
        $region17: #{resnet_forward.31} parent=15 // pred_check
          %p189 = pneg %p52
        $region18: #{resnet_forward.31} parent=15 // pred_check_branch
          %191 = sbr.rel (%p189) target = $region20
        $region19: #{resnet_forward.31} parent=15 // pred_region
          %s192 = sand.u32 %s42, 1
          %s193 = sand.u32 %s42, 1
          %s194 = smul.addr %s193, 192
          %s195 = scalar_lea.vmem [#allocation3], %s194
          %s196 = smul.u32 16, %s18
          %s197 = smul.u32 3, %s20
          %s198 = smul.addr %s196, 9
          %s199 = sadd.s32 %s197, %s198
          %s200 = smul.addr %s199, 4
          %s201 = scalar_lea.vmem %s0, %s200
          // Predicated region
          $region21: #{resnet_forward.31} parent=19 // pred_check
            _
          $region22: #{resnet_forward.31} parent=19 // pred_check_branch
            %203 = sbr.rel (0) target = $region24
          $region23: #{resnet_forward.31} parent=19 // pred_region
            // Predicated region
            $region25: #{resnet_forward.31} parent=23 // pred_check
              _
            $region26: #{resnet_forward.31} parent=23 // pred_check_branch
              %205 = sbr.rel (0) target = $region28
            $region27: #{resnet_forward.31} parent=23 // pred_region
              %s206 = scalar_lea.vmem %s201, 8
              %s207 = scalar_lea.vmem %s195, 8 [#allocation3]
              loop: start=0, step=1, limit=1
              $region29: #{resnet_forward.31} parent=27 // loop_pre_header
                _
              $region30: #{resnet_forward.31} parent=27 // loop_header
                %s209 = sphi 0, %s213
                %p210 = scmp.ge.s32.totalorder %s209, 1
                %s214 = sphi %s201, %s201
                %s215 = sphi %s195, %s195
              $region31: #{resnet_forward.31} parent=27 // loop_header_branch
                %212 = sbr.rel (%p210) target = $region35
              $region32: #{resnet_forward.31} parent=27 // loop_body
                %v216 = vld [vmem:[%s214] sm:$0xff]
                %217 = vst [vmem:[%s215] sm:$0xff] %v216
                %v218 = vld [vmem:[%s214 + $0x24] sm:$0xff]
                %219 = vst [vmem:[%s215 + $0xc] sm:$0xff] %v218
                %v220 = vld [vmem:[%s214 + $0x48] sm:$0xff]
                %221 = vst [vmem:[%s215 + $0x18] sm:$0xff] %v220
                %v222 = vld [vmem:[%s214 + $0x6c] sm:$0xff]
                %223 = vst [vmem:[%s215 + $0x24] sm:$0xff] %v222
                %v224 = vld [vmem:[%s214 + $0x90] sm:$0xff]
                %225 = vst [vmem:[%s215 + $0x30] sm:$0xff] %v224
                %v226 = vld [vmem:[%s214 + $0xb4] sm:$0xff]
                %227 = vst [vmem:[%s215 + $0x3c] sm:$0xff] %v226
                %v228 = vld [vmem:[%s214 + $0xd8] sm:$0xff]
                %229 = vst [vmem:[%s215 + $0x48] sm:$0xff] %v228
                %v230 = vld [vmem:[%s214 + $0xfc] sm:$0xff]
                %231 = vst [vmem:[%s215 + $0x54] sm:$0xff] %v230
                %v232 = vld [vmem:[%s214 + $0x120] sm:$0xff]
                %233 = vst [vmem:[%s215 + $0x60] sm:$0xff] %v232
                %v234 = vld [vmem:[%s214 + $0x144] sm:$0xff]
                %235 = vst [vmem:[%s215 + $0x6c] sm:$0xff] %v234
                %v236 = vld [vmem:[%s214 + $0x168] sm:$0xff]
                %237 = vst [vmem:[%s215 + $0x78] sm:$0xff] %v236
                %v238 = vld [vmem:[%s214 + $0x18c] sm:$0xff]
                %239 = vst [vmem:[%s215 + $0x84] sm:$0xff] %v238
                %v240 = vld [vmem:[%s214 + $0x1b0] sm:$0xff]
                %241 = vst [vmem:[%s215 + $0x90] sm:$0xff] %v240
                %v242 = vld [vmem:[%s214 + $0x1d4] sm:$0xff]
                %243 = vst [vmem:[%s215 + $0x9c] sm:$0xff] %v242
                %v244 = vld [vmem:[%s214 + $0x1f8] sm:$0xff]
                %245 = vst [vmem:[%s215 + $0xa8] sm:$0xff] %v244
                %v246 = vld [vmem:[%s214 + $0x21c] sm:$0xff]
                %247 = vst [vmem:[%s215 + $0xb4] sm:$0xff] %v246
              $region33: #{resnet_forward.31} parent=27 // loop_footer
                %s213 = sadd.s32 1, %s209
              $region34: #{resnet_forward.31} parent=27 // loop_footer_branch
                %208 = sbr.rel target = $region30
              $region35: #{resnet_forward.31} parent=27 // loop_exit
                _
              %s249 = ssub.s32 16, 1
              loop: start=0, step=1, limit=1
              $region36: #{resnet_forward.31} parent=27 // loop_pre_header
                _
              $region37: #{resnet_forward.31} parent=27 // loop_header
                %s251 = sphi 0, %s255
                %p252 = scmp.ge.s32.totalorder %s251, 1
                %s256 = sphi %s206, %s206
                %s257 = sphi %s207, %s207
              $region38: #{resnet_forward.31} parent=27 // loop_header_branch
                %254 = sbr.rel (%p252) target = $region42
              $region39: #{resnet_forward.31} parent=27 // loop_body
                %v258 = vld [vmem:[%s256] sm:%s249]
                %259 = vst [vmem:[%s257] sm:%s249] %v258
                %v260 = vld [vmem:[%s256 + $0x24] sm:%s249]
                %261 = vst [vmem:[%s257 + $0xc] sm:%s249] %v260
                %v262 = vld [vmem:[%s256 + $0x48] sm:%s249]
                %263 = vst [vmem:[%s257 + $0x18] sm:%s249] %v262
                %v264 = vld [vmem:[%s256 + $0x6c] sm:%s249]
                %265 = vst [vmem:[%s257 + $0x24] sm:%s249] %v264
                %v266 = vld [vmem:[%s256 + $0x90] sm:%s249]
                %267 = vst [vmem:[%s257 + $0x30] sm:%s249] %v266
                %v268 = vld [vmem:[%s256 + $0xb4] sm:%s249]
                %269 = vst [vmem:[%s257 + $0x3c] sm:%s249] %v268
                %v270 = vld [vmem:[%s256 + $0xd8] sm:%s249]
                %271 = vst [vmem:[%s257 + $0x48] sm:%s249] %v270
                %v272 = vld [vmem:[%s256 + $0xfc] sm:%s249]
                %273 = vst [vmem:[%s257 + $0x54] sm:%s249] %v272
                %v274 = vld [vmem:[%s256 + $0x120] sm:%s249]
                %275 = vst [vmem:[%s257 + $0x60] sm:%s249] %v274
                %v276 = vld [vmem:[%s256 + $0x144] sm:%s249]
                %277 = vst [vmem:[%s257 + $0x6c] sm:%s249] %v276
                %v278 = vld [vmem:[%s256 + $0x168] sm:%s249]
                %279 = vst [vmem:[%s257 + $0x78] sm:%s249] %v278
                %v280 = vld [vmem:[%s256 + $0x18c] sm:%s249]
                %281 = vst [vmem:[%s257 + $0x84] sm:%s249] %v280
                %v282 = vld [vmem:[%s256 + $0x1b0] sm:%s249]
                %283 = vst [vmem:[%s257 + $0x90] sm:%s249] %v282
                %v284 = vld [vmem:[%s256 + $0x1d4] sm:%s249]
                %285 = vst [vmem:[%s257 + $0x9c] sm:%s249] %v284
                %v286 = vld [vmem:[%s256 + $0x1f8] sm:%s249]
                %287 = vst [vmem:[%s257 + $0xa8] sm:%s249] %v286
                %v288 = vld [vmem:[%s256 + $0x21c] sm:%s249]
                %289 = vst [vmem:[%s257 + $0xb4] sm:%s249] %v288
              $region40: #{resnet_forward.31} parent=27 // loop_footer
                %s255 = sadd.s32 1, %s251
              $region41: #{resnet_forward.31} parent=27 // loop_footer_branch
                %250 = sbr.rel target = $region37
              $region42: #{resnet_forward.31} parent=27 // loop_exit
                _
            $region28: #{resnet_forward.31} parent=23 // pred_fallthru
              _
          $region24: #{resnet_forward.31} parent=19 // pred_fallthru
            _
          %290 = vnop
        $region20: #{resnet_forward.31} parent=15 // pred_fallthru
          _
        // Predicated region
        $region43: #{resnet_forward.31} parent=15 // pred_check
          %p291 = pneg %p80
        $region44: #{resnet_forward.31} parent=15 // pred_check_branch
          %293 = sbr.rel (%p291) target = $region46
        $region45: #{resnet_forward.31} parent=15 // pred_region
          %s294 = smul.u32 48, %s20
          %p295 = scmp.lt.s32.totalorder %s294, 143
          %s296 = scalar_select %p295, %s294, 143
          %p297 = scmp.lt.s32.totalorder %s19, 0
          %s298 = scalar_select %p297, %s19, 0
          %s299 = sadd.s32 %s298, %s296
          %s300 = smul.addr %s299, 4
          %s301 = scalar_lea.vmem %s1, %s300
          %s302 = smul.u32 48, %s20
        $region46: #{resnet_forward.31} parent=15 // pred_fallthru
          _
      $region16: #{resnet_forward.31} parent=5 // pred_fallthru
        _
      %p303 = scmp.le.s32.totalorder 1, %s11
      %p304 = scmp.lt.s32.totalorder %s11, 4
      %p305 = pnand %p303, %p304
      %p306 = pneg %p305
      // Predicated region
      $region47: #{resnet_forward.31} parent=5 // pred_check
        _
      $region48: #{resnet_forward.31} parent=5 // pred_check_branch
        %308 = sbr.rel (%p305) target = $region50
      $region49: #{resnet_forward.31} parent=5 // pred_region
        %s309 = ssub.s32 %s11, 1
        %s310 = sand.u32 %s45, 1
        %s311 = sand.u32 %s45, 1
        %s312 = smul.addr %s311, 192
        %s313 = scalar_lea.vmem [#allocation3], %s312
        // Predicated region
        $region51: #{resnet_forward.31} parent=49 // pred_check
          %p314 = pneg %p58
        $region52: #{resnet_forward.31} parent=49 // pred_check_branch
          %316 = sbr.rel (%p314) target = $region54
        $region53: #{resnet_forward.31} parent=49 // pred_region
          _
        $region54: #{resnet_forward.31} parent=49 // pred_fallthru
          _
        %s317 = sand.u32 %s45, 1
        %s318 = sand.u32 %s45, 1
        %s319 = smul.addr %s318, 192
        %s320 = scalar_lea.vmem [#allocation3], %s319
        %p321 = pneg %p58
        %p322 = pneg %p55
        %s323 = smul.u32 48, %s23
        %p324 = scmp.lt.s32.totalorder %s323, 143
        %s325 = scalar_select %p324, %s323, 143
        %p326 = scmp.lt.s32.totalorder %s22, 0
        %s327 = scalar_select %p326, %s22, 0
        %s328 = sadd.s32 %s327, %s325
        %s329 = smul.addr %s328, 4
        %s330 = scalar_lea.vmem %s1, %s329
        %p331 = pneg %p86
        %p332 = pneg %p83
        %p333 = pneg %p114
        %p334 = pneg %p111
        %s335 = smul.u32 16, %s21
        %p336 = scmp.lt.s32.totalorder %s335, 15
        %s337 = scalar_select %p336, %s335, 15
        %p338 = scmp.lt.s32.totalorder %s22, 0
        %s339 = scalar_select %p338, %s22, 0
        %s340 = sadd.s32 %s339, %s337
        %s341 = smul.addr %s340, 8
        %s342 = scalar_lea.vmem %s2, %s341
        %p343 = pneg %p142
        %p344 = pneg %p139
        %p345 = scmp.lt.s32.totalorder %s21, 0
        %s346 = scalar_select %p345, %s21, 0
        %p347 = scmp.lt.s32.totalorder %s22, 0
        %s348 = scalar_select %p347, %s22, 0
        %s349 = sadd.s32 %s348, %s346
        %s350 = scalar_lea.vmem %s3, %s349
        %p351 = pneg %p170
        %p352 = pneg %p167
        %p353 = scmp.lt.s32.totalorder %s21, 0
        %s354 = scalar_select %p353, %s21, 0
        %p355 = scmp.lt.s32.totalorder %s22, 0
        %s356 = scalar_select %p355, %s22, 0
        %s357 = sadd.s32 %s356, %s354
        %s358 = scalar_lea.vmem %s4, %s357
        %s359 = smul.u32 16, %s21
        %s360 = smul.u32 3, %s23
        %s361 = smul.u32 48, %s23
        %p362 = scmp.lt.s32.totalorder %s361, 143
        %s363 = scalar_select %p362, %s361, 143
        %p364 = scmp.lt.s32.totalorder %s22, 0
        %s365 = scalar_select %p364, %s22, 0
        %s366 = sadd.s32 %s365, %s363
        %s367 = smul.addr %s366, 4
        %s368 = scalar_lea.vmem %s1, %s367
        %s369 = smul.u32 48, %s23
        %s370 = smul.u32 16, %s21
        %p371 = scmp.lt.s32.totalorder %s370, 15
        %s372 = scalar_select %p371, %s370, 15
        %p373 = scmp.lt.s32.totalorder %s22, 0
        %s374 = scalar_select %p373, %s22, 0
        %s375 = sadd.s32 %s374, %s372
        %s376 = smul.addr %s375, 8
        %s377 = scalar_lea.vmem %s2, %s376
        %s378 = smul.u32 16, %s21
        %p379 = scmp.lt.s32.totalorder %s21, 0
        %s380 = scalar_select %p379, %s21, 0
        %p381 = scmp.lt.s32.totalorder %s22, 0
        %s382 = scalar_select %p381, %s22, 0
        %s383 = sadd.s32 %s382, %s380
        %s384 = scalar_lea.vmem %s3, %s383
        %p385 = scmp.lt.s32.totalorder %s21, 0
        %s386 = scalar_select %p385, %s21, 0
        %p387 = scmp.lt.s32.totalorder %s22, 0
        %s388 = scalar_select %p387, %s22, 0
        %s389 = sadd.s32 %s388, %s386
        %s390 = scalar_lea.vmem %s4, %s389
        %p391 = scmp.eq.s32.totalorder %s23, 0
        // Predicated region
        $region55: #{resnet_forward.31} parent=49 // pred_check
          %p392 = pneg %p391
        $region56: #{resnet_forward.31} parent=49 // pred_check_branch
          %394 = sbr.rel (%p392) target = $region58
        $region57: #{resnet_forward.31} parent=49 // pred_region
          %395 = vst [vmem:[#allocation2] sm:$0xff] 0.0
          %396 = vst [vmem:[#allocation2 + $0x8] sm:$0xff] 0.0
          %397 = vst [vmem:[#allocation2 + $0x10] sm:$0xff] 0.0
          %398 = vst [vmem:[#allocation2 + $0x18] sm:$0xff] 0.0
          %399 = vst [vmem:[#allocation2 + $0x20] sm:$0xff] 0.0
          %400 = vst [vmem:[#allocation2 + $0x28] sm:$0xff] 0.0
          %401 = vst [vmem:[#allocation2 + $0x30] sm:$0xff] 0.0
          %402 = vst [vmem:[#allocation2 + $0x38] sm:$0xff] 0.0
          %403 = vst [vmem:[#allocation2 + $0x40] sm:$0xff] 0.0
          %404 = vst [vmem:[#allocation2 + $0x48] sm:$0xff] 0.0
          %405 = vst [vmem:[#allocation2 + $0x50] sm:$0xff] 0.0
          %406 = vst [vmem:[#allocation2 + $0x58] sm:$0xff] 0.0
          %407 = vst [vmem:[#allocation2 + $0x60] sm:$0xff] 0.0
          %408 = vst [vmem:[#allocation2 + $0x68] sm:$0xff] 0.0
          %409 = vst [vmem:[#allocation2 + $0x70] sm:$0xff] 0.0
          %410 = vst [vmem:[#allocation2 + $0x78] sm:$0xff] 0.0
        $region58: #{resnet_forward.31} parent=49 // pred_fallthru
          _
        %v411 = vld [vmem:[#allocation2] sm:$0xff]
        %v412 = vld [vmem:[#allocation2 + $0x8] sm:$0xff]
        %v413 = vld [vmem:[#allocation2 + $0x10] sm:$0xff]
        %v414 = vld [vmem:[#allocation2 + $0x18] sm:$0xff]
        %v415 = vld [vmem:[#allocation2 + $0x20] sm:$0xff]
        %v416 = vld [vmem:[#allocation2 + $0x28] sm:$0xff]
        %v417 = vld [vmem:[#allocation2 + $0x30] sm:$0xff]
        %v418 = vld [vmem:[#allocation2 + $0x38] sm:$0xff]
        %v419 = vld [vmem:[#allocation2 + $0x40] sm:$0xff]
        %v420 = vld [vmem:[#allocation2 + $0x48] sm:$0xff]
        %v421 = vld [vmem:[#allocation2 + $0x50] sm:$0xff]
        %v422 = vld [vmem:[#allocation2 + $0x58] sm:$0xff]
        %v423 = vld [vmem:[#allocation2 + $0x60] sm:$0xff]
        %v424 = vld [vmem:[#allocation2 + $0x68] sm:$0xff]
        %v425 = vld [vmem:[#allocation2 + $0x70] sm:$0xff]
        %v426 = vld [vmem:[#allocation2 + $0x78] sm:$0xff]
        %v427 = vld [vmem:[%s313] sm:$0xff]
        %v428 = vld [vmem:[%s313 + $0x8] sm:$0xf]
        %v429 = vld [vmem:[%s313 + $0xc] sm:$0xff]
        %v430 = vld [vmem:[%s313 + $0x14] sm:$0xf]
        %v431 = vld [vmem:[%s313 + $0x18] sm:$0xff]
        %v432 = vld [vmem:[%s313 + $0x20] sm:$0xf]
        %v433 = vld [vmem:[%s313 + $0x24] sm:$0xff]
        %v434 = vld [vmem:[%s313 + $0x2c] sm:$0xf]
        %v435 = vld [vmem:[%s313 + $0x30] sm:$0xff]
        %v436 = vld [vmem:[%s313 + $0x38] sm:$0xf]
        %v437 = vld [vmem:[%s313 + $0x3c] sm:$0xff]
        %v438 = vld [vmem:[%s313 + $0x44] sm:$0xf]
        %v439 = vld [vmem:[%s313 + $0x48] sm:$0xff]
        %v440 = vld [vmem:[%s313 + $0x50] sm:$0xf]
        %v441 = vld [vmem:[%s313 + $0x54] sm:$0xff]
        %v442 = vld [vmem:[%s313 + $0x5c] sm:$0xf]
        %v443 = vld [vmem:[%s313 + $0x60] sm:$0xff]
        %v444 = vld [vmem:[%s313 + $0x68] sm:$0xf]
        %v445 = vld [vmem:[%s313 + $0x6c] sm:$0xff]
        %v446 = vld [vmem:[%s313 + $0x74] sm:$0xf]
        %v447 = vld [vmem:[%s313 + $0x78] sm:$0xff]
        %v448 = vld [vmem:[%s313 + $0x80] sm:$0xf]
        %v449 = vld [vmem:[%s313 + $0x84] sm:$0xff]
        %v450 = vld [vmem:[%s313 + $0x8c] sm:$0xf]
        %v451 = vld [vmem:[%s313 + $0x90] sm:$0xff]
        %v452 = vld [vmem:[%s313 + $0x98] sm:$0xf]
        %v453 = vld [vmem:[%s313 + $0x9c] sm:$0xff]
        %v454 = vld [vmem:[%s313 + $0xa4] sm:$0xf]
        %v455 = vld [vmem:[%s313 + $0xa8] sm:$0xff]
        %v456 = vld [vmem:[%s313 + $0xb0] sm:$0xf]
        %v457 = vld [vmem:[%s313 + $0xb4] sm:$0xff]
        %v458 = vld [vmem:[%s313 + $0xbc] sm:$0xf]
        %v459 = vld [vmem:[%s368] sm:$0xf]
        %v460 = vld [vmem:[%s368 + $0x4] sm:$0xf]
        %v461 = vld [vmem:[%s368 + $0x8] sm:$0xf]
        %v462 = vld [vmem:[%s368 + $0xc] sm:$0xf]
        %v463 = vld [vmem:[%s368 + $0x10] sm:$0xf]
        %v464 = vld [vmem:[%s368 + $0x14] sm:$0xf]
        %v465 = vld [vmem:[%s368 + $0x18] sm:$0xf]
        %v466 = vld [vmem:[%s368 + $0x1c] sm:$0xf]
        %v467 = vld [vmem:[%s368 + $0x20] sm:$0xf]
        %v468 = vld [vmem:[%s368 + $0x24] sm:$0xf]
        %v469 = vld [vmem:[%s368 + $0x28] sm:$0xf]
        %v470 = vld [vmem:[%s368 + $0x2c] sm:$0xf]
        %v471 = vld [vmem:[%s368 + $0x30] sm:$0xf]
        %v472 = vld [vmem:[%s368 + $0x34] sm:$0xf]
        %v473 = vld [vmem:[%s368 + $0x38] sm:$0xf]
        %v474 = vld [vmem:[%s368 + $0x3c] sm:$0xf]
        %v475 = vld [vmem:[%s368 + $0x40] sm:$0xf]
        %v476 = vld [vmem:[%s368 + $0x44] sm:$0xf]
        %v477 = vld [vmem:[%s368 + $0x48] sm:$0xf]
        %v478 = vld [vmem:[%s368 + $0x4c] sm:$0xf]
        %v479 = vld [vmem:[%s368 + $0x50] sm:$0xf]
        %v480 = vld [vmem:[%s368 + $0x54] sm:$0xf]
        %v481 = vld [vmem:[%s368 + $0x58] sm:$0xf]
        %v482 = vld [vmem:[%s368 + $0x5c] sm:$0xf]
        %v483 = vld [vmem:[%s368 + $0x60] sm:$0xf]
        %v484 = vld [vmem:[%s368 + $0x64] sm:$0xf]
        %v485 = vld [vmem:[%s368 + $0x68] sm:$0xf]
        %v486 = vld [vmem:[%s368 + $0x6c] sm:$0xf]
        %v487 = vld [vmem:[%s368 + $0x70] sm:$0xf]
        %v488 = vld [vmem:[%s368 + $0x74] sm:$0xf]
        %v489 = vld [vmem:[%s368 + $0x78] sm:$0xf]
        %v490 = vld [vmem:[%s368 + $0x7c] sm:$0xf]
        %v491 = vld [vmem:[%s368 + $0x80] sm:$0xf]
        %v492 = vld [vmem:[%s368 + $0x84] sm:$0xf]
        %v493 = vld [vmem:[%s368 + $0x88] sm:$0xf]
        %v494 = vld [vmem:[%s368 + $0x8c] sm:$0xf]
        %v495 = vld [vmem:[%s368 + $0x90] sm:$0xf]
        %v496 = vld [vmem:[%s368 + $0x94] sm:$0xf]
        %v497 = vld [vmem:[%s368 + $0x98] sm:$0xf]
        %v498 = vld [vmem:[%s368 + $0x9c] sm:$0xf]
        %v499 = vld [vmem:[%s368 + $0xa0] sm:$0xf]
        %v500 = vld [vmem:[%s368 + $0xa4] sm:$0xf]
        %v501 = vld [vmem:[%s368 + $0xa8] sm:$0xf]
        %v502 = vld [vmem:[%s368 + $0xac] sm:$0xf]
        %v503 = vld [vmem:[%s368 + $0xb0] sm:$0xf]
        %v504 = vld [vmem:[%s368 + $0xb4] sm:$0xf]
        %v505 = vld [vmem:[%s368 + $0xb8] sm:$0xf]
        %v506 = vld [vmem:[%s368 + $0xbc] sm:$0xf]
        %v539 = vunpack.c.l.b16 %v427
        %v540 = vunpack.c.h.b16 %v427
        %v541 = vunpack.c.l.b16 %v428
        %v542 = vunpack.c.l.b16 %v429
        %v543 = vunpack.c.h.b16 %v429
        %v544 = vunpack.c.l.b16 %v430
        %v545 = vunpack.c.l.b16 %v431
        %v546 = vunpack.c.h.b16 %v431
        %v547 = vunpack.c.l.b16 %v432
        %v548 = vunpack.c.l.b16 %v433
        %v549 = vunpack.c.h.b16 %v433
        %v550 = vunpack.c.l.b16 %v434
        %v551 = vunpack.c.l.b16 %v435
        %v552 = vunpack.c.h.b16 %v435
        %v553 = vunpack.c.l.b16 %v436
        %v554 = vunpack.c.l.b16 %v437
        %v555 = vunpack.c.h.b16 %v437
        %v556 = vunpack.c.l.b16 %v438
        %v557 = vunpack.c.l.b16 %v439
        %v558 = vunpack.c.h.b16 %v439
        %v559 = vunpack.c.l.b16 %v440
        %v560 = vunpack.c.l.b16 %v441
        %v561 = vunpack.c.h.b16 %v441
        %v562 = vunpack.c.l.b16 %v442
        %v563 = vunpack.c.l.b16 %v443
        %v564 = vunpack.c.h.b16 %v443
        %v565 = vunpack.c.l.b16 %v444
        %v566 = vunpack.c.l.b16 %v445
        %v567 = vunpack.c.h.b16 %v445
        %v568 = vunpack.c.l.b16 %v446
        %v569 = vunpack.c.l.b16 %v447
        %v570 = vunpack.c.h.b16 %v447
        %v571 = vunpack.c.l.b16 %v448
        %v572 = vunpack.c.l.b16 %v449
        %v573 = vunpack.c.h.b16 %v449
        %v574 = vunpack.c.l.b16 %v450
        %v575 = vunpack.c.l.b16 %v451
        %v576 = vunpack.c.h.b16 %v451
        %v577 = vunpack.c.l.b16 %v452
        %v578 = vunpack.c.l.b16 %v453
        %v579 = vunpack.c.h.b16 %v453
        %v580 = vunpack.c.l.b16 %v454
        %v581 = vunpack.c.l.b16 %v455
        %v582 = vunpack.c.h.b16 %v455
        %v583 = vunpack.c.l.b16 %v456
        %v584 = vunpack.c.l.b16 %v457
        %v585 = vunpack.c.h.b16 %v457
        %v586 = vunpack.c.l.b16 %v458
        %v587 = vpack.c.b16 %v542, %v539
        %v588 = vpack.c.b16 %v543, %v540
        %v589 = vpack.c.b16 %v544, %v541
        %v590 = vpack.c.b16 %v548, %v545
        %v591 = vpack.c.b16 %v549, %v546
        %v592 = vpack.c.b16 %v550, %v547
        %v593 = vpack.c.b16 %v554, %v551
        %v594 = vpack.c.b16 %v555, %v552
        %v595 = vpack.c.b16 %v556, %v553
        %v596 = vpack.c.b16 %v560, %v557
        %v597 = vpack.c.b16 %v561, %v558
        %v598 = vpack.c.b16 %v562, %v559
        %v599 = vpack.c.b16 %v566, %v563
        %v600 = vpack.c.b16 %v567, %v564
        %v601 = vpack.c.b16 %v568, %v565
        %v602 = vpack.c.b16 %v572, %v569
        %v603 = vpack.c.b16 %v573, %v570
        %v604 = vpack.c.b16 %v574, %v571
        %v605 = vpack.c.b16 %v578, %v575
        %v606 = vpack.c.b16 %v579, %v576
        %v607 = vpack.c.b16 %v580, %v577
        %v608 = vpack.c.b16 %v584, %v581
        %v609 = vpack.c.b16 %v585, %v582
        %v610 = vpack.c.b16 %v586, %v583
        %v683 = vunpack.c.l.b16 %v459
        %v684 = vunpack.c.l.b16 %v460
        %v685 = vunpack.c.l.b16 %v461
        %v686 = vunpack.c.l.b16 %v462
        %v687 = vunpack.c.l.b16 %v463
        %v688 = vunpack.c.l.b16 %v464
        %v689 = vunpack.c.l.b16 %v465
        %v690 = vunpack.c.l.b16 %v466
        %v691 = vunpack.c.l.b16 %v467
        %v692 = vunpack.c.l.b16 %v468
        %v693 = vunpack.c.l.b16 %v469
        %v694 = vunpack.c.l.b16 %v470
        %v695 = vunpack.c.l.b16 %v471
        %v696 = vunpack.c.l.b16 %v472
        %v697 = vunpack.c.l.b16 %v473
        %v698 = vunpack.c.l.b16 %v474
        %v699 = vunpack.c.l.b16 %v475
        %v700 = vunpack.c.l.b16 %v476
        %v701 = vunpack.c.l.b16 %v477
        %v702 = vunpack.c.l.b16 %v478
        %v703 = vunpack.c.l.b16 %v479
        %v704 = vunpack.c.l.b16 %v480
        %v705 = vunpack.c.l.b16 %v481
        %v706 = vunpack.c.l.b16 %v482
        %v707 = vunpack.c.l.b16 %v483
        %v708 = vunpack.c.l.b16 %v484
        %v709 = vunpack.c.l.b16 %v485
        %v710 = vunpack.c.l.b16 %v486
        %v711 = vunpack.c.l.b16 %v487
        %v712 = vunpack.c.l.b16 %v488
        %v713 = vunpack.c.l.b16 %v489
        %v714 = vunpack.c.l.b16 %v490
        %v715 = vunpack.c.l.b16 %v491
        %v716 = vunpack.c.l.b16 %v492
        %v717 = vunpack.c.l.b16 %v493
        %v718 = vunpack.c.l.b16 %v494
        %v719 = vunpack.c.l.b16 %v495
        %v720 = vunpack.c.l.b16 %v496
        %v721 = vunpack.c.l.b16 %v497
        %v722 = vunpack.c.l.b16 %v498
        %v723 = vunpack.c.l.b16 %v499
        %v724 = vunpack.c.l.b16 %v500
        %v725 = vunpack.c.l.b16 %v501
        %v726 = vunpack.c.l.b16 %v502
        %v727 = vunpack.c.l.b16 %v503
        %v728 = vunpack.c.l.b16 %v504
        %v729 = vunpack.c.l.b16 %v505
        %v730 = vunpack.c.l.b16 %v506
        %v731 = vpack.c.b16 %v684, %v683
        %v732 = vpack.c.b16 %v686, %v685
        %v733 = vpack.c.b16 %v688, %v687
        %v734 = vpack.c.b16 %v690, %v689
        %v735 = vpack.c.b16 %v692, %v691
        %v736 = vpack.c.b16 %v694, %v693
        %v737 = vpack.c.b16 %v696, %v695
        %v738 = vpack.c.b16 %v698, %v697
        %v739 = vpack.c.b16 %v700, %v699
        %v740 = vpack.c.b16 %v702, %v701
        %v741 = vpack.c.b16 %v704, %v703
        %v742 = vpack.c.b16 %v706, %v705
        %v743 = vpack.c.b16 %v708, %v707
        %v744 = vpack.c.b16 %v710, %v709
        %v745 = vpack.c.b16 %v712, %v711
        %v746 = vpack.c.b16 %v714, %v713
        %v747 = vpack.c.b16 %v716, %v715
        %v748 = vpack.c.b16 %v718, %v717
        %v749 = vpack.c.b16 %v720, %v719
        %v750 = vpack.c.b16 %v722, %v721
        %v751 = vpack.c.b16 %v724, %v723
        %v752 = vpack.c.b16 %v726, %v725
        %v753 = vpack.c.b16 %v728, %v727
        %v754 = vpack.c.b16 %v730, %v729
        %779 = vmatpush.bf16.msra.mxu0 %v738
        %780 = vmatpush.bf16.msra.mxu0 %v737
        %781 = vmatpush.bf16.msra.mxu0 %v736
        %782 = vmatpush.bf16.msra.mxu0 %v735
        %783 = vmatpush.bf16.msra.mxu0 %v734
        %784 = vmatpush.bf16.msra.mxu0 %v733
        %785 = vmatpush.bf16.msra.mxu0 %v732
        %786 = vmatpush.bf16.msra.mxu0 %v731
        %787 = vmatmul.bf16.gmra.mxu0 %v587
        %v788 = vpop.f32.mrf.mxu0
        %v789 = vadd.f32 0.0, %v788
        %v790 = vpop.f32.mrf.mxu0
        %v791 = vadd.f32 0.0, %v790
        %792 = vmatmul.bf16.gmra.mxu0 %v590
        %v793 = vpop.f32.mrf.mxu0
        %v794 = vadd.f32 0.0, %v793
        %v795 = vpop.f32.mrf.mxu0
        %v796 = vadd.f32 0.0, %v795
        %797 = vmatmul.bf16.gmra.mxu0 %v593
        %v798 = vpop.f32.mrf.mxu0
        %v799 = vadd.f32 0.0, %v798
        %v800 = vpop.f32.mrf.mxu0
        %v801 = vadd.f32 0.0, %v800
        %802 = vmatmul.bf16.gmra.mxu0 %v596
        %v803 = vpop.f32.mrf.mxu0
        %v804 = vadd.f32 0.0, %v803
        %v805 = vpop.f32.mrf.mxu0
        %v806 = vadd.f32 0.0, %v805
        %807 = vmatmul.bf16.gmra.mxu0 %v599
        %v808 = vpop.f32.mrf.mxu0
        %v809 = vadd.f32 0.0, %v808
        %v810 = vpop.f32.mrf.mxu0
        %v811 = vadd.f32 0.0, %v810
        %812 = vmatmul.bf16.gmra.mxu0 %v602
        %v813 = vpop.f32.mrf.mxu0
        %v814 = vadd.f32 0.0, %v813
        %v815 = vpop.f32.mrf.mxu0
        %v816 = vadd.f32 0.0, %v815
        %817 = vmatmul.bf16.gmra.mxu0 %v605
        %v818 = vpop.f32.mrf.mxu0
        %v819 = vadd.f32 0.0, %v818
        %v820 = vpop.f32.mrf.mxu0
        %v821 = vadd.f32 0.0, %v820
        %822 = vmatmul.bf16.gmra.mxu0 %v608
        %v823 = vpop.f32.mrf.mxu0
        %v824 = vadd.f32 0.0, %v823
        %v825 = vpop.f32.mrf.mxu0
        %v826 = vadd.f32 0.0, %v825
        %827 = vdwg.mxu0
        %828 = vmatpush.bf16.msra.mxu0 %v746
        %829 = vmatpush.bf16.msra.mxu0 %v745
        %830 = vmatpush.bf16.msra.mxu0 %v744
        %831 = vmatpush.bf16.msra.mxu0 %v743
        %832 = vmatpush.bf16.msra.mxu0 %v742
        %833 = vmatpush.bf16.msra.mxu0 %v741
        %834 = vmatpush.bf16.msra.mxu0 %v740
        %835 = vmatpush.bf16.msra.mxu0 %v739
        %836 = vmatmul.bf16.gmra.mxu0 %v588
        %v837 = vpop.f32.mrf.mxu0
        %v838 = vadd.f32 %v789, %v837
        %v839 = vpop.f32.mrf.mxu0
        %v840 = vadd.f32 %v791, %v839
        %841 = vmatmul.bf16.gmra.mxu0 %v591
        %v842 = vpop.f32.mrf.mxu0
        %v843 = vadd.f32 %v794, %v842
        %v844 = vpop.f32.mrf.mxu0
        %v845 = vadd.f32 %v796, %v844
        %846 = vmatmul.bf16.gmra.mxu0 %v594
        %v847 = vpop.f32.mrf.mxu0
        %v848 = vadd.f32 %v799, %v847
        %v849 = vpop.f32.mrf.mxu0
        %v850 = vadd.f32 %v801, %v849
        %851 = vmatmul.bf16.gmra.mxu0 %v597
        %v852 = vpop.f32.mrf.mxu0
        %v853 = vadd.f32 %v804, %v852
        %v854 = vpop.f32.mrf.mxu0
        %v855 = vadd.f32 %v806, %v854
        %856 = vmatmul.bf16.gmra.mxu0 %v600
        %v857 = vpop.f32.mrf.mxu0
        %v858 = vadd.f32 %v809, %v857
        %v859 = vpop.f32.mrf.mxu0
        %v860 = vadd.f32 %v811, %v859
        %861 = vmatmul.bf16.gmra.mxu0 %v603
        %v862 = vpop.f32.mrf.mxu0
        %v863 = vadd.f32 %v814, %v862
        %v864 = vpop.f32.mrf.mxu0
        %v865 = vadd.f32 %v816, %v864
        %866 = vmatmul.bf16.gmra.mxu0 %v606
        %v867 = vpop.f32.mrf.mxu0
        %v868 = vadd.f32 %v819, %v867
        %v869 = vpop.f32.mrf.mxu0
        %v870 = vadd.f32 %v821, %v869
        %871 = vmatmul.bf16.gmra.mxu0 %v609
        %v872 = vpop.f32.mrf.mxu0
        %v873 = vadd.f32 %v824, %v872
        %v874 = vpop.f32.mrf.mxu0
        %v875 = vadd.f32 %v826, %v874
        %876 = vdwg.mxu0
        %877 = vmatpush.bf16.msra.mxu0 %v754
        %878 = vmatpush.bf16.msra.mxu0 %v753
        %879 = vmatpush.bf16.msra.mxu0 %v752
        %880 = vmatpush.bf16.msra.mxu0 %v751
        %881 = vmatpush.bf16.msra.mxu0 %v750
        %882 = vmatpush.bf16.msra.mxu0 %v749
        %883 = vmatpush.bf16.msra.mxu0 %v748
        %884 = vmatpush.bf16.msra.mxu0 %v747
        %885 = vmatmul.bf16.gmra.mxu0 %v589
        %v886 = vpop.f32.mrf.mxu0
        %v887 = vadd.f32 %v838, %v886
        %v888 = vpop.f32.mrf.mxu0
        %v889 = vadd.f32 %v840, %v888
        %890 = vmatmul.bf16.gmra.mxu0 %v592
        %v891 = vpop.f32.mrf.mxu0
        %v892 = vadd.f32 %v843, %v891
        %v893 = vpop.f32.mrf.mxu0
        %v894 = vadd.f32 %v845, %v893
        %895 = vmatmul.bf16.gmra.mxu0 %v595
        %v896 = vpop.f32.mrf.mxu0
        %v897 = vadd.f32 %v848, %v896
        %v898 = vpop.f32.mrf.mxu0
        %v899 = vadd.f32 %v850, %v898
        %900 = vmatmul.bf16.gmra.mxu0 %v598
        %v901 = vpop.f32.mrf.mxu0
        %v902 = vadd.f32 %v853, %v901
        %v903 = vpop.f32.mrf.mxu0
        %v904 = vadd.f32 %v855, %v903
        %905 = vmatmul.bf16.gmra.mxu0 %v601
        %v906 = vpop.f32.mrf.mxu0
        %v907 = vadd.f32 %v858, %v906
        %v908 = vpop.f32.mrf.mxu0
        %v909 = vadd.f32 %v860, %v908
        %910 = vmatmul.bf16.gmra.mxu0 %v604
        %v911 = vpop.f32.mrf.mxu0
        %v912 = vadd.f32 %v863, %v911
        %v913 = vpop.f32.mrf.mxu0
        %v914 = vadd.f32 %v865, %v913
        %915 = vmatmul.bf16.gmra.mxu0 %v607
        %v916 = vpop.f32.mrf.mxu0
        %v917 = vadd.f32 %v868, %v916
        %v918 = vpop.f32.mrf.mxu0
        %v919 = vadd.f32 %v870, %v918
        %920 = vmatmul.bf16.gmra.mxu0 %v610
        %v921 = vpop.f32.mrf.mxu0
        %v922 = vadd.f32 %v873, %v921
        %v923 = vpop.f32.mrf.mxu0
        %v924 = vadd.f32 %v875, %v923
        %925 = vdwg.mxu0
        %v926 = vadd.f32 %v411, %v887
        %v927 = vadd.f32 %v412, %v889
        %v928 = vadd.f32 %v413, %v892
        %v929 = vadd.f32 %v414, %v894
        %v930 = vadd.f32 %v415, %v897
        %v931 = vadd.f32 %v416, %v899
        %v932 = vadd.f32 %v417, %v902
        %v933 = vadd.f32 %v418, %v904
        %v934 = vadd.f32 %v419, %v907
        %v935 = vadd.f32 %v420, %v909
        %v936 = vadd.f32 %v421, %v912
        %v937 = vadd.f32 %v422, %v914
        %v938 = vadd.f32 %v423, %v917
        %v939 = vadd.f32 %v424, %v919
        %v940 = vadd.f32 %v425, %v922
        %v941 = vadd.f32 %v426, %v924
        %942 = vst [vmem:[#allocation2] sm:$0xff] %v926
        %943 = vst [vmem:[#allocation2 + $0x8] sm:$0xff] %v927
        %944 = vst [vmem:[#allocation2 + $0x10] sm:$0xff] %v928
        %945 = vst [vmem:[#allocation2 + $0x18] sm:$0xff] %v929
        %946 = vst [vmem:[#allocation2 + $0x20] sm:$0xff] %v930
        %947 = vst [vmem:[#allocation2 + $0x28] sm:$0xff] %v931
        %948 = vst [vmem:[#allocation2 + $0x30] sm:$0xff] %v932
        %949 = vst [vmem:[#allocation2 + $0x38] sm:$0xff] %v933
        %950 = vst [vmem:[#allocation2 + $0x40] sm:$0xff] %v934
        %951 = vst [vmem:[#allocation2 + $0x48] sm:$0xff] %v935
        %952 = vst [vmem:[#allocation2 + $0x50] sm:$0xff] %v936
        %953 = vst [vmem:[#allocation2 + $0x58] sm:$0xff] %v937
        %954 = vst [vmem:[#allocation2 + $0x60] sm:$0xff] %v938
        %955 = vst [vmem:[#allocation2 + $0x68] sm:$0xff] %v939
        %956 = vst [vmem:[#allocation2 + $0x70] sm:$0xff] %v940
        %957 = vst [vmem:[#allocation2 + $0x78] sm:$0xff] %v941
        %p958 = scmp.eq.s32.totalorder %s23, 2
        // Predicated region
        $region59: #{resnet_forward.31} parent=49 // pred_check
          %p959 = pneg %p958
        $region60: #{resnet_forward.31} parent=49 // pred_check_branch
          %961 = sbr.rel (%p959) target = $region62
        $region61: #{resnet_forward.31} parent=49 // pred_region
          %v962 = vld [vmem:[#allocation2] sm:$0xff]
          %v963 = vld [vmem:[#allocation2 + $0x8] sm:$0xff]
          %v964 = vld [vmem:[#allocation2 + $0x10] sm:$0xff]
          %v965 = vld [vmem:[#allocation2 + $0x18] sm:$0xff]
          %v966 = vld [vmem:[#allocation2 + $0x20] sm:$0xff]
          %v967 = vld [vmem:[#allocation2 + $0x28] sm:$0xff]
          %v968 = vld [vmem:[#allocation2 + $0x30] sm:$0xff]
          %v969 = vld [vmem:[#allocation2 + $0x38] sm:$0xff]
          %v970 = vld [vmem:[#allocation2 + $0x40] sm:$0xff]
          %v971 = vld [vmem:[#allocation2 + $0x48] sm:$0xff]
          %v972 = vld [vmem:[#allocation2 + $0x50] sm:$0xff]
          %v973 = vld [vmem:[#allocation2 + $0x58] sm:$0xff]
          %v974 = vld [vmem:[#allocation2 + $0x60] sm:$0xff]
          %v975 = vld [vmem:[#allocation2 + $0x68] sm:$0xff]
          %v976 = vld [vmem:[#allocation2 + $0x70] sm:$0xff]
          %v977 = vld [vmem:[#allocation2 + $0x78] sm:$0xff]
          %978 = vst [vmem:[%s377] sm:$0xff] %v962
          %979 = vst [vmem:[%s377 + $0x8] sm:$0xff] %v963
          %980 = vst [vmem:[%s377 + $0x10] sm:$0xff] %v964
          %981 = vst [vmem:[%s377 + $0x18] sm:$0xff] %v965
          %982 = vst [vmem:[%s377 + $0x20] sm:$0xff] %v966
          %983 = vst [vmem:[%s377 + $0x28] sm:$0xff] %v967
          %984 = vst [vmem:[%s377 + $0x30] sm:$0xff] %v968
          %985 = vst [vmem:[%s377 + $0x38] sm:$0xff] %v969
          %986 = vst [vmem:[%s377 + $0x40] sm:$0xff] %v970
          %987 = vst [vmem:[%s377 + $0x48] sm:$0xff] %v971
          %988 = vst [vmem:[%s377 + $0x50] sm:$0xff] %v972
          %989 = vst [vmem:[%s377 + $0x58] sm:$0xff] %v973
          %990 = vst [vmem:[%s377 + $0x60] sm:$0xff] %v974
          %991 = vst [vmem:[%s377 + $0x68] sm:$0xff] %v975
          %992 = vst [vmem:[%s377 + $0x70] sm:$0xff] %v976
          %993 = vst [vmem:[%s377 + $0x78] sm:$0xff] %v977
          %v994 = vadd.f32 %v962, %v963
          %v995 = vadd.f32 %v994, %v964
          %v996 = vadd.f32 %v995, %v965
          %v997 = vadd.f32 %v996, %v966
          %v998 = vadd.f32 %v997, %v967
          %v999 = vadd.f32 %v998, %v968
          %v1000 = vadd.f32 %v999, %v969
          %v1001 = vadd.f32 %v1000, %v970
          %v1002 = vadd.f32 %v1001, %v971
          %v1003 = vadd.f32 %v1002, %v972
          %v1004 = vadd.f32 %v1003, %v973
          %v1005 = vadd.f32 %v1004, %v974
          %v1006 = vadd.f32 %v1005, %v975
          %v1007 = vadd.f32 %v1006, %v976
          %v1008 = vadd.f32 %v1007, %v977
          %v1009 = vrot.slane %v1008, 4
          %v1010 = vadd.f32 %v1008, %v1009
          %v1011 = vrot.slane %v1010, 2
          %v1012 = vadd.f32 %v1010, %v1011
          %v1013 = vrot.slane %v1012, 1
          %v1014 = vadd.f32 %v1012, %v1013
          %1015 = vst [vmem:[%s384] sm:$0x1] %v1014
          %v1016 = vmul.f32 %v962, %v962
          %v1017 = vmul.f32 %v963, %v963
          %v1018 = vmul.f32 %v964, %v964
          %v1019 = vmul.f32 %v965, %v965
          %v1020 = vmul.f32 %v966, %v966
          %v1021 = vmul.f32 %v967, %v967
          %v1022 = vmul.f32 %v968, %v968
          %v1023 = vmul.f32 %v969, %v969
          %v1024 = vmul.f32 %v970, %v970
          %v1025 = vmul.f32 %v971, %v971
          %v1026 = vmul.f32 %v972, %v972
          %v1027 = vmul.f32 %v973, %v973
          %v1028 = vmul.f32 %v974, %v974
          %v1029 = vmul.f32 %v975, %v975
          %v1030 = vmul.f32 %v976, %v976
          %v1031 = vmul.f32 %v977, %v977
          %v1032 = vadd.f32 %v1016, %v1017
          %v1033 = vadd.f32 %v1032, %v1018
          %v1034 = vadd.f32 %v1033, %v1019
          %v1035 = vadd.f32 %v1034, %v1020
          %v1036 = vadd.f32 %v1035, %v1021
          %v1037 = vadd.f32 %v1036, %v1022
          %v1038 = vadd.f32 %v1037, %v1023
          %v1039 = vadd.f32 %v1038, %v1024
          %v1040 = vadd.f32 %v1039, %v1025
          %v1041 = vadd.f32 %v1040, %v1026
          %v1042 = vadd.f32 %v1041, %v1027
          %v1043 = vadd.f32 %v1042, %v1028
          %v1044 = vadd.f32 %v1043, %v1029
          %v1045 = vadd.f32 %v1044, %v1030
          %v1046 = vadd.f32 %v1045, %v1031
          %v1047 = vrot.slane %v1046, 4
          %v1048 = vadd.f32 %v1046, %v1047
          %v1049 = vrot.slane %v1048, 2
          %v1050 = vadd.f32 %v1048, %v1049
          %v1051 = vrot.slane %v1050, 1
          %v1052 = vadd.f32 %v1050, %v1051
          %1053 = vst [vmem:[%s390] sm:$0x1] %v1052
        $region62: #{resnet_forward.31} parent=49 // pred_fallthru
          _
        %s1054 = smul.u32 16, %s21
        %p1055 = scmp.lt.s32.totalorder %s1054, 15
        %s1056 = scalar_select %p1055, %s1054, 15
        %p1057 = scmp.lt.s32.totalorder %s22, 0
        %s1058 = scalar_select %p1057, %s22, 0
        %s1059 = sadd.s32 %s1058, %s1056
        %s1060 = smul.addr %s1059, 8
        %s1061 = scalar_lea.vmem %s2, %s1060
        %p1062 = scmp.lt.s32.totalorder %s21, 0
        %s1063 = scalar_select %p1062, %s21, 0
        %p1064 = scmp.lt.s32.totalorder %s22, 0
        %s1065 = scalar_select %p1064, %s22, 0
        %s1066 = sadd.s32 %s1065, %s1063
        %s1067 = scalar_lea.vmem %s3, %s1066
        %p1068 = scmp.lt.s32.totalorder %s21, 0
        %s1069 = scalar_select %p1068, %s21, 0
        %p1070 = scmp.lt.s32.totalorder %s22, 0
        %s1071 = scalar_select %p1070, %s22, 0
        %s1072 = sadd.s32 %s1071, %s1069
        %s1073 = scalar_lea.vmem %s4, %s1072
        // Predicated region
        $region63: #{resnet_forward.31} parent=49 // pred_check
          %p1074 = pneg %p111
        $region64: #{resnet_forward.31} parent=49 // pred_check_branch
          %1076 = sbr.rel (%p1074) target = $region66
        $region65: #{resnet_forward.31} parent=49 // pred_region
          %s1077 = smul.u32 16, %s21
        $region66: #{resnet_forward.31} parent=49 // pred_fallthru
          _
        // Predicated region
        $region67: #{resnet_forward.31} parent=49 // pred_check
          %p1078 = pneg %p139
        $region68: #{resnet_forward.31} parent=49 // pred_check_branch
          %1080 = sbr.rel (%p1078) target = $region70
        $region69: #{resnet_forward.31} parent=49 // pred_region
          _
        $region70: #{resnet_forward.31} parent=49 // pred_fallthru
          _
        // Predicated region
        $region71: #{resnet_forward.31} parent=49 // pred_check
          %p1081 = pneg %p167
        $region72: #{resnet_forward.31} parent=49 // pred_check_branch
          %1083 = sbr.rel (%p1081) target = $region74
        $region73: #{resnet_forward.31} parent=49 // pred_region
          _
        $region74: #{resnet_forward.31} parent=49 // pred_fallthru
          _
        // Predicated region
        $region75: #{resnet_forward.31} parent=49 // pred_check
          %p1084 = pneg %p111
        $region76: #{resnet_forward.31} parent=49 // pred_check_branch
          %1086 = sbr.rel (%p1084) target = $region78
        $region77: #{resnet_forward.31} parent=49 // pred_region
          %s1087 = smul.u32 16, %s21
          %p1088 = scmp.lt.s32.totalorder %s1087, 15
          %s1089 = scalar_select %p1088, %s1087, 15
          %p1090 = scmp.lt.s32.totalorder %s22, 0
          %s1091 = scalar_select %p1090, %s22, 0
          %s1092 = sadd.s32 %s1091, %s1089
          %s1093 = smul.addr %s1092, 8
          %s1094 = scalar_lea.vmem %s2, %s1093
        $region78: #{resnet_forward.31} parent=49 // pred_fallthru
          _
        // Predicated region
        $region79: #{resnet_forward.31} parent=49 // pred_check
          %p1095 = pneg %p139
        $region80: #{resnet_forward.31} parent=49 // pred_check_branch
          %1097 = sbr.rel (%p1095) target = $region82
        $region81: #{resnet_forward.31} parent=49 // pred_region
          %p1098 = scmp.lt.s32.totalorder %s21, 0
          %s1099 = scalar_select %p1098, %s21, 0
          %p1100 = scmp.lt.s32.totalorder %s22, 0
          %s1101 = scalar_select %p1100, %s22, 0
          %s1102 = sadd.s32 %s1101, %s1099
          %s1103 = scalar_lea.vmem %s3, %s1102
        $region82: #{resnet_forward.31} parent=49 // pred_fallthru
          _
        // Predicated region
        $region83: #{resnet_forward.31} parent=49 // pred_check
          %p1104 = pneg %p167
        $region84: #{resnet_forward.31} parent=49 // pred_check_branch
          %1106 = sbr.rel (%p1104) target = $region86
        $region85: #{resnet_forward.31} parent=49 // pred_region
          %p1107 = scmp.lt.s32.totalorder %s21, 0
          %s1108 = scalar_select %p1107, %s21, 0
          %p1109 = scmp.lt.s32.totalorder %s22, 0
          %s1110 = scalar_select %p1109, %s22, 0
          %s1111 = sadd.s32 %s1110, %s1108
          %s1112 = scalar_lea.vmem %s4, %s1111
        $region86: #{resnet_forward.31} parent=49 // pred_fallthru
          _
      $region50: #{resnet_forward.31} parent=5 // pred_fallthru
        _
      %p1113 = scmp.le.s32.totalorder 2, %s11
      // Predicated region
      $region87: #{resnet_forward.31} parent=5 // pred_check
        %p1114 = pneg %p1113
      $region88: #{resnet_forward.31} parent=5 // pred_check_branch
        %1116 = sbr.rel (%p1114) target = $region90
      $region89: #{resnet_forward.31} parent=5 // pred_region
        %s1117 = ssub.s32 %s11, 2
      $region90: #{resnet_forward.31} parent=5 // pred_fallthru
        _
    $region6: #{resnet_forward.31} parent=1 // loop_footer
      %s15 = sadd.s32 1, %s11
    $region7: #{resnet_forward.31} parent=1 // loop_footer_branch
      %10 = sbr.rel target = $region3
    $region8: #{resnet_forward.31} parent=1 // loop_exit
      _

// kernel: resnet_forward.36
$region0: #{resnet_forward.36}
  #allocation0 [shape = 'u32[]', space=smem, size = 0x4, offset = 0x4, fixed_abs, tag = 'smem constant byte address 0x4 - core index']
  #allocation1 [shape = 'u32[72,128]{1,0:T(1,128)}', space=vmem, size = 0x9000, scoped, tag = 'internal scratch']
  %s0 = inlined_call_operand.vmem [shape: f32[128,128], index: 0, kind: input, shape index: {}]
  %s1 = inlined_call_operand.vmem [shape: f32[1,128], index: 1, kind: input, shape index: {}]
  %s2 = inlined_call_operand.vmem [shape: f32[1,128], index: 2, kind: input, shape index: {}]
  %s3 = inlined_call_operand.vmem [shape: f32[128,128], index: 3, kind: input, shape index: {}]
  %s4 = inlined_call_operand.vmem [shape: f32[128,128], index: 4, kind: output, shape index: {}]
  %s5 = sld [smem:[#allocation0]]
  $region26: #{resnet_forward.36} parent=0
    _
  %s7 = ssub.s32 1, %s5
  %s8 = scalar_select 0, %s7, %s5
  // Predicated region
  $region2: #{resnet_forward.36} parent=0 // pred_check
    _
  $region3: #{resnet_forward.36} parent=0 // pred_check_branch
    %10 = sbr.rel (0) target = $region5
  $region4: #{resnet_forward.36} parent=0 // pred_region
    _
  $region5: #{resnet_forward.36} parent=0 // pred_fallthru
    _
  // Predicated region
  $region6: #{resnet_forward.36} parent=0 // pred_check
    _
  $region7: #{resnet_forward.36} parent=0 // pred_check_branch
    %12 = sbr.rel (0) target = $region9
  $region8: #{resnet_forward.36} parent=0 // pred_region
    _
  $region9: #{resnet_forward.36} parent=0 // pred_fallthru
    _
  // Predicated region
  $region10: #{resnet_forward.36} parent=0 // pred_check
    _
  $region11: #{resnet_forward.36} parent=0 // pred_check_branch
    %14 = sbr.rel (0) target = $region13
  $region12: #{resnet_forward.36} parent=0 // pred_region
    _
  $region13: #{resnet_forward.36} parent=0 // pred_fallthru
    _
  // Predicated region
  $region14: #{resnet_forward.36} parent=0 // pred_check
    _
  $region15: #{resnet_forward.36} parent=0 // pred_check_branch
    %16 = sbr.rel (0) target = $region17
  $region16: #{resnet_forward.36} parent=0 // pred_region
    _
  $region17: #{resnet_forward.36} parent=0 // pred_fallthru
    _
  %v17 = vld [vmem:[%s0] sm:$0xff]
  %v18 = vld [vmem:[%s0 + $0x8] sm:$0xff]
  %v19 = vld [vmem:[%s0 + $0x10] sm:$0xff]
  %v20 = vld [vmem:[%s0 + $0x18] sm:$0xff]
  %v21 = vld [vmem:[%s0 + $0x20] sm:$0xff]
  %v22 = vld [vmem:[%s0 + $0x28] sm:$0xff]
  %v23 = vld [vmem:[%s0 + $0x30] sm:$0xff]
  %v24 = vld [vmem:[%s0 + $0x38] sm:$0xff]
  %v25 = vld [vmem:[%s0 + $0x40] sm:$0xff]
  %v26 = vld [vmem:[%s0 + $0x48] sm:$0xff]
  %v27 = vld [vmem:[%s0 + $0x50] sm:$0xff]
  %v28 = vld [vmem:[%s0 + $0x58] sm:$0xff]
  %v29 = vld [vmem:[%s0 + $0x60] sm:$0xff]
  %v30 = vld [vmem:[%s0 + $0x68] sm:$0xff]
  %v31 = vld [vmem:[%s0 + $0x70] sm:$0xff]
  %v32 = vld [vmem:[%s0 + $0x78] sm:$0xff]
  %v33 = vld [vmem:[%s1] sm:$0x1]
  %v35 = vperm.slane %v33, 0
  %v37 = vmul.f32 %v17, %v35
  %v38 = vmul.f32 %v18, %v35
  %v39 = vmul.f32 %v19, %v35
  %v40 = vmul.f32 %v20, %v35
  %v41 = vmul.f32 %v21, %v35
  %v42 = vmul.f32 %v22, %v35
  %v43 = vmul.f32 %v23, %v35
  %v44 = vmul.f32 %v24, %v35
  %v45 = vmul.f32 %v25, %v35
  %v46 = vmul.f32 %v26, %v35
  %v47 = vmul.f32 %v27, %v35
  %v48 = vmul.f32 %v28, %v35
  %v49 = vmul.f32 %v29, %v35
  %v50 = vmul.f32 %v30, %v35
  %v51 = vmul.f32 %v31, %v35
  %v52 = vmul.f32 %v32, %v35
  %v53 = vld [vmem:[%s2] sm:$0x1]
  %v55 = vperm.slane %v53, 0
  %v57 = vadd.f32 %v37, %v55
  %v58 = vadd.f32 %v38, %v55
  %v59 = vadd.f32 %v39, %v55
  %v60 = vadd.f32 %v40, %v55
  %v61 = vadd.f32 %v41, %v55
  %v62 = vadd.f32 %v42, %v55
  %v63 = vadd.f32 %v43, %v55
  %v64 = vadd.f32 %v44, %v55
  %v65 = vadd.f32 %v45, %v55
  %v66 = vadd.f32 %v46, %v55
  %v67 = vadd.f32 %v47, %v55
  %v68 = vadd.f32 %v48, %v55
  %v69 = vadd.f32 %v49, %v55
  %v70 = vadd.f32 %v50, %v55
  %v71 = vadd.f32 %v51, %v55
  %v72 = vadd.f32 %v52, %v55
  %v73 = vld [vmem:[%s3] sm:$0xff]
  %v74 = vld [vmem:[%s3 + $0x8] sm:$0xff]
  %v75 = vld [vmem:[%s3 + $0x10] sm:$0xff]
  %v76 = vld [vmem:[%s3 + $0x18] sm:$0xff]
  %v77 = vld [vmem:[%s3 + $0x20] sm:$0xff]
  %v78 = vld [vmem:[%s3 + $0x28] sm:$0xff]
  %v79 = vld [vmem:[%s3 + $0x30] sm:$0xff]
  %v80 = vld [vmem:[%s3 + $0x38] sm:$0xff]
  %v81 = vld [vmem:[%s3 + $0x40] sm:$0xff]
  %v82 = vld [vmem:[%s3 + $0x48] sm:$0xff]
  %v83 = vld [vmem:[%s3 + $0x50] sm:$0xff]
  %v84 = vld [vmem:[%s3 + $0x58] sm:$0xff]
  %v85 = vld [vmem:[%s3 + $0x60] sm:$0xff]
  %v86 = vld [vmem:[%s3 + $0x68] sm:$0xff]
  %v87 = vld [vmem:[%s3 + $0x70] sm:$0xff]
  %v88 = vld [vmem:[%s3 + $0x78] sm:$0xff]
  %v89 = vadd.f32 %v57, %v73
  %v90 = vadd.f32 %v58, %v74
  %v91 = vadd.f32 %v59, %v75
  %v92 = vadd.f32 %v60, %v76
  %v93 = vadd.f32 %v61, %v77
  %v94 = vadd.f32 %v62, %v78
  %v95 = vadd.f32 %v63, %v79
  %v96 = vadd.f32 %v64, %v80
  %v97 = vadd.f32 %v65, %v81
  %v98 = vadd.f32 %v66, %v82
  %v99 = vadd.f32 %v67, %v83
  %v100 = vadd.f32 %v68, %v84
  %v101 = vadd.f32 %v69, %v85
  %v102 = vadd.f32 %v70, %v86
  %v103 = vadd.f32 %v71, %v87
  %v104 = vadd.f32 %v72, %v88
  %v105 = vmax.f32 %v89, 0.0
  %v106 = vmax.f32 %v90, 0.0
  %v107 = vmax.f32 %v91, 0.0
  %v108 = vmax.f32 %v92, 0.0
  %v109 = vmax.f32 %v93, 0.0
  %v110 = vmax.f32 %v94, 0.0
  %v111 = vmax.f32 %v95, 0.0
  %v112 = vmax.f32 %v96, 0.0
  %v113 = vmax.f32 %v97, 0.0
  %v114 = vmax.f32 %v98, 0.0
  %v115 = vmax.f32 %v99, 0.0
  %v116 = vmax.f32 %v100, 0.0
  %v117 = vmax.f32 %v101, 0.0
  %v118 = vmax.f32 %v102, 0.0
  %v119 = vmax.f32 %v103, 0.0
  %v120 = vmax.f32 %v104, 0.0
  %121 = vst [vmem:[%s4] sm:$0xff] %v105
  %122 = vst [vmem:[%s4 + $0x8] sm:$0xff] %v106
  %123 = vst [vmem:[%s4 + $0x10] sm:$0xff] %v107
  %124 = vst [vmem:[%s4 + $0x18] sm:$0xff] %v108
  %125 = vst [vmem:[%s4 + $0x20] sm:$0xff] %v109
  %126 = vst [vmem:[%s4 + $0x28] sm:$0xff] %v110
  %127 = vst [vmem:[%s4 + $0x30] sm:$0xff] %v111
  %128 = vst [vmem:[%s4 + $0x38] sm:$0xff] %v112
  %129 = vst [vmem:[%s4 + $0x40] sm:$0xff] %v113
  %130 = vst [vmem:[%s4 + $0x48] sm:$0xff] %v114
  %131 = vst [vmem:[%s4 + $0x50] sm:$0xff] %v115
  %132 = vst [vmem:[%s4 + $0x58] sm:$0xff] %v116
  %133 = vst [vmem:[%s4 + $0x60] sm:$0xff] %v117
  %134 = vst [vmem:[%s4 + $0x68] sm:$0xff] %v118
  %135 = vst [vmem:[%s4 + $0x70] sm:$0xff] %v119
  %136 = vst [vmem:[%s4 + $0x78] sm:$0xff] %v120
  // Predicated region
  $region18: #{resnet_forward.36} parent=0 // pred_check
    _
  $region19: #{resnet_forward.36} parent=0 // pred_check_branch
    %138 = sbr.rel (0) target = $region21
  $region20: #{resnet_forward.36} parent=0 // pred_region
    _
  $region21: #{resnet_forward.36} parent=0 // pred_fallthru
    _
  // Predicated region
  $region22: #{resnet_forward.36} parent=0 // pred_check
    _
  $region23: #{resnet_forward.36} parent=0 // pred_check_branch
    %140 = sbr.rel (0) target = $region25
  $region24: #{resnet_forward.36} parent=0 // pred_region
    _
  $region25: #{resnet_forward.36} parent=0 // pred_fallthru
    _

// kernel: resnet_forward.40
$region0: #{resnet_forward.40}
  #allocation0 [shape = 'u32[]', space=smem, size = 0x4, offset = 0x4, fixed_abs, tag = 'smem constant byte address 0x4 - core index']
  #allocation1 [shape = 'u32[72,128]{1,0:T(1,128)}', space=vmem, size = 0x9000, scoped, tag = 'internal scratch']
  #allocation2 [shape = 'f32[32,128]{1,0:T(8,128)}', space=vmem, size = 0x4000, scoped, tag = 'scratch operand']
  %s0 = inlined_call_operand.vmem [shape: bf16[32,128], index: 0, kind: input, shape index: {}]
  %s1 = inlined_call_operand.vmem [shape: bf16[128,128], index: 1, kind: input, shape index: {}]
  %s2 = inlined_call_operand.vmem [shape: f32[32,128], index: 2, kind: output, shape index: {0}]
  %s3 = inlined_call_operand.vmem [shape: f32[1,1,128], index: 3, kind: output, shape index: {1}]
  %s4 = inlined_call_operand.vmem [shape: f32[1,1,128], index: 4, kind: output, shape index: {2}]
  %5 = xla_tuple %s2, %s3, %s4
  %s6 = sld [smem:[#allocation0]]
  $region42: #{resnet_forward.40} parent=0
    _
  %s8 = ssub.s32 1, %s6
  %s9 = scalar_select 0, %s8, %s6
  // Predicated region
  $region2: #{resnet_forward.40} parent=0 // pred_check
    _
  $region3: #{resnet_forward.40} parent=0 // pred_check_branch
    %11 = sbr.rel (0) target = $region5
  $region4: #{resnet_forward.40} parent=0 // pred_region
    _
  $region5: #{resnet_forward.40} parent=0 // pred_fallthru
    _
  // Predicated region
  $region6: #{resnet_forward.40} parent=0 // pred_check
    _
  $region7: #{resnet_forward.40} parent=0 // pred_check_branch
    %13 = sbr.rel (0) target = $region9
  $region8: #{resnet_forward.40} parent=0 // pred_region
    _
  $region9: #{resnet_forward.40} parent=0 // pred_fallthru
    _
  %p14 = scmp.eq.s32.totalorder 0, 0
  // Predicated region
  $region10: #{resnet_forward.40} parent=0 // pred_check
    %p15 = pneg %p14
  $region11: #{resnet_forward.40} parent=0 // pred_check_branch
    %17 = sbr.rel (%p15) target = $region13
  $region12: #{resnet_forward.40} parent=0 // pred_region
    %18 = vst [vmem:[#allocation2] sm:$0xff] 0.0
    %19 = vst [vmem:[#allocation2 + $0x8] sm:$0xff] 0.0
    %20 = vst [vmem:[#allocation2 + $0x10] sm:$0xff] 0.0
    %21 = vst [vmem:[#allocation2 + $0x18] sm:$0xff] 0.0
  $region13: #{resnet_forward.40} parent=0 // pred_fallthru
    _
  %v22 = vld [vmem:[#allocation2] sm:$0xff]
  %v23 = vld [vmem:[#allocation2 + $0x8] sm:$0xff]
  %v24 = vld [vmem:[#allocation2 + $0x10] sm:$0xff]
  %v25 = vld [vmem:[#allocation2 + $0x18] sm:$0xff]
  %v26 = vld [vmem:[%s0] sm:$0xf]
  %v27 = vld [vmem:[%s0 + $0x4] sm:$0xf]
  %v28 = vld [vmem:[%s0 + $0x8] sm:$0xf]
  %v29 = vld [vmem:[%s0 + $0xc] sm:$0xf]
  %v30 = vld [vmem:[%s1] sm:$0xf]
  %v31 = vld [vmem:[%s1 + $0x4] sm:$0xf]
  %v32 = vld [vmem:[%s1 + $0x8] sm:$0xf]
  %v33 = vld [vmem:[%s1 + $0xc] sm:$0xf]
  %v34 = vld [vmem:[%s1 + $0x10] sm:$0xf]
  %v35 = vld [vmem:[%s1 + $0x14] sm:$0xf]
  %v36 = vld [vmem:[%s1 + $0x18] sm:$0xf]
  %v37 = vld [vmem:[%s1 + $0x1c] sm:$0xf]
  %v38 = vld [vmem:[%s1 + $0x20] sm:$0xf]
  %v39 = vld [vmem:[%s1 + $0x24] sm:$0xf]
  %v40 = vld [vmem:[%s1 + $0x28] sm:$0xf]
  %v41 = vld [vmem:[%s1 + $0x2c] sm:$0xf]
  %v42 = vld [vmem:[%s1 + $0x30] sm:$0xf]
  %v43 = vld [vmem:[%s1 + $0x34] sm:$0xf]
  %v44 = vld [vmem:[%s1 + $0x38] sm:$0xf]
  %v45 = vld [vmem:[%s1 + $0x3c] sm:$0xf]
  %v50 = vunpack.c.l.b16 %v26
  %v51 = vunpack.c.l.b16 %v27
  %v52 = vunpack.c.l.b16 %v28
  %v53 = vunpack.c.l.b16 %v29
  %v54 = vpack.c.b16 %v51, %v50
  %v55 = vpack.c.b16 %v53, %v52
  %v74 = vunpack.c.l.b16 %v30
  %v75 = vunpack.c.l.b16 %v31
  %v76 = vunpack.c.l.b16 %v32
  %v77 = vunpack.c.l.b16 %v33
  %v78 = vunpack.c.l.b16 %v34
  %v79 = vunpack.c.l.b16 %v35
  %v80 = vunpack.c.l.b16 %v36
  %v81 = vunpack.c.l.b16 %v37
  %v82 = vunpack.c.l.b16 %v38
  %v83 = vunpack.c.l.b16 %v39
  %v84 = vunpack.c.l.b16 %v40
  %v85 = vunpack.c.l.b16 %v41
  %v86 = vunpack.c.l.b16 %v42
  %v87 = vunpack.c.l.b16 %v43
  %v88 = vunpack.c.l.b16 %v44
  %v89 = vunpack.c.l.b16 %v45
  %v90 = vpack.c.b16 %v75, %v74
  %v91 = vpack.c.b16 %v77, %v76
  %v92 = vpack.c.b16 %v79, %v78
  %v93 = vpack.c.b16 %v81, %v80
  %v94 = vpack.c.b16 %v83, %v82
  %v95 = vpack.c.b16 %v85, %v84
  %v96 = vpack.c.b16 %v87, %v86
  %v97 = vpack.c.b16 %v89, %v88
  %106 = vmatpush.bf16.msra.mxu0 %v97
  %107 = vmatpush.bf16.msra.mxu0 %v96
  %108 = vmatpush.bf16.msra.mxu0 %v95
  %109 = vmatpush.bf16.msra.mxu0 %v94
  %110 = vmatpush.bf16.msra.mxu0 %v93
  %111 = vmatpush.bf16.msra.mxu0 %v92
  %112 = vmatpush.bf16.msra.mxu0 %v91
  %113 = vmatpush.bf16.msra.mxu0 %v90
  %114 = vmatmul.bf16.gmra.mxu0 %v54
  %v115 = vpop.f32.mrf.mxu0
  %v116 = vadd.f32 0.0, %v115
  %v117 = vpop.f32.mrf.mxu0
  %v118 = vadd.f32 0.0, %v117
  %119 = vmatmul.bf16.gmra.mxu0 %v55
  %v120 = vpop.f32.mrf.mxu0
  %v121 = vadd.f32 0.0, %v120
  %v122 = vpop.f32.mrf.mxu0
  %v123 = vadd.f32 0.0, %v122
  %124 = vdwg.mxu0
  %v125 = vadd.f32 %v22, %v116
  %v126 = vadd.f32 %v23, %v118
  %v127 = vadd.f32 %v24, %v121
  %v128 = vadd.f32 %v25, %v123
  %129 = vst [vmem:[#allocation2] sm:$0xff] %v125
  %130 = vst [vmem:[#allocation2 + $0x8] sm:$0xff] %v126
  %131 = vst [vmem:[#allocation2 + $0x10] sm:$0xff] %v127
  %132 = vst [vmem:[#allocation2 + $0x18] sm:$0xff] %v128
  // Predicated region
  $region14: #{resnet_forward.40} parent=0 // pred_check
    %p133 = pneg %p14
  $region15: #{resnet_forward.40} parent=0 // pred_check_branch
    %135 = sbr.rel (%p133) target = $region17
  $region16: #{resnet_forward.40} parent=0 // pred_region
    %v136 = vld [vmem:[#allocation2] sm:$0xff]
    %v137 = vld [vmem:[#allocation2 + $0x8] sm:$0xff]
    %v138 = vld [vmem:[#allocation2 + $0x10] sm:$0xff]
    %v139 = vld [vmem:[#allocation2 + $0x18] sm:$0xff]
    %140 = vst [vmem:[%s2] sm:$0xff] %v136
    %141 = vst [vmem:[%s2 + $0x8] sm:$0xff] %v137
    %142 = vst [vmem:[%s2 + $0x10] sm:$0xff] %v138
    %143 = vst [vmem:[%s2 + $0x18] sm:$0xff] %v139
    %v144 = vadd.f32 %v136, %v137
    %v145 = vadd.f32 %v144, %v138
    %v146 = vadd.f32 %v145, %v139
    %v147 = vrot.slane %v146, 4
    %v148 = vadd.f32 %v146, %v147
    %v149 = vrot.slane %v148, 2
    %v150 = vadd.f32 %v148, %v149
    %v151 = vrot.slane %v150, 1
    %v152 = vadd.f32 %v150, %v151
    %153 = vst [vmem:[%s3] sm:$0x1] %v152
    %v154 = vmul.f32 %v136, %v136
    %v155 = vmul.f32 %v137, %v137
    %v156 = vmul.f32 %v138, %v138
    %v157 = vmul.f32 %v139, %v139
    %v158 = vadd.f32 %v154, %v155
    %v159 = vadd.f32 %v158, %v156
    %v160 = vadd.f32 %v159, %v157
    %v161 = vrot.slane %v160, 4
    %v162 = vadd.f32 %v160, %v161
    %v163 = vrot.slane %v162, 2
    %v164 = vadd.f32 %v162, %v163
    %v165 = vrot.slane %v164, 1
    %v166 = vadd.f32 %v164, %v165
    %167 = vst [vmem:[%s4] sm:$0x1] %v166
  $region17: #{resnet_forward.40} parent=0 // pred_fallthru
    _
  // Predicated region
  $region18: #{resnet_forward.40} parent=0 // pred_check
    _
  $region19: #{resnet_forward.40} parent=0 // pred_check_branch
    %169 = sbr.rel (0) target = $region21
  $region20: #{resnet_forward.40} parent=0 // pred_region
    _
  $region21: #{resnet_forward.40} parent=0 // pred_fallthru
    _
  // Predicated region
  $region22: #{resnet_forward.40} parent=0 // pred_check
    _
  $region23: #{resnet_forward.40} parent=0 // pred_check_branch
    %171 = sbr.rel (0) target = $region25
  $region24: #{resnet_forward.40} parent=0 // pred_region
    _
  $region25: #{resnet_forward.40} parent=0 // pred_fallthru
    _
  // Predicated region
  $region26: #{resnet_forward.40} parent=0 // pred_check
    _
  $region27: #{resnet_forward.40} parent=0 // pred_check_branch
    %173 = sbr.rel (0) target = $region29
  $region28: #{resnet_forward.40} parent=0 // pred_region
    _
  $region29: #{resnet_forward.40} parent=0 // pred_fallthru
    _
  // Predicated region
  $region30: #{resnet_forward.40} parent=0 // pred_check
    _
  $region31: #{resnet_forward.40} parent=0 // pred_check_branch
    %175 = sbr.rel (0) target = $region33
  $region32: #{resnet_forward.40} parent=0 // pred_region
    _
  $region33: #{resnet_forward.40} parent=0 // pred_fallthru
    _
  // Predicated region
  $region34: #{resnet_forward.40} parent=0 // pred_check
    _
  $region35: #{resnet_forward.40} parent=0 // pred_check_branch
    %177 = sbr.rel (0) target = $region37
  $region36: #{resnet_forward.40} parent=0 // pred_region
    _
  $region37: #{resnet_forward.40} parent=0 // pred_fallthru
    _
  // Predicated region
  $region38: #{resnet_forward.40} parent=0 // pred_check
    _
  $region39: #{resnet_forward.40} parent=0 // pred_check_branch
    %179 = sbr.rel (0) target = $region41
  $region40: #{resnet_forward.40} parent=0 // pred_region
    _
  $region41: #{resnet_forward.40} parent=0 // pred_fallthru
    _

// kernel: resnet_forward.41
$region0: #{resnet_forward.41}
  #allocation0 [shape = 'u32[]', space=smem, size = 0x4, offset = 0x4, fixed_abs, tag = 'smem constant byte address 0x4 - core index']
  #allocation1 [shape = 'u32[72,128]{1,0:T(1,128)}', space=vmem, size = 0x9000, scoped, tag = 'internal scratch']
  %s0 = inlined_call_operand.vmem [shape: f32[32,128], index: 0, kind: input, shape index: {}]
  %s1 = inlined_call_operand.vmem [shape: f32[1,128], index: 1, kind: input, shape index: {}]
  %s2 = inlined_call_operand.vmem [shape: f32[1,128], index: 2, kind: input, shape index: {}]
  %s3 = inlined_call_operand.vmem [shape: f32[32,128], index: 3, kind: output, shape index: {}]
  %s4 = sld [smem:[#allocation0]]
  $region22: #{resnet_forward.41} parent=0
    _
  %s6 = ssub.s32 1, %s4
  %s7 = scalar_select 0, %s6, %s4
  // Predicated region
  $region2: #{resnet_forward.41} parent=0 // pred_check
    _
  $region3: #{resnet_forward.41} parent=0 // pred_check_branch
    %9 = sbr.rel (0) target = $region5
  $region4: #{resnet_forward.41} parent=0 // pred_region
    _
  $region5: #{resnet_forward.41} parent=0 // pred_fallthru
    _
  // Predicated region
  $region6: #{resnet_forward.41} parent=0 // pred_check
    _
  $region7: #{resnet_forward.41} parent=0 // pred_check_branch
    %11 = sbr.rel (0) target = $region9
  $region8: #{resnet_forward.41} parent=0 // pred_region
    _
  $region9: #{resnet_forward.41} parent=0 // pred_fallthru
    _
  // Predicated region
  $region10: #{resnet_forward.41} parent=0 // pred_check
    _
  $region11: #{resnet_forward.41} parent=0 // pred_check_branch
    %13 = sbr.rel (0) target = $region13
  $region12: #{resnet_forward.41} parent=0 // pred_region
    _
  $region13: #{resnet_forward.41} parent=0 // pred_fallthru
    _
  %v14 = vld [vmem:[%s0] sm:$0xff]
  %v15 = vld [vmem:[%s0 + $0x8] sm:$0xff]
  %v16 = vld [vmem:[%s0 + $0x10] sm:$0xff]
  %v17 = vld [vmem:[%s0 + $0x18] sm:$0xff]
  %v18 = vld [vmem:[%s1] sm:$0x1]
  %v20 = vperm.slane %v18, 0
  %v22 = vmul.f32 %v14, %v20
  %v23 = vmul.f32 %v15, %v20
  %v24 = vmul.f32 %v16, %v20
  %v25 = vmul.f32 %v17, %v20
  %v26 = vld [vmem:[%s2] sm:$0x1]
  %v28 = vperm.slane %v26, 0
  %v30 = vadd.f32 %v22, %v28
  %v31 = vadd.f32 %v23, %v28
  %v32 = vadd.f32 %v24, %v28
  %v33 = vadd.f32 %v25, %v28
  %34 = vst [vmem:[%s3] sm:$0xff] %v30
  %35 = vst [vmem:[%s3 + $0x8] sm:$0xff] %v31
  %36 = vst [vmem:[%s3 + $0x10] sm:$0xff] %v32
  %37 = vst [vmem:[%s3 + $0x18] sm:$0xff] %v33
  // Predicated region
  $region14: #{resnet_forward.41} parent=0 // pred_check
    _
  $region15: #{resnet_forward.41} parent=0 // pred_check_branch
    %39 = sbr.rel (0) target = $region17
  $region16: #{resnet_forward.41} parent=0 // pred_region
    _
  $region17: #{resnet_forward.41} parent=0 // pred_fallthru
    _
  // Predicated region
  $region18: #{resnet_forward.41} parent=0 // pred_check
    _
  $region19: #{resnet_forward.41} parent=0 // pred_check_branch
    %41 = sbr.rel (0) target = $region21
  $region20: #{resnet_forward.41} parent=0 // pred_region
    _
  $region21: #{resnet_forward.41} parent=0 // pred_fallthru
    _

// kernel: resnet_forward.38
$region0: #{resnet_forward.38}
  #allocation0 [shape = 'u32[]', space=smem, size = 0x4, offset = 0x4, fixed_abs, tag = 'smem constant byte address 0x4 - core index']
  #allocation1 [shape = 'u32[72,128]{1,0:T(1,128)}', space=vmem, size = 0x9000, scoped, tag = 'internal scratch']
  %s0 = inlined_call_operand.vmem [shape: f32[32,128], index: 0, kind: input, shape index: {}]
  %s1 = inlined_call_operand.vmem [shape: f32[1,128], index: 1, kind: input, shape index: {}]
  %s2 = inlined_call_operand.vmem [shape: f32[1,128], index: 2, kind: input, shape index: {}]
  %s3 = inlined_call_operand.vmem [shape: f32[32,128], index: 3, kind: output, shape index: {}]
  %s4 = sld [smem:[#allocation0]]
  $region22: #{resnet_forward.38} parent=0
    _
  %s6 = ssub.s32 1, %s4
  %s7 = scalar_select 0, %s6, %s4
  // Predicated region
  $region2: #{resnet_forward.38} parent=0 // pred_check
    _
  $region3: #{resnet_forward.38} parent=0 // pred_check_branch
    %9 = sbr.rel (0) target = $region5
  $region4: #{resnet_forward.38} parent=0 // pred_region
    _
  $region5: #{resnet_forward.38} parent=0 // pred_fallthru
    _
  // Predicated region
  $region6: #{resnet_forward.38} parent=0 // pred_check
    _
  $region7: #{resnet_forward.38} parent=0 // pred_check_branch
    %11 = sbr.rel (0) target = $region9
  $region8: #{resnet_forward.38} parent=0 // pred_region
    _
  $region9: #{resnet_forward.38} parent=0 // pred_fallthru
    _
  // Predicated region
  $region10: #{resnet_forward.38} parent=0 // pred_check
    _
  $region11: #{resnet_forward.38} parent=0 // pred_check_branch
    %13 = sbr.rel (0) target = $region13
  $region12: #{resnet_forward.38} parent=0 // pred_region
    _
  $region13: #{resnet_forward.38} parent=0 // pred_fallthru
    _
  %v14 = vld [vmem:[%s0] sm:$0xff]
  %v15 = vld [vmem:[%s0 + $0x8] sm:$0xff]
  %v16 = vld [vmem:[%s0 + $0x10] sm:$0xff]
  %v17 = vld [vmem:[%s0 + $0x18] sm:$0xff]
  %v18 = vld [vmem:[%s1] sm:$0x1]
  %v20 = vperm.slane %v18, 0
  %v22 = vmul.f32 %v14, %v20
  %v23 = vmul.f32 %v15, %v20
  %v24 = vmul.f32 %v16, %v20
  %v25 = vmul.f32 %v17, %v20
  %v26 = vld [vmem:[%s2] sm:$0x1]
  %v28 = vperm.slane %v26, 0
  %v30 = vadd.f32 %v22, %v28
  %v31 = vadd.f32 %v23, %v28
  %v32 = vadd.f32 %v24, %v28
  %v33 = vadd.f32 %v25, %v28
  %v34 = vmax.f32 %v30, 0.0
  %v35 = vmax.f32 %v31, 0.0
  %v36 = vmax.f32 %v32, 0.0
  %v37 = vmax.f32 %v33, 0.0
  %38 = vst [vmem:[%s3] sm:$0xff] %v34
  %39 = vst [vmem:[%s3 + $0x8] sm:$0xff] %v35
  %40 = vst [vmem:[%s3 + $0x10] sm:$0xff] %v36
  %41 = vst [vmem:[%s3 + $0x18] sm:$0xff] %v37
  // Predicated region
  $region14: #{resnet_forward.38} parent=0 // pred_check
    _
  $region15: #{resnet_forward.38} parent=0 // pred_check_branch
    %43 = sbr.rel (0) target = $region17
  $region16: #{resnet_forward.38} parent=0 // pred_region
    _
  $region17: #{resnet_forward.38} parent=0 // pred_fallthru
    _
  // Predicated region
  $region18: #{resnet_forward.38} parent=0 // pred_check
    _
  $region19: #{resnet_forward.38} parent=0 // pred_check_branch
    %45 = sbr.rel (0) target = $region21
  $region20: #{resnet_forward.38} parent=0 // pred_region
    _
  $region21: #{resnet_forward.38} parent=0 // pred_fallthru
    _

// kernel: resnet_forward.37
$region0: #{resnet_forward.37}
  #allocation0 [shape = 'u32[]', space=smem, size = 0x4, offset = 0x4, fixed_abs, tag = 'smem constant byte address 0x4 - core index']
  #allocation1 [shape = 'u32[72,128]{1,0:T(1,128)}', space=vmem, size = 0x9000, scoped, tag = 'internal scratch']
  #allocation2 [shape = 'f32[32,128]{1,0:T(8,128)}', space=vmem, size = 0x4000, scoped, tag = 'scratch operand']
  %s0 = inlined_call_operand.vmem [shape: bf16[32,1152], index: 0, kind: input, shape index: {}]
  %s1 = inlined_call_operand.vmem [shape: bf16[1152,128], index: 1, kind: input, shape index: {}]
  %s2 = inlined_call_operand.vmem [shape: f32[32,128], index: 2, kind: output, shape index: {0}]
  %s3 = inlined_call_operand.vmem [shape: f32[1,1,128], index: 3, kind: output, shape index: {1}]
  %s4 = inlined_call_operand.vmem [shape: f32[1,1,128], index: 4, kind: output, shape index: {2}]
  %5 = xla_tuple %s2, %s3, %s4
  %s6 = sld [smem:[#allocation0]]
  $region91: #{resnet_forward.37} parent=0
    _
  %s8 = ssub.s32 1, %s6
  %s9 = scalar_select 0, %s8, %s6
  $region1: #{resnet_forward.37} parent=0
    #allocation3 [shape = 'u8[49152]{0}', space=vmem, size = 0xc000, scoped, tag = 'input window, operand 0']
    loop: start=0, step=1, limit=5
    $region2: #{resnet_forward.37} parent=1 // loop_pre_header
      _
    $region3: #{resnet_forward.37} parent=1 // loop_header
      %s11 = sphi 0, %s15
      %p12 = scmp.ge.s32.totalorder %s11, 5
      %s18 = sphi 0, %s37
      %s19 = sphi 0, %s33
      %s20 = sphi 0, %s29
      %s21 = sphi 0, %s18
      %s22 = sphi 0, %s19
      %s23 = sphi 0, %s20
      %s24 = sphi 0, %s21
      %s25 = sphi 0, %s22
      %s26 = sphi 0, %s23
      %s42 = sphi 0, %s44
      %s45 = sphi 0, %s42
      %s46 = sphi 0, %s45
      %s62 = sphi 0, %s46
      %s70 = sphi 0, %s72
      %s73 = sphi 0, %s70
      %s74 = sphi 0, %s73
      %s90 = sphi 0, %s74
      %s98 = sphi 0, %s100
      %s101 = sphi 0, %s98
      %s102 = sphi 0, %s101
      %s118 = sphi 0, %s102
      %s126 = sphi 0, %s128
      %s129 = sphi 0, %s126
      %s130 = sphi 0, %s129
      %s146 = sphi 0, %s130
      %s154 = sphi 0, %s156
      %s157 = sphi 0, %s154
      %s158 = sphi 0, %s157
      %s174 = sphi 0, %s158
    $region4: #{resnet_forward.37} parent=1 // loop_header_branch
      %14 = sbr.rel (%p12) target = $region8
    $region5: #{resnet_forward.37} parent=1 // loop_body
      %s16 = ssub.s32 %s11, 1
      %s17 = ssub.s32 %s11, 2
      %s27 = sadd.s32 1, %s20
      %p28 = scmp.ge.s32.totalorder %s27, 3
      %s29 = scalar_select %p28, 0, %s27
      %s30 = sadd.s32 1, %s19
      %s31 = scalar_select %p28, %s30, %s19
      %p32 = scmp.ge.s32.totalorder %s31, 1
      %s33 = scalar_select %p32, 0, %s31
      %s34 = sadd.s32 1, %s18
      %s35 = scalar_select %p32, %s34, %s18
      %p36 = scmp.ge.s32.totalorder %s35, 1
      %s37 = scalar_select %p36, 0, %s35
      %s38 = ssub.s32 %s18, %s37
      %s39 = ssub.s32 %s20, %s29
      %s40 = sor.u32 %s38, %s39
      %p41 = scmp.eq.s32.totalorder %s40, 0
      %s43 = sadd.s32 %s42, 1
      %s44 = scalar_select %p41, %s42, %s43
      %p47 = pneg %p41
      %p48 = scmp.eq.s32.totalorder %s11, 2
      %p49 = por %p47, %p48
      %p50 = scmp.ne.s32.totalorder %s42, %s45
      %p51 = scmp.eq.s32.totalorder %s11, 0
      %p52 = por %p50, %p51
      %p53 = scmp.ne.s32.totalorder %s42, %s45
      %p54 = scmp.eq.s32.totalorder %s16, 2
      %p55 = por %p53, %p54
      %p56 = scmp.ne.s32.totalorder %s45, %s46
      %p57 = scmp.eq.s32.totalorder %s16, 0
      %p58 = por %p56, %p57
      %p59 = scmp.ne.s32.totalorder %s45, %s46
      %p60 = scmp.eq.s32.totalorder %s17, 2
      %p61 = por %p59, %p60
      %p63 = scmp.ne.s32.totalorder %s46, %s62
      %p64 = scmp.eq.s32.totalorder %s17, 0
      %p65 = por %p63, %p64
      %s66 = ssub.s32 %s20, %s29
      %s67 = ssub.s32 %s19, %s33
      %s68 = sor.u32 %s66, %s67
      %p69 = scmp.eq.s32.totalorder %s68, 0
      %s71 = sadd.s32 %s70, 1
      %s72 = scalar_select %p69, %s70, %s71
      %p75 = pneg %p69
      %p76 = scmp.eq.s32.totalorder %s11, 2
      %p77 = por %p75, %p76
      %p78 = scmp.ne.s32.totalorder %s70, %s73
      %p79 = scmp.eq.s32.totalorder %s11, 0
      %p80 = por %p78, %p79
      %p81 = scmp.ne.s32.totalorder %s70, %s73
      %p82 = scmp.eq.s32.totalorder %s16, 2
      %p83 = por %p81, %p82
      %p84 = scmp.ne.s32.totalorder %s73, %s74
      %p85 = scmp.eq.s32.totalorder %s16, 0
      %p86 = por %p84, %p85
      %p87 = scmp.ne.s32.totalorder %s73, %s74
      %p88 = scmp.eq.s32.totalorder %s17, 2
      %p89 = por %p87, %p88
      %p91 = scmp.ne.s32.totalorder %s74, %s90
      %p92 = scmp.eq.s32.totalorder %s17, 0
      %p93 = por %p91, %p92
      %s94 = ssub.s32 %s18, %s37
      %s95 = ssub.s32 %s19, %s33
      %s96 = sor.u32 %s94, %s95
      %p97 = scmp.eq.s32.totalorder %s96, 0
      %s99 = sadd.s32 %s98, 1
      %s100 = scalar_select %p97, %s98, %s99
      %p103 = pneg %p97
      %p104 = scmp.eq.s32.totalorder %s11, 2
      %p105 = por %p103, %p104
      %p106 = scmp.ne.s32.totalorder %s98, %s101
      %p107 = scmp.eq.s32.totalorder %s11, 0
      %p108 = por %p106, %p107
      %p109 = scmp.ne.s32.totalorder %s98, %s101
      %p110 = scmp.eq.s32.totalorder %s16, 2
      %p111 = por %p109, %p110
      %p112 = scmp.ne.s32.totalorder %s101, %s102
      %p113 = scmp.eq.s32.totalorder %s16, 0
      %p114 = por %p112, %p113
      %p115 = scmp.ne.s32.totalorder %s101, %s102
      %p116 = scmp.eq.s32.totalorder %s17, 2
      %p117 = por %p115, %p116
      %p119 = scmp.ne.s32.totalorder %s102, %s118
      %p120 = scmp.eq.s32.totalorder %s17, 0
      %p121 = por %p119, %p120
      %s122 = ssub.s32 %s18, %s37
      %s123 = ssub.s32 %s19, %s33
      %s124 = sor.u32 %s122, %s123
      %p125 = scmp.eq.s32.totalorder %s124, 0
      %s127 = sadd.s32 %s126, 1
      %s128 = scalar_select %p125, %s126, %s127
      %p131 = pneg %p125
      %p132 = scmp.eq.s32.totalorder %s11, 2
      %p133 = por %p131, %p132
      %p134 = scmp.ne.s32.totalorder %s126, %s129
      %p135 = scmp.eq.s32.totalorder %s11, 0
      %p136 = por %p134, %p135
      %p137 = scmp.ne.s32.totalorder %s126, %s129
      %p138 = scmp.eq.s32.totalorder %s16, 2
      %p139 = por %p137, %p138
      %p140 = scmp.ne.s32.totalorder %s129, %s130
      %p141 = scmp.eq.s32.totalorder %s16, 0
      %p142 = por %p140, %p141
      %p143 = scmp.ne.s32.totalorder %s129, %s130
      %p144 = scmp.eq.s32.totalorder %s17, 2
      %p145 = por %p143, %p144
      %p147 = scmp.ne.s32.totalorder %s130, %s146
      %p148 = scmp.eq.s32.totalorder %s17, 0
      %p149 = por %p147, %p148
      %s150 = ssub.s32 %s18, %s37
      %s151 = ssub.s32 %s19, %s33
      %s152 = sor.u32 %s150, %s151
      %p153 = scmp.eq.s32.totalorder %s152, 0
      %s155 = sadd.s32 %s154, 1
      %s156 = scalar_select %p153, %s154, %s155
      %p159 = pneg %p153
      %p160 = scmp.eq.s32.totalorder %s11, 2
      %p161 = por %p159, %p160
      %p162 = scmp.ne.s32.totalorder %s154, %s157
      %p163 = scmp.eq.s32.totalorder %s11, 0
      %p164 = por %p162, %p163
      %p165 = scmp.ne.s32.totalorder %s154, %s157
      %p166 = scmp.eq.s32.totalorder %s16, 2
      %p167 = por %p165, %p166
      %p168 = scmp.ne.s32.totalorder %s157, %s158
      %p169 = scmp.eq.s32.totalorder %s16, 0
      %p170 = por %p168, %p169
      %p171 = scmp.ne.s32.totalorder %s157, %s158
      %p172 = scmp.eq.s32.totalorder %s17, 2
      %p173 = por %p171, %p172
      %p175 = scmp.ne.s32.totalorder %s158, %s174
      %p176 = scmp.eq.s32.totalorder %s17, 0
      %p177 = por %p175, %p176
      %p178 = scmp.le.s32.totalorder 1, %s11
      %p179 = scmp.lt.s32.totalorder %s11, 4
      %p180 = pnand %p178, %p179
      %p181 = pneg %p180
      // Predicated region
      $region9: #{resnet_forward.37} parent=5 // pred_check
        _
      $region10: #{resnet_forward.37} parent=5 // pred_check_branch
        %183 = sbr.rel (%p180) target = $region12
      $region11: #{resnet_forward.37} parent=5 // pred_region
        %s184 = ssub.s32 %s11, 1
      $region12: #{resnet_forward.37} parent=5 // pred_fallthru
        _
      %p185 = scmp.lt.s32.totalorder %s11, 3
      // Predicated region
      $region13: #{resnet_forward.37} parent=5 // pred_check
        %p186 = pneg %p185
      $region14: #{resnet_forward.37} parent=5 // pred_check_branch
        %188 = sbr.rel (%p186) target = $region16
      $region15: #{resnet_forward.37} parent=5 // pred_region
        // Predicated region
        $region17: #{resnet_forward.37} parent=15 // pred_check
          %p189 = pneg %p52
        $region18: #{resnet_forward.37} parent=15 // pred_check_branch
          %191 = sbr.rel (%p189) target = $region20
        $region19: #{resnet_forward.37} parent=15 // pred_region
          %s192 = sand.u32 %s42, 1
          %s193 = sand.u32 %s42, 1
          %s194 = smul.addr %s193, 48
          %s195 = scalar_lea.vmem [#allocation3], %s194
          %s196 = smul.u32 4, %s18
          %s197 = smul.u32 3, %s20
          %s198 = smul.addr %s196, 9
          %s199 = sadd.s32 %s197, %s198
          %s200 = smul.addr %s199, 4
          %s201 = scalar_lea.vmem %s0, %s200
          // Predicated region
          $region21: #{resnet_forward.37} parent=19 // pred_check
            _
          $region22: #{resnet_forward.37} parent=19 // pred_check_branch
            %203 = sbr.rel (0) target = $region24
          $region23: #{resnet_forward.37} parent=19 // pred_region
            // Predicated region
            $region25: #{resnet_forward.37} parent=23 // pred_check
              _
            $region26: #{resnet_forward.37} parent=23 // pred_check_branch
              %205 = sbr.rel (0) target = $region28
            $region27: #{resnet_forward.37} parent=23 // pred_region
              %s206 = scalar_lea.vmem %s201, 8
              %s207 = scalar_lea.vmem %s195, 8 [#allocation3]
              loop: start=0, step=1, limit=1
              $region29: #{resnet_forward.37} parent=27 // loop_pre_header
                _
              $region30: #{resnet_forward.37} parent=27 // loop_header
                %s209 = sphi 0, %s213
                %p210 = scmp.ge.s32.totalorder %s209, 1
                %s214 = sphi %s201, %s201
                %s215 = sphi %s195, %s195
              $region31: #{resnet_forward.37} parent=27 // loop_header_branch
                %212 = sbr.rel (%p210) target = $region35
              $region32: #{resnet_forward.37} parent=27 // loop_body
                %v216 = vld [vmem:[%s214] sm:$0xff]
                %217 = vst [vmem:[%s215] sm:$0xff] %v216
                %v218 = vld [vmem:[%s214 + $0x24] sm:$0xff]
                %219 = vst [vmem:[%s215 + $0xc] sm:$0xff] %v218
                %v220 = vld [vmem:[%s214 + $0x48] sm:$0xff]
                %221 = vst [vmem:[%s215 + $0x18] sm:$0xff] %v220
                %v222 = vld [vmem:[%s214 + $0x6c] sm:$0xff]
                %223 = vst [vmem:[%s215 + $0x24] sm:$0xff] %v222
              $region33: #{resnet_forward.37} parent=27 // loop_footer
                %s213 = sadd.s32 1, %s209
              $region34: #{resnet_forward.37} parent=27 // loop_footer_branch
                %208 = sbr.rel target = $region30
              $region35: #{resnet_forward.37} parent=27 // loop_exit
                _
              %s225 = ssub.s32 16, 1
              loop: start=0, step=1, limit=1
              $region36: #{resnet_forward.37} parent=27 // loop_pre_header
                _
              $region37: #{resnet_forward.37} parent=27 // loop_header
                %s227 = sphi 0, %s231
                %p228 = scmp.ge.s32.totalorder %s227, 1
                %s232 = sphi %s206, %s206
                %s233 = sphi %s207, %s207
              $region38: #{resnet_forward.37} parent=27 // loop_header_branch
                %230 = sbr.rel (%p228) target = $region42
              $region39: #{resnet_forward.37} parent=27 // loop_body
                %v234 = vld [vmem:[%s232] sm:%s225]
                %235 = vst [vmem:[%s233] sm:%s225] %v234
                %v236 = vld [vmem:[%s232 + $0x24] sm:%s225]
                %237 = vst [vmem:[%s233 + $0xc] sm:%s225] %v236
                %v238 = vld [vmem:[%s232 + $0x48] sm:%s225]
                %239 = vst [vmem:[%s233 + $0x18] sm:%s225] %v238
                %v240 = vld [vmem:[%s232 + $0x6c] sm:%s225]
                %241 = vst [vmem:[%s233 + $0x24] sm:%s225] %v240
              $region40: #{resnet_forward.37} parent=27 // loop_footer
                %s231 = sadd.s32 1, %s227
              $region41: #{resnet_forward.37} parent=27 // loop_footer_branch
                %226 = sbr.rel target = $region37
              $region42: #{resnet_forward.37} parent=27 // loop_exit
                _
            $region28: #{resnet_forward.37} parent=23 // pred_fallthru
              _
          $region24: #{resnet_forward.37} parent=19 // pred_fallthru
            _
          %242 = vnop
        $region20: #{resnet_forward.37} parent=15 // pred_fallthru
          _
        // Predicated region
        $region43: #{resnet_forward.37} parent=15 // pred_check
          %p243 = pneg %p80
        $region44: #{resnet_forward.37} parent=15 // pred_check_branch
          %245 = sbr.rel (%p243) target = $region46
        $region45: #{resnet_forward.37} parent=15 // pred_region
          %s246 = smul.u32 48, %s20
          %p247 = scmp.lt.s32.totalorder %s246, 143
          %s248 = scalar_select %p247, %s246, 143
          %p249 = scmp.lt.s32.totalorder %s19, 0
          %s250 = scalar_select %p249, %s19, 0
          %s251 = sadd.s32 %s250, %s248
          %s252 = smul.addr %s251, 4
          %s253 = scalar_lea.vmem %s1, %s252
          %s254 = smul.u32 48, %s20
        $region46: #{resnet_forward.37} parent=15 // pred_fallthru
          _
      $region16: #{resnet_forward.37} parent=5 // pred_fallthru
        _
      %p255 = scmp.le.s32.totalorder 1, %s11
      %p256 = scmp.lt.s32.totalorder %s11, 4
      %p257 = pnand %p255, %p256
      %p258 = pneg %p257
      // Predicated region
      $region47: #{resnet_forward.37} parent=5 // pred_check
        _
      $region48: #{resnet_forward.37} parent=5 // pred_check_branch
        %260 = sbr.rel (%p257) target = $region50
      $region49: #{resnet_forward.37} parent=5 // pred_region
        %s261 = ssub.s32 %s11, 1
        %s262 = sand.u32 %s45, 1
        %s263 = sand.u32 %s45, 1
        %s264 = smul.addr %s263, 48
        %s265 = scalar_lea.vmem [#allocation3], %s264
        // Predicated region
        $region51: #{resnet_forward.37} parent=49 // pred_check
          %p266 = pneg %p58
        $region52: #{resnet_forward.37} parent=49 // pred_check_branch
          %268 = sbr.rel (%p266) target = $region54
        $region53: #{resnet_forward.37} parent=49 // pred_region
          _
        $region54: #{resnet_forward.37} parent=49 // pred_fallthru
          _
        %s269 = sand.u32 %s45, 1
        %s270 = sand.u32 %s45, 1
        %s271 = smul.addr %s270, 48
        %s272 = scalar_lea.vmem [#allocation3], %s271
        %p273 = pneg %p58
        %p274 = pneg %p55
        %s275 = smul.u32 48, %s23
        %p276 = scmp.lt.s32.totalorder %s275, 143
        %s277 = scalar_select %p276, %s275, 143
        %p278 = scmp.lt.s32.totalorder %s22, 0
        %s279 = scalar_select %p278, %s22, 0
        %s280 = sadd.s32 %s279, %s277
        %s281 = smul.addr %s280, 4
        %s282 = scalar_lea.vmem %s1, %s281
        %p283 = pneg %p86
        %p284 = pneg %p83
        %p285 = pneg %p114
        %p286 = pneg %p111
        %s287 = smul.u32 4, %s21
        %p288 = scmp.lt.s32.totalorder %s287, 3
        %s289 = scalar_select %p288, %s287, 3
        %p290 = scmp.lt.s32.totalorder %s22, 0
        %s291 = scalar_select %p290, %s22, 0
        %s292 = sadd.s32 %s291, %s289
        %s293 = smul.addr %s292, 8
        %s294 = scalar_lea.vmem %s2, %s293
        %p295 = pneg %p142
        %p296 = pneg %p139
        %p297 = scmp.lt.s32.totalorder %s21, 0
        %s298 = scalar_select %p297, %s21, 0
        %p299 = scmp.lt.s32.totalorder %s22, 0
        %s300 = scalar_select %p299, %s22, 0
        %s301 = sadd.s32 %s300, %s298
        %s302 = scalar_lea.vmem %s3, %s301
        %p303 = pneg %p170
        %p304 = pneg %p167
        %p305 = scmp.lt.s32.totalorder %s21, 0
        %s306 = scalar_select %p305, %s21, 0
        %p307 = scmp.lt.s32.totalorder %s22, 0
        %s308 = scalar_select %p307, %s22, 0
        %s309 = sadd.s32 %s308, %s306
        %s310 = scalar_lea.vmem %s4, %s309
        %s311 = smul.u32 4, %s21
        %s312 = smul.u32 3, %s23
        %s313 = smul.u32 48, %s23
        %p314 = scmp.lt.s32.totalorder %s313, 143
        %s315 = scalar_select %p314, %s313, 143
        %p316 = scmp.lt.s32.totalorder %s22, 0
        %s317 = scalar_select %p316, %s22, 0
        %s318 = sadd.s32 %s317, %s315
        %s319 = smul.addr %s318, 4
        %s320 = scalar_lea.vmem %s1, %s319
        %s321 = smul.u32 48, %s23
        %s322 = smul.u32 4, %s21
        %p323 = scmp.lt.s32.totalorder %s322, 3
        %s324 = scalar_select %p323, %s322, 3
        %p325 = scmp.lt.s32.totalorder %s22, 0
        %s326 = scalar_select %p325, %s22, 0
        %s327 = sadd.s32 %s326, %s324
        %s328 = smul.addr %s327, 8
        %s329 = scalar_lea.vmem %s2, %s328
        %s330 = smul.u32 4, %s21
        %p331 = scmp.lt.s32.totalorder %s21, 0
        %s332 = scalar_select %p331, %s21, 0
        %p333 = scmp.lt.s32.totalorder %s22, 0
        %s334 = scalar_select %p333, %s22, 0
        %s335 = sadd.s32 %s334, %s332
        %s336 = scalar_lea.vmem %s3, %s335
        %p337 = scmp.lt.s32.totalorder %s21, 0
        %s338 = scalar_select %p337, %s21, 0
        %p339 = scmp.lt.s32.totalorder %s22, 0
        %s340 = scalar_select %p339, %s22, 0
        %s341 = sadd.s32 %s340, %s338
        %s342 = scalar_lea.vmem %s4, %s341
        %p343 = scmp.eq.s32.totalorder %s23, 0
        // Predicated region
        $region55: #{resnet_forward.37} parent=49 // pred_check
          %p344 = pneg %p343
        $region56: #{resnet_forward.37} parent=49 // pred_check_branch
          %346 = sbr.rel (%p344) target = $region58
        $region57: #{resnet_forward.37} parent=49 // pred_region
          %347 = vst [vmem:[#allocation2] sm:$0xff] 0.0
          %348 = vst [vmem:[#allocation2 + $0x8] sm:$0xff] 0.0
          %349 = vst [vmem:[#allocation2 + $0x10] sm:$0xff] 0.0
          %350 = vst [vmem:[#allocation2 + $0x18] sm:$0xff] 0.0
        $region58: #{resnet_forward.37} parent=49 // pred_fallthru
          _
        %v351 = vld [vmem:[#allocation2] sm:$0xff]
        %v352 = vld [vmem:[#allocation2 + $0x8] sm:$0xff]
        %v353 = vld [vmem:[#allocation2 + $0x10] sm:$0xff]
        %v354 = vld [vmem:[#allocation2 + $0x18] sm:$0xff]
        %v355 = vld [vmem:[%s265] sm:$0xff]
        %v356 = vld [vmem:[%s265 + $0x8] sm:$0xf]
        %v357 = vld [vmem:[%s265 + $0xc] sm:$0xff]
        %v358 = vld [vmem:[%s265 + $0x14] sm:$0xf]
        %v359 = vld [vmem:[%s265 + $0x18] sm:$0xff]
        %v360 = vld [vmem:[%s265 + $0x20] sm:$0xf]
        %v361 = vld [vmem:[%s265 + $0x24] sm:$0xff]
        %v362 = vld [vmem:[%s265 + $0x2c] sm:$0xf]
        %v363 = vld [vmem:[%s320] sm:$0xf]
        %v364 = vld [vmem:[%s320 + $0x4] sm:$0xf]
        %v365 = vld [vmem:[%s320 + $0x8] sm:$0xf]
        %v366 = vld [vmem:[%s320 + $0xc] sm:$0xf]
        %v367 = vld [vmem:[%s320 + $0x10] sm:$0xf]
        %v368 = vld [vmem:[%s320 + $0x14] sm:$0xf]
        %v369 = vld [vmem:[%s320 + $0x18] sm:$0xf]
        %v370 = vld [vmem:[%s320 + $0x1c] sm:$0xf]
        %v371 = vld [vmem:[%s320 + $0x20] sm:$0xf]
        %v372 = vld [vmem:[%s320 + $0x24] sm:$0xf]
        %v373 = vld [vmem:[%s320 + $0x28] sm:$0xf]
        %v374 = vld [vmem:[%s320 + $0x2c] sm:$0xf]
        %v375 = vld [vmem:[%s320 + $0x30] sm:$0xf]
        %v376 = vld [vmem:[%s320 + $0x34] sm:$0xf]
        %v377 = vld [vmem:[%s320 + $0x38] sm:$0xf]
        %v378 = vld [vmem:[%s320 + $0x3c] sm:$0xf]
        %v379 = vld [vmem:[%s320 + $0x40] sm:$0xf]
        %v380 = vld [vmem:[%s320 + $0x44] sm:$0xf]
        %v381 = vld [vmem:[%s320 + $0x48] sm:$0xf]
        %v382 = vld [vmem:[%s320 + $0x4c] sm:$0xf]
        %v383 = vld [vmem:[%s320 + $0x50] sm:$0xf]
        %v384 = vld [vmem:[%s320 + $0x54] sm:$0xf]
        %v385 = vld [vmem:[%s320 + $0x58] sm:$0xf]
        %v386 = vld [vmem:[%s320 + $0x5c] sm:$0xf]
        %v387 = vld [vmem:[%s320 + $0x60] sm:$0xf]
        %v388 = vld [vmem:[%s320 + $0x64] sm:$0xf]
        %v389 = vld [vmem:[%s320 + $0x68] sm:$0xf]
        %v390 = vld [vmem:[%s320 + $0x6c] sm:$0xf]
        %v391 = vld [vmem:[%s320 + $0x70] sm:$0xf]
        %v392 = vld [vmem:[%s320 + $0x74] sm:$0xf]
        %v393 = vld [vmem:[%s320 + $0x78] sm:$0xf]
        %v394 = vld [vmem:[%s320 + $0x7c] sm:$0xf]
        %v395 = vld [vmem:[%s320 + $0x80] sm:$0xf]
        %v396 = vld [vmem:[%s320 + $0x84] sm:$0xf]
        %v397 = vld [vmem:[%s320 + $0x88] sm:$0xf]
        %v398 = vld [vmem:[%s320 + $0x8c] sm:$0xf]
        %v399 = vld [vmem:[%s320 + $0x90] sm:$0xf]
        %v400 = vld [vmem:[%s320 + $0x94] sm:$0xf]
        %v401 = vld [vmem:[%s320 + $0x98] sm:$0xf]
        %v402 = vld [vmem:[%s320 + $0x9c] sm:$0xf]
        %v403 = vld [vmem:[%s320 + $0xa0] sm:$0xf]
        %v404 = vld [vmem:[%s320 + $0xa4] sm:$0xf]
        %v405 = vld [vmem:[%s320 + $0xa8] sm:$0xf]
        %v406 = vld [vmem:[%s320 + $0xac] sm:$0xf]
        %v407 = vld [vmem:[%s320 + $0xb0] sm:$0xf]
        %v408 = vld [vmem:[%s320 + $0xb4] sm:$0xf]
        %v409 = vld [vmem:[%s320 + $0xb8] sm:$0xf]
        %v410 = vld [vmem:[%s320 + $0xbc] sm:$0xf]
        %v419 = vunpack.c.l.b16 %v355
        %v420 = vunpack.c.h.b16 %v355
        %v421 = vunpack.c.l.b16 %v356
        %v422 = vunpack.c.l.b16 %v357
        %v423 = vunpack.c.h.b16 %v357
        %v424 = vunpack.c.l.b16 %v358
        %v425 = vunpack.c.l.b16 %v359
        %v426 = vunpack.c.h.b16 %v359
        %v427 = vunpack.c.l.b16 %v360
        %v428 = vunpack.c.l.b16 %v361
        %v429 = vunpack.c.h.b16 %v361
        %v430 = vunpack.c.l.b16 %v362
        %v431 = vpack.c.b16 %v422, %v419
        %v432 = vpack.c.b16 %v423, %v420
        %v433 = vpack.c.b16 %v424, %v421
        %v434 = vpack.c.b16 %v428, %v425
        %v435 = vpack.c.b16 %v429, %v426
        %v436 = vpack.c.b16 %v430, %v427
        %v491 = vunpack.c.l.b16 %v363
        %v492 = vunpack.c.l.b16 %v364
        %v493 = vunpack.c.l.b16 %v365
        %v494 = vunpack.c.l.b16 %v366
        %v495 = vunpack.c.l.b16 %v367
        %v496 = vunpack.c.l.b16 %v368
        %v497 = vunpack.c.l.b16 %v369
        %v498 = vunpack.c.l.b16 %v370
        %v499 = vunpack.c.l.b16 %v371
        %v500 = vunpack.c.l.b16 %v372
        %v501 = vunpack.c.l.b16 %v373
        %v502 = vunpack.c.l.b16 %v374
        %v503 = vunpack.c.l.b16 %v375
        %v504 = vunpack.c.l.b16 %v376
        %v505 = vunpack.c.l.b16 %v377
        %v506 = vunpack.c.l.b16 %v378
        %v507 = vunpack.c.l.b16 %v379
        %v508 = vunpack.c.l.b16 %v380
        %v509 = vunpack.c.l.b16 %v381
        %v510 = vunpack.c.l.b16 %v382
        %v511 = vunpack.c.l.b16 %v383
        %v512 = vunpack.c.l.b16 %v384
        %v513 = vunpack.c.l.b16 %v385
        %v514 = vunpack.c.l.b16 %v386
        %v515 = vunpack.c.l.b16 %v387
        %v516 = vunpack.c.l.b16 %v388
        %v517 = vunpack.c.l.b16 %v389
        %v518 = vunpack.c.l.b16 %v390
        %v519 = vunpack.c.l.b16 %v391
        %v520 = vunpack.c.l.b16 %v392
        %v521 = vunpack.c.l.b16 %v393
        %v522 = vunpack.c.l.b16 %v394
        %v523 = vunpack.c.l.b16 %v395
        %v524 = vunpack.c.l.b16 %v396
        %v525 = vunpack.c.l.b16 %v397
        %v526 = vunpack.c.l.b16 %v398
        %v527 = vunpack.c.l.b16 %v399
        %v528 = vunpack.c.l.b16 %v400
        %v529 = vunpack.c.l.b16 %v401
        %v530 = vunpack.c.l.b16 %v402
        %v531 = vunpack.c.l.b16 %v403
        %v532 = vunpack.c.l.b16 %v404
        %v533 = vunpack.c.l.b16 %v405
        %v534 = vunpack.c.l.b16 %v406
        %v535 = vunpack.c.l.b16 %v407
        %v536 = vunpack.c.l.b16 %v408
        %v537 = vunpack.c.l.b16 %v409
        %v538 = vunpack.c.l.b16 %v410
        %v539 = vpack.c.b16 %v492, %v491
        %v540 = vpack.c.b16 %v494, %v493
        %v541 = vpack.c.b16 %v496, %v495
        %v542 = vpack.c.b16 %v498, %v497
        %v543 = vpack.c.b16 %v500, %v499
        %v544 = vpack.c.b16 %v502, %v501
        %v545 = vpack.c.b16 %v504, %v503
        %v546 = vpack.c.b16 %v506, %v505
        %v547 = vpack.c.b16 %v508, %v507
        %v548 = vpack.c.b16 %v510, %v509
        %v549 = vpack.c.b16 %v512, %v511
        %v550 = vpack.c.b16 %v514, %v513
        %v551 = vpack.c.b16 %v516, %v515
        %v552 = vpack.c.b16 %v518, %v517
        %v553 = vpack.c.b16 %v520, %v519
        %v554 = vpack.c.b16 %v522, %v521
        %v555 = vpack.c.b16 %v524, %v523
        %v556 = vpack.c.b16 %v526, %v525
        %v557 = vpack.c.b16 %v528, %v527
        %v558 = vpack.c.b16 %v530, %v529
        %v559 = vpack.c.b16 %v532, %v531
        %v560 = vpack.c.b16 %v534, %v533
        %v561 = vpack.c.b16 %v536, %v535
        %v562 = vpack.c.b16 %v538, %v537
        %587 = vmatpush.bf16.msra.mxu0 %v546
        %588 = vmatpush.bf16.msra.mxu0 %v545
        %589 = vmatpush.bf16.msra.mxu0 %v544
        %590 = vmatpush.bf16.msra.mxu0 %v543
        %591 = vmatpush.bf16.msra.mxu0 %v542
        %592 = vmatpush.bf16.msra.mxu0 %v541
        %593 = vmatpush.bf16.msra.mxu0 %v540
        %594 = vmatpush.bf16.msra.mxu0 %v539
        %595 = vmatmul.bf16.gmra.mxu0 %v431
        %v596 = vpop.f32.mrf.mxu0
        %v597 = vadd.f32 0.0, %v596
        %v598 = vpop.f32.mrf.mxu0
        %v599 = vadd.f32 0.0, %v598
        %600 = vmatmul.bf16.gmra.mxu0 %v434
        %v601 = vpop.f32.mrf.mxu0
        %v602 = vadd.f32 0.0, %v601
        %v603 = vpop.f32.mrf.mxu0
        %v604 = vadd.f32 0.0, %v603
        %605 = vdwg.mxu0
        %606 = vmatpush.bf16.msra.mxu0 %v554
        %607 = vmatpush.bf16.msra.mxu0 %v553
        %608 = vmatpush.bf16.msra.mxu0 %v552
        %609 = vmatpush.bf16.msra.mxu0 %v551
        %610 = vmatpush.bf16.msra.mxu0 %v550
        %611 = vmatpush.bf16.msra.mxu0 %v549
        %612 = vmatpush.bf16.msra.mxu0 %v548
        %613 = vmatpush.bf16.msra.mxu0 %v547
        %614 = vmatmul.bf16.gmra.mxu0 %v432
        %v615 = vpop.f32.mrf.mxu0
        %v616 = vadd.f32 %v597, %v615
        %v617 = vpop.f32.mrf.mxu0
        %v618 = vadd.f32 %v599, %v617
        %619 = vmatmul.bf16.gmra.mxu0 %v435
        %v620 = vpop.f32.mrf.mxu0
        %v621 = vadd.f32 %v602, %v620
        %v622 = vpop.f32.mrf.mxu0
        %v623 = vadd.f32 %v604, %v622
        %624 = vdwg.mxu0
        %625 = vmatpush.bf16.msra.mxu0 %v562
        %626 = vmatpush.bf16.msra.mxu0 %v561
        %627 = vmatpush.bf16.msra.mxu0 %v560
        %628 = vmatpush.bf16.msra.mxu0 %v559
        %629 = vmatpush.bf16.msra.mxu0 %v558
        %630 = vmatpush.bf16.msra.mxu0 %v557
        %631 = vmatpush.bf16.msra.mxu0 %v556
        %632 = vmatpush.bf16.msra.mxu0 %v555
        %633 = vmatmul.bf16.gmra.mxu0 %v433
        %v634 = vpop.f32.mrf.mxu0
        %v635 = vadd.f32 %v616, %v634
        %v636 = vpop.f32.mrf.mxu0
        %v637 = vadd.f32 %v618, %v636
        %638 = vmatmul.bf16.gmra.mxu0 %v436
        %v639 = vpop.f32.mrf.mxu0
        %v640 = vadd.f32 %v621, %v639
        %v641 = vpop.f32.mrf.mxu0
        %v642 = vadd.f32 %v623, %v641
        %643 = vdwg.mxu0
        %v644 = vadd.f32 %v351, %v635
        %v645 = vadd.f32 %v352, %v637
        %v646 = vadd.f32 %v353, %v640
        %v647 = vadd.f32 %v354, %v642
        %648 = vst [vmem:[#allocation2] sm:$0xff] %v644
        %649 = vst [vmem:[#allocation2 + $0x8] sm:$0xff] %v645
        %650 = vst [vmem:[#allocation2 + $0x10] sm:$0xff] %v646
        %651 = vst [vmem:[#allocation2 + $0x18] sm:$0xff] %v647
        %p652 = scmp.eq.s32.totalorder %s23, 2
        // Predicated region
        $region59: #{resnet_forward.37} parent=49 // pred_check
          %p653 = pneg %p652
        $region60: #{resnet_forward.37} parent=49 // pred_check_branch
          %655 = sbr.rel (%p653) target = $region62
        $region61: #{resnet_forward.37} parent=49 // pred_region
          %v656 = vld [vmem:[#allocation2] sm:$0xff]
          %v657 = vld [vmem:[#allocation2 + $0x8] sm:$0xff]
          %v658 = vld [vmem:[#allocation2 + $0x10] sm:$0xff]
          %v659 = vld [vmem:[#allocation2 + $0x18] sm:$0xff]
          %660 = vst [vmem:[%s329] sm:$0xff] %v656
          %661 = vst [vmem:[%s329 + $0x8] sm:$0xff] %v657
          %662 = vst [vmem:[%s329 + $0x10] sm:$0xff] %v658
          %663 = vst [vmem:[%s329 + $0x18] sm:$0xff] %v659
          %v664 = vadd.f32 %v656, %v657
          %v665 = vadd.f32 %v664, %v658
          %v666 = vadd.f32 %v665, %v659
          %v667 = vrot.slane %v666, 4
          %v668 = vadd.f32 %v666, %v667
          %v669 = vrot.slane %v668, 2
          %v670 = vadd.f32 %v668, %v669
          %v671 = vrot.slane %v670, 1
          %v672 = vadd.f32 %v670, %v671
          %673 = vst [vmem:[%s336] sm:$0x1] %v672
          %v674 = vmul.f32 %v656, %v656
          %v675 = vmul.f32 %v657, %v657
          %v676 = vmul.f32 %v658, %v658
          %v677 = vmul.f32 %v659, %v659
          %v678 = vadd.f32 %v674, %v675
          %v679 = vadd.f32 %v678, %v676
          %v680 = vadd.f32 %v679, %v677
          %v681 = vrot.slane %v680, 4
          %v682 = vadd.f32 %v680, %v681
          %v683 = vrot.slane %v682, 2
          %v684 = vadd.f32 %v682, %v683
          %v685 = vrot.slane %v684, 1
          %v686 = vadd.f32 %v684, %v685
          %687 = vst [vmem:[%s342] sm:$0x1] %v686
        $region62: #{resnet_forward.37} parent=49 // pred_fallthru
          _
        %s688 = smul.u32 4, %s21
        %p689 = scmp.lt.s32.totalorder %s688, 3
        %s690 = scalar_select %p689, %s688, 3
        %p691 = scmp.lt.s32.totalorder %s22, 0
        %s692 = scalar_select %p691, %s22, 0
        %s693 = sadd.s32 %s692, %s690
        %s694 = smul.addr %s693, 8
        %s695 = scalar_lea.vmem %s2, %s694
        %p696 = scmp.lt.s32.totalorder %s21, 0
        %s697 = scalar_select %p696, %s21, 0
        %p698 = scmp.lt.s32.totalorder %s22, 0
        %s699 = scalar_select %p698, %s22, 0
        %s700 = sadd.s32 %s699, %s697
        %s701 = scalar_lea.vmem %s3, %s700
        %p702 = scmp.lt.s32.totalorder %s21, 0
        %s703 = scalar_select %p702, %s21, 0
        %p704 = scmp.lt.s32.totalorder %s22, 0
        %s705 = scalar_select %p704, %s22, 0
        %s706 = sadd.s32 %s705, %s703
        %s707 = scalar_lea.vmem %s4, %s706
        // Predicated region
        $region63: #{resnet_forward.37} parent=49 // pred_check
          %p708 = pneg %p111
        $region64: #{resnet_forward.37} parent=49 // pred_check_branch
          %710 = sbr.rel (%p708) target = $region66
        $region65: #{resnet_forward.37} parent=49 // pred_region
          %s711 = smul.u32 4, %s21
        $region66: #{resnet_forward.37} parent=49 // pred_fallthru
          _
        // Predicated region
        $region67: #{resnet_forward.37} parent=49 // pred_check
          %p712 = pneg %p139
        $region68: #{resnet_forward.37} parent=49 // pred_check_branch
          %714 = sbr.rel (%p712) target = $region70
        $region69: #{resnet_forward.37} parent=49 // pred_region
          _
        $region70: #{resnet_forward.37} parent=49 // pred_fallthru
          _
        // Predicated region
        $region71: #{resnet_forward.37} parent=49 // pred_check
          %p715 = pneg %p167
        $region72: #{resnet_forward.37} parent=49 // pred_check_branch
          %717 = sbr.rel (%p715) target = $region74
        $region73: #{resnet_forward.37} parent=49 // pred_region
          _
        $region74: #{resnet_forward.37} parent=49 // pred_fallthru
          _
        // Predicated region
        $region75: #{resnet_forward.37} parent=49 // pred_check
          %p718 = pneg %p111
        $region76: #{resnet_forward.37} parent=49 // pred_check_branch
          %720 = sbr.rel (%p718) target = $region78
        $region77: #{resnet_forward.37} parent=49 // pred_region
          %s721 = smul.u32 4, %s21
          %p722 = scmp.lt.s32.totalorder %s721, 3
          %s723 = scalar_select %p722, %s721, 3
          %p724 = scmp.lt.s32.totalorder %s22, 0
          %s725 = scalar_select %p724, %s22, 0
          %s726 = sadd.s32 %s725, %s723
          %s727 = smul.addr %s726, 8
          %s728 = scalar_lea.vmem %s2, %s727
        $region78: #{resnet_forward.37} parent=49 // pred_fallthru
          _
        // Predicated region
        $region79: #{resnet_forward.37} parent=49 // pred_check
          %p729 = pneg %p139
        $region80: #{resnet_forward.37} parent=49 // pred_check_branch
          %731 = sbr.rel (%p729) target = $region82
        $region81: #{resnet_forward.37} parent=49 // pred_region
          %p732 = scmp.lt.s32.totalorder %s21, 0
          %s733 = scalar_select %p732, %s21, 0
          %p734 = scmp.lt.s32.totalorder %s22, 0
          %s735 = scalar_select %p734, %s22, 0
          %s736 = sadd.s32 %s735, %s733
          %s737 = scalar_lea.vmem %s3, %s736
        $region82: #{resnet_forward.37} parent=49 // pred_fallthru
          _
        // Predicated region
        $region83: #{resnet_forward.37} parent=49 // pred_check
          %p738 = pneg %p167
        $region84: #{resnet_forward.37} parent=49 // pred_check_branch
          %740 = sbr.rel (%p738) target = $region86
        $region85: #{resnet_forward.37} parent=49 // pred_region
          %p741 = scmp.lt.s32.totalorder %s21, 0
          %s742 = scalar_select %p741, %s21, 0
          %p743 = scmp.lt.s32.totalorder %s22, 0
          %s744 = scalar_select %p743, %s22, 0
          %s745 = sadd.s32 %s744, %s742
          %s746 = scalar_lea.vmem %s4, %s745
        $region86: #{resnet_forward.37} parent=49 // pred_fallthru
          _
      $region50: #{resnet_forward.37} parent=5 // pred_fallthru
        _
      %p747 = scmp.le.s32.totalorder 2, %s11
      // Predicated region
      $region87: #{resnet_forward.37} parent=5 // pred_check
        %p748 = pneg %p747
      $region88: #{resnet_forward.37} parent=5 // pred_check_branch
        %750 = sbr.rel (%p748) target = $region90
      $region89: #{resnet_forward.37} parent=5 // pred_region
        %s751 = ssub.s32 %s11, 2
      $region90: #{resnet_forward.37} parent=5 // pred_fallthru
        _
    $region6: #{resnet_forward.37} parent=1 // loop_footer
      %s15 = sadd.s32 1, %s11
    $region7: #{resnet_forward.37} parent=1 // loop_footer_branch
      %10 = sbr.rel target = $region3
    $region8: #{resnet_forward.37} parent=1 // loop_exit
      _

// kernel: resnet_forward.42
$region0: #{resnet_forward.42}
  #allocation0 [shape = 'u32[]', space=smem, size = 0x4, offset = 0x4, fixed_abs, tag = 'smem constant byte address 0x4 - core index']
  #allocation1 [shape = 'u32[72,128]{1,0:T(1,128)}', space=vmem, size = 0x9000, scoped, tag = 'internal scratch']
  %s0 = inlined_call_operand.vmem [shape: f32[32,128], index: 0, kind: input, shape index: {}]
  %s1 = inlined_call_operand.vmem [shape: f32[1,128], index: 1, kind: input, shape index: {}]
  %s2 = inlined_call_operand.vmem [shape: f32[1,128], index: 2, kind: input, shape index: {}]
  %s3 = inlined_call_operand.vmem [shape: f32[32,128], index: 3, kind: input, shape index: {}]
  %s4 = inlined_call_operand.vmem [shape: f32[32,128], index: 4, kind: output, shape index: {}]
  %s5 = sld [smem:[#allocation0]]
  $region26: #{resnet_forward.42} parent=0
    _
  %s7 = ssub.s32 1, %s5
  %s8 = scalar_select 0, %s7, %s5
  // Predicated region
  $region2: #{resnet_forward.42} parent=0 // pred_check
    _
  $region3: #{resnet_forward.42} parent=0 // pred_check_branch
    %10 = sbr.rel (0) target = $region5
  $region4: #{resnet_forward.42} parent=0 // pred_region
    _
  $region5: #{resnet_forward.42} parent=0 // pred_fallthru
    _
  // Predicated region
  $region6: #{resnet_forward.42} parent=0 // pred_check
    _
  $region7: #{resnet_forward.42} parent=0 // pred_check_branch
    %12 = sbr.rel (0) target = $region9
  $region8: #{resnet_forward.42} parent=0 // pred_region
    _
  $region9: #{resnet_forward.42} parent=0 // pred_fallthru
    _
  // Predicated region
  $region10: #{resnet_forward.42} parent=0 // pred_check
    _
  $region11: #{resnet_forward.42} parent=0 // pred_check_branch
    %14 = sbr.rel (0) target = $region13
  $region12: #{resnet_forward.42} parent=0 // pred_region
    _
  $region13: #{resnet_forward.42} parent=0 // pred_fallthru
    _
  // Predicated region
  $region14: #{resnet_forward.42} parent=0 // pred_check
    _
  $region15: #{resnet_forward.42} parent=0 // pred_check_branch
    %16 = sbr.rel (0) target = $region17
  $region16: #{resnet_forward.42} parent=0 // pred_region
    _
  $region17: #{resnet_forward.42} parent=0 // pred_fallthru
    _
  %v17 = vld [vmem:[%s0] sm:$0xff]
  %v18 = vld [vmem:[%s0 + $0x8] sm:$0xff]
  %v19 = vld [vmem:[%s0 + $0x10] sm:$0xff]
  %v20 = vld [vmem:[%s0 + $0x18] sm:$0xff]
  %v21 = vld [vmem:[%s1] sm:$0x1]
  %v23 = vperm.slane %v21, 0
  %v25 = vmul.f32 %v17, %v23
  %v26 = vmul.f32 %v18, %v23
  %v27 = vmul.f32 %v19, %v23
  %v28 = vmul.f32 %v20, %v23
  %v29 = vld [vmem:[%s2] sm:$0x1]
  %v31 = vperm.slane %v29, 0
  %v33 = vadd.f32 %v25, %v31
  %v34 = vadd.f32 %v26, %v31
  %v35 = vadd.f32 %v27, %v31
  %v36 = vadd.f32 %v28, %v31
  %v37 = vld [vmem:[%s3] sm:$0xff]
  %v38 = vld [vmem:[%s3 + $0x8] sm:$0xff]
  %v39 = vld [vmem:[%s3 + $0x10] sm:$0xff]
  %v40 = vld [vmem:[%s3 + $0x18] sm:$0xff]
  %v41 = vadd.f32 %v33, %v37
  %v42 = vadd.f32 %v34, %v38
  %v43 = vadd.f32 %v35, %v39
  %v44 = vadd.f32 %v36, %v40
  %v45 = vmax.f32 %v41, 0.0
  %v46 = vmax.f32 %v42, 0.0
  %v47 = vmax.f32 %v43, 0.0
  %v48 = vmax.f32 %v44, 0.0
  %49 = vst [vmem:[%s4] sm:$0xff] %v45
  %50 = vst [vmem:[%s4 + $0x8] sm:$0xff] %v46
  %51 = vst [vmem:[%s4 + $0x10] sm:$0xff] %v47
  %52 = vst [vmem:[%s4 + $0x18] sm:$0xff] %v48
  // Predicated region
  $region18: #{resnet_forward.42} parent=0 // pred_check
    _
  $region19: #{resnet_forward.42} parent=0 // pred_check_branch
    %54 = sbr.rel (0) target = $region21
  $region20: #{resnet_forward.42} parent=0 // pred_region
    _
  $region21: #{resnet_forward.42} parent=0 // pred_fallthru
    _
  // Predicated region
  $region22: #{resnet_forward.42} parent=0 // pred_check
    _
  $region23: #{resnet_forward.42} parent=0 // pred_check_branch
    %56 = sbr.rel (0) target = $region25
  $region24: #{resnet_forward.42} parent=0 // pred_region
    _
  $region25: #{resnet_forward.42} parent=0 // pred_fallthru
    _

// kernel: resnet_forward.46
$region0: #{resnet_forward.46}
  #allocation0 [shape = 'u32[]', space=smem, size = 0x4, offset = 0x4, fixed_abs, tag = 'smem constant byte address 0x4 - core index']
  #allocation1 [shape = 'u32[72,128]{1,0:T(1,128)}', space=vmem, size = 0x9000, scoped, tag = 'internal scratch']
  #allocation2 [shape = 'f32[8,128]{1,0:T(8,128)}', space=vmem, size = 0x1000, scoped, tag = 'scratch operand']
  %s0 = inlined_call_operand.vmem [shape: bf16[8,128], index: 0, kind: input, shape index: {}]
  %s1 = inlined_call_operand.vmem [shape: bf16[128,128], index: 1, kind: input, shape index: {}]
  %s2 = inlined_call_operand.vmem [shape: f32[8,128], index: 2, kind: output, shape index: {0}]
  %s3 = inlined_call_operand.vmem [shape: f32[1,1,128], index: 3, kind: output, shape index: {1}]
  %s4 = inlined_call_operand.vmem [shape: f32[1,1,128], index: 4, kind: output, shape index: {2}]
  %5 = xla_tuple %s2, %s3, %s4
  %s6 = sld [smem:[#allocation0]]
  $region42: #{resnet_forward.46} parent=0
    _
  %s8 = ssub.s32 1, %s6
  %s9 = scalar_select 0, %s8, %s6
  // Predicated region
  $region2: #{resnet_forward.46} parent=0 // pred_check
    _
  $region3: #{resnet_forward.46} parent=0 // pred_check_branch
    %11 = sbr.rel (0) target = $region5
  $region4: #{resnet_forward.46} parent=0 // pred_region
    _
  $region5: #{resnet_forward.46} parent=0 // pred_fallthru
    _
  // Predicated region
  $region6: #{resnet_forward.46} parent=0 // pred_check
    _
  $region7: #{resnet_forward.46} parent=0 // pred_check_branch
    %13 = sbr.rel (0) target = $region9
  $region8: #{resnet_forward.46} parent=0 // pred_region
    _
  $region9: #{resnet_forward.46} parent=0 // pred_fallthru
    _
  %p14 = scmp.eq.s32.totalorder 0, 0
  // Predicated region
  $region10: #{resnet_forward.46} parent=0 // pred_check
    %p15 = pneg %p14
  $region11: #{resnet_forward.46} parent=0 // pred_check_branch
    %17 = sbr.rel (%p15) target = $region13
  $region12: #{resnet_forward.46} parent=0 // pred_region
    %18 = vst [vmem:[#allocation2] sm:$0xff] 0.0
  $region13: #{resnet_forward.46} parent=0 // pred_fallthru
    _
  %v19 = vld [vmem:[#allocation2] sm:$0xff]
  %v20 = vld [vmem:[%s0] sm:$0xf]
  %v21 = vld [vmem:[%s1] sm:$0xf]
  %v22 = vld [vmem:[%s1 + $0x4] sm:$0xf]
  %v23 = vld [vmem:[%s1 + $0x8] sm:$0xf]
  %v24 = vld [vmem:[%s1 + $0xc] sm:$0xf]
  %v25 = vld [vmem:[%s1 + $0x10] sm:$0xf]
  %v26 = vld [vmem:[%s1 + $0x14] sm:$0xf]
  %v27 = vld [vmem:[%s1 + $0x18] sm:$0xf]
  %v28 = vld [vmem:[%s1 + $0x1c] sm:$0xf]
  %v29 = vld [vmem:[%s1 + $0x20] sm:$0xf]
  %v30 = vld [vmem:[%s1 + $0x24] sm:$0xf]
  %v31 = vld [vmem:[%s1 + $0x28] sm:$0xf]
  %v32 = vld [vmem:[%s1 + $0x2c] sm:$0xf]
  %v33 = vld [vmem:[%s1 + $0x30] sm:$0xf]
  %v34 = vld [vmem:[%s1 + $0x34] sm:$0xf]
  %v35 = vld [vmem:[%s1 + $0x38] sm:$0xf]
  %v36 = vld [vmem:[%s1 + $0x3c] sm:$0xf]
  %v53 = vunpack.c.l.b16 %v21
  %v54 = vunpack.c.l.b16 %v22
  %v55 = vunpack.c.l.b16 %v23
  %v56 = vunpack.c.l.b16 %v24
  %v57 = vunpack.c.l.b16 %v25
  %v58 = vunpack.c.l.b16 %v26
  %v59 = vunpack.c.l.b16 %v27
  %v60 = vunpack.c.l.b16 %v28
  %v61 = vunpack.c.l.b16 %v29
  %v62 = vunpack.c.l.b16 %v30
  %v63 = vunpack.c.l.b16 %v31
  %v64 = vunpack.c.l.b16 %v32
  %v65 = vunpack.c.l.b16 %v33
  %v66 = vunpack.c.l.b16 %v34
  %v67 = vunpack.c.l.b16 %v35
  %v68 = vunpack.c.l.b16 %v36
  %v69 = vpack.c.b16 %v54, %v53
  %v70 = vpack.c.b16 %v56, %v55
  %v71 = vpack.c.b16 %v58, %v57
  %v72 = vpack.c.b16 %v60, %v59
  %v73 = vpack.c.b16 %v62, %v61
  %v74 = vpack.c.b16 %v64, %v63
  %v75 = vpack.c.b16 %v66, %v65
  %v76 = vpack.c.b16 %v68, %v67
  %85 = vmatpush.bf16.msra.mxu0 %v76
  %86 = vmatpush.bf16.msra.mxu0 %v75
  %87 = vmatpush.bf16.msra.mxu0 %v74
  %88 = vmatpush.bf16.msra.mxu0 %v73
  %89 = vmatpush.bf16.msra.mxu0 %v72
  %90 = vmatpush.bf16.msra.mxu0 %v71
  %91 = vmatpush.bf16.msra.mxu0 %v70
  %92 = vmatpush.bf16.msra.mxu0 %v69
  %93 = vmatmul.bf16.gmra.mxu0 %v20
  %v94 = vpop.f32.mrf.mxu0
  %v95 = vadd.f32 0.0, %v94
  %v96 = vpop.f32.mrf.mxu0
  %97 = vdwg.mxu0
  %v98 = vadd.f32 %v19, %v95
  %99 = vst [vmem:[#allocation2] sm:$0xff] %v98
  // Predicated region
  $region14: #{resnet_forward.46} parent=0 // pred_check
    %p100 = pneg %p14
  $region15: #{resnet_forward.46} parent=0 // pred_check_branch
    %102 = sbr.rel (%p100) target = $region17
  $region16: #{resnet_forward.46} parent=0 // pred_region
    %v103 = vld [vmem:[#allocation2] sm:$0xff]
    %104 = vst [vmem:[%s2] sm:$0xff] %v103
    %v105 = vrot.slane %v103, 4
    %v106 = vadd.f32 %v103, %v105
    %v107 = vrot.slane %v106, 2
    %v108 = vadd.f32 %v106, %v107
    %v109 = vrot.slane %v108, 1
    %v110 = vadd.f32 %v108, %v109
    %111 = vst [vmem:[%s3] sm:$0x1] %v110
    %v112 = vmul.f32 %v103, %v103
    %v113 = vrot.slane %v112, 4
    %v114 = vadd.f32 %v112, %v113
    %v115 = vrot.slane %v114, 2
    %v116 = vadd.f32 %v114, %v115
    %v117 = vrot.slane %v116, 1
    %v118 = vadd.f32 %v116, %v117
    %119 = vst [vmem:[%s4] sm:$0x1] %v118
  $region17: #{resnet_forward.46} parent=0 // pred_fallthru
    _
  // Predicated region
  $region18: #{resnet_forward.46} parent=0 // pred_check
    _
  $region19: #{resnet_forward.46} parent=0 // pred_check_branch
    %121 = sbr.rel (0) target = $region21
  $region20: #{resnet_forward.46} parent=0 // pred_region
    _
  $region21: #{resnet_forward.46} parent=0 // pred_fallthru
    _
  // Predicated region
  $region22: #{resnet_forward.46} parent=0 // pred_check
    _
  $region23: #{resnet_forward.46} parent=0 // pred_check_branch
    %123 = sbr.rel (0) target = $region25
  $region24: #{resnet_forward.46} parent=0 // pred_region
    _
  $region25: #{resnet_forward.46} parent=0 // pred_fallthru
    _
  // Predicated region
  $region26: #{resnet_forward.46} parent=0 // pred_check
    _
  $region27: #{resnet_forward.46} parent=0 // pred_check_branch
    %125 = sbr.rel (0) target = $region29
  $region28: #{resnet_forward.46} parent=0 // pred_region
    _
  $region29: #{resnet_forward.46} parent=0 // pred_fallthru
    _
  // Predicated region
  $region30: #{resnet_forward.46} parent=0 // pred_check
    _
  $region31: #{resnet_forward.46} parent=0 // pred_check_branch
    %127 = sbr.rel (0) target = $region33
  $region32: #{resnet_forward.46} parent=0 // pred_region
    _
  $region33: #{resnet_forward.46} parent=0 // pred_fallthru
    _
  // Predicated region
  $region34: #{resnet_forward.46} parent=0 // pred_check
    _
  $region35: #{resnet_forward.46} parent=0 // pred_check_branch
    %129 = sbr.rel (0) target = $region37
  $region36: #{resnet_forward.46} parent=0 // pred_region
    _
  $region37: #{resnet_forward.46} parent=0 // pred_fallthru
    _
  // Predicated region
  $region38: #{resnet_forward.46} parent=0 // pred_check
    _
  $region39: #{resnet_forward.46} parent=0 // pred_check_branch
    %131 = sbr.rel (0) target = $region41
  $region40: #{resnet_forward.46} parent=0 // pred_region
    _
  $region41: #{resnet_forward.46} parent=0 // pred_fallthru
    _

// kernel: resnet_forward.47
$region0: #{resnet_forward.47}
  #allocation0 [shape = 'u32[]', space=smem, size = 0x4, offset = 0x4, fixed_abs, tag = 'smem constant byte address 0x4 - core index']
  #allocation1 [shape = 'u32[72,128]{1,0:T(1,128)}', space=vmem, size = 0x9000, scoped, tag = 'internal scratch']
  %s0 = inlined_call_operand.vmem [shape: f32[8,128], index: 0, kind: input, shape index: {}]
  %s1 = inlined_call_operand.vmem [shape: f32[1,128], index: 1, kind: input, shape index: {}]
  %s2 = inlined_call_operand.vmem [shape: f32[1,128], index: 2, kind: input, shape index: {}]
  %s3 = inlined_call_operand.vmem [shape: f32[8,128], index: 3, kind: output, shape index: {}]
  %s4 = sld [smem:[#allocation0]]
  $region22: #{resnet_forward.47} parent=0
    _
  %s6 = ssub.s32 1, %s4
  %s7 = scalar_select 0, %s6, %s4
  // Predicated region
  $region2: #{resnet_forward.47} parent=0 // pred_check
    _
  $region3: #{resnet_forward.47} parent=0 // pred_check_branch
    %9 = sbr.rel (0) target = $region5
  $region4: #{resnet_forward.47} parent=0 // pred_region
    _
  $region5: #{resnet_forward.47} parent=0 // pred_fallthru
    _
  // Predicated region
  $region6: #{resnet_forward.47} parent=0 // pred_check
    _
  $region7: #{resnet_forward.47} parent=0 // pred_check_branch
    %11 = sbr.rel (0) target = $region9
  $region8: #{resnet_forward.47} parent=0 // pred_region
    _
  $region9: #{resnet_forward.47} parent=0 // pred_fallthru
    _
  // Predicated region
  $region10: #{resnet_forward.47} parent=0 // pred_check
    _
  $region11: #{resnet_forward.47} parent=0 // pred_check_branch
    %13 = sbr.rel (0) target = $region13
  $region12: #{resnet_forward.47} parent=0 // pred_region
    _
  $region13: #{resnet_forward.47} parent=0 // pred_fallthru
    _
  %v14 = vld [vmem:[%s0] sm:$0xff]
  %v15 = vld [vmem:[%s1] sm:$0x1]
  %v17 = vperm.slane %v15, 0
  %v19 = vmul.f32 %v14, %v17
  %v20 = vld [vmem:[%s2] sm:$0x1]
  %v22 = vperm.slane %v20, 0
  %v24 = vadd.f32 %v19, %v22
  %25 = vst [vmem:[%s3] sm:$0xff] %v24
  // Predicated region
  $region14: #{resnet_forward.47} parent=0 // pred_check
    _
  $region15: #{resnet_forward.47} parent=0 // pred_check_branch
    %27 = sbr.rel (0) target = $region17
  $region16: #{resnet_forward.47} parent=0 // pred_region
    _
  $region17: #{resnet_forward.47} parent=0 // pred_fallthru
    _
  // Predicated region
  $region18: #{resnet_forward.47} parent=0 // pred_check
    _
  $region19: #{resnet_forward.47} parent=0 // pred_check_branch
    %29 = sbr.rel (0) target = $region21
  $region20: #{resnet_forward.47} parent=0 // pred_region
    _
  $region21: #{resnet_forward.47} parent=0 // pred_fallthru
    _

// kernel: resnet_forward.44
$region0: #{resnet_forward.44}
  #allocation0 [shape = 'u32[]', space=smem, size = 0x4, offset = 0x4, fixed_abs, tag = 'smem constant byte address 0x4 - core index']
  #allocation1 [shape = 'u32[72,128]{1,0:T(1,128)}', space=vmem, size = 0x9000, scoped, tag = 'internal scratch']
  %s0 = inlined_call_operand.vmem [shape: f32[8,128], index: 0, kind: input, shape index: {}]
  %s1 = inlined_call_operand.vmem [shape: f32[1,128], index: 1, kind: input, shape index: {}]
  %s2 = inlined_call_operand.vmem [shape: f32[1,128], index: 2, kind: input, shape index: {}]
  %s3 = inlined_call_operand.vmem [shape: f32[8,128], index: 3, kind: output, shape index: {}]
  %s4 = sld [smem:[#allocation0]]
  $region22: #{resnet_forward.44} parent=0
    _
  %s6 = ssub.s32 1, %s4
  %s7 = scalar_select 0, %s6, %s4
  // Predicated region
  $region2: #{resnet_forward.44} parent=0 // pred_check
    _
  $region3: #{resnet_forward.44} parent=0 // pred_check_branch
    %9 = sbr.rel (0) target = $region5
  $region4: #{resnet_forward.44} parent=0 // pred_region
    _
  $region5: #{resnet_forward.44} parent=0 // pred_fallthru
    _
  // Predicated region
  $region6: #{resnet_forward.44} parent=0 // pred_check
    _
  $region7: #{resnet_forward.44} parent=0 // pred_check_branch
    %11 = sbr.rel (0) target = $region9
  $region8: #{resnet_forward.44} parent=0 // pred_region
    _
  $region9: #{resnet_forward.44} parent=0 // pred_fallthru
    _
  // Predicated region
  $region10: #{resnet_forward.44} parent=0 // pred_check
    _
  $region11: #{resnet_forward.44} parent=0 // pred_check_branch
    %13 = sbr.rel (0) target = $region13
  $region12: #{resnet_forward.44} parent=0 // pred_region
    _
  $region13: #{resnet_forward.44} parent=0 // pred_fallthru
    _
  %v14 = vld [vmem:[%s0] sm:$0xff]
  %v15 = vld [vmem:[%s1] sm:$0x1]
  %v17 = vperm.slane %v15, 0
  %v19 = vmul.f32 %v14, %v17
  %v20 = vld [vmem:[%s2] sm:$0x1]
  %v22 = vperm.slane %v20, 0
  %v24 = vadd.f32 %v19, %v22
  %v25 = vmax.f32 %v24, 0.0
  %26 = vst [vmem:[%s3] sm:$0xff] %v25
  // Predicated region
  $region14: #{resnet_forward.44} parent=0 // pred_check
    _
  $region15: #{resnet_forward.44} parent=0 // pred_check_branch
    %28 = sbr.rel (0) target = $region17
  $region16: #{resnet_forward.44} parent=0 // pred_region
    _
  $region17: #{resnet_forward.44} parent=0 // pred_fallthru
    _
  // Predicated region
  $region18: #{resnet_forward.44} parent=0 // pred_check
    _
  $region19: #{resnet_forward.44} parent=0 // pred_check_branch
    %30 = sbr.rel (0) target = $region21
  $region20: #{resnet_forward.44} parent=0 // pred_region
    _
  $region21: #{resnet_forward.44} parent=0 // pred_fallthru
    _

// kernel: resnet_forward.43
$region0: #{resnet_forward.43}
  #allocation0 [shape = 'u32[]', space=smem, size = 0x4, offset = 0x4, fixed_abs, tag = 'smem constant byte address 0x4 - core index']
  #allocation1 [shape = 'u32[72,128]{1,0:T(1,128)}', space=vmem, size = 0x9000, scoped, tag = 'internal scratch']
  #allocation2 [shape = 'f32[8,128]{1,0:T(8,128)}', space=vmem, size = 0x1000, scoped, tag = 'scratch operand']
  %s0 = inlined_call_operand.vmem [shape: bf16[8,1152], index: 0, kind: input, shape index: {}]
  %s1 = inlined_call_operand.vmem [shape: bf16[1152,128], index: 1, kind: input, shape index: {}]
  %s2 = inlined_call_operand.vmem [shape: f32[8,128], index: 2, kind: output, shape index: {0}]
  %s3 = inlined_call_operand.vmem [shape: f32[1,1,128], index: 3, kind: output, shape index: {1}]
  %s4 = inlined_call_operand.vmem [shape: f32[1,1,128], index: 4, kind: output, shape index: {2}]
  %5 = xla_tuple %s2, %s3, %s4
  %s6 = sld [smem:[#allocation0]]
  $region65: #{resnet_forward.43} parent=0
    _
  %s8 = ssub.s32 1, %s6
  %s9 = scalar_select 0, %s8, %s6
  loop: start=0, step=1, limit=5
  $region2: #{resnet_forward.43} parent=0 // loop_pre_header
    _
  $region3: #{resnet_forward.43} parent=0 // loop_header
    %s11 = sphi 0, %s15
    %p12 = scmp.ge.s32.totalorder %s11, 5
    %s18 = sphi 0, %s37
    %s19 = sphi 0, %s33
    %s20 = sphi 0, %s29
    %s21 = sphi 0, %s18
    %s22 = sphi 0, %s19
    %s23 = sphi 0, %s20
    %s24 = sphi 0, %s21
    %s25 = sphi 0, %s22
    %s26 = sphi 0, %s23
    %s42 = sphi 0, %s44
    %s45 = sphi 0, %s42
    %s46 = sphi 0, %s45
    %s62 = sphi 0, %s46
    %s70 = sphi 0, %s72
    %s73 = sphi 0, %s70
    %s74 = sphi 0, %s73
    %s90 = sphi 0, %s74
    %s98 = sphi 0, %s100
    %s101 = sphi 0, %s98
    %s102 = sphi 0, %s101
    %s118 = sphi 0, %s102
    %s126 = sphi 0, %s128
    %s129 = sphi 0, %s126
    %s130 = sphi 0, %s129
    %s146 = sphi 0, %s130
    %s154 = sphi 0, %s156
    %s157 = sphi 0, %s154
    %s158 = sphi 0, %s157
    %s174 = sphi 0, %s158
  $region4: #{resnet_forward.43} parent=0 // loop_header_branch
    %14 = sbr.rel (%p12) target = $region8
  $region5: #{resnet_forward.43} parent=0 // loop_body
    %s16 = ssub.s32 %s11, 1
    %s17 = ssub.s32 %s11, 2
    %s27 = sadd.s32 1, %s20
    %p28 = scmp.ge.s32.totalorder %s27, 3
    %s29 = scalar_select %p28, 0, %s27
    %s30 = sadd.s32 1, %s19
    %s31 = scalar_select %p28, %s30, %s19
    %p32 = scmp.ge.s32.totalorder %s31, 1
    %s33 = scalar_select %p32, 0, %s31
    %s34 = sadd.s32 1, %s18
    %s35 = scalar_select %p32, %s34, %s18
    %p36 = scmp.ge.s32.totalorder %s35, 1
    %s37 = scalar_select %p36, 0, %s35
    %s38 = ssub.s32 %s18, %s37
    %s39 = ssub.s32 %s20, %s29
    %s40 = sor.u32 %s38, %s39
    %p41 = scmp.eq.s32.totalorder %s40, 0
    %s43 = sadd.s32 %s42, 1
    %s44 = scalar_select %p41, %s42, %s43
    %p47 = pneg %p41
    %p48 = scmp.eq.s32.totalorder %s11, 2
    %p49 = por %p47, %p48
    %p50 = scmp.ne.s32.totalorder %s42, %s45
    %p51 = scmp.eq.s32.totalorder %s11, 0
    %p52 = por %p50, %p51
    %p53 = scmp.ne.s32.totalorder %s42, %s45
    %p54 = scmp.eq.s32.totalorder %s16, 2
    %p55 = por %p53, %p54
    %p56 = scmp.ne.s32.totalorder %s45, %s46
    %p57 = scmp.eq.s32.totalorder %s16, 0
    %p58 = por %p56, %p57
    %p59 = scmp.ne.s32.totalorder %s45, %s46
    %p60 = scmp.eq.s32.totalorder %s17, 2
    %p61 = por %p59, %p60
    %p63 = scmp.ne.s32.totalorder %s46, %s62
    %p64 = scmp.eq.s32.totalorder %s17, 0
    %p65 = por %p63, %p64
    %s66 = ssub.s32 %s20, %s29
    %s67 = ssub.s32 %s19, %s33
    %s68 = sor.u32 %s66, %s67
    %p69 = scmp.eq.s32.totalorder %s68, 0
    %s71 = sadd.s32 %s70, 1
    %s72 = scalar_select %p69, %s70, %s71
    %p75 = pneg %p69
    %p76 = scmp.eq.s32.totalorder %s11, 2
    %p77 = por %p75, %p76
    %p78 = scmp.ne.s32.totalorder %s70, %s73
    %p79 = scmp.eq.s32.totalorder %s11, 0
    %p80 = por %p78, %p79
    %p81 = scmp.ne.s32.totalorder %s70, %s73
    %p82 = scmp.eq.s32.totalorder %s16, 2
    %p83 = por %p81, %p82
    %p84 = scmp.ne.s32.totalorder %s73, %s74
    %p85 = scmp.eq.s32.totalorder %s16, 0
    %p86 = por %p84, %p85
    %p87 = scmp.ne.s32.totalorder %s73, %s74
    %p88 = scmp.eq.s32.totalorder %s17, 2
    %p89 = por %p87, %p88
    %p91 = scmp.ne.s32.totalorder %s74, %s90
    %p92 = scmp.eq.s32.totalorder %s17, 0
    %p93 = por %p91, %p92
    %s94 = ssub.s32 %s18, %s37
    %s95 = ssub.s32 %s19, %s33
    %s96 = sor.u32 %s94, %s95
    %p97 = scmp.eq.s32.totalorder %s96, 0
    %s99 = sadd.s32 %s98, 1
    %s100 = scalar_select %p97, %s98, %s99
    %p103 = pneg %p97
    %p104 = scmp.eq.s32.totalorder %s11, 2
    %p105 = por %p103, %p104
    %p106 = scmp.ne.s32.totalorder %s98, %s101
    %p107 = scmp.eq.s32.totalorder %s11, 0
    %p108 = por %p106, %p107
    %p109 = scmp.ne.s32.totalorder %s98, %s101
    %p110 = scmp.eq.s32.totalorder %s16, 2
    %p111 = por %p109, %p110
    %p112 = scmp.ne.s32.totalorder %s101, %s102
    %p113 = scmp.eq.s32.totalorder %s16, 0
    %p114 = por %p112, %p113
    %p115 = scmp.ne.s32.totalorder %s101, %s102
    %p116 = scmp.eq.s32.totalorder %s17, 2
    %p117 = por %p115, %p116
    %p119 = scmp.ne.s32.totalorder %s102, %s118
    %p120 = scmp.eq.s32.totalorder %s17, 0
    %p121 = por %p119, %p120
    %s122 = ssub.s32 %s18, %s37
    %s123 = ssub.s32 %s19, %s33
    %s124 = sor.u32 %s122, %s123
    %p125 = scmp.eq.s32.totalorder %s124, 0
    %s127 = sadd.s32 %s126, 1
    %s128 = scalar_select %p125, %s126, %s127
    %p131 = pneg %p125
    %p132 = scmp.eq.s32.totalorder %s11, 2
    %p133 = por %p131, %p132
    %p134 = scmp.ne.s32.totalorder %s126, %s129
    %p135 = scmp.eq.s32.totalorder %s11, 0
    %p136 = por %p134, %p135
    %p137 = scmp.ne.s32.totalorder %s126, %s129
    %p138 = scmp.eq.s32.totalorder %s16, 2
    %p139 = por %p137, %p138
    %p140 = scmp.ne.s32.totalorder %s129, %s130
    %p141 = scmp.eq.s32.totalorder %s16, 0
    %p142 = por %p140, %p141
    %p143 = scmp.ne.s32.totalorder %s129, %s130
    %p144 = scmp.eq.s32.totalorder %s17, 2
    %p145 = por %p143, %p144
    %p147 = scmp.ne.s32.totalorder %s130, %s146
    %p148 = scmp.eq.s32.totalorder %s17, 0
    %p149 = por %p147, %p148
    %s150 = ssub.s32 %s18, %s37
    %s151 = ssub.s32 %s19, %s33
    %s152 = sor.u32 %s150, %s151
    %p153 = scmp.eq.s32.totalorder %s152, 0
    %s155 = sadd.s32 %s154, 1
    %s156 = scalar_select %p153, %s154, %s155
    %p159 = pneg %p153
    %p160 = scmp.eq.s32.totalorder %s11, 2
    %p161 = por %p159, %p160
    %p162 = scmp.ne.s32.totalorder %s154, %s157
    %p163 = scmp.eq.s32.totalorder %s11, 0
    %p164 = por %p162, %p163
    %p165 = scmp.ne.s32.totalorder %s154, %s157
    %p166 = scmp.eq.s32.totalorder %s16, 2
    %p167 = por %p165, %p166
    %p168 = scmp.ne.s32.totalorder %s157, %s158
    %p169 = scmp.eq.s32.totalorder %s16, 0
    %p170 = por %p168, %p169
    %p171 = scmp.ne.s32.totalorder %s157, %s158
    %p172 = scmp.eq.s32.totalorder %s17, 2
    %p173 = por %p171, %p172
    %p175 = scmp.ne.s32.totalorder %s158, %s174
    %p176 = scmp.eq.s32.totalorder %s17, 0
    %p177 = por %p175, %p176
    %p178 = scmp.le.s32.totalorder 1, %s11
    %p179 = scmp.lt.s32.totalorder %s11, 4
    %p180 = pnand %p178, %p179
    %p181 = pneg %p180
    // Predicated region
    $region9: #{resnet_forward.43} parent=5 // pred_check
      _
    $region10: #{resnet_forward.43} parent=5 // pred_check_branch
      %183 = sbr.rel (%p180) target = $region12
    $region11: #{resnet_forward.43} parent=5 // pred_region
      %s184 = ssub.s32 %s11, 1
    $region12: #{resnet_forward.43} parent=5 // pred_fallthru
      _
    %p185 = scmp.lt.s32.totalorder %s11, 3
    // Predicated region
    $region13: #{resnet_forward.43} parent=5 // pred_check
      %p186 = pneg %p185
    $region14: #{resnet_forward.43} parent=5 // pred_check_branch
      %188 = sbr.rel (%p186) target = $region16
    $region15: #{resnet_forward.43} parent=5 // pred_region
      // Predicated region
      $region17: #{resnet_forward.43} parent=15 // pred_check
        %p189 = pneg %p52
      $region18: #{resnet_forward.43} parent=15 // pred_check_branch
        %191 = sbr.rel (%p189) target = $region20
      $region19: #{resnet_forward.43} parent=15 // pred_region
        %s192 = smul.u32 3, %s20
        %p193 = scmp.lt.s32.totalorder %s18, 0
        %s194 = scalar_select %p193, %s18, 0
        %p195 = scmp.lt.s32.totalorder %s192, 8
        %s196 = scalar_select %p195, %s192, 8
        %s197 = smul.addr %s194, 9
        %s198 = sadd.s32 %s196, %s197
        %s199 = smul.addr %s198, 4
        %s200 = scalar_lea.vmem %s0, %s199
        %s201 = smul.u32 3, %s20
      $region20: #{resnet_forward.43} parent=15 // pred_fallthru
        _
      // Predicated region
      $region21: #{resnet_forward.43} parent=15 // pred_check
        %p202 = pneg %p80
      $region22: #{resnet_forward.43} parent=15 // pred_check_branch
        %204 = sbr.rel (%p202) target = $region24
      $region23: #{resnet_forward.43} parent=15 // pred_region
        %s205 = smul.u32 48, %s20
        %p206 = scmp.lt.s32.totalorder %s205, 143
        %s207 = scalar_select %p206, %s205, 143
        %p208 = scmp.lt.s32.totalorder %s19, 0
        %s209 = scalar_select %p208, %s19, 0
        %s210 = sadd.s32 %s209, %s207
        %s211 = smul.addr %s210, 4
        %s212 = scalar_lea.vmem %s1, %s211
        %s213 = smul.u32 48, %s20
      $region24: #{resnet_forward.43} parent=15 // pred_fallthru
        _
    $region16: #{resnet_forward.43} parent=5 // pred_fallthru
      _
    %p214 = scmp.le.s32.totalorder 1, %s11
    %p215 = scmp.lt.s32.totalorder %s11, 4
    %p216 = pnand %p214, %p215
    %p217 = pneg %p216
    // Predicated region
    $region25: #{resnet_forward.43} parent=5 // pred_check
      _
    $region26: #{resnet_forward.43} parent=5 // pred_check_branch
      %219 = sbr.rel (%p216) target = $region28
    $region27: #{resnet_forward.43} parent=5 // pred_region
      %s220 = ssub.s32 %s11, 1
      %s221 = smul.u32 3, %s23
      %p222 = scmp.lt.s32.totalorder %s21, 0
      %s223 = scalar_select %p222, %s21, 0
      %p224 = scmp.lt.s32.totalorder %s221, 8
      %s225 = scalar_select %p224, %s221, 8
      %s226 = smul.addr %s223, 9
      %s227 = sadd.s32 %s225, %s226
      %s228 = smul.addr %s227, 4
      %s229 = scalar_lea.vmem %s0, %s228
      %p230 = pneg %p58
      %p231 = pneg %p55
      %s232 = smul.u32 48, %s23
      %p233 = scmp.lt.s32.totalorder %s232, 143
      %s234 = scalar_select %p233, %s232, 143
      %p235 = scmp.lt.s32.totalorder %s22, 0
      %s236 = scalar_select %p235, %s22, 0
      %s237 = sadd.s32 %s236, %s234
      %s238 = smul.addr %s237, 4
      %s239 = scalar_lea.vmem %s1, %s238
      %p240 = pneg %p86
      %p241 = pneg %p83
      %p242 = pneg %p114
      %p243 = pneg %p111
      %p244 = scmp.lt.s32.totalorder %s21, 0
      %s245 = scalar_select %p244, %s21, 0
      %p246 = scmp.lt.s32.totalorder %s22, 0
      %s247 = scalar_select %p246, %s22, 0
      %s248 = sadd.s32 %s247, %s245
      %s249 = smul.addr %s248, 8
      %s250 = scalar_lea.vmem %s2, %s249
      %p251 = pneg %p142
      %p252 = pneg %p139
      %p253 = scmp.lt.s32.totalorder %s21, 0
      %s254 = scalar_select %p253, %s21, 0
      %p255 = scmp.lt.s32.totalorder %s22, 0
      %s256 = scalar_select %p255, %s22, 0
      %s257 = sadd.s32 %s256, %s254
      %s258 = scalar_lea.vmem %s3, %s257
      %p259 = pneg %p170
      %p260 = pneg %p167
      %p261 = scmp.lt.s32.totalorder %s21, 0
      %s262 = scalar_select %p261, %s21, 0
      %p263 = scmp.lt.s32.totalorder %s22, 0
      %s264 = scalar_select %p263, %s22, 0
      %s265 = sadd.s32 %s264, %s262
      %s266 = scalar_lea.vmem %s4, %s265
      %s267 = smul.u32 3, %s23
      %p268 = scmp.lt.s32.totalorder %s21, 0
      %s269 = scalar_select %p268, %s21, 0
      %p270 = scmp.lt.s32.totalorder %s267, 8
      %s271 = scalar_select %p270, %s267, 8
      %s272 = smul.addr %s269, 9
      %s273 = sadd.s32 %s271, %s272
      %s274 = smul.addr %s273, 4
      %s275 = scalar_lea.vmem %s0, %s274
      %s276 = smul.u32 3, %s23
      %s277 = smul.u32 48, %s23
      %p278 = scmp.lt.s32.totalorder %s277, 143
      %s279 = scalar_select %p278, %s277, 143
      %p280 = scmp.lt.s32.totalorder %s22, 0
      %s281 = scalar_select %p280, %s22, 0
      %s282 = sadd.s32 %s281, %s279
      %s283 = smul.addr %s282, 4
      %s284 = scalar_lea.vmem %s1, %s283
      %s285 = smul.u32 48, %s23
      %p286 = scmp.lt.s32.totalorder %s21, 0
      %s287 = scalar_select %p286, %s21, 0
      %p288 = scmp.lt.s32.totalorder %s22, 0
      %s289 = scalar_select %p288, %s22, 0
      %s290 = sadd.s32 %s289, %s287
      %s291 = smul.addr %s290, 8
      %s292 = scalar_lea.vmem %s2, %s291
      %p293 = scmp.lt.s32.totalorder %s21, 0
      %s294 = scalar_select %p293, %s21, 0
      %p295 = scmp.lt.s32.totalorder %s22, 0
      %s296 = scalar_select %p295, %s22, 0
      %s297 = sadd.s32 %s296, %s294
      %s298 = scalar_lea.vmem %s3, %s297
      %p299 = scmp.lt.s32.totalorder %s21, 0
      %s300 = scalar_select %p299, %s21, 0
      %p301 = scmp.lt.s32.totalorder %s22, 0
      %s302 = scalar_select %p301, %s22, 0
      %s303 = sadd.s32 %s302, %s300
      %s304 = scalar_lea.vmem %s4, %s303
      %p305 = scmp.eq.s32.totalorder %s23, 0
      // Predicated region
      $region29: #{resnet_forward.43} parent=27 // pred_check
        %p306 = pneg %p305
      $region30: #{resnet_forward.43} parent=27 // pred_check_branch
        %308 = sbr.rel (%p306) target = $region32
      $region31: #{resnet_forward.43} parent=27 // pred_region
        %309 = vst [vmem:[#allocation2] sm:$0xff] 0.0
      $region32: #{resnet_forward.43} parent=27 // pred_fallthru
        _
      %v310 = vld [vmem:[#allocation2] sm:$0xff]
      %v311 = vld [vmem:[%s275] sm:$0xff]
      %v312 = vld [vmem:[%s275 + $0x8] sm:$0xf]
      %v313 = vld [vmem:[%s284] sm:$0xf]
      %v314 = vld [vmem:[%s284 + $0x4] sm:$0xf]
      %v315 = vld [vmem:[%s284 + $0x8] sm:$0xf]
      %v316 = vld [vmem:[%s284 + $0xc] sm:$0xf]
      %v317 = vld [vmem:[%s284 + $0x10] sm:$0xf]
      %v318 = vld [vmem:[%s284 + $0x14] sm:$0xf]
      %v319 = vld [vmem:[%s284 + $0x18] sm:$0xf]
      %v320 = vld [vmem:[%s284 + $0x1c] sm:$0xf]
      %v321 = vld [vmem:[%s284 + $0x20] sm:$0xf]
      %v322 = vld [vmem:[%s284 + $0x24] sm:$0xf]
      %v323 = vld [vmem:[%s284 + $0x28] sm:$0xf]
      %v324 = vld [vmem:[%s284 + $0x2c] sm:$0xf]
      %v325 = vld [vmem:[%s284 + $0x30] sm:$0xf]
      %v326 = vld [vmem:[%s284 + $0x34] sm:$0xf]
      %v327 = vld [vmem:[%s284 + $0x38] sm:$0xf]
      %v328 = vld [vmem:[%s284 + $0x3c] sm:$0xf]
      %v329 = vld [vmem:[%s284 + $0x40] sm:$0xf]
      %v330 = vld [vmem:[%s284 + $0x44] sm:$0xf]
      %v331 = vld [vmem:[%s284 + $0x48] sm:$0xf]
      %v332 = vld [vmem:[%s284 + $0x4c] sm:$0xf]
      %v333 = vld [vmem:[%s284 + $0x50] sm:$0xf]
      %v334 = vld [vmem:[%s284 + $0x54] sm:$0xf]
      %v335 = vld [vmem:[%s284 + $0x58] sm:$0xf]
      %v336 = vld [vmem:[%s284 + $0x5c] sm:$0xf]
      %v337 = vld [vmem:[%s284 + $0x60] sm:$0xf]
      %v338 = vld [vmem:[%s284 + $0x64] sm:$0xf]
      %v339 = vld [vmem:[%s284 + $0x68] sm:$0xf]
      %v340 = vld [vmem:[%s284 + $0x6c] sm:$0xf]
      %v341 = vld [vmem:[%s284 + $0x70] sm:$0xf]
      %v342 = vld [vmem:[%s284 + $0x74] sm:$0xf]
      %v343 = vld [vmem:[%s284 + $0x78] sm:$0xf]
      %v344 = vld [vmem:[%s284 + $0x7c] sm:$0xf]
      %v345 = vld [vmem:[%s284 + $0x80] sm:$0xf]
      %v346 = vld [vmem:[%s284 + $0x84] sm:$0xf]
      %v347 = vld [vmem:[%s284 + $0x88] sm:$0xf]
      %v348 = vld [vmem:[%s284 + $0x8c] sm:$0xf]
      %v349 = vld [vmem:[%s284 + $0x90] sm:$0xf]
      %v350 = vld [vmem:[%s284 + $0x94] sm:$0xf]
      %v351 = vld [vmem:[%s284 + $0x98] sm:$0xf]
      %v352 = vld [vmem:[%s284 + $0x9c] sm:$0xf]
      %v353 = vld [vmem:[%s284 + $0xa0] sm:$0xf]
      %v354 = vld [vmem:[%s284 + $0xa4] sm:$0xf]
      %v355 = vld [vmem:[%s284 + $0xa8] sm:$0xf]
      %v356 = vld [vmem:[%s284 + $0xac] sm:$0xf]
      %v357 = vld [vmem:[%s284 + $0xb0] sm:$0xf]
      %v358 = vld [vmem:[%s284 + $0xb4] sm:$0xf]
      %v359 = vld [vmem:[%s284 + $0xb8] sm:$0xf]
      %v360 = vld [vmem:[%s284 + $0xbc] sm:$0xf]
      %v363 = vunpack.c.l.b16 %v311
      %v364 = vunpack.c.h.b16 %v311
      %v365 = vunpack.c.l.b16 %v312
      %v366 = vpack.c.b16 %v363, %v363
      %v367 = vpack.c.b16 %v364, %v364
      %v368 = vpack.c.b16 %v365, %v365
      %v420 = vunpack.c.l.b16 %v313
      %v421 = vunpack.c.l.b16 %v314
      %v422 = vunpack.c.l.b16 %v315
      %v423 = vunpack.c.l.b16 %v316
      %v424 = vunpack.c.l.b16 %v317
      %v425 = vunpack.c.l.b16 %v318
      %v426 = vunpack.c.l.b16 %v319
      %v427 = vunpack.c.l.b16 %v320
      %v428 = vunpack.c.l.b16 %v321
      %v429 = vunpack.c.l.b16 %v322
      %v430 = vunpack.c.l.b16 %v323
      %v431 = vunpack.c.l.b16 %v324
      %v432 = vunpack.c.l.b16 %v325
      %v433 = vunpack.c.l.b16 %v326
      %v434 = vunpack.c.l.b16 %v327
      %v435 = vunpack.c.l.b16 %v328
      %v436 = vunpack.c.l.b16 %v329
      %v437 = vunpack.c.l.b16 %v330
      %v438 = vunpack.c.l.b16 %v331
      %v439 = vunpack.c.l.b16 %v332
      %v440 = vunpack.c.l.b16 %v333
      %v441 = vunpack.c.l.b16 %v334
      %v442 = vunpack.c.l.b16 %v335
      %v443 = vunpack.c.l.b16 %v336
      %v444 = vunpack.c.l.b16 %v337
      %v445 = vunpack.c.l.b16 %v338
      %v446 = vunpack.c.l.b16 %v339
      %v447 = vunpack.c.l.b16 %v340
      %v448 = vunpack.c.l.b16 %v341
      %v449 = vunpack.c.l.b16 %v342
      %v450 = vunpack.c.l.b16 %v343
      %v451 = vunpack.c.l.b16 %v344
      %v452 = vunpack.c.l.b16 %v345
      %v453 = vunpack.c.l.b16 %v346
      %v454 = vunpack.c.l.b16 %v347
      %v455 = vunpack.c.l.b16 %v348
      %v456 = vunpack.c.l.b16 %v349
      %v457 = vunpack.c.l.b16 %v350
      %v458 = vunpack.c.l.b16 %v351
      %v459 = vunpack.c.l.b16 %v352
      %v460 = vunpack.c.l.b16 %v353
      %v461 = vunpack.c.l.b16 %v354
      %v462 = vunpack.c.l.b16 %v355
      %v463 = vunpack.c.l.b16 %v356
      %v464 = vunpack.c.l.b16 %v357
      %v465 = vunpack.c.l.b16 %v358
      %v466 = vunpack.c.l.b16 %v359
      %v467 = vunpack.c.l.b16 %v360
      %v468 = vpack.c.b16 %v421, %v420
      %v469 = vpack.c.b16 %v423, %v422
      %v470 = vpack.c.b16 %v425, %v424
      %v471 = vpack.c.b16 %v427, %v426
      %v472 = vpack.c.b16 %v429, %v428
      %v473 = vpack.c.b16 %v431, %v430
      %v474 = vpack.c.b16 %v433, %v432
      %v475 = vpack.c.b16 %v435, %v434
      %v476 = vpack.c.b16 %v437, %v436
      %v477 = vpack.c.b16 %v439, %v438
      %v478 = vpack.c.b16 %v441, %v440
      %v479 = vpack.c.b16 %v443, %v442
      %v480 = vpack.c.b16 %v445, %v444
      %v481 = vpack.c.b16 %v447, %v446
      %v482 = vpack.c.b16 %v449, %v448
      %v483 = vpack.c.b16 %v451, %v450
      %v484 = vpack.c.b16 %v453, %v452
      %v485 = vpack.c.b16 %v455, %v454
      %v486 = vpack.c.b16 %v457, %v456
      %v487 = vpack.c.b16 %v459, %v458
      %v488 = vpack.c.b16 %v461, %v460
      %v489 = vpack.c.b16 %v463, %v462
      %v490 = vpack.c.b16 %v465, %v464
      %v491 = vpack.c.b16 %v467, %v466
      %516 = vmatpush.bf16.msra.mxu0 %v475
      %517 = vmatpush.bf16.msra.mxu0 %v474
      %518 = vmatpush.bf16.msra.mxu0 %v473
      %519 = vmatpush.bf16.msra.mxu0 %v472
      %520 = vmatpush.bf16.msra.mxu0 %v471
      %521 = vmatpush.bf16.msra.mxu0 %v470
      %522 = vmatpush.bf16.msra.mxu0 %v469
      %523 = vmatpush.bf16.msra.mxu0 %v468
      %524 = vmatmul.bf16.gmra.mxu0 %v366
      %v525 = vpop.f32.mrf.mxu0
      %v526 = vadd.f32 0.0, %v525
      %v527 = vpop.f32.mrf.mxu0
      %528 = vdwg.mxu0
      %529 = vmatpush.bf16.msra.mxu0 %v483
      %530 = vmatpush.bf16.msra.mxu0 %v482
      %531 = vmatpush.bf16.msra.mxu0 %v481
      %532 = vmatpush.bf16.msra.mxu0 %v480
      %533 = vmatpush.bf16.msra.mxu0 %v479
      %534 = vmatpush.bf16.msra.mxu0 %v478
      %535 = vmatpush.bf16.msra.mxu0 %v477
      %536 = vmatpush.bf16.msra.mxu0 %v476
      %537 = vmatmul.bf16.gmra.mxu0 %v367
      %v538 = vpop.f32.mrf.mxu0
      %v539 = vadd.f32 %v526, %v538
      %v540 = vpop.f32.mrf.mxu0
      %541 = vdwg.mxu0
      %542 = vmatpush.bf16.msra.mxu0 %v491
      %543 = vmatpush.bf16.msra.mxu0 %v490
      %544 = vmatpush.bf16.msra.mxu0 %v489
      %545 = vmatpush.bf16.msra.mxu0 %v488
      %546 = vmatpush.bf16.msra.mxu0 %v487
      %547 = vmatpush.bf16.msra.mxu0 %v486
      %548 = vmatpush.bf16.msra.mxu0 %v485
      %549 = vmatpush.bf16.msra.mxu0 %v484
      %550 = vmatmul.bf16.gmra.mxu0 %v368
      %v551 = vpop.f32.mrf.mxu0
      %v552 = vadd.f32 %v539, %v551
      %v553 = vpop.f32.mrf.mxu0
      %554 = vdwg.mxu0
      %v555 = vadd.f32 %v310, %v552
      %556 = vst [vmem:[#allocation2] sm:$0xff] %v555
      %p557 = scmp.eq.s32.totalorder %s23, 2
      // Predicated region
      $region33: #{resnet_forward.43} parent=27 // pred_check
        %p558 = pneg %p557
      $region34: #{resnet_forward.43} parent=27 // pred_check_branch
        %560 = sbr.rel (%p558) target = $region36
      $region35: #{resnet_forward.43} parent=27 // pred_region
        %v561 = vld [vmem:[#allocation2] sm:$0xff]
        %562 = vst [vmem:[%s292] sm:$0xff] %v561
        %v563 = vrot.slane %v561, 4
        %v564 = vadd.f32 %v561, %v563
        %v565 = vrot.slane %v564, 2
        %v566 = vadd.f32 %v564, %v565
        %v567 = vrot.slane %v566, 1
        %v568 = vadd.f32 %v566, %v567
        %569 = vst [vmem:[%s298] sm:$0x1] %v568
        %v570 = vmul.f32 %v561, %v561
        %v571 = vrot.slane %v570, 4
        %v572 = vadd.f32 %v570, %v571
        %v573 = vrot.slane %v572, 2
        %v574 = vadd.f32 %v572, %v573
        %v575 = vrot.slane %v574, 1
        %v576 = vadd.f32 %v574, %v575
        %577 = vst [vmem:[%s304] sm:$0x1] %v576
      $region36: #{resnet_forward.43} parent=27 // pred_fallthru
        _
      %p578 = scmp.lt.s32.totalorder %s21, 0
      %s579 = scalar_select %p578, %s21, 0
      %p580 = scmp.lt.s32.totalorder %s22, 0
      %s581 = scalar_select %p580, %s22, 0
      %s582 = sadd.s32 %s581, %s579
      %s583 = smul.addr %s582, 8
      %s584 = scalar_lea.vmem %s2, %s583
      %p585 = scmp.lt.s32.totalorder %s21, 0
      %s586 = scalar_select %p585, %s21, 0
      %p587 = scmp.lt.s32.totalorder %s22, 0
      %s588 = scalar_select %p587, %s22, 0
      %s589 = sadd.s32 %s588, %s586
      %s590 = scalar_lea.vmem %s3, %s589
      %p591 = scmp.lt.s32.totalorder %s21, 0
      %s592 = scalar_select %p591, %s21, 0
      %p593 = scmp.lt.s32.totalorder %s22, 0
      %s594 = scalar_select %p593, %s22, 0
      %s595 = sadd.s32 %s594, %s592
      %s596 = scalar_lea.vmem %s4, %s595
      // Predicated region
      $region37: #{resnet_forward.43} parent=27 // pred_check
        %p597 = pneg %p111
      $region38: #{resnet_forward.43} parent=27 // pred_check_branch
        %599 = sbr.rel (%p597) target = $region40
      $region39: #{resnet_forward.43} parent=27 // pred_region
        _
      $region40: #{resnet_forward.43} parent=27 // pred_fallthru
        _
      // Predicated region
      $region41: #{resnet_forward.43} parent=27 // pred_check
        %p600 = pneg %p139
      $region42: #{resnet_forward.43} parent=27 // pred_check_branch
        %602 = sbr.rel (%p600) target = $region44
      $region43: #{resnet_forward.43} parent=27 // pred_region
        _
      $region44: #{resnet_forward.43} parent=27 // pred_fallthru
        _
      // Predicated region
      $region45: #{resnet_forward.43} parent=27 // pred_check
        %p603 = pneg %p167
      $region46: #{resnet_forward.43} parent=27 // pred_check_branch
        %605 = sbr.rel (%p603) target = $region48
      $region47: #{resnet_forward.43} parent=27 // pred_region
        _
      $region48: #{resnet_forward.43} parent=27 // pred_fallthru
        _
      // Predicated region
      $region49: #{resnet_forward.43} parent=27 // pred_check
        %p606 = pneg %p111
      $region50: #{resnet_forward.43} parent=27 // pred_check_branch
        %608 = sbr.rel (%p606) target = $region52
      $region51: #{resnet_forward.43} parent=27 // pred_region
        %p609 = scmp.lt.s32.totalorder %s21, 0
        %s610 = scalar_select %p609, %s21, 0
        %p611 = scmp.lt.s32.totalorder %s22, 0
        %s612 = scalar_select %p611, %s22, 0
        %s613 = sadd.s32 %s612, %s610
        %s614 = smul.addr %s613, 8
        %s615 = scalar_lea.vmem %s2, %s614
      $region52: #{resnet_forward.43} parent=27 // pred_fallthru
        _
      // Predicated region
      $region53: #{resnet_forward.43} parent=27 // pred_check
        %p616 = pneg %p139
      $region54: #{resnet_forward.43} parent=27 // pred_check_branch
        %618 = sbr.rel (%p616) target = $region56
      $region55: #{resnet_forward.43} parent=27 // pred_region
        %p619 = scmp.lt.s32.totalorder %s21, 0
        %s620 = scalar_select %p619, %s21, 0
        %p621 = scmp.lt.s32.totalorder %s22, 0
        %s622 = scalar_select %p621, %s22, 0
        %s623 = sadd.s32 %s622, %s620
        %s624 = scalar_lea.vmem %s3, %s623
      $region56: #{resnet_forward.43} parent=27 // pred_fallthru
        _
      // Predicated region
      $region57: #{resnet_forward.43} parent=27 // pred_check
        %p625 = pneg %p167
      $region58: #{resnet_forward.43} parent=27 // pred_check_branch
        %627 = sbr.rel (%p625) target = $region60
      $region59: #{resnet_forward.43} parent=27 // pred_region
        %p628 = scmp.lt.s32.totalorder %s21, 0
        %s629 = scalar_select %p628, %s21, 0
        %p630 = scmp.lt.s32.totalorder %s22, 0
        %s631 = scalar_select %p630, %s22, 0
        %s632 = sadd.s32 %s631, %s629
        %s633 = scalar_lea.vmem %s4, %s632
      $region60: #{resnet_forward.43} parent=27 // pred_fallthru
        _
    $region28: #{resnet_forward.43} parent=5 // pred_fallthru
      _
    %p634 = scmp.le.s32.totalorder 2, %s11
    // Predicated region
    $region61: #{resnet_forward.43} parent=5 // pred_check
      %p635 = pneg %p634
    $region62: #{resnet_forward.43} parent=5 // pred_check_branch
      %637 = sbr.rel (%p635) target = $region64
    $region63: #{resnet_forward.43} parent=5 // pred_region
      %s638 = ssub.s32 %s11, 2
    $region64: #{resnet_forward.43} parent=5 // pred_fallthru
      _
  $region6: #{resnet_forward.43} parent=0 // loop_footer
    %s15 = sadd.s32 1, %s11
  $region7: #{resnet_forward.43} parent=0 // loop_footer_branch
    %10 = sbr.rel target = $region3
  $region8: #{resnet_forward.43} parent=0 // loop_exit
    _

// kernel: resnet_forward.49
$region0: #{resnet_forward.49}
  #allocation0 [shape = 'u32[]', space=smem, size = 0x4, offset = 0x4, fixed_abs, tag = 'smem constant byte address 0x4 - core index']
  #allocation1 [shape = 'u32[72,128]{1,0:T(1,128)}', space=vmem, size = 0x9000, scoped, tag = 'internal scratch']
  %s0 = inlined_call_operand.vmem [shape: f32[2,4,128], index: 0, kind: input, shape index: {}]
  %s1 = inlined_call_operand.vmem [shape: bf16[128,128], index: 1, kind: input, shape index: {}]
  %s2 = inlined_call_operand.vmem [shape: f32[1,128], index: 2, kind: input, shape index: {}]
  %s3 = inlined_call_operand.hbm [shape: f32[2,128], index: 3, kind: output, shape index: {}]
  %s4 = sld [smem:[#allocation0]]
  $region22: #{resnet_forward.49} parent=0
    _
  %s6 = ssub.s32 1, %s4
  %s7 = scalar_select 0, %s6, %s4
  $region1: #{resnet_forward.49} parent=0
    #allocation2 [shape = 'u8[1024]{0}', space=vmem, size = 0x400, scoped, tag = 'output window, operand 0, single buffered']
    #allocation3 [shape = 's32[1]{0}', space=sflag, size = 0x4, scoped, tag = 'scoped memory for resnet_forward.49']
    %8 = vsyncpa [#allocation3], 0
    // Predicated region
    $region2: #{resnet_forward.49} parent=1 // pred_check
      _
    $region3: #{resnet_forward.49} parent=1 // pred_check_branch
      %10 = sbr.rel (0) target = $region5
    $region4: #{resnet_forward.49} parent=1 // pred_region
      _
    $region5: #{resnet_forward.49} parent=1 // pred_fallthru
      _
    // Predicated region
    $region6: #{resnet_forward.49} parent=1 // pred_check
      _
    $region7: #{resnet_forward.49} parent=1 // pred_check_branch
      %12 = sbr.rel (0) target = $region9
    $region8: #{resnet_forward.49} parent=1 // pred_region
      _
    $region9: #{resnet_forward.49} parent=1 // pred_fallthru
      _
    // Predicated region
    $region10: #{resnet_forward.49} parent=1 // pred_check
      _
    $region11: #{resnet_forward.49} parent=1 // pred_check_branch
      %14 = sbr.rel (0) target = $region13
    $region12: #{resnet_forward.49} parent=1 // pred_region
      _
    $region13: #{resnet_forward.49} parent=1 // pred_fallthru
      _
    %v15 = vld [vmem:[%s0] sm:$0xf]
    %v16 = vld [vmem:[%s0 + $0x4] sm:$0xf]
    %vm17 = vcmask 1043456
    %v18 = vsel %vm17, %v15, 0.0
    %v19 = vrot.slane %v18, 4
    %v20 = vadd.f32 %v18, %v19
    %v21 = vrot.slane %v20, 2
    %v22 = vadd.f32 %v20, %v21
    %v23 = vrot.slane %v22, 1
    %v24 = vadd.f32 %v22, %v23
    %v25 = vsel %vm17, %v16, 0.0
    %v26 = vrot.slane %v25, 4
    %v27 = vadd.f32 %v25, %v26
    %v28 = vrot.slane %v27, 2
    %v29 = vadd.f32 %v27, %v28
    %v30 = vrot.slane %v29, 1
    %v31 = vadd.f32 %v29, %v30
    %v32 = vrcp.pop 4.0
    %v33 = vmul.f32 4.0, %v32
    %v34 = vsub.f32 1.0, %v33
    %v35 = vmul.f32 %v32, %v34
    %v36 = vadd.f32 %v32, %v35
    %vm37 = vweird.f32 %v32
    %v38 = vsel %vm37, %v32, %v36
    %v39 = vmul.f32 %v24, %v38
    %v40 = vmul.f32 %v31, %v38
    %v41 = vpack.c.bf16 %v39, %v39
    %v42 = vpack.c.bf16 %v40, %v40
    %v43 = vld [vmem:[%s1] sm:$0xf]
    %v44 = vld [vmem:[%s1 + $0x4] sm:$0xf]
    %v45 = vld [vmem:[%s1 + $0x8] sm:$0xf]
    %v46 = vld [vmem:[%s1 + $0xc] sm:$0xf]
    %v47 = vld [vmem:[%s1 + $0x10] sm:$0xf]
    %v48 = vld [vmem:[%s1 + $0x14] sm:$0xf]
    %v49 = vld [vmem:[%s1 + $0x18] sm:$0xf]
    %v50 = vld [vmem:[%s1 + $0x1c] sm:$0xf]
    %v51 = vld [vmem:[%s1 + $0x20] sm:$0xf]
    %v52 = vld [vmem:[%s1 + $0x24] sm:$0xf]
    %v53 = vld [vmem:[%s1 + $0x28] sm:$0xf]
    %v54 = vld [vmem:[%s1 + $0x2c] sm:$0xf]
    %v55 = vld [vmem:[%s1 + $0x30] sm:$0xf]
    %v56 = vld [vmem:[%s1 + $0x34] sm:$0xf]
    %v57 = vld [vmem:[%s1 + $0x38] sm:$0xf]
    %v58 = vld [vmem:[%s1 + $0x3c] sm:$0xf]
    %v59 = vld [vmem:[%s2] sm:$0x1]
    %v61 = vperm.slane %v59, 0
    %v65 = vunpack.c.l.b16 %v41
    %v66 = vunpack.c.l.b16 %v42
    %vm67 = vcmask 1041409
    %v68 = vsel %vm67, %v66, %v65
    %v69 = vpack.c.b16 %v68, %v68
    %v87 = vunpack.c.l.b16 %v43
    %v88 = vunpack.c.l.b16 %v44
    %v89 = vunpack.c.l.b16 %v45
    %v90 = vunpack.c.l.b16 %v46
    %v91 = vunpack.c.l.b16 %v47
    %v92 = vunpack.c.l.b16 %v48
    %v93 = vunpack.c.l.b16 %v49
    %v94 = vunpack.c.l.b16 %v50
    %v95 = vunpack.c.l.b16 %v51
    %v96 = vunpack.c.l.b16 %v52
    %v97 = vunpack.c.l.b16 %v53
    %v98 = vunpack.c.l.b16 %v54
    %v99 = vunpack.c.l.b16 %v55
    %v100 = vunpack.c.l.b16 %v56
    %v101 = vunpack.c.l.b16 %v57
    %v102 = vunpack.c.l.b16 %v58
    %v103 = vpack.c.b16 %v88, %v87
    %v104 = vpack.c.b16 %v90, %v89
    %v105 = vpack.c.b16 %v92, %v91
    %v106 = vpack.c.b16 %v94, %v93
    %v107 = vpack.c.b16 %v96, %v95
    %v108 = vpack.c.b16 %v98, %v97
    %v109 = vpack.c.b16 %v100, %v99
    %v110 = vpack.c.b16 %v102, %v101
    %119 = vmatpush.bf16.msra.mxu0 %v110
    %120 = vmatpush.bf16.msra.mxu0 %v109
    %121 = vmatpush.bf16.msra.mxu0 %v108
    %122 = vmatpush.bf16.msra.mxu0 %v107
    %123 = vmatpush.bf16.msra.mxu0 %v106
    %124 = vmatpush.bf16.msra.mxu0 %v105
    %125 = vmatpush.bf16.msra.mxu0 %v104
    %126 = vmatpush.bf16.msra.mxu0 %v103
    %127 = vmatmul.bf16.gmra.mxu0 %v69
    %v128 = vpop.f32.mrf.mxu0
    %v129 = vadd.f32 %v61, %v128
    %v130 = vpop.f32.mrf.mxu0
    %131 = vdwg.mxu0
    %132 = vst [vmem:[#allocation2] sm:$0x3] %v129
    // Predicated region
    $region14: #{resnet_forward.49} parent=1 // pred_check
      _
    $region15: #{resnet_forward.49} parent=1 // pred_check_branch
      %134 = sbr.rel (0) target = $region17
    $region16: #{resnet_forward.49} parent=1 // pred_region
      %136 = vsyncadd [#allocation3], 0
      %s138 = sshll.u32 [#allocation2], 4
      %s139 = int_to_ptr.vmem [resolvable:$true] %s138
      %s140 = sshll.u32 %s3, 4
      %s141 = int_to_ptr.hbm [resolvable:$true] %s140
      %143 = dma.vmem_to_hbm [thread:$0]  %s139, 32, %s141, [#allocation3]
    $region17: #{resnet_forward.49} parent=1 // pred_fallthru
      _
    // Predicated region
    $region18: #{resnet_forward.49} parent=1 // pred_check
      _
    $region19: #{resnet_forward.49} parent=1 // pred_check_branch
      %145 = sbr.rel (0) target = $region21
    $region20: #{resnet_forward.49} parent=1 // pred_region
      %147 = dma.done [#allocation3], 32
    $region21: #{resnet_forward.49} parent=1 // pred_fallthru
      _
    %148 = vsyncpa [#allocation3], 1

// kernel: resnet_forward.48
$region0: #{resnet_forward.48}
  #allocation0 [shape = 'u32[]', space=smem, size = 0x4, offset = 0x4, fixed_abs, tag = 'smem constant byte address 0x4 - core index']
  #allocation1 [shape = 'u32[72,128]{1,0:T(1,128)}', space=vmem, size = 0x9000, scoped, tag = 'internal scratch']
  %s0 = inlined_call_operand.vmem [shape: f32[8,128], index: 0, kind: input, shape index: {}]
  %s1 = inlined_call_operand.vmem [shape: f32[1,128], index: 1, kind: input, shape index: {}]
  %s2 = inlined_call_operand.vmem [shape: f32[1,128], index: 2, kind: input, shape index: {}]
  %s3 = inlined_call_operand.vmem [shape: f32[8,128], index: 3, kind: input, shape index: {}]
  %s4 = inlined_call_operand.vmem [shape: f32[8,128], index: 4, kind: output, shape index: {}]
  %s5 = sld [smem:[#allocation0]]
  $region26: #{resnet_forward.48} parent=0
    _
  %s7 = ssub.s32 1, %s5
  %s8 = scalar_select 0, %s7, %s5
  // Predicated region
  $region2: #{resnet_forward.48} parent=0 // pred_check
    _
  $region3: #{resnet_forward.48} parent=0 // pred_check_branch
    %10 = sbr.rel (0) target = $region5
  $region4: #{resnet_forward.48} parent=0 // pred_region
    _
  $region5: #{resnet_forward.48} parent=0 // pred_fallthru
    _
  // Predicated region
  $region6: #{resnet_forward.48} parent=0 // pred_check
    _
  $region7: #{resnet_forward.48} parent=0 // pred_check_branch
    %12 = sbr.rel (0) target = $region9
  $region8: #{resnet_forward.48} parent=0 // pred_region
    _
  $region9: #{resnet_forward.48} parent=0 // pred_fallthru
    _
  // Predicated region
  $region10: #{resnet_forward.48} parent=0 // pred_check
    _
  $region11: #{resnet_forward.48} parent=0 // pred_check_branch
    %14 = sbr.rel (0) target = $region13
  $region12: #{resnet_forward.48} parent=0 // pred_region
    _
  $region13: #{resnet_forward.48} parent=0 // pred_fallthru
    _
  // Predicated region
  $region14: #{resnet_forward.48} parent=0 // pred_check
    _
  $region15: #{resnet_forward.48} parent=0 // pred_check_branch
    %16 = sbr.rel (0) target = $region17
  $region16: #{resnet_forward.48} parent=0 // pred_region
    _
  $region17: #{resnet_forward.48} parent=0 // pred_fallthru
    _
  %v17 = vld [vmem:[%s0] sm:$0xff]
  %v18 = vld [vmem:[%s1] sm:$0x1]
  %v20 = vperm.slane %v18, 0
  %v22 = vmul.f32 %v17, %v20
  %v23 = vld [vmem:[%s2] sm:$0x1]
  %v25 = vperm.slane %v23, 0
  %v27 = vadd.f32 %v22, %v25
  %v28 = vld [vmem:[%s3] sm:$0xff]
  %v29 = vadd.f32 %v27, %v28
  %v30 = vmax.f32 %v29, 0.0
  %31 = vst [vmem:[%s4] sm:$0xff] %v30
  // Predicated region
  $region18: #{resnet_forward.48} parent=0 // pred_check
    _
  $region19: #{resnet_forward.48} parent=0 // pred_check_branch
    %33 = sbr.rel (0) target = $region21
  $region20: #{resnet_forward.48} parent=0 // pred_region
    _
  $region21: #{resnet_forward.48} parent=0 // pred_fallthru
    _
  // Predicated region
  $region22: #{resnet_forward.48} parent=0 // pred_check
    _
  $region23: #{resnet_forward.48} parent=0 // pred_check_branch
    %35 = sbr.rel (0) target = $region25
  $region24: #{resnet_forward.48} parent=0 // pred_region
    _
  $region25: #{resnet_forward.48} parent=0 // pred_fallthru
    _

</llo_original>
